<compile_context>
chip_gen: v5e
topology: v5e:2x2
jax: 0.10.0
libtpu: 0.0.40
codegen_flags: <defaults>
</compile_context>

<pallas_src>
import jax
import jax.numpy as jnp
from jax.experimental import pallas as pl
from jax.experimental.pallas import tpu as pltpu

_BN_EPS = 1e-5


def _plan(batch):
    """Pixel grouping so every scratch / output store is a full 8-sublane-aligned tile."""
    if batch >= 8:
        assert batch % 8 == 0, "batch must be 1, 2, 4, 8 or a multiple of 8"
        ppg, gr = 1, batch                      # pixels per group, rows per group
    else:
        assert 8 % batch == 0, "batch must be 1, 2, 4, 8 or a multiple of 8"
        ppg, gr = 8 // batch, 8
    ngroups = -(-25 // ppg)                     # ceil(25 / ppg) 5x5 layer-2 pixels
    return ppg, gr, ngroups


# ------------------------------ fused kernel -------------------------------

def _decoder_kernel(x_ref, w1_ref, w2_ref, w3_ref, w4_ref, bn_ref, o_ref, h2_ref):
    f32, bf16 = jnp.float32, jnp.bfloat16
    B = x_ref.shape[0]
    ppg, gr, ngroups = _plan(B)

    # Merged per-channel parameter slab (one DMA): rows g1,b1,g2,b2,g3,b3,bias4,unused.
    g1, b1 = bn_ref[0:1, :], bn_ref[1:2, :]
    g2, b2 = bn_ref[2:3, :], bn_ref[3:4, :]
    g3, b3 = bn_ref[4:5, :], bn_ref[5:6, :]
    bias4 = bn_ref[6:7, :]

    w2v = w2_ref[...]            # (128, 9*128)  bf16
    w3v = w3_ref[...]            # (128, 16*128) bf16
    w4v = w4_ref[...]            # (128, 128)    bf16

    # ---- Layer 1: ConvT(256->128, k=2, s=1) on a 1x1 input == one matmul. --------------
    # p1 columns are (s1, c) with s1 = 2*ki1 + kj1 = the 2x2 output pixel.
    p1 = jnp.dot(x_ref[...].astype(bf16), w1_ref[...], preferred_element_type=f32)  # (B,512)
    blk = [p1[:, s * 128:(s + 1) * 128] for s in range(4)]
    # BN1 (train-mode batch stats over 4 pixels x B), one-pass sums, gamma folded in.
    n1 = 4 * B
    s1 = jnp.sum(blk[0] + blk[1] + blk[2] + blk[3], axis=0, keepdims=True)
    q1 = jnp.sum(blk[0] * blk[0] + blk[1] * blk[1] + blk[2] * blk[2] + blk[3] * blk[3],
                 axis=0, keepdims=True)
    mean1 = s1 * (1.0 / n1)
    var1 = jnp.maximum(q1 * (1.0 / n1) - mean1 * mean1, 0.0)
    scale1 = g1 * jax.lax.rsqrt(var1 + _BN_EPS)
    shift1 = b1 - mean1 * scale1
    a1 = [jnp.maximum(v * scale1 + shift1, 0.0).astype(bf16) for v in blk]   # 4 x (B,128)

    # ---- Layer 2: ConvT(128->64, k=3, s=2): 2x2 -> 5x5. ---------------------------------
    # Natural (Cin, 9*Cpad) weight; overlap-add done here on (B,128) slabs (pure VALU).
    acc = [None] * 25
    for s in range(4):
        hi, wi = s // 2, s % 2
        pp = jnp.dot(a1[s], w2v, preferred_element_type=f32)     # (B, 9*128), cols (t2, c)
        for ki in range(3):
            for kj in range(3):
                qpix = (2 * hi + ki) * 5 + (2 * wi + kj)
                term = pp[:, (3 * ki + kj) * 128:(3 * ki + kj + 1) * 128]
                acc[qpix] = term if acc[qpix] is None else acc[qpix] + term

    # BN2 stats (one pass over the 25 accumulated slabs), gamma folded into the scale.
    n2 = 25 * B
    sa, qa = acc[0], acc[0] * acc[0]
    for qpix in range(1, 25):
        sa = sa + acc[qpix]
        qa = qa + acc[qpix] * acc[qpix]
    s2 = jnp.sum(sa, axis=0, keepdims=True)
    q2 = jnp.sum(qa, axis=0, keepdims=True)
    mean2 = s2 * (1.0 / n2)
    var2 = jnp.maximum(q2 * (1.0 / n2) - mean2 * mean2, 0.0)
    scale2 = g2 * jax.lax.rsqrt(var2 + _BN_EPS)
    shift2 = b2 - mean2 * scale2

    # Normalize + ReLU, then store h2 to scratch in groups of `ppg` pixels so every store
    # is a full sublane-aligned (gr,128) tile: no masked stores, no sublane rotates.
    h2 = [jnp.maximum(acc[qpix] * scale2 + shift2, 0.0) for qpix in range(25)]
    zero_slab = jnp.zeros((B, 128), f32)
    for g in range(ngroups):
        parts = [h2[qpix] if qpix < 25 else zero_slab
                 for qpix in range(g * ppg, (g + 1) * ppg)]
        chunk = jnp.concatenate(parts, axis=0) if len(parts) > 1 else parts[0]
        h2_ref[g * gr:(g + 1) * gr, :] = chunk

    # ---- Layer 3 BN stats (pass 1, streaming; no 800x128 slab ever materialized). -------
    # ConvT(64->32, k=4, s=4) has stride == kernel -> per-pixel matmul; p3 columns (t3, c).
    # Zero-pad pixels (>= 25) contribute zeros and are excluded via the true count n3.
    n3 = 25 * 16 * B
    s3a = jnp.zeros((gr, 128), f32)
    q3a = jnp.zeros((gr, 128), f32)
    for g in range(ngroups):
        h = h2_ref[g * gr:(g + 1) * gr, :].astype(bf16)
        p3 = jnp.dot(h, w3v, preferred_element_type=f32)          # (gr, 16*128)
        bs = p3[:, 0:128]
        bq = bs * bs
        for t in range(1, 16):
            b_ = p3[:, t * 128:(t + 1) * 128]
            bs = bs + b_
            bq = bq + b_ * b_
        s3a = s3a + bs
        q3a = q3a + bq
    s3 = jnp.sum(s3a, axis=0, keepdims=True)
    q3 = jnp.sum(q3a, axis=0, keepdims=True)
    mean3 = s3 * (1.0 / n3)
    var3 = jnp.maximum(q3 * (1.0 / n3) - mean3 * mean3, 0.0)
    scale3 = g3 * jax.lax.rsqrt(var3 + _BN_EPS)
    shift3 = b3 - mean3 * scale3

    # ---- Layers 3+4 tail (pass 2), chunked per pixel group. -----------------------------
    # Recompute the cheap layer-3 matmul per chunk, normalize, stack the 16 tap blocks into
    # a (16*gr,128) LHS (free: whole-(gr,128)-vreg stacking), run one layer-4 matmul, add
    # bias, exact tanh-sigmoid, and store one aligned (16*gr,128) bf16 slab.
    for g in range(ngroups):
        h = h2_ref[g * gr:(g + 1) * gr, :].astype(bf16)
        p3 = jnp.dot(h, w3v, preferred_element_type=f32)          # (gr, 16*128)
        x3 = jnp.concatenate(
            [jnp.maximum(p3[:, t * 128:(t + 1) * 128] * scale3 + shift3, 0.0)
             for t in range(16)], axis=0)                         # (16*gr, 128) rows (t3,p,b)
        p4 = jnp.dot(x3.astype(bf16), w4v, preferred_element_type=f32)   # (16*gr, 128)
        y = p4 + bias4
        sig = jnp.tanh(y * 0.5) * 0.5 + 0.5                        # exact sigmoid, one EUP op
        o_ref[g * 16 * gr:(g + 1) * 16 * gr, :] = sig.astype(o_ref.dtype)


# --------------------------- parameter preparation --------------------------

def prepare_params(p):
    """One-time repack of PyTorch-style params into kernel-ready bf16/f32 slabs."""
    f32, bf16 = jnp.float32, jnp.bfloat16

    # Layer 1: (256, 128, 2, 2) -> (256, 4*128), columns (s1 = 2*ki+kj, c). No pad waste.
    w1f = jnp.transpose(p["w1"], (0, 2, 3, 1)).reshape(256, 4 * 128).astype(bf16)

    # Layer 2: natural weight, only Cout padded 64->128 lanes (no dense col2im fold).
    w2t = jnp.transpose(p["w2"], (0, 2, 3, 1))                    # (128, 3, 3, 64)
    w2f = jnp.pad(w2t, ((0, 0), (0, 0), (0, 0), (0, 64))).reshape(128, 9 * 128).astype(bf16)

    # Layer 3: (64, 32, 4, 4) -> (128, 16*128); Cin 64->128 zero rows, Cout 32->128 lanes.
    w3t = jnp.transpose(p["w3"], (0, 2, 3, 1))                    # (64, 4, 4, 32)
    w3f = jnp.pad(w3t, ((0, 64), (0, 0), (0, 0), (0, 96))).reshape(128, 16 * 128).astype(bf16)

    # Layer 4: (32, 3, 4, 4) -> (128, 128); Cin 32->128, Cout 3->8 (16 taps * 8 lanes).
    w4t = jnp.transpose(p["w4"], (0, 2, 3, 1))                    # (32, 4, 4, 3)
    w4f = jnp.pad(w4t, ((0, 96), (0, 0), (0, 0), (0, 5))).reshape(128, 128).astype(bf16)

    # Merge all small per-channel vectors into one (8,128) f32 slab -> one DMA.
    def row(v):
        return jnp.pad(v.astype(f32), (0, 128 - v.shape[0]))
    bias4_row = jnp.tile(jnp.pad(p["bias4"].astype(f32), (0, 5)), 16)
    bn = jnp.stack([row(p["g1"]), row(p["b1"]), row(p["g2"]), row(p["b2"]),
                    row(p["g3"]), row(p["b3"]), bias4_row, jnp.zeros((128,), f32)], axis=0)

    return dict(w1=w1f, w2=w2f, w3=w3f, w4=w4f, bn=bn)


# ------------------------------ forward wrapper ------------------------------

def conv_decoder_forward(prep, x):
    n, cin, h, w = x.shape
    assert (cin, h, w) == (256, 1, 1), "fused decoder specialized to the 1x1 latent input"
    ppg, gr, ngroups = _plan(n)
    rows_out = ngroups * 16 * gr                                  # (pad pixels dropped below)
    x2d = x.reshape(n, 256)

    out2d = pl.pallas_call(
        _decoder_kernel,
        out_shape=jax.ShapeDtypeStruct((rows_out, 128), jnp.bfloat16),
        in_specs=[pl.BlockSpec(memory_space=pltpu.MemorySpace.VMEM)] * 6,
        out_specs=pl.BlockSpec(memory_space=pltpu.MemorySpace.VMEM),
        scratch_shapes=[pltpu.VMEM((ngroups * gr, 128), jnp.float32)],
    )(x2d, prep["w1"], prep["w2"], prep["w3"], prep["w4"], prep["bn"])
    # NOTE: batch-statistics BatchNorm couples all pixels/samples, so the fused kernel runs
    # on a single TensorCore.  TODO(synk): for larger batch, add a batch grid axis (weights
    # DMA once via constant index_map) and/or a 2-way v7x core split with a cross-core BN
    # stat reduction; at B=2 the single-call, single-core layout is the right choice.

    # Kernel output rows are (group, ki3, kj3, pixel-in-group, b); columns (ki4, kj4, c_pad8).
    # Depth-to-space decode: Y = 16*oh2 + 4*ki3 + ki4,  X = 16*ow2 + 4*kj3 + kj4.
    qpad = ngroups * ppg
    out = out2d.reshape(ngroups, 4, 4, ppg, n, 4, 4, 8)           # (g,ki3,kj3,p,b,ki4,kj4,c8)
    out = jnp.transpose(out, (0, 3, 4, 7, 1, 5, 2, 6))            # (g,p,b,c8,ki3,ki4,kj3,kj4)
    out = out.reshape(qpad, n, 8, 4, 4, 4, 4)[:25, :, :3]         # (q2,b,c,ki3,ki4,kj3,kj4)
    out = out.reshape(5, 5, n, 3, 4, 4, 4, 4)                     # (oh2,ow2,b,c,ki3,ki4,kj3,kj4)
    out = jnp.transpose(out, (2, 3, 0, 4, 5, 1, 6, 7)).reshape(n, 3, 80, 80)
    return out.astype(jnp.float32)
    # TODO(synk): .beval()/.btrain() toggle BatchNorm running-stats mode (module state);
    # this script implements the default train-mode batch-statistics forward only.


# ------------------------------- init & reference ---------------------------

def init_params(key):
    keys = jax.random.split(key, 11)
    p = {}
    p["w1"] = 0.05 * jax.random.normal(keys[0], (256, 128, 2, 2), jnp.float32)
    p["g1"] = 1.0 + 0.05 * jax.random.normal(keys[1], (128,), jnp.float32)
    p["b1"] = 0.05 * jax.random.normal(keys[2], (128,), jnp.float32)
    p["w2"] = 0.05 * jax.random.normal(keys[3], (128, 64, 3, 3), jnp.float32)
    p["g2"] = 1.0 + 0.05 * jax.random.normal(keys[4], (64,), jnp.float32)
    p["b2"] = 0.05 * jax.random.normal(keys[5], (64,), jnp.float32)
    p["w3"] = 0.05 * jax.random.normal(keys[6], (64, 32, 4, 4), jnp.float32)
    p["g3"] = 1.0 + 0.05 * jax.random.normal(keys[7], (32,), jnp.float32)
    p["b3"] = 0.05 * jax.random.normal(keys[8], (32,), jnp.float32)
    p["w4"] = 0.05 * jax.random.normal(keys[9], (32, 3, 4, 4), jnp.float32)
    p["bias4"] = 0.05 * jax.random.normal(keys[10], (3,), jnp.float32)
    return p


def _ref_conv_transpose2d(x, w, stride):
    n, cin, h, wd = x.shape
    _, cout, k, _ = w.shape
    oh, ow = (h - 1) * stride + k, (wd - 1) * stride + k
    pat = jnp.einsum('bihw,iokl->bhwokl', x, w)
    out = jnp.zeros((n, cout, oh, ow), jnp.float32)
    for ki in range(k):
        for kj in range(k):
            piece = jnp.transpose(pat[:, :, :, :, ki, kj], (0, 3, 1, 2))
            out = out.at[:, :, ki:ki + stride * (h - 1) + 1:stride,
                         kj:kj + stride * (wd - 1) + 1:stride].add(piece)
    return out


def _ref_bn_relu(x, g, b):
    mean = x.mean(axis=(0, 2, 3), keepdims=True)
    var = x.var(axis=(0, 2, 3), keepdims=True)  # biased, train-mode normalization
    y = (x - mean) / jnp.sqrt(var + _BN_EPS) * g.reshape(1, -1, 1, 1) + b.reshape(1, -1, 1, 1)
    return jnp.maximum(y, 0.0)


def conv_decoder_reference(params, x):
    h = _ref_bn_relu(_ref_conv_transpose2d(x, params["w1"], 1), params["g1"], params["b1"])
    h = _ref_bn_relu(_ref_conv_transpose2d(h, params["w2"], 2), params["g2"], params["b2"])
    h = _ref_bn_relu(_ref_conv_transpose2d(h, params["w3"], 4), params["g3"], params["b3"])
    h = _ref_conv_transpose2d(h, params["w4"], 4) + params["bias4"].reshape(1, -1, 1, 1)
    return jax.nn.sigmoid(h)


# ------------------------------------ main -----------------------------------

if __name__ == "__main__":
    key = jax.random.PRNGKey(0)
    pkey, xkey = jax.random.split(key)
    params = init_params(pkey)
    # Latent input (B, 256, 1, 1) -> decoder output (B, 3, 80, 80)
    x = jax.random.normal(xkey, (2, 256, 1, 1), jnp.float32)

    prep = prepare_params(params)             # one-time weight repack (off the hot path)
    fwd = jax.jit(conv_decoder_forward)
    y = jax.block_until_ready(fwd(prep, x))

    assert y.shape == (2, 3, 80, 80), y.shape
    assert y.dtype == jnp.float32
    assert bool(jnp.all(jnp.isfinite(y)))
    assert bool(jnp.all((y >= 0.0) & (y <= 1.0)))   # sigmoid range

    # Cross-check against a pure-JAX f32 reference (bf16 matmuls + bf16 output -> loose tol).
    y_ref = jax.jit(conv_decoder_reference)(params, x)
    err = float(jnp.max(jnp.abs(y - y_ref)))
    assert err < 3e-2, f"max abs error vs reference: {err}"

    print("KERNEL_OK")
</pallas_src>

<mosaic_0001>
module attributes {stable_mosaic.version = 11 : i64} {
  func.func @_decoder_kernel(%arg0: memref<2x256xf32, #tpu.memory_space<vmem>>, %arg1: memref<256x512xbf16, #tpu.memory_space<vmem>>, %arg2: memref<128x1152xbf16, #tpu.memory_space<vmem>>, %arg3: memref<128x2048xbf16, #tpu.memory_space<vmem>>, %arg4: memref<128x128xbf16, #tpu.memory_space<vmem>>, %arg5: memref<8x128xf32, #tpu.memory_space<vmem>>, %arg6: memref<896x128xbf16, #tpu.memory_space<vmem>>, %arg7: memref<56x128xf32, #tpu.memory_space<vmem>>) attributes {dimension_semantics = [], scalar_prefetch = 0 : i64, scratch_operands = 1 : i64, tpu.core_type = #tpu.core_type<tc>} {
    %c0 = arith.constant 0 : index
    %c0_0 = arith.constant 0 : index
    %0 = vector.load %arg5[%c0, %c0_0] : memref<8x128xf32, #tpu.memory_space<vmem>>, vector<1x128xf32>
    %c1 = arith.constant 1 : index
    %c0_1 = arith.constant 0 : index
    %1 = vector.load %arg5[%c1, %c0_1] : memref<8x128xf32, #tpu.memory_space<vmem>>, vector<1x128xf32>
    %c2 = arith.constant 2 : index
    %c0_2 = arith.constant 0 : index
    %2 = vector.load %arg5[%c2, %c0_2] : memref<8x128xf32, #tpu.memory_space<vmem>>, vector<1x128xf32>
    %c3 = arith.constant 3 : index
    %c0_3 = arith.constant 0 : index
    %3 = vector.load %arg5[%c3, %c0_3] : memref<8x128xf32, #tpu.memory_space<vmem>>, vector<1x128xf32>
    %c4 = arith.constant 4 : index
    %c0_4 = arith.constant 0 : index
    %4 = vector.load %arg5[%c4, %c0_4] : memref<8x128xf32, #tpu.memory_space<vmem>>, vector<1x128xf32>
    %c5 = arith.constant 5 : index
    %c0_5 = arith.constant 0 : index
    %5 = vector.load %arg5[%c5, %c0_5] : memref<8x128xf32, #tpu.memory_space<vmem>>, vector<1x128xf32>
    %c6 = arith.constant 6 : index
    %c0_6 = arith.constant 0 : index
    %6 = vector.load %arg5[%c6, %c0_6] : memref<8x128xf32, #tpu.memory_space<vmem>>, vector<1x128xf32>
    %c0_7 = arith.constant 0 : index
    %c0_8 = arith.constant 0 : index
    %7 = vector.load %arg2[%c0_7, %c0_8] : memref<128x1152xbf16, #tpu.memory_space<vmem>>, vector<128x1152xbf16>
    %c0_9 = arith.constant 0 : index
    %c0_10 = arith.constant 0 : index
    %8 = vector.load %arg3[%c0_9, %c0_10] : memref<128x2048xbf16, #tpu.memory_space<vmem>>, vector<128x2048xbf16>
    %c0_11 = arith.constant 0 : index
    %c0_12 = arith.constant 0 : index
    %9 = vector.load %arg4[%c0_11, %c0_12] : memref<128x128xbf16, #tpu.memory_space<vmem>>, vector<128x128xbf16>
    %c0_13 = arith.constant 0 : index
    %c0_14 = arith.constant 0 : index
    %10 = vector.load %arg0[%c0_13, %c0_14] : memref<2x256xf32, #tpu.memory_space<vmem>>, vector<2x256xf32>
    %11 = arith.truncf %10 : vector<2x256xf32> to vector<2x256xbf16>
    %c0_15 = arith.constant 0 : index
    %c0_16 = arith.constant 0 : index
    %12 = vector.load %arg1[%c0_15, %c0_16] : memref<256x512xbf16, #tpu.memory_space<vmem>>, vector<256x512xbf16>
    %cst = arith.constant dense<0.000000e+00> : vector<2x512xf32>
    %13 = tpu.matmul %11, %12, %cst {dimension_numbers = #tpu.dot_dimension_numbers<[1], [0], [0], [1], [0, 0, 1, 1], [], []>} : vector<2x256xbf16>, vector<256x512xbf16>, vector<2x512xf32> -> vector<2x512xf32>
    %14 = vector.extract_strided_slice %13 {offsets = [0, 0], sizes = [2, 128], strides = [1, 1]} : vector<2x512xf32> to vector<2x128xf32>
    %15 = vector.extract_strided_slice %13 {offsets = [0, 128], sizes = [2, 128], strides = [1, 1]} : vector<2x512xf32> to vector<2x128xf32>
    %16 = vector.extract_strided_slice %13 {offsets = [0, 256], sizes = [2, 128], strides = [1, 1]} : vector<2x512xf32> to vector<2x128xf32>
    %17 = vector.extract_strided_slice %13 {offsets = [0, 384], sizes = [2, 128], strides = [1, 1]} : vector<2x512xf32> to vector<2x128xf32>
    %18 = arith.addf %14, %15 : vector<2x128xf32>
    %19 = arith.addf %18, %16 : vector<2x128xf32>
    %20 = arith.addf %19, %17 : vector<2x128xf32>
    %cst_17 = arith.constant dense<0.000000e+00> : vector<128xf32>
    %21 = vector.multi_reduction <add>, %20, %cst_17 [0] : vector<2x128xf32> to vector<128xf32>
    %22 = vector.shape_cast %21 : vector<128xf32> to vector<1x128xf32>
    %23 = arith.mulf %14, %14 : vector<2x128xf32>
    %24 = arith.mulf %15, %15 : vector<2x128xf32>
    %25 = arith.addf %23, %24 : vector<2x128xf32>
    %26 = arith.mulf %16, %16 : vector<2x128xf32>
    %27 = arith.addf %25, %26 : vector<2x128xf32>
    %28 = arith.mulf %17, %17 : vector<2x128xf32>
    %29 = arith.addf %27, %28 : vector<2x128xf32>
    %cst_18 = arith.constant dense<0.000000e+00> : vector<128xf32>
    %30 = vector.multi_reduction <add>, %29, %cst_18 [0] : vector<2x128xf32> to vector<128xf32>
    %31 = vector.shape_cast %30 : vector<128xf32> to vector<1x128xf32>
    %cst_19 = arith.constant 1.250000e-01 : f32
    %32 = vector.broadcast %cst_19 : f32 to vector<1x128xf32>
    %33 = arith.mulf %22, %32 : vector<1x128xf32>
    %cst_20 = arith.constant 1.250000e-01 : f32
    %34 = vector.broadcast %cst_20 : f32 to vector<1x128xf32>
    %35 = arith.mulf %31, %34 : vector<1x128xf32>
    %36 = arith.mulf %33, %33 : vector<1x128xf32>
    %37 = arith.subf %35, %36 : vector<1x128xf32>
    %cst_21 = arith.constant 0.000000e+00 : f32
    %38 = vector.broadcast %cst_21 : f32 to vector<1x128xf32>
    %39 = arith.maximumf %37, %38 : vector<1x128xf32>
    %cst_22 = arith.constant 9.99999974E-6 : f32
    %40 = vector.broadcast %cst_22 : f32 to vector<1x128xf32>
    %41 = arith.addf %39, %40 : vector<1x128xf32>
    %42 = math.rsqrt %41 : vector<1x128xf32>
    %43 = arith.mulf %0, %42 : vector<1x128xf32>
    %44 = arith.mulf %33, %43 : vector<1x128xf32>
    %45 = arith.subf %1, %44 : vector<1x128xf32>
    %46 = vector.broadcast %43 : vector<1x128xf32> to vector<2x128xf32>
    %47 = arith.mulf %14, %46 : vector<2x128xf32>
    %48 = vector.broadcast %45 : vector<1x128xf32> to vector<2x128xf32>
    %49 = arith.addf %47, %48 : vector<2x128xf32>
    %cst_23 = arith.constant 0.000000e+00 : f32
    %50 = vector.broadcast %cst_23 : f32 to vector<2x128xf32>
    %51 = arith.maximumf %49, %50 : vector<2x128xf32>
    %52 = arith.truncf %51 : vector<2x128xf32> to vector<2x128xbf16>
    %53 = vector.broadcast %43 : vector<1x128xf32> to vector<2x128xf32>
    %54 = arith.mulf %15, %53 : vector<2x128xf32>
    %55 = vector.broadcast %45 : vector<1x128xf32> to vector<2x128xf32>
    %56 = arith.addf %54, %55 : vector<2x128xf32>
    %cst_24 = arith.constant 0.000000e+00 : f32
    %57 = vector.broadcast %cst_24 : f32 to vector<2x128xf32>
    %58 = arith.maximumf %56, %57 : vector<2x128xf32>
    %59 = arith.truncf %58 : vector<2x128xf32> to vector<2x128xbf16>
    %60 = vector.broadcast %43 : vector<1x128xf32> to vector<2x128xf32>
    %61 = arith.mulf %16, %60 : vector<2x128xf32>
    %62 = vector.broadcast %45 : vector<1x128xf32> to vector<2x128xf32>
    %63 = arith.addf %61, %62 : vector<2x128xf32>
    %cst_25 = arith.constant 0.000000e+00 : f32
    %64 = vector.broadcast %cst_25 : f32 to vector<2x128xf32>
    %65 = arith.maximumf %63, %64 : vector<2x128xf32>
    %66 = arith.truncf %65 : vector<2x128xf32> to vector<2x128xbf16>
    %67 = vector.broadcast %43 : vector<1x128xf32> to vector<2x128xf32>
    %68 = arith.mulf %17, %67 : vector<2x128xf32>
    %69 = vector.broadcast %45 : vector<1x128xf32> to vector<2x128xf32>
    %70 = arith.addf %68, %69 : vector<2x128xf32>
    %cst_26 = arith.constant 0.000000e+00 : f32
    %71 = vector.broadcast %cst_26 : f32 to vector<2x128xf32>
    %72 = arith.maximumf %70, %71 : vector<2x128xf32>
    %73 = arith.truncf %72 : vector<2x128xf32> to vector<2x128xbf16>
    %cst_27 = arith.constant dense<0.000000e+00> : vector<2x1152xf32>
    %74 = tpu.matmul %52, %7, %cst_27 {dimension_numbers = #tpu.dot_dimension_numbers<[1], [0], [0], [1], [0, 0, 1, 1], [], []>} : vector<2x128xbf16>, vector<128x1152xbf16>, vector<2x1152xf32> -> vector<2x1152xf32>
    %75 = vector.extract_strided_slice %74 {offsets = [0, 0], sizes = [2, 128], strides = [1, 1]} : vector<2x1152xf32> to vector<2x128xf32>
    %76 = vector.extract_strided_slice %74 {offsets = [0, 128], sizes = [2, 128], strides = [1, 1]} : vector<2x1152xf32> to vector<2x128xf32>
    %77 = vector.extract_strided_slice %74 {offsets = [0, 256], sizes = [2, 128], strides = [1, 1]} : vector<2x1152xf32> to vector<2x128xf32>
    %78 = vector.extract_strided_slice %74 {offsets = [0, 384], sizes = [2, 128], strides = [1, 1]} : vector<2x1152xf32> to vector<2x128xf32>
    %79 = vector.extract_strided_slice %74 {offsets = [0, 512], sizes = [2, 128], strides = [1, 1]} : vector<2x1152xf32> to vector<2x128xf32>
    %80 = vector.extract_strided_slice %74 {offsets = [0, 640], sizes = [2, 128], strides = [1, 1]} : vector<2x1152xf32> to vector<2x128xf32>
    %81 = vector.extract_strided_slice %74 {offsets = [0, 768], sizes = [2, 128], strides = [1, 1]} : vector<2x1152xf32> to vector<2x128xf32>
    %82 = vector.extract_strided_slice %74 {offsets = [0, 896], sizes = [2, 128], strides = [1, 1]} : vector<2x1152xf32> to vector<2x128xf32>
    %83 = vector.extract_strided_slice %74 {offsets = [0, 1024], sizes = [2, 128], strides = [1, 1]} : vector<2x1152xf32> to vector<2x128xf32>
    %cst_28 = arith.constant dense<0.000000e+00> : vector<2x1152xf32>
    %84 = tpu.matmul %59, %7, %cst_28 {dimension_numbers = #tpu.dot_dimension_numbers<[1], [0], [0], [1], [0, 0, 1, 1], [], []>} : vector<2x128xbf16>, vector<128x1152xbf16>, vector<2x1152xf32> -> vector<2x1152xf32>
    %85 = vector.extract_strided_slice %84 {offsets = [0, 0], sizes = [2, 128], strides = [1, 1]} : vector<2x1152xf32> to vector<2x128xf32>
    %86 = arith.addf %77, %85 : vector<2x128xf32>
    %87 = vector.extract_strided_slice %84 {offsets = [0, 128], sizes = [2, 128], strides = [1, 1]} : vector<2x1152xf32> to vector<2x128xf32>
    %88 = vector.extract_strided_slice %84 {offsets = [0, 256], sizes = [2, 128], strides = [1, 1]} : vector<2x1152xf32> to vector<2x128xf32>
    %89 = vector.extract_strided_slice %84 {offsets = [0, 384], sizes = [2, 128], strides = [1, 1]} : vector<2x1152xf32> to vector<2x128xf32>
    %90 = arith.addf %80, %89 : vector<2x128xf32>
    %91 = vector.extract_strided_slice %84 {offsets = [0, 512], sizes = [2, 128], strides = [1, 1]} : vector<2x1152xf32> to vector<2x128xf32>
    %92 = vector.extract_strided_slice %84 {offsets = [0, 640], sizes = [2, 128], strides = [1, 1]} : vector<2x1152xf32> to vector<2x128xf32>
    %93 = vector.extract_strided_slice %84 {offsets = [0, 768], sizes = [2, 128], strides = [1, 1]} : vector<2x1152xf32> to vector<2x128xf32>
    %94 = arith.addf %83, %93 : vector<2x128xf32>
    %95 = vector.extract_strided_slice %84 {offsets = [0, 896], sizes = [2, 128], strides = [1, 1]} : vector<2x1152xf32> to vector<2x128xf32>
    %96 = vector.extract_strided_slice %84 {offsets = [0, 1024], sizes = [2, 128], strides = [1, 1]} : vector<2x1152xf32> to vector<2x128xf32>
    %cst_29 = arith.constant dense<0.000000e+00> : vector<2x1152xf32>
    %97 = tpu.matmul %66, %7, %cst_29 {dimension_numbers = #tpu.dot_dimension_numbers<[1], [0], [0], [1], [0, 0, 1, 1], [], []>} : vector<2x128xbf16>, vector<128x1152xbf16>, vector<2x1152xf32> -> vector<2x1152xf32>
    %98 = vector.extract_strided_slice %97 {offsets = [0, 0], sizes = [2, 128], strides = [1, 1]} : vector<2x1152xf32> to vector<2x128xf32>
    %99 = arith.addf %81, %98 : vector<2x128xf32>
    %100 = vector.extract_strided_slice %97 {offsets = [0, 128], sizes = [2, 128], strides = [1, 1]} : vector<2x1152xf32> to vector<2x128xf32>
    %101 = arith.addf %82, %100 : vector<2x128xf32>
    %102 = vector.extract_strided_slice %97 {offsets = [0, 256], sizes = [2, 128], strides = [1, 1]} : vector<2x1152xf32> to vector<2x128xf32>
    %103 = arith.addf %94, %102 : vector<2x128xf32>
    %104 = vector.extract_strided_slice %97 {offsets = [0, 384], sizes = [2, 128], strides = [1, 1]} : vector<2x1152xf32> to vector<2x128xf32>
    %105 = vector.extract_strided_slice %97 {offsets = [0, 512], sizes = [2, 128], strides = [1, 1]} : vector<2x1152xf32> to vector<2x128xf32>
    %106 = vector.extract_strided_slice %97 {offsets = [0, 640], sizes = [2, 128], strides = [1, 1]} : vector<2x1152xf32> to vector<2x128xf32>
    %107 = vector.extract_strided_slice %97 {offsets = [0, 768], sizes = [2, 128], strides = [1, 1]} : vector<2x1152xf32> to vector<2x128xf32>
    %108 = vector.extract_strided_slice %97 {offsets = [0, 896], sizes = [2, 128], strides = [1, 1]} : vector<2x1152xf32> to vector<2x128xf32>
    %109 = vector.extract_strided_slice %97 {offsets = [0, 1024], sizes = [2, 128], strides = [1, 1]} : vector<2x1152xf32> to vector<2x128xf32>
    %cst_30 = arith.constant dense<0.000000e+00> : vector<2x1152xf32>
    %110 = tpu.matmul %73, %7, %cst_30 {dimension_numbers = #tpu.dot_dimension_numbers<[1], [0], [0], [1], [0, 0, 1, 1], [], []>} : vector<2x128xbf16>, vector<128x1152xbf16>, vector<2x1152xf32> -> vector<2x1152xf32>
    %111 = vector.extract_strided_slice %110 {offsets = [0, 0], sizes = [2, 128], strides = [1, 1]} : vector<2x1152xf32> to vector<2x128xf32>
    %112 = arith.addf %103, %111 : vector<2x128xf32>
    %113 = vector.extract_strided_slice %110 {offsets = [0, 128], sizes = [2, 128], strides = [1, 1]} : vector<2x1152xf32> to vector<2x128xf32>
    %114 = arith.addf %95, %113 : vector<2x128xf32>
    %115 = vector.extract_strided_slice %110 {offsets = [0, 256], sizes = [2, 128], strides = [1, 1]} : vector<2x1152xf32> to vector<2x128xf32>
    %116 = arith.addf %96, %115 : vector<2x128xf32>
    %117 = vector.extract_strided_slice %110 {offsets = [0, 384], sizes = [2, 128], strides = [1, 1]} : vector<2x1152xf32> to vector<2x128xf32>
    %118 = arith.addf %106, %117 : vector<2x128xf32>
    %119 = vector.extract_strided_slice %110 {offsets = [0, 512], sizes = [2, 128], strides = [1, 1]} : vector<2x1152xf32> to vector<2x128xf32>
    %120 = vector.extract_strided_slice %110 {offsets = [0, 640], sizes = [2, 128], strides = [1, 1]} : vector<2x1152xf32> to vector<2x128xf32>
    %121 = vector.extract_strided_slice %110 {offsets = [0, 768], sizes = [2, 128], strides = [1, 1]} : vector<2x1152xf32> to vector<2x128xf32>
    %122 = arith.addf %109, %121 : vector<2x128xf32>
    %123 = vector.extract_strided_slice %110 {offsets = [0, 896], sizes = [2, 128], strides = [1, 1]} : vector<2x1152xf32> to vector<2x128xf32>
    %124 = vector.extract_strided_slice %110 {offsets = [0, 1024], sizes = [2, 128], strides = [1, 1]} : vector<2x1152xf32> to vector<2x128xf32>
    %125 = arith.mulf %75, %75 : vector<2x128xf32>
    %126 = arith.addf %75, %76 : vector<2x128xf32>
    %127 = arith.mulf %76, %76 : vector<2x128xf32>
    %128 = arith.addf %125, %127 : vector<2x128xf32>
    %129 = arith.addf %126, %86 : vector<2x128xf32>
    %130 = arith.mulf %86, %86 : vector<2x128xf32>
    %131 = arith.addf %128, %130 : vector<2x128xf32>
    %132 = arith.addf %129, %87 : vector<2x128xf32>
    %133 = arith.mulf %87, %87 : vector<2x128xf32>
    %134 = arith.addf %131, %133 : vector<2x128xf32>
    %135 = arith.addf %132, %88 : vector<2x128xf32>
    %136 = arith.mulf %88, %88 : vector<2x128xf32>
    %137 = arith.addf %134, %136 : vector<2x128xf32>
    %138 = arith.addf %135, %78 : vector<2x128xf32>
    %139 = arith.mulf %78, %78 : vector<2x128xf32>
    %140 = arith.addf %137, %139 : vector<2x128xf32>
    %141 = arith.addf %138, %79 : vector<2x128xf32>
    %142 = arith.mulf %79, %79 : vector<2x128xf32>
    %143 = arith.addf %140, %142 : vector<2x128xf32>
    %144 = arith.addf %141, %90 : vector<2x128xf32>
    %145 = arith.mulf %90, %90 : vector<2x128xf32>
    %146 = arith.addf %143, %145 : vector<2x128xf32>
    %147 = arith.addf %144, %91 : vector<2x128xf32>
    %148 = arith.mulf %91, %91 : vector<2x128xf32>
    %149 = arith.addf %146, %148 : vector<2x128xf32>
    %150 = arith.addf %147, %92 : vector<2x128xf32>
    %151 = arith.mulf %92, %92 : vector<2x128xf32>
    %152 = arith.addf %149, %151 : vector<2x128xf32>
    %153 = arith.addf %150, %99 : vector<2x128xf32>
    %154 = arith.mulf %99, %99 : vector<2x128xf32>
    %155 = arith.addf %152, %154 : vector<2x128xf32>
    %156 = arith.addf %153, %101 : vector<2x128xf32>
    %157 = arith.mulf %101, %101 : vector<2x128xf32>
    %158 = arith.addf %155, %157 : vector<2x128xf32>
    %159 = arith.addf %156, %112 : vector<2x128xf32>
    %160 = arith.mulf %112, %112 : vector<2x128xf32>
    %161 = arith.addf %158, %160 : vector<2x128xf32>
    %162 = arith.addf %159, %114 : vector<2x128xf32>
    %163 = arith.mulf %114, %114 : vector<2x128xf32>
    %164 = arith.addf %161, %163 : vector<2x128xf32>
    %165 = arith.addf %162, %116 : vector<2x128xf32>
    %166 = arith.mulf %116, %116 : vector<2x128xf32>
    %167 = arith.addf %164, %166 : vector<2x128xf32>
    %168 = arith.addf %165, %104 : vector<2x128xf32>
    %169 = arith.mulf %104, %104 : vector<2x128xf32>
    %170 = arith.addf %167, %169 : vector<2x128xf32>
    %171 = arith.addf %168, %105 : vector<2x128xf32>
    %172 = arith.mulf %105, %105 : vector<2x128xf32>
    %173 = arith.addf %170, %172 : vector<2x128xf32>
    %174 = arith.addf %171, %118 : vector<2x128xf32>
    %175 = arith.mulf %118, %118 : vector<2x128xf32>
    %176 = arith.addf %173, %175 : vector<2x128xf32>
    %177 = arith.addf %174, %119 : vector<2x128xf32>
    %178 = arith.mulf %119, %119 : vector<2x128xf32>
    %179 = arith.addf %176, %178 : vector<2x128xf32>
    %180 = arith.addf %177, %120 : vector<2x128xf32>
    %181 = arith.mulf %120, %120 : vector<2x128xf32>
    %182 = arith.addf %179, %181 : vector<2x128xf32>
    %183 = arith.addf %180, %107 : vector<2x128xf32>
    %184 = arith.mulf %107, %107 : vector<2x128xf32>
    %185 = arith.addf %182, %184 : vector<2x128xf32>
    %186 = arith.addf %183, %108 : vector<2x128xf32>
    %187 = arith.mulf %108, %108 : vector<2x128xf32>
    %188 = arith.addf %185, %187 : vector<2x128xf32>
    %189 = arith.addf %186, %122 : vector<2x128xf32>
    %190 = arith.mulf %122, %122 : vector<2x128xf32>
    %191 = arith.addf %188, %190 : vector<2x128xf32>
    %192 = arith.addf %189, %123 : vector<2x128xf32>
    %193 = arith.mulf %123, %123 : vector<2x128xf32>
    %194 = arith.addf %191, %193 : vector<2x128xf32>
    %195 = arith.addf %192, %124 : vector<2x128xf32>
    %196 = arith.mulf %124, %124 : vector<2x128xf32>
    %197 = arith.addf %194, %196 : vector<2x128xf32>
    %cst_31 = arith.constant dense<0.000000e+00> : vector<128xf32>
    %198 = vector.multi_reduction <add>, %195, %cst_31 [0] : vector<2x128xf32> to vector<128xf32>
    %199 = vector.shape_cast %198 : vector<128xf32> to vector<1x128xf32>
    %cst_32 = arith.constant dense<0.000000e+00> : vector<128xf32>
    %200 = vector.multi_reduction <add>, %197, %cst_32 [0] : vector<2x128xf32> to vector<128xf32>
    %201 = vector.shape_cast %200 : vector<128xf32> to vector<1x128xf32>
    %cst_33 = arith.constant 2.000000e-02 : f32
    %202 = vector.broadcast %cst_33 : f32 to vector<1x128xf32>
    %203 = arith.mulf %199, %202 : vector<1x128xf32>
    %cst_34 = arith.constant 2.000000e-02 : f32
    %204 = vector.broadcast %cst_34 : f32 to vector<1x128xf32>
    %205 = arith.mulf %201, %204 : vector<1x128xf32>
    %206 = arith.mulf %203, %203 : vector<1x128xf32>
    %207 = arith.subf %205, %206 : vector<1x128xf32>
    %cst_35 = arith.constant 0.000000e+00 : f32
    %208 = vector.broadcast %cst_35 : f32 to vector<1x128xf32>
    %209 = arith.maximumf %207, %208 : vector<1x128xf32>
    %cst_36 = arith.constant 9.99999974E-6 : f32
    %210 = vector.broadcast %cst_36 : f32 to vector<1x128xf32>
    %211 = arith.addf %209, %210 : vector<1x128xf32>
    %212 = math.rsqrt %211 : vector<1x128xf32>
    %213 = arith.mulf %2, %212 : vector<1x128xf32>
    %214 = arith.mulf %203, %213 : vector<1x128xf32>
    %215 = arith.subf %3, %214 : vector<1x128xf32>
    %216 = vector.broadcast %213 : vector<1x128xf32> to vector<2x128xf32>
    %217 = arith.mulf %75, %216 : vector<2x128xf32>
    %218 = vector.broadcast %215 : vector<1x128xf32> to vector<2x128xf32>
    %219 = arith.addf %217, %218 : vector<2x128xf32>
    %cst_37 = arith.constant 0.000000e+00 : f32
    %220 = vector.broadcast %cst_37 : f32 to vector<2x128xf32>
    %221 = arith.maximumf %219, %220 : vector<2x128xf32>
    %222 = vector.broadcast %213 : vector<1x128xf32> to vector<2x128xf32>
    %223 = arith.mulf %76, %222 : vector<2x128xf32>
    %224 = vector.broadcast %215 : vector<1x128xf32> to vector<2x128xf32>
    %225 = arith.addf %223, %224 : vector<2x128xf32>
    %cst_38 = arith.constant 0.000000e+00 : f32
    %226 = vector.broadcast %cst_38 : f32 to vector<2x128xf32>
    %227 = arith.maximumf %225, %226 : vector<2x128xf32>
    %228 = vector.broadcast %213 : vector<1x128xf32> to vector<2x128xf32>
    %229 = arith.mulf %86, %228 : vector<2x128xf32>
    %230 = vector.broadcast %215 : vector<1x128xf32> to vector<2x128xf32>
    %231 = arith.addf %229, %230 : vector<2x128xf32>
    %cst_39 = arith.constant 0.000000e+00 : f32
    %232 = vector.broadcast %cst_39 : f32 to vector<2x128xf32>
    %233 = arith.maximumf %231, %232 : vector<2x128xf32>
    %234 = vector.broadcast %213 : vector<1x128xf32> to vector<2x128xf32>
    %235 = arith.mulf %87, %234 : vector<2x128xf32>
    %236 = vector.broadcast %215 : vector<1x128xf32> to vector<2x128xf32>
    %237 = arith.addf %235, %236 : vector<2x128xf32>
    %cst_40 = arith.constant 0.000000e+00 : f32
    %238 = vector.broadcast %cst_40 : f32 to vector<2x128xf32>
    %239 = arith.maximumf %237, %238 : vector<2x128xf32>
    %240 = vector.broadcast %213 : vector<1x128xf32> to vector<2x128xf32>
    %241 = arith.mulf %88, %240 : vector<2x128xf32>
    %242 = vector.broadcast %215 : vector<1x128xf32> to vector<2x128xf32>
    %243 = arith.addf %241, %242 : vector<2x128xf32>
    %cst_41 = arith.constant 0.000000e+00 : f32
    %244 = vector.broadcast %cst_41 : f32 to vector<2x128xf32>
    %245 = arith.maximumf %243, %244 : vector<2x128xf32>
    %246 = vector.broadcast %213 : vector<1x128xf32> to vector<2x128xf32>
    %247 = arith.mulf %78, %246 : vector<2x128xf32>
    %248 = vector.broadcast %215 : vector<1x128xf32> to vector<2x128xf32>
    %249 = arith.addf %247, %248 : vector<2x128xf32>
    %cst_42 = arith.constant 0.000000e+00 : f32
    %250 = vector.broadcast %cst_42 : f32 to vector<2x128xf32>
    %251 = arith.maximumf %249, %250 : vector<2x128xf32>
    %252 = vector.broadcast %213 : vector<1x128xf32> to vector<2x128xf32>
    %253 = arith.mulf %79, %252 : vector<2x128xf32>
    %254 = vector.broadcast %215 : vector<1x128xf32> to vector<2x128xf32>
    %255 = arith.addf %253, %254 : vector<2x128xf32>
    %cst_43 = arith.constant 0.000000e+00 : f32
    %256 = vector.broadcast %cst_43 : f32 to vector<2x128xf32>
    %257 = arith.maximumf %255, %256 : vector<2x128xf32>
    %258 = vector.broadcast %213 : vector<1x128xf32> to vector<2x128xf32>
    %259 = arith.mulf %90, %258 : vector<2x128xf32>
    %260 = vector.broadcast %215 : vector<1x128xf32> to vector<2x128xf32>
    %261 = arith.addf %259, %260 : vector<2x128xf32>
    %cst_44 = arith.constant 0.000000e+00 : f32
    %262 = vector.broadcast %cst_44 : f32 to vector<2x128xf32>
    %263 = arith.maximumf %261, %262 : vector<2x128xf32>
    %264 = vector.broadcast %213 : vector<1x128xf32> to vector<2x128xf32>
    %265 = arith.mulf %91, %264 : vector<2x128xf32>
    %266 = vector.broadcast %215 : vector<1x128xf32> to vector<2x128xf32>
    %267 = arith.addf %265, %266 : vector<2x128xf32>
    %cst_45 = arith.constant 0.000000e+00 : f32
    %268 = vector.broadcast %cst_45 : f32 to vector<2x128xf32>
    %269 = arith.maximumf %267, %268 : vector<2x128xf32>
    %270 = vector.broadcast %213 : vector<1x128xf32> to vector<2x128xf32>
    %271 = arith.mulf %92, %270 : vector<2x128xf32>
    %272 = vector.broadcast %215 : vector<1x128xf32> to vector<2x128xf32>
    %273 = arith.addf %271, %272 : vector<2x128xf32>
    %cst_46 = arith.constant 0.000000e+00 : f32
    %274 = vector.broadcast %cst_46 : f32 to vector<2x128xf32>
    %275 = arith.maximumf %273, %274 : vector<2x128xf32>
    %276 = vector.broadcast %213 : vector<1x128xf32> to vector<2x128xf32>
    %277 = arith.mulf %99, %276 : vector<2x128xf32>
    %278 = vector.broadcast %215 : vector<1x128xf32> to vector<2x128xf32>
    %279 = arith.addf %277, %278 : vector<2x128xf32>
    %cst_47 = arith.constant 0.000000e+00 : f32
    %280 = vector.broadcast %cst_47 : f32 to vector<2x128xf32>
    %281 = arith.maximumf %279, %280 : vector<2x128xf32>
    %282 = vector.broadcast %213 : vector<1x128xf32> to vector<2x128xf32>
    %283 = arith.mulf %101, %282 : vector<2x128xf32>
    %284 = vector.broadcast %215 : vector<1x128xf32> to vector<2x128xf32>
    %285 = arith.addf %283, %284 : vector<2x128xf32>
    %cst_48 = arith.constant 0.000000e+00 : f32
    %286 = vector.broadcast %cst_48 : f32 to vector<2x128xf32>
    %287 = arith.maximumf %285, %286 : vector<2x128xf32>
    %288 = vector.broadcast %213 : vector<1x128xf32> to vector<2x128xf32>
    %289 = arith.mulf %112, %288 : vector<2x128xf32>
    %290 = vector.broadcast %215 : vector<1x128xf32> to vector<2x128xf32>
    %291 = arith.addf %289, %290 : vector<2x128xf32>
    %cst_49 = arith.constant 0.000000e+00 : f32
    %292 = vector.broadcast %cst_49 : f32 to vector<2x128xf32>
    %293 = arith.maximumf %291, %292 : vector<2x128xf32>
    %294 = vector.broadcast %213 : vector<1x128xf32> to vector<2x128xf32>
    %295 = arith.mulf %114, %294 : vector<2x128xf32>
    %296 = vector.broadcast %215 : vector<1x128xf32> to vector<2x128xf32>
    %297 = arith.addf %295, %296 : vector<2x128xf32>
    %cst_50 = arith.constant 0.000000e+00 : f32
    %298 = vector.broadcast %cst_50 : f32 to vector<2x128xf32>
    %299 = arith.maximumf %297, %298 : vector<2x128xf32>
    %300 = vector.broadcast %213 : vector<1x128xf32> to vector<2x128xf32>
    %301 = arith.mulf %116, %300 : vector<2x128xf32>
    %302 = vector.broadcast %215 : vector<1x128xf32> to vector<2x128xf32>
    %303 = arith.addf %301, %302 : vector<2x128xf32>
    %cst_51 = arith.constant 0.000000e+00 : f32
    %304 = vector.broadcast %cst_51 : f32 to vector<2x128xf32>
    %305 = arith.maximumf %303, %304 : vector<2x128xf32>
    %306 = vector.broadcast %213 : vector<1x128xf32> to vector<2x128xf32>
    %307 = arith.mulf %104, %306 : vector<2x128xf32>
    %308 = vector.broadcast %215 : vector<1x128xf32> to vector<2x128xf32>
    %309 = arith.addf %307, %308 : vector<2x128xf32>
    %cst_52 = arith.constant 0.000000e+00 : f32
    %310 = vector.broadcast %cst_52 : f32 to vector<2x128xf32>
    %311 = arith.maximumf %309, %310 : vector<2x128xf32>
    %312 = vector.broadcast %213 : vector<1x128xf32> to vector<2x128xf32>
    %313 = arith.mulf %105, %312 : vector<2x128xf32>
    %314 = vector.broadcast %215 : vector<1x128xf32> to vector<2x128xf32>
    %315 = arith.addf %313, %314 : vector<2x128xf32>
    %cst_53 = arith.constant 0.000000e+00 : f32
    %316 = vector.broadcast %cst_53 : f32 to vector<2x128xf32>
    %317 = arith.maximumf %315, %316 : vector<2x128xf32>
    %318 = vector.broadcast %213 : vector<1x128xf32> to vector<2x128xf32>
    %319 = arith.mulf %118, %318 : vector<2x128xf32>
    %320 = vector.broadcast %215 : vector<1x128xf32> to vector<2x128xf32>
    %321 = arith.addf %319, %320 : vector<2x128xf32>
    %cst_54 = arith.constant 0.000000e+00 : f32
    %322 = vector.broadcast %cst_54 : f32 to vector<2x128xf32>
    %323 = arith.maximumf %321, %322 : vector<2x128xf32>
    %324 = vector.broadcast %213 : vector<1x128xf32> to vector<2x128xf32>
    %325 = arith.mulf %119, %324 : vector<2x128xf32>
    %326 = vector.broadcast %215 : vector<1x128xf32> to vector<2x128xf32>
    %327 = arith.addf %325, %326 : vector<2x128xf32>
    %cst_55 = arith.constant 0.000000e+00 : f32
    %328 = vector.broadcast %cst_55 : f32 to vector<2x128xf32>
    %329 = arith.maximumf %327, %328 : vector<2x128xf32>
    %330 = vector.broadcast %213 : vector<1x128xf32> to vector<2x128xf32>
    %331 = arith.mulf %120, %330 : vector<2x128xf32>
    %332 = vector.broadcast %215 : vector<1x128xf32> to vector<2x128xf32>
    %333 = arith.addf %331, %332 : vector<2x128xf32>
    %cst_56 = arith.constant 0.000000e+00 : f32
    %334 = vector.broadcast %cst_56 : f32 to vector<2x128xf32>
    %335 = arith.maximumf %333, %334 : vector<2x128xf32>
    %336 = vector.broadcast %213 : vector<1x128xf32> to vector<2x128xf32>
    %337 = arith.mulf %107, %336 : vector<2x128xf32>
    %338 = vector.broadcast %215 : vector<1x128xf32> to vector<2x128xf32>
    %339 = arith.addf %337, %338 : vector<2x128xf32>
    %cst_57 = arith.constant 0.000000e+00 : f32
    %340 = vector.broadcast %cst_57 : f32 to vector<2x128xf32>
    %341 = arith.maximumf %339, %340 : vector<2x128xf32>
    %342 = vector.broadcast %213 : vector<1x128xf32> to vector<2x128xf32>
    %343 = arith.mulf %108, %342 : vector<2x128xf32>
    %344 = vector.broadcast %215 : vector<1x128xf32> to vector<2x128xf32>
    %345 = arith.addf %343, %344 : vector<2x128xf32>
    %cst_58 = arith.constant 0.000000e+00 : f32
    %346 = vector.broadcast %cst_58 : f32 to vector<2x128xf32>
    %347 = arith.maximumf %345, %346 : vector<2x128xf32>
    %348 = vector.broadcast %213 : vector<1x128xf32> to vector<2x128xf32>
    %349 = arith.mulf %122, %348 : vector<2x128xf32>
    %350 = vector.broadcast %215 : vector<1x128xf32> to vector<2x128xf32>
    %351 = arith.addf %349, %350 : vector<2x128xf32>
    %cst_59 = arith.constant 0.000000e+00 : f32
    %352 = vector.broadcast %cst_59 : f32 to vector<2x128xf32>
    %353 = arith.maximumf %351, %352 : vector<2x128xf32>
    %354 = vector.broadcast %213 : vector<1x128xf32> to vector<2x128xf32>
    %355 = arith.mulf %123, %354 : vector<2x128xf32>
    %356 = vector.broadcast %215 : vector<1x128xf32> to vector<2x128xf32>
    %357 = arith.addf %355, %356 : vector<2x128xf32>
    %cst_60 = arith.constant 0.000000e+00 : f32
    %358 = vector.broadcast %cst_60 : f32 to vector<2x128xf32>
    %359 = arith.maximumf %357, %358 : vector<2x128xf32>
    %360 = vector.broadcast %213 : vector<1x128xf32> to vector<2x128xf32>
    %361 = arith.mulf %124, %360 : vector<2x128xf32>
    %362 = vector.broadcast %215 : vector<1x128xf32> to vector<2x128xf32>
    %363 = arith.addf %361, %362 : vector<2x128xf32>
    %cst_61 = arith.constant 0.000000e+00 : f32
    %364 = vector.broadcast %cst_61 : f32 to vector<2x128xf32>
    %365 = arith.maximumf %363, %364 : vector<2x128xf32>
    %cst_62 = arith.constant 0.000000e+00 : f32
    %366 = vector.broadcast %cst_62 : f32 to vector<2x128xf32>
    %367 = tpu.concatenate %221, %227, %233, %239 in 0 : vector<2x128xf32>, vector<2x128xf32>, vector<2x128xf32>, vector<2x128xf32> -> vector<8x128xf32>
    %c0_63 = arith.constant 0 : index
    %c0_64 = arith.constant 0 : index
    %368 = vector.load %arg7[%c0_63, %c0_64] : memref<56x128xf32, #tpu.memory_space<vmem>>, vector<8x128xf32>
    tpu.vector_store %arg7[%c0_63, %c0_64], %367 {strides = array<i32>} : memref<56x128xf32, #tpu.memory_space<vmem>>, vector<8x128xf32>,
    %369 = tpu.concatenate %245, %251, %257, %263 in 0 : vector<2x128xf32>, vector<2x128xf32>, vector<2x128xf32>, vector<2x128xf32> -> vector<8x128xf32>
    %c8 = arith.constant 8 : index
    %c0_65 = arith.constant 0 : index
    %370 = vector.load %arg7[%c8, %c0_65] : memref<56x128xf32, #tpu.memory_space<vmem>>, vector<8x128xf32>
    tpu.vector_store %arg7[%c8, %c0_65], %369 {strides = array<i32>} : memref<56x128xf32, #tpu.memory_space<vmem>>, vector<8x128xf32>,
    %371 = tpu.concatenate %269, %275, %281, %287 in 0 : vector<2x128xf32>, vector<2x128xf32>, vector<2x128xf32>, vector<2x128xf32> -> vector<8x128xf32>
    %c16 = arith.constant 16 : index
    %c0_66 = arith.constant 0 : index
    %372 = vector.load %arg7[%c16, %c0_66] : memref<56x128xf32, #tpu.memory_space<vmem>>, vector<8x128xf32>
    tpu.vector_store %arg7[%c16, %c0_66], %371 {strides = array<i32>} : memref<56x128xf32, #tpu.memory_space<vmem>>, vector<8x128xf32>,
    %373 = tpu.concatenate %293, %299, %305, %311 in 0 : vector<2x128xf32>, vector<2x128xf32>, vector<2x128xf32>, vector<2x128xf32> -> vector<8x128xf32>
    %c24 = arith.constant 24 : index
    %c0_67 = arith.constant 0 : index
    %374 = vector.load %arg7[%c24, %c0_67] : memref<56x128xf32, #tpu.memory_space<vmem>>, vector<8x128xf32>
    tpu.vector_store %arg7[%c24, %c0_67], %373 {strides = array<i32>} : memref<56x128xf32, #tpu.memory_space<vmem>>, vector<8x128xf32>,
    %375 = tpu.concatenate %317, %323, %329, %335 in 0 : vector<2x128xf32>, vector<2x128xf32>, vector<2x128xf32>, vector<2x128xf32> -> vector<8x128xf32>
    %c32 = arith.constant 32 : index
    %c0_68 = arith.constant 0 : index
    %376 = vector.load %arg7[%c32, %c0_68] : memref<56x128xf32, #tpu.memory_space<vmem>>, vector<8x128xf32>
    tpu.vector_store %arg7[%c32, %c0_68], %375 {strides = array<i32>} : memref<56x128xf32, #tpu.memory_space<vmem>>, vector<8x128xf32>,
    %377 = tpu.concatenate %341, %347, %353, %359 in 0 : vector<2x128xf32>, vector<2x128xf32>, vector<2x128xf32>, vector<2x128xf32> -> vector<8x128xf32>
    %c40 = arith.constant 40 : index
    %c0_69 = arith.constant 0 : index
    %378 = vector.load %arg7[%c40, %c0_69] : memref<56x128xf32, #tpu.memory_space<vmem>>, vector<8x128xf32>
    tpu.vector_store %arg7[%c40, %c0_69], %377 {strides = array<i32>} : memref<56x128xf32, #tpu.memory_space<vmem>>, vector<8x128xf32>,
    %379 = tpu.concatenate %365, %366, %366, %366 in 0 : vector<2x128xf32>, vector<2x128xf32>, vector<2x128xf32>, vector<2x128xf32> -> vector<8x128xf32>
    %c48 = arith.constant 48 : index
    %c0_70 = arith.constant 0 : index
    %380 = vector.load %arg7[%c48, %c0_70] : memref<56x128xf32, #tpu.memory_space<vmem>>, vector<8x128xf32>
    tpu.vector_store %arg7[%c48, %c0_70], %379 {strides = array<i32>} : memref<56x128xf32, #tpu.memory_space<vmem>>, vector<8x128xf32>,
    %cst_71 = arith.constant 0.000000e+00 : f32
    %381 = vector.broadcast %cst_71 : f32 to vector<8x128xf32>
    %cst_72 = arith.constant 0.000000e+00 : f32
    %382 = vector.broadcast %cst_72 : f32 to vector<8x128xf32>
    %c0_73 = arith.constant 0 : index
    %c0_74 = arith.constant 0 : index
    %383 = vector.load %arg7[%c0_73, %c0_74] : memref<56x128xf32, #tpu.memory_space<vmem>>, vector<8x128xf32>
    %384 = arith.truncf %383 : vector<8x128xf32> to vector<8x128xbf16>
    %cst_75 = arith.constant dense<0.000000e+00> : vector<8x2048xf32>
    %385 = tpu.matmul %384, %8, %cst_75 {dimension_numbers = #tpu.dot_dimension_numbers<[1], [0], [0], [1], [0, 0, 1, 1], [], []>} : vector<8x128xbf16>, vector<128x2048xbf16>, vector<8x2048xf32> -> vector<8x2048xf32>
    %386 = vector.extract_strided_slice %385 {offsets = [0, 0], sizes = [8, 128], strides = [1, 1]} : vector<8x2048xf32> to vector<8x128xf32>
    %387 = arith.mulf %386, %386 : vector<8x128xf32>
    %388 = vector.extract_strided_slice %385 {offsets = [0, 128], sizes = [8, 128], strides = [1, 1]} : vector<8x2048xf32> to vector<8x128xf32>
    %389 = arith.addf %386, %388 : vector<8x128xf32>
    %390 = arith.mulf %388, %388 : vector<8x128xf32>
    %391 = arith.addf %387, %390 : vector<8x128xf32>
    %392 = vector.extract_strided_slice %385 {offsets = [0, 256], sizes = [8, 128], strides = [1, 1]} : vector<8x2048xf32> to vector<8x128xf32>
    %393 = arith.addf %389, %392 : vector<8x128xf32>
    %394 = arith.mulf %392, %392 : vector<8x128xf32>
    %395 = arith.addf %391, %394 : vector<8x128xf32>
    %396 = vector.extract_strided_slice %385 {offsets = [0, 384], sizes = [8, 128], strides = [1, 1]} : vector<8x2048xf32> to vector<8x128xf32>
    %397 = arith.addf %393, %396 : vector<8x128xf32>
    %398 = arith.mulf %396, %396 : vector<8x128xf32>
    %399 = arith.addf %395, %398 : vector<8x128xf32>
    %400 = vector.extract_strided_slice %385 {offsets = [0, 512], sizes = [8, 128], strides = [1, 1]} : vector<8x2048xf32> to vector<8x128xf32>
    %401 = arith.addf %397, %400 : vector<8x128xf32>
    %402 = arith.mulf %400, %400 : vector<8x128xf32>
    %403 = arith.addf %399, %402 : vector<8x128xf32>
    %404 = vector.extract_strided_slice %385 {offsets = [0, 640], sizes = [8, 128], strides = [1, 1]} : vector<8x2048xf32> to vector<8x128xf32>
    %405 = arith.addf %401, %404 : vector<8x128xf32>
    %406 = arith.mulf %404, %404 : vector<8x128xf32>
    %407 = arith.addf %403, %406 : vector<8x128xf32>
    %408 = vector.extract_strided_slice %385 {offsets = [0, 768], sizes = [8, 128], strides = [1, 1]} : vector<8x2048xf32> to vector<8x128xf32>
    %409 = arith.addf %405, %408 : vector<8x128xf32>
    %410 = arith.mulf %408, %408 : vector<8x128xf32>
    %411 = arith.addf %407, %410 : vector<8x128xf32>
    %412 = vector.extract_strided_slice %385 {offsets = [0, 896], sizes = [8, 128], strides = [1, 1]} : vector<8x2048xf32> to vector<8x128xf32>
    %413 = arith.addf %409, %412 : vector<8x128xf32>
    %414 = arith.mulf %412, %412 : vector<8x128xf32>
    %415 = arith.addf %411, %414 : vector<8x128xf32>
    %416 = vector.extract_strided_slice %385 {offsets = [0, 1024], sizes = [8, 128], strides = [1, 1]} : vector<8x2048xf32> to vector<8x128xf32>
    %417 = arith.addf %413, %416 : vector<8x128xf32>
    %418 = arith.mulf %416, %416 : vector<8x128xf32>
    %419 = arith.addf %415, %418 : vector<8x128xf32>
    %420 = vector.extract_strided_slice %385 {offsets = [0, 1152], sizes = [8, 128], strides = [1, 1]} : vector<8x2048xf32> to vector<8x128xf32>
    %421 = arith.addf %417, %420 : vector<8x128xf32>
    %422 = arith.mulf %420, %420 : vector<8x128xf32>
    %423 = arith.addf %419, %422 : vector<8x128xf32>
    %424 = vector.extract_strided_slice %385 {offsets = [0, 1280], sizes = [8, 128], strides = [1, 1]} : vector<8x2048xf32> to vector<8x128xf32>
    %425 = arith.addf %421, %424 : vector<8x128xf32>
    %426 = arith.mulf %424, %424 : vector<8x128xf32>
    %427 = arith.addf %423, %426 : vector<8x128xf32>
    %428 = vector.extract_strided_slice %385 {offsets = [0, 1408], sizes = [8, 128], strides = [1, 1]} : vector<8x2048xf32> to vector<8x128xf32>
    %429 = arith.addf %425, %428 : vector<8x128xf32>
    %430 = arith.mulf %428, %428 : vector<8x128xf32>
    %431 = arith.addf %427, %430 : vector<8x128xf32>
    %432 = vector.extract_strided_slice %385 {offsets = [0, 1536], sizes = [8, 128], strides = [1, 1]} : vector<8x2048xf32> to vector<8x128xf32>
    %433 = arith.addf %429, %432 : vector<8x128xf32>
    %434 = arith.mulf %432, %432 : vector<8x128xf32>
    %435 = arith.addf %431, %434 : vector<8x128xf32>
    %436 = vector.extract_strided_slice %385 {offsets = [0, 1664], sizes = [8, 128], strides = [1, 1]} : vector<8x2048xf32> to vector<8x128xf32>
    %437 = arith.addf %433, %436 : vector<8x128xf32>
    %438 = arith.mulf %436, %436 : vector<8x128xf32>
    %439 = arith.addf %435, %438 : vector<8x128xf32>
    %440 = vector.extract_strided_slice %385 {offsets = [0, 1792], sizes = [8, 128], strides = [1, 1]} : vector<8x2048xf32> to vector<8x128xf32>
    %441 = arith.addf %437, %440 : vector<8x128xf32>
    %442 = arith.mulf %440, %440 : vector<8x128xf32>
    %443 = arith.addf %439, %442 : vector<8x128xf32>
    %444 = vector.extract_strided_slice %385 {offsets = [0, 1920], sizes = [8, 128], strides = [1, 1]} : vector<8x2048xf32> to vector<8x128xf32>
    %445 = arith.addf %441, %444 : vector<8x128xf32>
    %446 = arith.mulf %444, %444 : vector<8x128xf32>
    %447 = arith.addf %443, %446 : vector<8x128xf32>
    %448 = arith.addf %381, %445 : vector<8x128xf32>
    %449 = arith.addf %382, %447 : vector<8x128xf32>
    %c8_76 = arith.constant 8 : index
    %c0_77 = arith.constant 0 : index
    %450 = vector.load %arg7[%c8_76, %c0_77] : memref<56x128xf32, #tpu.memory_space<vmem>>, vector<8x128xf32>
    %451 = arith.truncf %450 : vector<8x128xf32> to vector<8x128xbf16>
    %cst_78 = arith.constant dense<0.000000e+00> : vector<8x2048xf32>
    %452 = tpu.matmul %451, %8, %cst_78 {dimension_numbers = #tpu.dot_dimension_numbers<[1], [0], [0], [1], [0, 0, 1, 1], [], []>} : vector<8x128xbf16>, vector<128x2048xbf16>, vector<8x2048xf32> -> vector<8x2048xf32>
    %453 = vector.extract_strided_slice %452 {offsets = [0, 0], sizes = [8, 128], strides = [1, 1]} : vector<8x2048xf32> to vector<8x128xf32>
    %454 = arith.mulf %453, %453 : vector<8x128xf32>
    %455 = vector.extract_strided_slice %452 {offsets = [0, 128], sizes = [8, 128], strides = [1, 1]} : vector<8x2048xf32> to vector<8x128xf32>
    %456 = arith.addf %453, %455 : vector<8x128xf32>
    %457 = arith.mulf %455, %455 : vector<8x128xf32>
    %458 = arith.addf %454, %457 : vector<8x128xf32>
    %459 = vector.extract_strided_slice %452 {offsets = [0, 256], sizes = [8, 128], strides = [1, 1]} : vector<8x2048xf32> to vector<8x128xf32>
    %460 = arith.addf %456, %459 : vector<8x128xf32>
    %461 = arith.mulf %459, %459 : vector<8x128xf32>
    %462 = arith.addf %458, %461 : vector<8x128xf32>
    %463 = vector.extract_strided_slice %452 {offsets = [0, 384], sizes = [8, 128], strides = [1, 1]} : vector<8x2048xf32> to vector<8x128xf32>
    %464 = arith.addf %460, %463 : vector<8x128xf32>
    %465 = arith.mulf %463, %463 : vector<8x128xf32>
    %466 = arith.addf %462, %465 : vector<8x128xf32>
    %467 = vector.extract_strided_slice %452 {offsets = [0, 512], sizes = [8, 128], strides = [1, 1]} : vector<8x2048xf32> to vector<8x128xf32>
    %468 = arith.addf %464, %467 : vector<8x128xf32>
    %469 = arith.mulf %467, %467 : vector<8x128xf32>
    %470 = arith.addf %466, %469 : vector<8x128xf32>
    %471 = vector.extract_strided_slice %452 {offsets = [0, 640], sizes = [8, 128], strides = [1, 1]} : vector<8x2048xf32> to vector<8x128xf32>
    %472 = arith.addf %468, %471 : vector<8x128xf32>
    %473 = arith.mulf %471, %471 : vector<8x128xf32>
    %474 = arith.addf %470, %473 : vector<8x128xf32>
    %475 = vector.extract_strided_slice %452 {offsets = [0, 768], sizes = [8, 128], strides = [1, 1]} : vector<8x2048xf32> to vector<8x128xf32>
    %476 = arith.addf %472, %475 : vector<8x128xf32>
    %477 = arith.mulf %475, %475 : vector<8x128xf32>
    %478 = arith.addf %474, %477 : vector<8x128xf32>
    %479 = vector.extract_strided_slice %452 {offsets = [0, 896], sizes = [8, 128], strides = [1, 1]} : vector<8x2048xf32> to vector<8x128xf32>
    %480 = arith.addf %476, %479 : vector<8x128xf32>
    %481 = arith.mulf %479, %479 : vector<8x128xf32>
    %482 = arith.addf %478, %481 : vector<8x128xf32>
    %483 = vector.extract_strided_slice %452 {offsets = [0, 1024], sizes = [8, 128], strides = [1, 1]} : vector<8x2048xf32> to vector<8x128xf32>
    %484 = arith.addf %480, %483 : vector<8x128xf32>
    %485 = arith.mulf %483, %483 : vector<8x128xf32>
    %486 = arith.addf %482, %485 : vector<8x128xf32>
    %487 = vector.extract_strided_slice %452 {offsets = [0, 1152], sizes = [8, 128], strides = [1, 1]} : vector<8x2048xf32> to vector<8x128xf32>
    %488 = arith.addf %484, %487 : vector<8x128xf32>
    %489 = arith.mulf %487, %487 : vector<8x128xf32>
    %490 = arith.addf %486, %489 : vector<8x128xf32>
    %491 = vector.extract_strided_slice %452 {offsets = [0, 1280], sizes = [8, 128], strides = [1, 1]} : vector<8x2048xf32> to vector<8x128xf32>
    %492 = arith.addf %488, %491 : vector<8x128xf32>
    %493 = arith.mulf %491, %491 : vector<8x128xf32>
    %494 = arith.addf %490, %493 : vector<8x128xf32>
    %495 = vector.extract_strided_slice %452 {offsets = [0, 1408], sizes = [8, 128], strides = [1, 1]} : vector<8x2048xf32> to vector<8x128xf32>
    %496 = arith.addf %492, %495 : vector<8x128xf32>
    %497 = arith.mulf %495, %495 : vector<8x128xf32>
    %498 = arith.addf %494, %497 : vector<8x128xf32>
    %499 = vector.extract_strided_slice %452 {offsets = [0, 1536], sizes = [8, 128], strides = [1, 1]} : vector<8x2048xf32> to vector<8x128xf32>
    %500 = arith.addf %496, %499 : vector<8x128xf32>
    %501 = arith.mulf %499, %499 : vector<8x128xf32>
    %502 = arith.addf %498, %501 : vector<8x128xf32>
    %503 = vector.extract_strided_slice %452 {offsets = [0, 1664], sizes = [8, 128], strides = [1, 1]} : vector<8x2048xf32> to vector<8x128xf32>
    %504 = arith.addf %500, %503 : vector<8x128xf32>
    %505 = arith.mulf %503, %503 : vector<8x128xf32>
    %506 = arith.addf %502, %505 : vector<8x128xf32>
    %507 = vector.extract_strided_slice %452 {offsets = [0, 1792], sizes = [8, 128], strides = [1, 1]} : vector<8x2048xf32> to vector<8x128xf32>
    %508 = arith.addf %504, %507 : vector<8x128xf32>
    %509 = arith.mulf %507, %507 : vector<8x128xf32>
    %510 = arith.addf %506, %509 : vector<8x128xf32>
    %511 = vector.extract_strided_slice %452 {offsets = [0, 1920], sizes = [8, 128], strides = [1, 1]} : vector<8x2048xf32> to vector<8x128xf32>
    %512 = arith.addf %508, %511 : vector<8x128xf32>
    %513 = arith.mulf %511, %511 : vector<8x128xf32>
    %514 = arith.addf %510, %513 : vector<8x128xf32>
    %515 = arith.addf %448, %512 : vector<8x128xf32>
    %516 = arith.addf %449, %514 : vector<8x128xf32>
    %c16_79 = arith.constant 16 : index
    %c0_80 = arith.constant 0 : index
    %517 = vector.load %arg7[%c16_79, %c0_80] : memref<56x128xf32, #tpu.memory_space<vmem>>, vector<8x128xf32>
    %518 = arith.truncf %517 : vector<8x128xf32> to vector<8x128xbf16>
    %cst_81 = arith.constant dense<0.000000e+00> : vector<8x2048xf32>
    %519 = tpu.matmul %518, %8, %cst_81 {dimension_numbers = #tpu.dot_dimension_numbers<[1], [0], [0], [1], [0, 0, 1, 1], [], []>} : vector<8x128xbf16>, vector<128x2048xbf16>, vector<8x2048xf32> -> vector<8x2048xf32>
    %520 = vector.extract_strided_slice %519 {offsets = [0, 0], sizes = [8, 128], strides = [1, 1]} : vector<8x2048xf32> to vector<8x128xf32>
    %521 = arith.mulf %520, %520 : vector<8x128xf32>
    %522 = vector.extract_strided_slice %519 {offsets = [0, 128], sizes = [8, 128], strides = [1, 1]} : vector<8x2048xf32> to vector<8x128xf32>
    %523 = arith.addf %520, %522 : vector<8x128xf32>
    %524 = arith.mulf %522, %522 : vector<8x128xf32>
    %525 = arith.addf %521, %524 : vector<8x128xf32>
    %526 = vector.extract_strided_slice %519 {offsets = [0, 256], sizes = [8, 128], strides = [1, 1]} : vector<8x2048xf32> to vector<8x128xf32>
    %527 = arith.addf %523, %526 : vector<8x128xf32>
    %528 = arith.mulf %526, %526 : vector<8x128xf32>
    %529 = arith.addf %525, %528 : vector<8x128xf32>
    %530 = vector.extract_strided_slice %519 {offsets = [0, 384], sizes = [8, 128], strides = [1, 1]} : vector<8x2048xf32> to vector<8x128xf32>
    %531 = arith.addf %527, %530 : vector<8x128xf32>
    %532 = arith.mulf %530, %530 : vector<8x128xf32>
    %533 = arith.addf %529, %532 : vector<8x128xf32>
    %534 = vector.extract_strided_slice %519 {offsets = [0, 512], sizes = [8, 128], strides = [1, 1]} : vector<8x2048xf32> to vector<8x128xf32>
    %535 = arith.addf %531, %534 : vector<8x128xf32>
    %536 = arith.mulf %534, %534 : vector<8x128xf32>
    %537 = arith.addf %533, %536 : vector<8x128xf32>
    %538 = vector.extract_strided_slice %519 {offsets = [0, 640], sizes = [8, 128], strides = [1, 1]} : vector<8x2048xf32> to vector<8x128xf32>
    %539 = arith.addf %535, %538 : vector<8x128xf32>
    %540 = arith.mulf %538, %538 : vector<8x128xf32>
    %541 = arith.addf %537, %540 : vector<8x128xf32>
    %542 = vector.extract_strided_slice %519 {offsets = [0, 768], sizes = [8, 128], strides = [1, 1]} : vector<8x2048xf32> to vector<8x128xf32>
    %543 = arith.addf %539, %542 : vector<8x128xf32>
    %544 = arith.mulf %542, %542 : vector<8x128xf32>
    %545 = arith.addf %541, %544 : vector<8x128xf32>
    %546 = vector.extract_strided_slice %519 {offsets = [0, 896], sizes = [8, 128], strides = [1, 1]} : vector<8x2048xf32> to vector<8x128xf32>
    %547 = arith.addf %543, %546 : vector<8x128xf32>
    %548 = arith.mulf %546, %546 : vector<8x128xf32>
    %549 = arith.addf %545, %548 : vector<8x128xf32>
    %550 = vector.extract_strided_slice %519 {offsets = [0, 1024], sizes = [8, 128], strides = [1, 1]} : vector<8x2048xf32> to vector<8x128xf32>
    %551 = arith.addf %547, %550 : vector<8x128xf32>
    %552 = arith.mulf %550, %550 : vector<8x128xf32>
    %553 = arith.addf %549, %552 : vector<8x128xf32>
    %554 = vector.extract_strided_slice %519 {offsets = [0, 1152], sizes = [8, 128], strides = [1, 1]} : vector<8x2048xf32> to vector<8x128xf32>
    %555 = arith.addf %551, %554 : vector<8x128xf32>
    %556 = arith.mulf %554, %554 : vector<8x128xf32>
    %557 = arith.addf %553, %556 : vector<8x128xf32>
    %558 = vector.extract_strided_slice %519 {offsets = [0, 1280], sizes = [8, 128], strides = [1, 1]} : vector<8x2048xf32> to vector<8x128xf32>
    %559 = arith.addf %555, %558 : vector<8x128xf32>
    %560 = arith.mulf %558, %558 : vector<8x128xf32>
    %561 = arith.addf %557, %560 : vector<8x128xf32>
    %562 = vector.extract_strided_slice %519 {offsets = [0, 1408], sizes = [8, 128], strides = [1, 1]} : vector<8x2048xf32> to vector<8x128xf32>
    %563 = arith.addf %559, %562 : vector<8x128xf32>
    %564 = arith.mulf %562, %562 : vector<8x128xf32>
    %565 = arith.addf %561, %564 : vector<8x128xf32>
    %566 = vector.extract_strided_slice %519 {offsets = [0, 1536], sizes = [8, 128], strides = [1, 1]} : vector<8x2048xf32> to vector<8x128xf32>
    %567 = arith.addf %563, %566 : vector<8x128xf32>
    %568 = arith.mulf %566, %566 : vector<8x128xf32>
    %569 = arith.addf %565, %568 : vector<8x128xf32>
    %570 = vector.extract_strided_slice %519 {offsets = [0, 1664], sizes = [8, 128], strides = [1, 1]} : vector<8x2048xf32> to vector<8x128xf32>
    %571 = arith.addf %567, %570 : vector<8x128xf32>
    %572 = arith.mulf %570, %570 : vector<8x128xf32>
    %573 = arith.addf %569, %572 : vector<8x128xf32>
    %574 = vector.extract_strided_slice %519 {offsets = [0, 1792], sizes = [8, 128], strides = [1, 1]} : vector<8x2048xf32> to vector<8x128xf32>
    %575 = arith.addf %571, %574 : vector<8x128xf32>
    %576 = arith.mulf %574, %574 : vector<8x128xf32>
    %577 = arith.addf %573, %576 : vector<8x128xf32>
    %578 = vector.extract_strided_slice %519 {offsets = [0, 1920], sizes = [8, 128], strides = [1, 1]} : vector<8x2048xf32> to vector<8x128xf32>
    %579 = arith.addf %575, %578 : vector<8x128xf32>
    %580 = arith.mulf %578, %578 : vector<8x128xf32>
    %581 = arith.addf %577, %580 : vector<8x128xf32>
    %582 = arith.addf %515, %579 : vector<8x128xf32>
    %583 = arith.addf %516, %581 : vector<8x128xf32>
    %c24_82 = arith.constant 24 : index
    %c0_83 = arith.constant 0 : index
    %584 = vector.load %arg7[%c24_82, %c0_83] : memref<56x128xf32, #tpu.memory_space<vmem>>, vector<8x128xf32>
    %585 = arith.truncf %584 : vector<8x128xf32> to vector<8x128xbf16>
    %cst_84 = arith.constant dense<0.000000e+00> : vector<8x2048xf32>
    %586 = tpu.matmul %585, %8, %cst_84 {dimension_numbers = #tpu.dot_dimension_numbers<[1], [0], [0], [1], [0, 0, 1, 1], [], []>} : vector<8x128xbf16>, vector<128x2048xbf16>, vector<8x2048xf32> -> vector<8x2048xf32>
    %587 = vector.extract_strided_slice %586 {offsets = [0, 0], sizes = [8, 128], strides = [1, 1]} : vector<8x2048xf32> to vector<8x128xf32>
    %588 = arith.mulf %587, %587 : vector<8x128xf32>
    %589 = vector.extract_strided_slice %586 {offsets = [0, 128], sizes = [8, 128], strides = [1, 1]} : vector<8x2048xf32> to vector<8x128xf32>
    %590 = arith.addf %587, %589 : vector<8x128xf32>
    %591 = arith.mulf %589, %589 : vector<8x128xf32>
    %592 = arith.addf %588, %591 : vector<8x128xf32>
    %593 = vector.extract_strided_slice %586 {offsets = [0, 256], sizes = [8, 128], strides = [1, 1]} : vector<8x2048xf32> to vector<8x128xf32>
    %594 = arith.addf %590, %593 : vector<8x128xf32>
    %595 = arith.mulf %593, %593 : vector<8x128xf32>
    %596 = arith.addf %592, %595 : vector<8x128xf32>
    %597 = vector.extract_strided_slice %586 {offsets = [0, 384], sizes = [8, 128], strides = [1, 1]} : vector<8x2048xf32> to vector<8x128xf32>
    %598 = arith.addf %594, %597 : vector<8x128xf32>
    %599 = arith.mulf %597, %597 : vector<8x128xf32>
    %600 = arith.addf %596, %599 : vector<8x128xf32>
    %601 = vector.extract_strided_slice %586 {offsets = [0, 512], sizes = [8, 128], strides = [1, 1]} : vector<8x2048xf32> to vector<8x128xf32>
    %602 = arith.addf %598, %601 : vector<8x128xf32>
    %603 = arith.mulf %601, %601 : vector<8x128xf32>
    %604 = arith.addf %600, %603 : vector<8x128xf32>
    %605 = vector.extract_strided_slice %586 {offsets = [0, 640], sizes = [8, 128], strides = [1, 1]} : vector<8x2048xf32> to vector<8x128xf32>
    %606 = arith.addf %602, %605 : vector<8x128xf32>
    %607 = arith.mulf %605, %605 : vector<8x128xf32>
    %608 = arith.addf %604, %607 : vector<8x128xf32>
    %609 = vector.extract_strided_slice %586 {offsets = [0, 768], sizes = [8, 128], strides = [1, 1]} : vector<8x2048xf32> to vector<8x128xf32>
    %610 = arith.addf %606, %609 : vector<8x128xf32>
    %611 = arith.mulf %609, %609 : vector<8x128xf32>
    %612 = arith.addf %608, %611 : vector<8x128xf32>
    %613 = vector.extract_strided_slice %586 {offsets = [0, 896], sizes = [8, 128], strides = [1, 1]} : vector<8x2048xf32> to vector<8x128xf32>
    %614 = arith.addf %610, %613 : vector<8x128xf32>
    %615 = arith.mulf %613, %613 : vector<8x128xf32>
    %616 = arith.addf %612, %615 : vector<8x128xf32>
    %617 = vector.extract_strided_slice %586 {offsets = [0, 1024], sizes = [8, 128], strides = [1, 1]} : vector<8x2048xf32> to vector<8x128xf32>
    %618 = arith.addf %614, %617 : vector<8x128xf32>
    %619 = arith.mulf %617, %617 : vector<8x128xf32>
    %620 = arith.addf %616, %619 : vector<8x128xf32>
    %621 = vector.extract_strided_slice %586 {offsets = [0, 1152], sizes = [8, 128], strides = [1, 1]} : vector<8x2048xf32> to vector<8x128xf32>
    %622 = arith.addf %618, %621 : vector<8x128xf32>
    %623 = arith.mulf %621, %621 : vector<8x128xf32>
    %624 = arith.addf %620, %623 : vector<8x128xf32>
    %625 = vector.extract_strided_slice %586 {offsets = [0, 1280], sizes = [8, 128], strides = [1, 1]} : vector<8x2048xf32> to vector<8x128xf32>
    %626 = arith.addf %622, %625 : vector<8x128xf32>
    %627 = arith.mulf %625, %625 : vector<8x128xf32>
    %628 = arith.addf %624, %627 : vector<8x128xf32>
    %629 = vector.extract_strided_slice %586 {offsets = [0, 1408], sizes = [8, 128], strides = [1, 1]} : vector<8x2048xf32> to vector<8x128xf32>
    %630 = arith.addf %626, %629 : vector<8x128xf32>
    %631 = arith.mulf %629, %629 : vector<8x128xf32>
    %632 = arith.addf %628, %631 : vector<8x128xf32>
    %633 = vector.extract_strided_slice %586 {offsets = [0, 1536], sizes = [8, 128], strides = [1, 1]} : vector<8x2048xf32> to vector<8x128xf32>
    %634 = arith.addf %630, %633 : vector<8x128xf32>
    %635 = arith.mulf %633, %633 : vector<8x128xf32>
    %636 = arith.addf %632, %635 : vector<8x128xf32>
    %637 = vector.extract_strided_slice %586 {offsets = [0, 1664], sizes = [8, 128], strides = [1, 1]} : vector<8x2048xf32> to vector<8x128xf32>
    %638 = arith.addf %634, %637 : vector<8x128xf32>
    %639 = arith.mulf %637, %637 : vector<8x128xf32>
    %640 = arith.addf %636, %639 : vector<8x128xf32>
    %641 = vector.extract_strided_slice %586 {offsets = [0, 1792], sizes = [8, 128], strides = [1, 1]} : vector<8x2048xf32> to vector<8x128xf32>
    %642 = arith.addf %638, %641 : vector<8x128xf32>
    %643 = arith.mulf %641, %641 : vector<8x128xf32>
    %644 = arith.addf %640, %643 : vector<8x128xf32>
    %645 = vector.extract_strided_slice %586 {offsets = [0, 1920], sizes = [8, 128], strides = [1, 1]} : vector<8x2048xf32> to vector<8x128xf32>
    %646 = arith.addf %642, %645 : vector<8x128xf32>
    %647 = arith.mulf %645, %645 : vector<8x128xf32>
    %648 = arith.addf %644, %647 : vector<8x128xf32>
    %649 = arith.addf %582, %646 : vector<8x128xf32>
    %650 = arith.addf %583, %648 : vector<8x128xf32>
    %c32_85 = arith.constant 32 : index
    %c0_86 = arith.constant 0 : index
    %651 = vector.load %arg7[%c32_85, %c0_86] : memref<56x128xf32, #tpu.memory_space<vmem>>, vector<8x128xf32>
    %652 = arith.truncf %651 : vector<8x128xf32> to vector<8x128xbf16>
    %cst_87 = arith.constant dense<0.000000e+00> : vector<8x2048xf32>
    %653 = tpu.matmul %652, %8, %cst_87 {dimension_numbers = #tpu.dot_dimension_numbers<[1], [0], [0], [1], [0, 0, 1, 1], [], []>} : vector<8x128xbf16>, vector<128x2048xbf16>, vector<8x2048xf32> -> vector<8x2048xf32>
    %654 = vector.extract_strided_slice %653 {offsets = [0, 0], sizes = [8, 128], strides = [1, 1]} : vector<8x2048xf32> to vector<8x128xf32>
    %655 = arith.mulf %654, %654 : vector<8x128xf32>
    %656 = vector.extract_strided_slice %653 {offsets = [0, 128], sizes = [8, 128], strides = [1, 1]} : vector<8x2048xf32> to vector<8x128xf32>
    %657 = arith.addf %654, %656 : vector<8x128xf32>
    %658 = arith.mulf %656, %656 : vector<8x128xf32>
    %659 = arith.addf %655, %658 : vector<8x128xf32>
    %660 = vector.extract_strided_slice %653 {offsets = [0, 256], sizes = [8, 128], strides = [1, 1]} : vector<8x2048xf32> to vector<8x128xf32>
    %661 = arith.addf %657, %660 : vector<8x128xf32>
    %662 = arith.mulf %660, %660 : vector<8x128xf32>
    %663 = arith.addf %659, %662 : vector<8x128xf32>
    %664 = vector.extract_strided_slice %653 {offsets = [0, 384], sizes = [8, 128], strides = [1, 1]} : vector<8x2048xf32> to vector<8x128xf32>
    %665 = arith.addf %661, %664 : vector<8x128xf32>
    %666 = arith.mulf %664, %664 : vector<8x128xf32>
    %667 = arith.addf %663, %666 : vector<8x128xf32>
    %668 = vector.extract_strided_slice %653 {offsets = [0, 512], sizes = [8, 128], strides = [1, 1]} : vector<8x2048xf32> to vector<8x128xf32>
    %669 = arith.addf %665, %668 : vector<8x128xf32>
    %670 = arith.mulf %668, %668 : vector<8x128xf32>
    %671 = arith.addf %667, %670 : vector<8x128xf32>
    %672 = vector.extract_strided_slice %653 {offsets = [0, 640], sizes = [8, 128], strides = [1, 1]} : vector<8x2048xf32> to vector<8x128xf32>
    %673 = arith.addf %669, %672 : vector<8x128xf32>
    %674 = arith.mulf %672, %672 : vector<8x128xf32>
    %675 = arith.addf %671, %674 : vector<8x128xf32>
    %676 = vector.extract_strided_slice %653 {offsets = [0, 768], sizes = [8, 128], strides = [1, 1]} : vector<8x2048xf32> to vector<8x128xf32>
    %677 = arith.addf %673, %676 : vector<8x128xf32>
    %678 = arith.mulf %676, %676 : vector<8x128xf32>
    %679 = arith.addf %675, %678 : vector<8x128xf32>
    %680 = vector.extract_strided_slice %653 {offsets = [0, 896], sizes = [8, 128], strides = [1, 1]} : vector<8x2048xf32> to vector<8x128xf32>
    %681 = arith.addf %677, %680 : vector<8x128xf32>
    %682 = arith.mulf %680, %680 : vector<8x128xf32>
    %683 = arith.addf %679, %682 : vector<8x128xf32>
    %684 = vector.extract_strided_slice %653 {offsets = [0, 1024], sizes = [8, 128], strides = [1, 1]} : vector<8x2048xf32> to vector<8x128xf32>
    %685 = arith.addf %681, %684 : vector<8x128xf32>
    %686 = arith.mulf %684, %684 : vector<8x128xf32>
    %687 = arith.addf %683, %686 : vector<8x128xf32>
    %688 = vector.extract_strided_slice %653 {offsets = [0, 1152], sizes = [8, 128], strides = [1, 1]} : vector<8x2048xf32> to vector<8x128xf32>
    %689 = arith.addf %685, %688 : vector<8x128xf32>
    %690 = arith.mulf %688, %688 : vector<8x128xf32>
    %691 = arith.addf %687, %690 : vector<8x128xf32>
    %692 = vector.extract_strided_slice %653 {offsets = [0, 1280], sizes = [8, 128], strides = [1, 1]} : vector<8x2048xf32> to vector<8x128xf32>
    %693 = arith.addf %689, %692 : vector<8x128xf32>
    %694 = arith.mulf %692, %692 : vector<8x128xf32>
    %695 = arith.addf %691, %694 : vector<8x128xf32>
    %696 = vector.extract_strided_slice %653 {offsets = [0, 1408], sizes = [8, 128], strides = [1, 1]} : vector<8x2048xf32> to vector<8x128xf32>
    %697 = arith.addf %693, %696 : vector<8x128xf32>
    %698 = arith.mulf %696, %696 : vector<8x128xf32>
    %699 = arith.addf %695, %698 : vector<8x128xf32>
    %700 = vector.extract_strided_slice %653 {offsets = [0, 1536], sizes = [8, 128], strides = [1, 1]} : vector<8x2048xf32> to vector<8x128xf32>
    %701 = arith.addf %697, %700 : vector<8x128xf32>
    %702 = arith.mulf %700, %700 : vector<8x128xf32>
    %703 = arith.addf %699, %702 : vector<8x128xf32>
    %704 = vector.extract_strided_slice %653 {offsets = [0, 1664], sizes = [8, 128], strides = [1, 1]} : vector<8x2048xf32> to vector<8x128xf32>
    %705 = arith.addf %701, %704 : vector<8x128xf32>
    %706 = arith.mulf %704, %704 : vector<8x128xf32>
    %707 = arith.addf %703, %706 : vector<8x128xf32>
    %708 = vector.extract_strided_slice %653 {offsets = [0, 1792], sizes = [8, 128], strides = [1, 1]} : vector<8x2048xf32> to vector<8x128xf32>
    %709 = arith.addf %705, %708 : vector<8x128xf32>
    %710 = arith.mulf %708, %708 : vector<8x128xf32>
    %711 = arith.addf %707, %710 : vector<8x128xf32>
    %712 = vector.extract_strided_slice %653 {offsets = [0, 1920], sizes = [8, 128], strides = [1, 1]} : vector<8x2048xf32> to vector<8x128xf32>
    %713 = arith.addf %709, %712 : vector<8x128xf32>
    %714 = arith.mulf %712, %712 : vector<8x128xf32>
    %715 = arith.addf %711, %714 : vector<8x128xf32>
    %716 = arith.addf %649, %713 : vector<8x128xf32>
    %717 = arith.addf %650, %715 : vector<8x128xf32>
    %c40_88 = arith.constant 40 : index
    %c0_89 = arith.constant 0 : index
    %718 = vector.load %arg7[%c40_88, %c0_89] : memref<56x128xf32, #tpu.memory_space<vmem>>, vector<8x128xf32>
    %719 = arith.truncf %718 : vector<8x128xf32> to vector<8x128xbf16>
    %cst_90 = arith.constant dense<0.000000e+00> : vector<8x2048xf32>
    %720 = tpu.matmul %719, %8, %cst_90 {dimension_numbers = #tpu.dot_dimension_numbers<[1], [0], [0], [1], [0, 0, 1, 1], [], []>} : vector<8x128xbf16>, vector<128x2048xbf16>, vector<8x2048xf32> -> vector<8x2048xf32>
    %721 = vector.extract_strided_slice %720 {offsets = [0, 0], sizes = [8, 128], strides = [1, 1]} : vector<8x2048xf32> to vector<8x128xf32>
    %722 = arith.mulf %721, %721 : vector<8x128xf32>
    %723 = vector.extract_strided_slice %720 {offsets = [0, 128], sizes = [8, 128], strides = [1, 1]} : vector<8x2048xf32> to vector<8x128xf32>
    %724 = arith.addf %721, %723 : vector<8x128xf32>
    %725 = arith.mulf %723, %723 : vector<8x128xf32>
    %726 = arith.addf %722, %725 : vector<8x128xf32>
    %727 = vector.extract_strided_slice %720 {offsets = [0, 256], sizes = [8, 128], strides = [1, 1]} : vector<8x2048xf32> to vector<8x128xf32>
    %728 = arith.addf %724, %727 : vector<8x128xf32>
    %729 = arith.mulf %727, %727 : vector<8x128xf32>
    %730 = arith.addf %726, %729 : vector<8x128xf32>
    %731 = vector.extract_strided_slice %720 {offsets = [0, 384], sizes = [8, 128], strides = [1, 1]} : vector<8x2048xf32> to vector<8x128xf32>
    %732 = arith.addf %728, %731 : vector<8x128xf32>
    %733 = arith.mulf %731, %731 : vector<8x128xf32>
    %734 = arith.addf %730, %733 : vector<8x128xf32>
    %735 = vector.extract_strided_slice %720 {offsets = [0, 512], sizes = [8, 128], strides = [1, 1]} : vector<8x2048xf32> to vector<8x128xf32>
    %736 = arith.addf %732, %735 : vector<8x128xf32>
    %737 = arith.mulf %735, %735 : vector<8x128xf32>
    %738 = arith.addf %734, %737 : vector<8x128xf32>
    %739 = vector.extract_strided_slice %720 {offsets = [0, 640], sizes = [8, 128], strides = [1, 1]} : vector<8x2048xf32> to vector<8x128xf32>
    %740 = arith.addf %736, %739 : vector<8x128xf32>
    %741 = arith.mulf %739, %739 : vector<8x128xf32>
    %742 = arith.addf %738, %741 : vector<8x128xf32>
    %743 = vector.extract_strided_slice %720 {offsets = [0, 768], sizes = [8, 128], strides = [1, 1]} : vector<8x2048xf32> to vector<8x128xf32>
    %744 = arith.addf %740, %743 : vector<8x128xf32>
    %745 = arith.mulf %743, %743 : vector<8x128xf32>
    %746 = arith.addf %742, %745 : vector<8x128xf32>
    %747 = vector.extract_strided_slice %720 {offsets = [0, 896], sizes = [8, 128], strides = [1, 1]} : vector<8x2048xf32> to vector<8x128xf32>
    %748 = arith.addf %744, %747 : vector<8x128xf32>
    %749 = arith.mulf %747, %747 : vector<8x128xf32>
    %750 = arith.addf %746, %749 : vector<8x128xf32>
    %751 = vector.extract_strided_slice %720 {offsets = [0, 1024], sizes = [8, 128], strides = [1, 1]} : vector<8x2048xf32> to vector<8x128xf32>
    %752 = arith.addf %748, %751 : vector<8x128xf32>
    %753 = arith.mulf %751, %751 : vector<8x128xf32>
    %754 = arith.addf %750, %753 : vector<8x128xf32>
    %755 = vector.extract_strided_slice %720 {offsets = [0, 1152], sizes = [8, 128], strides = [1, 1]} : vector<8x2048xf32> to vector<8x128xf32>
    %756 = arith.addf %752, %755 : vector<8x128xf32>
    %757 = arith.mulf %755, %755 : vector<8x128xf32>
    %758 = arith.addf %754, %757 : vector<8x128xf32>
    %759 = vector.extract_strided_slice %720 {offsets = [0, 1280], sizes = [8, 128], strides = [1, 1]} : vector<8x2048xf32> to vector<8x128xf32>
    %760 = arith.addf %756, %759 : vector<8x128xf32>
    %761 = arith.mulf %759, %759 : vector<8x128xf32>
    %762 = arith.addf %758, %761 : vector<8x128xf32>
    %763 = vector.extract_strided_slice %720 {offsets = [0, 1408], sizes = [8, 128], strides = [1, 1]} : vector<8x2048xf32> to vector<8x128xf32>
    %764 = arith.addf %760, %763 : vector<8x128xf32>
    %765 = arith.mulf %763, %763 : vector<8x128xf32>
    %766 = arith.addf %762, %765 : vector<8x128xf32>
    %767 = vector.extract_strided_slice %720 {offsets = [0, 1536], sizes = [8, 128], strides = [1, 1]} : vector<8x2048xf32> to vector<8x128xf32>
    %768 = arith.addf %764, %767 : vector<8x128xf32>
    %769 = arith.mulf %767, %767 : vector<8x128xf32>
    %770 = arith.addf %766, %769 : vector<8x128xf32>
    %771 = vector.extract_strided_slice %720 {offsets = [0, 1664], sizes = [8, 128], strides = [1, 1]} : vector<8x2048xf32> to vector<8x128xf32>
    %772 = arith.addf %768, %771 : vector<8x128xf32>
    %773 = arith.mulf %771, %771 : vector<8x128xf32>
    %774 = arith.addf %770, %773 : vector<8x128xf32>
    %775 = vector.extract_strided_slice %720 {offsets = [0, 1792], sizes = [8, 128], strides = [1, 1]} : vector<8x2048xf32> to vector<8x128xf32>
    %776 = arith.addf %772, %775 : vector<8x128xf32>
    %777 = arith.mulf %775, %775 : vector<8x128xf32>
    %778 = arith.addf %774, %777 : vector<8x128xf32>
    %779 = vector.extract_strided_slice %720 {offsets = [0, 1920], sizes = [8, 128], strides = [1, 1]} : vector<8x2048xf32> to vector<8x128xf32>
    %780 = arith.addf %776, %779 : vector<8x128xf32>
    %781 = arith.mulf %779, %779 : vector<8x128xf32>
    %782 = arith.addf %778, %781 : vector<8x128xf32>
    %783 = arith.addf %716, %780 : vector<8x128xf32>
    %784 = arith.addf %717, %782 : vector<8x128xf32>
    %c48_91 = arith.constant 48 : index
    %c0_92 = arith.constant 0 : index
    %785 = vector.load %arg7[%c48_91, %c0_92] : memref<56x128xf32, #tpu.memory_space<vmem>>, vector<8x128xf32>
    %786 = arith.truncf %785 : vector<8x128xf32> to vector<8x128xbf16>
    %cst_93 = arith.constant dense<0.000000e+00> : vector<8x2048xf32>
    %787 = tpu.matmul %786, %8, %cst_93 {dimension_numbers = #tpu.dot_dimension_numbers<[1], [0], [0], [1], [0, 0, 1, 1], [], []>} : vector<8x128xbf16>, vector<128x2048xbf16>, vector<8x2048xf32> -> vector<8x2048xf32>
    %788 = vector.extract_strided_slice %787 {offsets = [0, 0], sizes = [8, 128], strides = [1, 1]} : vector<8x2048xf32> to vector<8x128xf32>
    %789 = arith.mulf %788, %788 : vector<8x128xf32>
    %790 = vector.extract_strided_slice %787 {offsets = [0, 128], sizes = [8, 128], strides = [1, 1]} : vector<8x2048xf32> to vector<8x128xf32>
    %791 = arith.addf %788, %790 : vector<8x128xf32>
    %792 = arith.mulf %790, %790 : vector<8x128xf32>
    %793 = arith.addf %789, %792 : vector<8x128xf32>
    %794 = vector.extract_strided_slice %787 {offsets = [0, 256], sizes = [8, 128], strides = [1, 1]} : vector<8x2048xf32> to vector<8x128xf32>
    %795 = arith.addf %791, %794 : vector<8x128xf32>
    %796 = arith.mulf %794, %794 : vector<8x128xf32>
    %797 = arith.addf %793, %796 : vector<8x128xf32>
    %798 = vector.extract_strided_slice %787 {offsets = [0, 384], sizes = [8, 128], strides = [1, 1]} : vector<8x2048xf32> to vector<8x128xf32>
    %799 = arith.addf %795, %798 : vector<8x128xf32>
    %800 = arith.mulf %798, %798 : vector<8x128xf32>
    %801 = arith.addf %797, %800 : vector<8x128xf32>
    %802 = vector.extract_strided_slice %787 {offsets = [0, 512], sizes = [8, 128], strides = [1, 1]} : vector<8x2048xf32> to vector<8x128xf32>
    %803 = arith.addf %799, %802 : vector<8x128xf32>
    %804 = arith.mulf %802, %802 : vector<8x128xf32>
    %805 = arith.addf %801, %804 : vector<8x128xf32>
    %806 = vector.extract_strided_slice %787 {offsets = [0, 640], sizes = [8, 128], strides = [1, 1]} : vector<8x2048xf32> to vector<8x128xf32>
    %807 = arith.addf %803, %806 : vector<8x128xf32>
    %808 = arith.mulf %806, %806 : vector<8x128xf32>
    %809 = arith.addf %805, %808 : vector<8x128xf32>
    %810 = vector.extract_strided_slice %787 {offsets = [0, 768], sizes = [8, 128], strides = [1, 1]} : vector<8x2048xf32> to vector<8x128xf32>
    %811 = arith.addf %807, %810 : vector<8x128xf32>
    %812 = arith.mulf %810, %810 : vector<8x128xf32>
    %813 = arith.addf %809, %812 : vector<8x128xf32>
    %814 = vector.extract_strided_slice %787 {offsets = [0, 896], sizes = [8, 128], strides = [1, 1]} : vector<8x2048xf32> to vector<8x128xf32>
    %815 = arith.addf %811, %814 : vector<8x128xf32>
    %816 = arith.mulf %814, %814 : vector<8x128xf32>
    %817 = arith.addf %813, %816 : vector<8x128xf32>
    %818 = vector.extract_strided_slice %787 {offsets = [0, 1024], sizes = [8, 128], strides = [1, 1]} : vector<8x2048xf32> to vector<8x128xf32>
    %819 = arith.addf %815, %818 : vector<8x128xf32>
    %820 = arith.mulf %818, %818 : vector<8x128xf32>
    %821 = arith.addf %817, %820 : vector<8x128xf32>
    %822 = vector.extract_strided_slice %787 {offsets = [0, 1152], sizes = [8, 128], strides = [1, 1]} : vector<8x2048xf32> to vector<8x128xf32>
    %823 = arith.addf %819, %822 : vector<8x128xf32>
    %824 = arith.mulf %822, %822 : vector<8x128xf32>
    %825 = arith.addf %821, %824 : vector<8x128xf32>
    %826 = vector.extract_strided_slice %787 {offsets = [0, 1280], sizes = [8, 128], strides = [1, 1]} : vector<8x2048xf32> to vector<8x128xf32>
    %827 = arith.addf %823, %826 : vector<8x128xf32>
    %828 = arith.mulf %826, %826 : vector<8x128xf32>
    %829 = arith.addf %825, %828 : vector<8x128xf32>
    %830 = vector.extract_strided_slice %787 {offsets = [0, 1408], sizes = [8, 128], strides = [1, 1]} : vector<8x2048xf32> to vector<8x128xf32>
    %831 = arith.addf %827, %830 : vector<8x128xf32>
    %832 = arith.mulf %830, %830 : vector<8x128xf32>
    %833 = arith.addf %829, %832 : vector<8x128xf32>
    %834 = vector.extract_strided_slice %787 {offsets = [0, 1536], sizes = [8, 128], strides = [1, 1]} : vector<8x2048xf32> to vector<8x128xf32>
    %835 = arith.addf %831, %834 : vector<8x128xf32>
    %836 = arith.mulf %834, %834 : vector<8x128xf32>
    %837 = arith.addf %833, %836 : vector<8x128xf32>
    %838 = vector.extract_strided_slice %787 {offsets = [0, 1664], sizes = [8, 128], strides = [1, 1]} : vector<8x2048xf32> to vector<8x128xf32>
    %839 = arith.addf %835, %838 : vector<8x128xf32>
    %840 = arith.mulf %838, %838 : vector<8x128xf32>
    %841 = arith.addf %837, %840 : vector<8x128xf32>
    %842 = vector.extract_strided_slice %787 {offsets = [0, 1792], sizes = [8, 128], strides = [1, 1]} : vector<8x2048xf32> to vector<8x128xf32>
    %843 = arith.addf %839, %842 : vector<8x128xf32>
    %844 = arith.mulf %842, %842 : vector<8x128xf32>
    %845 = arith.addf %841, %844 : vector<8x128xf32>
    %846 = vector.extract_strided_slice %787 {offsets = [0, 1920], sizes = [8, 128], strides = [1, 1]} : vector<8x2048xf32> to vector<8x128xf32>
    %847 = arith.addf %843, %846 : vector<8x128xf32>
    %848 = arith.mulf %846, %846 : vector<8x128xf32>
    %849 = arith.addf %845, %848 : vector<8x128xf32>
    %850 = arith.addf %783, %847 : vector<8x128xf32>
    %851 = arith.addf %784, %849 : vector<8x128xf32>
    %cst_94 = arith.constant dense<0.000000e+00> : vector<128xf32>
    %852 = vector.multi_reduction <add>, %850, %cst_94 [0] : vector<8x128xf32> to vector<128xf32>
    %853 = vector.shape_cast %852 : vector<128xf32> to vector<1x128xf32>
    %cst_95 = arith.constant dense<0.000000e+00> : vector<128xf32>
    %854 = vector.multi_reduction <add>, %851, %cst_95 [0] : vector<8x128xf32> to vector<128xf32>
    %855 = vector.shape_cast %854 : vector<128xf32> to vector<1x128xf32>
    %cst_96 = arith.constant 1.250000e-03 : f32
    %856 = vector.broadcast %cst_96 : f32 to vector<1x128xf32>
    %857 = arith.mulf %853, %856 : vector<1x128xf32>
    %cst_97 = arith.constant 1.250000e-03 : f32
    %858 = vector.broadcast %cst_97 : f32 to vector<1x128xf32>
    %859 = arith.mulf %855, %858 : vector<1x128xf32>
    %860 = arith.mulf %857, %857 : vector<1x128xf32>
    %861 = arith.subf %859, %860 : vector<1x128xf32>
    %cst_98 = arith.constant 0.000000e+00 : f32
    %862 = vector.broadcast %cst_98 : f32 to vector<1x128xf32>
    %863 = arith.maximumf %861, %862 : vector<1x128xf32>
    %cst_99 = arith.constant 9.99999974E-6 : f32
    %864 = vector.broadcast %cst_99 : f32 to vector<1x128xf32>
    %865 = arith.addf %863, %864 : vector<1x128xf32>
    %866 = math.rsqrt %865 : vector<1x128xf32>
    %867 = arith.mulf %4, %866 : vector<1x128xf32>
    %868 = arith.mulf %857, %867 : vector<1x128xf32>
    %869 = arith.subf %5, %868 : vector<1x128xf32>
    %c0_100 = arith.constant 0 : index
    %c0_101 = arith.constant 0 : index
    %870 = vector.load %arg7[%c0_100, %c0_101] : memref<56x128xf32, #tpu.memory_space<vmem>>, vector<8x128xf32>
    %871 = arith.truncf %870 : vector<8x128xf32> to vector<8x128xbf16>
    %cst_102 = arith.constant dense<0.000000e+00> : vector<8x2048xf32>
    %872 = tpu.matmul %871, %8, %cst_102 {dimension_numbers = #tpu.dot_dimension_numbers<[1], [0], [0], [1], [0, 0, 1, 1], [], []>} : vector<8x128xbf16>, vector<128x2048xbf16>, vector<8x2048xf32> -> vector<8x2048xf32>
    %873 = vector.extract_strided_slice %872 {offsets = [0, 0], sizes = [8, 128], strides = [1, 1]} : vector<8x2048xf32> to vector<8x128xf32>
    %874 = vector.broadcast %867 : vector<1x128xf32> to vector<8x128xf32>
    %875 = arith.mulf %873, %874 : vector<8x128xf32>
    %876 = vector.broadcast %869 : vector<1x128xf32> to vector<8x128xf32>
    %877 = arith.addf %875, %876 : vector<8x128xf32>
    %cst_103 = arith.constant 0.000000e+00 : f32
    %878 = vector.broadcast %cst_103 : f32 to vector<8x128xf32>
    %879 = arith.maximumf %877, %878 : vector<8x128xf32>
    %880 = vector.extract_strided_slice %872 {offsets = [0, 128], sizes = [8, 128], strides = [1, 1]} : vector<8x2048xf32> to vector<8x128xf32>
    %881 = vector.broadcast %867 : vector<1x128xf32> to vector<8x128xf32>
    %882 = arith.mulf %880, %881 : vector<8x128xf32>
    %883 = vector.broadcast %869 : vector<1x128xf32> to vector<8x128xf32>
    %884 = arith.addf %882, %883 : vector<8x128xf32>
    %cst_104 = arith.constant 0.000000e+00 : f32
    %885 = vector.broadcast %cst_104 : f32 to vector<8x128xf32>
    %886 = arith.maximumf %884, %885 : vector<8x128xf32>
    %887 = vector.extract_strided_slice %872 {offsets = [0, 256], sizes = [8, 128], strides = [1, 1]} : vector<8x2048xf32> to vector<8x128xf32>
    %888 = vector.broadcast %867 : vector<1x128xf32> to vector<8x128xf32>
    %889 = arith.mulf %887, %888 : vector<8x128xf32>
    %890 = vector.broadcast %869 : vector<1x128xf32> to vector<8x128xf32>
    %891 = arith.addf %889, %890 : vector<8x128xf32>
    %cst_105 = arith.constant 0.000000e+00 : f32
    %892 = vector.broadcast %cst_105 : f32 to vector<8x128xf32>
    %893 = arith.maximumf %891, %892 : vector<8x128xf32>
    %894 = vector.extract_strided_slice %872 {offsets = [0, 384], sizes = [8, 128], strides = [1, 1]} : vector<8x2048xf32> to vector<8x128xf32>
    %895 = vector.broadcast %867 : vector<1x128xf32> to vector<8x128xf32>
    %896 = arith.mulf %894, %895 : vector<8x128xf32>
    %897 = vector.broadcast %869 : vector<1x128xf32> to vector<8x128xf32>
    %898 = arith.addf %896, %897 : vector<8x128xf32>
    %cst_106 = arith.constant 0.000000e+00 : f32
    %899 = vector.broadcast %cst_106 : f32 to vector<8x128xf32>
    %900 = arith.maximumf %898, %899 : vector<8x128xf32>
    %901 = vector.extract_strided_slice %872 {offsets = [0, 512], sizes = [8, 128], strides = [1, 1]} : vector<8x2048xf32> to vector<8x128xf32>
    %902 = vector.broadcast %867 : vector<1x128xf32> to vector<8x128xf32>
    %903 = arith.mulf %901, %902 : vector<8x128xf32>
    %904 = vector.broadcast %869 : vector<1x128xf32> to vector<8x128xf32>
    %905 = arith.addf %903, %904 : vector<8x128xf32>
    %cst_107 = arith.constant 0.000000e+00 : f32
    %906 = vector.broadcast %cst_107 : f32 to vector<8x128xf32>
    %907 = arith.maximumf %905, %906 : vector<8x128xf32>
    %908 = vector.extract_strided_slice %872 {offsets = [0, 640], sizes = [8, 128], strides = [1, 1]} : vector<8x2048xf32> to vector<8x128xf32>
    %909 = vector.broadcast %867 : vector<1x128xf32> to vector<8x128xf32>
    %910 = arith.mulf %908, %909 : vector<8x128xf32>
    %911 = vector.broadcast %869 : vector<1x128xf32> to vector<8x128xf32>
    %912 = arith.addf %910, %911 : vector<8x128xf32>
    %cst_108 = arith.constant 0.000000e+00 : f32
    %913 = vector.broadcast %cst_108 : f32 to vector<8x128xf32>
    %914 = arith.maximumf %912, %913 : vector<8x128xf32>
    %915 = vector.extract_strided_slice %872 {offsets = [0, 768], sizes = [8, 128], strides = [1, 1]} : vector<8x2048xf32> to vector<8x128xf32>
    %916 = vector.broadcast %867 : vector<1x128xf32> to vector<8x128xf32>
    %917 = arith.mulf %915, %916 : vector<8x128xf32>
    %918 = vector.broadcast %869 : vector<1x128xf32> to vector<8x128xf32>
    %919 = arith.addf %917, %918 : vector<8x128xf32>
    %cst_109 = arith.constant 0.000000e+00 : f32
    %920 = vector.broadcast %cst_109 : f32 to vector<8x128xf32>
    %921 = arith.maximumf %919, %920 : vector<8x128xf32>
    %922 = vector.extract_strided_slice %872 {offsets = [0, 896], sizes = [8, 128], strides = [1, 1]} : vector<8x2048xf32> to vector<8x128xf32>
    %923 = vector.broadcast %867 : vector<1x128xf32> to vector<8x128xf32>
    %924 = arith.mulf %922, %923 : vector<8x128xf32>
    %925 = vector.broadcast %869 : vector<1x128xf32> to vector<8x128xf32>
    %926 = arith.addf %924, %925 : vector<8x128xf32>
    %cst_110 = arith.constant 0.000000e+00 : f32
    %927 = vector.broadcast %cst_110 : f32 to vector<8x128xf32>
    %928 = arith.maximumf %926, %927 : vector<8x128xf32>
    %929 = vector.extract_strided_slice %872 {offsets = [0, 1024], sizes = [8, 128], strides = [1, 1]} : vector<8x2048xf32> to vector<8x128xf32>
    %930 = vector.broadcast %867 : vector<1x128xf32> to vector<8x128xf32>
    %931 = arith.mulf %929, %930 : vector<8x128xf32>
    %932 = vector.broadcast %869 : vector<1x128xf32> to vector<8x128xf32>
    %933 = arith.addf %931, %932 : vector<8x128xf32>
    %cst_111 = arith.constant 0.000000e+00 : f32
    %934 = vector.broadcast %cst_111 : f32 to vector<8x128xf32>
    %935 = arith.maximumf %933, %934 : vector<8x128xf32>
    %936 = vector.extract_strided_slice %872 {offsets = [0, 1152], sizes = [8, 128], strides = [1, 1]} : vector<8x2048xf32> to vector<8x128xf32>
    %937 = vector.broadcast %867 : vector<1x128xf32> to vector<8x128xf32>
    %938 = arith.mulf %936, %937 : vector<8x128xf32>
    %939 = vector.broadcast %869 : vector<1x128xf32> to vector<8x128xf32>
    %940 = arith.addf %938, %939 : vector<8x128xf32>
    %cst_112 = arith.constant 0.000000e+00 : f32
    %941 = vector.broadcast %cst_112 : f32 to vector<8x128xf32>
    %942 = arith.maximumf %940, %941 : vector<8x128xf32>
    %943 = vector.extract_strided_slice %872 {offsets = [0, 1280], sizes = [8, 128], strides = [1, 1]} : vector<8x2048xf32> to vector<8x128xf32>
    %944 = vector.broadcast %867 : vector<1x128xf32> to vector<8x128xf32>
    %945 = arith.mulf %943, %944 : vector<8x128xf32>
    %946 = vector.broadcast %869 : vector<1x128xf32> to vector<8x128xf32>
    %947 = arith.addf %945, %946 : vector<8x128xf32>
    %cst_113 = arith.constant 0.000000e+00 : f32
    %948 = vector.broadcast %cst_113 : f32 to vector<8x128xf32>
    %949 = arith.maximumf %947, %948 : vector<8x128xf32>
    %950 = vector.extract_strided_slice %872 {offsets = [0, 1408], sizes = [8, 128], strides = [1, 1]} : vector<8x2048xf32> to vector<8x128xf32>
    %951 = vector.broadcast %867 : vector<1x128xf32> to vector<8x128xf32>
    %952 = arith.mulf %950, %951 : vector<8x128xf32>
    %953 = vector.broadcast %869 : vector<1x128xf32> to vector<8x128xf32>
    %954 = arith.addf %952, %953 : vector<8x128xf32>
    %cst_114 = arith.constant 0.000000e+00 : f32
    %955 = vector.broadcast %cst_114 : f32 to vector<8x128xf32>
    %956 = arith.maximumf %954, %955 : vector<8x128xf32>
    %957 = vector.extract_strided_slice %872 {offsets = [0, 1536], sizes = [8, 128], strides = [1, 1]} : vector<8x2048xf32> to vector<8x128xf32>
    %958 = vector.broadcast %867 : vector<1x128xf32> to vector<8x128xf32>
    %959 = arith.mulf %957, %958 : vector<8x128xf32>
    %960 = vector.broadcast %869 : vector<1x128xf32> to vector<8x128xf32>
    %961 = arith.addf %959, %960 : vector<8x128xf32>
    %cst_115 = arith.constant 0.000000e+00 : f32
    %962 = vector.broadcast %cst_115 : f32 to vector<8x128xf32>
    %963 = arith.maximumf %961, %962 : vector<8x128xf32>
    %964 = vector.extract_strided_slice %872 {offsets = [0, 1664], sizes = [8, 128], strides = [1, 1]} : vector<8x2048xf32> to vector<8x128xf32>
    %965 = vector.broadcast %867 : vector<1x128xf32> to vector<8x128xf32>
    %966 = arith.mulf %964, %965 : vector<8x128xf32>
    %967 = vector.broadcast %869 : vector<1x128xf32> to vector<8x128xf32>
    %968 = arith.addf %966, %967 : vector<8x128xf32>
    %cst_116 = arith.constant 0.000000e+00 : f32
    %969 = vector.broadcast %cst_116 : f32 to vector<8x128xf32>
    %970 = arith.maximumf %968, %969 : vector<8x128xf32>
    %971 = vector.extract_strided_slice %872 {offsets = [0, 1792], sizes = [8, 128], strides = [1, 1]} : vector<8x2048xf32> to vector<8x128xf32>
    %972 = vector.broadcast %867 : vector<1x128xf32> to vector<8x128xf32>
    %973 = arith.mulf %971, %972 : vector<8x128xf32>
    %974 = vector.broadcast %869 : vector<1x128xf32> to vector<8x128xf32>
    %975 = arith.addf %973, %974 : vector<8x128xf32>
    %cst_117 = arith.constant 0.000000e+00 : f32
    %976 = vector.broadcast %cst_117 : f32 to vector<8x128xf32>
    %977 = arith.maximumf %975, %976 : vector<8x128xf32>
    %978 = vector.extract_strided_slice %872 {offsets = [0, 1920], sizes = [8, 128], strides = [1, 1]} : vector<8x2048xf32> to vector<8x128xf32>
    %979 = vector.broadcast %867 : vector<1x128xf32> to vector<8x128xf32>
    %980 = arith.mulf %978, %979 : vector<8x128xf32>
    %981 = vector.broadcast %869 : vector<1x128xf32> to vector<8x128xf32>
    %982 = arith.addf %980, %981 : vector<8x128xf32>
    %cst_118 = arith.constant 0.000000e+00 : f32
    %983 = vector.broadcast %cst_118 : f32 to vector<8x128xf32>
    %984 = arith.maximumf %982, %983 : vector<8x128xf32>
    %985 = tpu.concatenate %879, %886, %893, %900, %907, %914, %921, %928, %935, %942, %949, %956, %963, %970, %977, %984 in 0 : vector<8x128xf32>, vector<8x128xf32>, vector<8x128xf32>, vector<8x128xf32>, vector<8x128xf32>, vector<8x128xf32>, vector<8x128xf32>, vector<8x128xf32>, vector<8x128xf32>, vector<8x128xf32>, vector<8x128xf32>, vector<8x128xf32>, vector<8x128xf32>, vector<8x128xf32>, vector<8x128xf32>, vector<8x128xf32> -> vector<128x128xf32>
    %986 = arith.truncf %985 : vector<128x128xf32> to vector<128x128xbf16>
    %cst_119 = arith.constant dense<0.000000e+00> : vector<128x128xf32>
    %987 = tpu.matmul %986, %9, %cst_119 {dimension_numbers = #tpu.dot_dimension_numbers<[1], [0], [0], [1], [0, 0, 1, 1], [], []>} : vector<128x128xbf16>, vector<128x128xbf16>, vector<128x128xf32> -> vector<128x128xf32>
    %988 = vector.broadcast %6 : vector<1x128xf32> to vector<128x128xf32>
    %989 = arith.addf %987, %988 : vector<128x128xf32>
    %cst_120 = arith.constant 5.000000e-01 : f32
    %990 = vector.broadcast %cst_120 : f32 to vector<128x128xf32>
    %991 = arith.mulf %989, %990 : vector<128x128xf32>
    %992 = math.tanh %991 : vector<128x128xf32>
    %cst_121 = arith.constant 5.000000e-01 : f32
    %993 = vector.broadcast %cst_121 : f32 to vector<128x128xf32>
    %994 = arith.mulf %992, %993 : vector<128x128xf32>
    %cst_122 = arith.constant 5.000000e-01 : f32
    %995 = vector.broadcast %cst_122 : f32 to vector<128x128xf32>
    %996 = arith.addf %994, %995 : vector<128x128xf32>
    %997 = arith.truncf %996 : vector<128x128xf32> to vector<128x128xbf16>
    %c0_123 = arith.constant 0 : index
    %c0_124 = arith.constant 0 : index
    %998 = vector.load %arg6[%c0_123, %c0_124] : memref<896x128xbf16, #tpu.memory_space<vmem>>, vector<128x128xbf16>
    tpu.vector_store %arg6[%c0_123, %c0_124], %997 {strides = array<i32>} : memref<896x128xbf16, #tpu.memory_space<vmem>>, vector<128x128xbf16>,
    %c8_125 = arith.constant 8 : index
    %c0_126 = arith.constant 0 : index
    %999 = vector.load %arg7[%c8_125, %c0_126] : memref<56x128xf32, #tpu.memory_space<vmem>>, vector<8x128xf32>
    %1000 = arith.truncf %999 : vector<8x128xf32> to vector<8x128xbf16>
    %cst_127 = arith.constant dense<0.000000e+00> : vector<8x2048xf32>
    %1001 = tpu.matmul %1000, %8, %cst_127 {dimension_numbers = #tpu.dot_dimension_numbers<[1], [0], [0], [1], [0, 0, 1, 1], [], []>} : vector<8x128xbf16>, vector<128x2048xbf16>, vector<8x2048xf32> -> vector<8x2048xf32>
    %1002 = vector.extract_strided_slice %1001 {offsets = [0, 0], sizes = [8, 128], strides = [1, 1]} : vector<8x2048xf32> to vector<8x128xf32>
    %1003 = vector.broadcast %867 : vector<1x128xf32> to vector<8x128xf32>
    %1004 = arith.mulf %1002, %1003 : vector<8x128xf32>
    %1005 = vector.broadcast %869 : vector<1x128xf32> to vector<8x128xf32>
    %1006 = arith.addf %1004, %1005 : vector<8x128xf32>
    %cst_128 = arith.constant 0.000000e+00 : f32
    %1007 = vector.broadcast %cst_128 : f32 to vector<8x128xf32>
    %1008 = arith.maximumf %1006, %1007 : vector<8x128xf32>
    %1009 = vector.extract_strided_slice %1001 {offsets = [0, 128], sizes = [8, 128], strides = [1, 1]} : vector<8x2048xf32> to vector<8x128xf32>
    %1010 = vector.broadcast %867 : vector<1x128xf32> to vector<8x128xf32>
    %1011 = arith.mulf %1009, %1010 : vector<8x128xf32>
    %1012 = vector.broadcast %869 : vector<1x128xf32> to vector<8x128xf32>
    %1013 = arith.addf %1011, %1012 : vector<8x128xf32>
    %cst_129 = arith.constant 0.000000e+00 : f32
    %1014 = vector.broadcast %cst_129 : f32 to vector<8x128xf32>
    %1015 = arith.maximumf %1013, %1014 : vector<8x128xf32>
    %1016 = vector.extract_strided_slice %1001 {offsets = [0, 256], sizes = [8, 128], strides = [1, 1]} : vector<8x2048xf32> to vector<8x128xf32>
    %1017 = vector.broadcast %867 : vector<1x128xf32> to vector<8x128xf32>
    %1018 = arith.mulf %1016, %1017 : vector<8x128xf32>
    %1019 = vector.broadcast %869 : vector<1x128xf32> to vector<8x128xf32>
    %1020 = arith.addf %1018, %1019 : vector<8x128xf32>
    %cst_130 = arith.constant 0.000000e+00 : f32
    %1021 = vector.broadcast %cst_130 : f32 to vector<8x128xf32>
    %1022 = arith.maximumf %1020, %1021 : vector<8x128xf32>
    %1023 = vector.extract_strided_slice %1001 {offsets = [0, 384], sizes = [8, 128], strides = [1, 1]} : vector<8x2048xf32> to vector<8x128xf32>
    %1024 = vector.broadcast %867 : vector<1x128xf32> to vector<8x128xf32>
    %1025 = arith.mulf %1023, %1024 : vector<8x128xf32>
    %1026 = vector.broadcast %869 : vector<1x128xf32> to vector<8x128xf32>
    %1027 = arith.addf %1025, %1026 : vector<8x128xf32>
    %cst_131 = arith.constant 0.000000e+00 : f32
    %1028 = vector.broadcast %cst_131 : f32 to vector<8x128xf32>
    %1029 = arith.maximumf %1027, %1028 : vector<8x128xf32>
    %1030 = vector.extract_strided_slice %1001 {offsets = [0, 512], sizes = [8, 128], strides = [1, 1]} : vector<8x2048xf32> to vector<8x128xf32>
    %1031 = vector.broadcast %867 : vector<1x128xf32> to vector<8x128xf32>
    %1032 = arith.mulf %1030, %1031 : vector<8x128xf32>
    %1033 = vector.broadcast %869 : vector<1x128xf32> to vector<8x128xf32>
    %1034 = arith.addf %1032, %1033 : vector<8x128xf32>
    %cst_132 = arith.constant 0.000000e+00 : f32
    %1035 = vector.broadcast %cst_132 : f32 to vector<8x128xf32>
    %1036 = arith.maximumf %1034, %1035 : vector<8x128xf32>
    %1037 = vector.extract_strided_slice %1001 {offsets = [0, 640], sizes = [8, 128], strides = [1, 1]} : vector<8x2048xf32> to vector<8x128xf32>
    %1038 = vector.broadcast %867 : vector<1x128xf32> to vector<8x128xf32>
    %1039 = arith.mulf %1037, %1038 : vector<8x128xf32>
    %1040 = vector.broadcast %869 : vector<1x128xf32> to vector<8x128xf32>
    %1041 = arith.addf %1039, %1040 : vector<8x128xf32>
    %cst_133 = arith.constant 0.000000e+00 : f32
    %1042 = vector.broadcast %cst_133 : f32 to vector<8x128xf32>
    %1043 = arith.maximumf %1041, %1042 : vector<8x128xf32>
    %1044 = vector.extract_strided_slice %1001 {offsets = [0, 768], sizes = [8, 128], strides = [1, 1]} : vector<8x2048xf32> to vector<8x128xf32>
    %1045 = vector.broadcast %867 : vector<1x128xf32> to vector<8x128xf32>
    %1046 = arith.mulf %1044, %1045 : vector<8x128xf32>
    %1047 = vector.broadcast %869 : vector<1x128xf32> to vector<8x128xf32>
    %1048 = arith.addf %1046, %1047 : vector<8x128xf32>
    %cst_134 = arith.constant 0.000000e+00 : f32
    %1049 = vector.broadcast %cst_134 : f32 to vector<8x128xf32>
    %1050 = arith.maximumf %1048, %1049 : vector<8x128xf32>
    %1051 = vector.extract_strided_slice %1001 {offsets = [0, 896], sizes = [8, 128], strides = [1, 1]} : vector<8x2048xf32> to vector<8x128xf32>
    %1052 = vector.broadcast %867 : vector<1x128xf32> to vector<8x128xf32>
    %1053 = arith.mulf %1051, %1052 : vector<8x128xf32>
    %1054 = vector.broadcast %869 : vector<1x128xf32> to vector<8x128xf32>
    %1055 = arith.addf %1053, %1054 : vector<8x128xf32>
    %cst_135 = arith.constant 0.000000e+00 : f32
    %1056 = vector.broadcast %cst_135 : f32 to vector<8x128xf32>
    %1057 = arith.maximumf %1055, %1056 : vector<8x128xf32>
    %1058 = vector.extract_strided_slice %1001 {offsets = [0, 1024], sizes = [8, 128], strides = [1, 1]} : vector<8x2048xf32> to vector<8x128xf32>
    %1059 = vector.broadcast %867 : vector<1x128xf32> to vector<8x128xf32>
    %1060 = arith.mulf %1058, %1059 : vector<8x128xf32>
    %1061 = vector.broadcast %869 : vector<1x128xf32> to vector<8x128xf32>
    %1062 = arith.addf %1060, %1061 : vector<8x128xf32>
    %cst_136 = arith.constant 0.000000e+00 : f32
    %1063 = vector.broadcast %cst_136 : f32 to vector<8x128xf32>
    %1064 = arith.maximumf %1062, %1063 : vector<8x128xf32>
    %1065 = vector.extract_strided_slice %1001 {offsets = [0, 1152], sizes = [8, 128], strides = [1, 1]} : vector<8x2048xf32> to vector<8x128xf32>
    %1066 = vector.broadcast %867 : vector<1x128xf32> to vector<8x128xf32>
    %1067 = arith.mulf %1065, %1066 : vector<8x128xf32>
    %1068 = vector.broadcast %869 : vector<1x128xf32> to vector<8x128xf32>
    %1069 = arith.addf %1067, %1068 : vector<8x128xf32>
    %cst_137 = arith.constant 0.000000e+00 : f32
    %1070 = vector.broadcast %cst_137 : f32 to vector<8x128xf32>
    %1071 = arith.maximumf %1069, %1070 : vector<8x128xf32>
    %1072 = vector.extract_strided_slice %1001 {offsets = [0, 1280], sizes = [8, 128], strides = [1, 1]} : vector<8x2048xf32> to vector<8x128xf32>
    %1073 = vector.broadcast %867 : vector<1x128xf32> to vector<8x128xf32>
    %1074 = arith.mulf %1072, %1073 : vector<8x128xf32>
    %1075 = vector.broadcast %869 : vector<1x128xf32> to vector<8x128xf32>
    %1076 = arith.addf %1074, %1075 : vector<8x128xf32>
    %cst_138 = arith.constant 0.000000e+00 : f32
    %1077 = vector.broadcast %cst_138 : f32 to vector<8x128xf32>
    %1078 = arith.maximumf %1076, %1077 : vector<8x128xf32>
    %1079 = vector.extract_strided_slice %1001 {offsets = [0, 1408], sizes = [8, 128], strides = [1, 1]} : vector<8x2048xf32> to vector<8x128xf32>
    %1080 = vector.broadcast %867 : vector<1x128xf32> to vector<8x128xf32>
    %1081 = arith.mulf %1079, %1080 : vector<8x128xf32>
    %1082 = vector.broadcast %869 : vector<1x128xf32> to vector<8x128xf32>
    %1083 = arith.addf %1081, %1082 : vector<8x128xf32>
    %cst_139 = arith.constant 0.000000e+00 : f32
    %1084 = vector.broadcast %cst_139 : f32 to vector<8x128xf32>
    %1085 = arith.maximumf %1083, %1084 : vector<8x128xf32>
    %1086 = vector.extract_strided_slice %1001 {offsets = [0, 1536], sizes = [8, 128], strides = [1, 1]} : vector<8x2048xf32> to vector<8x128xf32>
    %1087 = vector.broadcast %867 : vector<1x128xf32> to vector<8x128xf32>
    %1088 = arith.mulf %1086, %1087 : vector<8x128xf32>
    %1089 = vector.broadcast %869 : vector<1x128xf32> to vector<8x128xf32>
    %1090 = arith.addf %1088, %1089 : vector<8x128xf32>
    %cst_140 = arith.constant 0.000000e+00 : f32
    %1091 = vector.broadcast %cst_140 : f32 to vector<8x128xf32>
    %1092 = arith.maximumf %1090, %1091 : vector<8x128xf32>
    %1093 = vector.extract_strided_slice %1001 {offsets = [0, 1664], sizes = [8, 128], strides = [1, 1]} : vector<8x2048xf32> to vector<8x128xf32>
    %1094 = vector.broadcast %867 : vector<1x128xf32> to vector<8x128xf32>
    %1095 = arith.mulf %1093, %1094 : vector<8x128xf32>
    %1096 = vector.broadcast %869 : vector<1x128xf32> to vector<8x128xf32>
    %1097 = arith.addf %1095, %1096 : vector<8x128xf32>
    %cst_141 = arith.constant 0.000000e+00 : f32
    %1098 = vector.broadcast %cst_141 : f32 to vector<8x128xf32>
    %1099 = arith.maximumf %1097, %1098 : vector<8x128xf32>
    %1100 = vector.extract_strided_slice %1001 {offsets = [0, 1792], sizes = [8, 128], strides = [1, 1]} : vector<8x2048xf32> to vector<8x128xf32>
    %1101 = vector.broadcast %867 : vector<1x128xf32> to vector<8x128xf32>
    %1102 = arith.mulf %1100, %1101 : vector<8x128xf32>
    %1103 = vector.broadcast %869 : vector<1x128xf32> to vector<8x128xf32>
    %1104 = arith.addf %1102, %1103 : vector<8x128xf32>
    %cst_142 = arith.constant 0.000000e+00 : f32
    %1105 = vector.broadcast %cst_142 : f32 to vector<8x128xf32>
    %1106 = arith.maximumf %1104, %1105 : vector<8x128xf32>
    %1107 = vector.extract_strided_slice %1001 {offsets = [0, 1920], sizes = [8, 128], strides = [1, 1]} : vector<8x2048xf32> to vector<8x128xf32>
    %1108 = vector.broadcast %867 : vector<1x128xf32> to vector<8x128xf32>
    %1109 = arith.mulf %1107, %1108 : vector<8x128xf32>
    %1110 = vector.broadcast %869 : vector<1x128xf32> to vector<8x128xf32>
    %1111 = arith.addf %1109, %1110 : vector<8x128xf32>
    %cst_143 = arith.constant 0.000000e+00 : f32
    %1112 = vector.broadcast %cst_143 : f32 to vector<8x128xf32>
    %1113 = arith.maximumf %1111, %1112 : vector<8x128xf32>
    %1114 = tpu.concatenate %1008, %1015, %1022, %1029, %1036, %1043, %1050, %1057, %1064, %1071, %1078, %1085, %1092, %1099, %1106, %1113 in 0 : vector<8x128xf32>, vector<8x128xf32>, vector<8x128xf32>, vector<8x128xf32>, vector<8x128xf32>, vector<8x128xf32>, vector<8x128xf32>, vector<8x128xf32>, vector<8x128xf32>, vector<8x128xf32>, vector<8x128xf32>, vector<8x128xf32>, vector<8x128xf32>, vector<8x128xf32>, vector<8x128xf32>, vector<8x128xf32> -> vector<128x128xf32>
    %1115 = arith.truncf %1114 : vector<128x128xf32> to vector<128x128xbf16>
    %cst_144 = arith.constant dense<0.000000e+00> : vector<128x128xf32>
    %1116 = tpu.matmul %1115, %9, %cst_144 {dimension_numbers = #tpu.dot_dimension_numbers<[1], [0], [0], [1], [0, 0, 1, 1], [], []>} : vector<128x128xbf16>, vector<128x128xbf16>, vector<128x128xf32> -> vector<128x128xf32>
    %1117 = vector.broadcast %6 : vector<1x128xf32> to vector<128x128xf32>
    %1118 = arith.addf %1116, %1117 : vector<128x128xf32>
    %cst_145 = arith.constant 5.000000e-01 : f32
    %1119 = vector.broadcast %cst_145 : f32 to vector<128x128xf32>
    %1120 = arith.mulf %1118, %1119 : vector<128x128xf32>
    %1121 = math.tanh %1120 : vector<128x128xf32>
    %cst_146 = arith.constant 5.000000e-01 : f32
    %1122 = vector.broadcast %cst_146 : f32 to vector<128x128xf32>
    %1123 = arith.mulf %1121, %1122 : vector<128x128xf32>
    %cst_147 = arith.constant 5.000000e-01 : f32
    %1124 = vector.broadcast %cst_147 : f32 to vector<128x128xf32>
    %1125 = arith.addf %1123, %1124 : vector<128x128xf32>
    %1126 = arith.truncf %1125 : vector<128x128xf32> to vector<128x128xbf16>
    %c128 = arith.constant 128 : index
    %c0_148 = arith.constant 0 : index
    %1127 = vector.load %arg6[%c128, %c0_148] : memref<896x128xbf16, #tpu.memory_space<vmem>>, vector<128x128xbf16>
    tpu.vector_store %arg6[%c128, %c0_148], %1126 {strides = array<i32>} : memref<896x128xbf16, #tpu.memory_space<vmem>>, vector<128x128xbf16>,
    %c16_149 = arith.constant 16 : index
    %c0_150 = arith.constant 0 : index
    %1128 = vector.load %arg7[%c16_149, %c0_150] : memref<56x128xf32, #tpu.memory_space<vmem>>, vector<8x128xf32>
    %1129 = arith.truncf %1128 : vector<8x128xf32> to vector<8x128xbf16>
    %cst_151 = arith.constant dense<0.000000e+00> : vector<8x2048xf32>
    %1130 = tpu.matmul %1129, %8, %cst_151 {dimension_numbers = #tpu.dot_dimension_numbers<[1], [0], [0], [1], [0, 0, 1, 1], [], []>} : vector<8x128xbf16>, vector<128x2048xbf16>, vector<8x2048xf32> -> vector<8x2048xf32>
    %1131 = vector.extract_strided_slice %1130 {offsets = [0, 0], sizes = [8, 128], strides = [1, 1]} : vector<8x2048xf32> to vector<8x128xf32>
    %1132 = vector.broadcast %867 : vector<1x128xf32> to vector<8x128xf32>
    %1133 = arith.mulf %1131, %1132 : vector<8x128xf32>
    %1134 = vector.broadcast %869 : vector<1x128xf32> to vector<8x128xf32>
    %1135 = arith.addf %1133, %1134 : vector<8x128xf32>
    %cst_152 = arith.constant 0.000000e+00 : f32
    %1136 = vector.broadcast %cst_152 : f32 to vector<8x128xf32>
    %1137 = arith.maximumf %1135, %1136 : vector<8x128xf32>
    %1138 = vector.extract_strided_slice %1130 {offsets = [0, 128], sizes = [8, 128], strides = [1, 1]} : vector<8x2048xf32> to vector<8x128xf32>
    %1139 = vector.broadcast %867 : vector<1x128xf32> to vector<8x128xf32>
    %1140 = arith.mulf %1138, %1139 : vector<8x128xf32>
    %1141 = vector.broadcast %869 : vector<1x128xf32> to vector<8x128xf32>
    %1142 = arith.addf %1140, %1141 : vector<8x128xf32>
    %cst_153 = arith.constant 0.000000e+00 : f32
    %1143 = vector.broadcast %cst_153 : f32 to vector<8x128xf32>
    %1144 = arith.maximumf %1142, %1143 : vector<8x128xf32>
    %1145 = vector.extract_strided_slice %1130 {offsets = [0, 256], sizes = [8, 128], strides = [1, 1]} : vector<8x2048xf32> to vector<8x128xf32>
    %1146 = vector.broadcast %867 : vector<1x128xf32> to vector<8x128xf32>
    %1147 = arith.mulf %1145, %1146 : vector<8x128xf32>
    %1148 = vector.broadcast %869 : vector<1x128xf32> to vector<8x128xf32>
    %1149 = arith.addf %1147, %1148 : vector<8x128xf32>
    %cst_154 = arith.constant 0.000000e+00 : f32
    %1150 = vector.broadcast %cst_154 : f32 to vector<8x128xf32>
    %1151 = arith.maximumf %1149, %1150 : vector<8x128xf32>
    %1152 = vector.extract_strided_slice %1130 {offsets = [0, 384], sizes = [8, 128], strides = [1, 1]} : vector<8x2048xf32> to vector<8x128xf32>
    %1153 = vector.broadcast %867 : vector<1x128xf32> to vector<8x128xf32>
    %1154 = arith.mulf %1152, %1153 : vector<8x128xf32>
    %1155 = vector.broadcast %869 : vector<1x128xf32> to vector<8x128xf32>
    %1156 = arith.addf %1154, %1155 : vector<8x128xf32>
    %cst_155 = arith.constant 0.000000e+00 : f32
    %1157 = vector.broadcast %cst_155 : f32 to vector<8x128xf32>
    %1158 = arith.maximumf %1156, %1157 : vector<8x128xf32>
    %1159 = vector.extract_strided_slice %1130 {offsets = [0, 512], sizes = [8, 128], strides = [1, 1]} : vector<8x2048xf32> to vector<8x128xf32>
    %1160 = vector.broadcast %867 : vector<1x128xf32> to vector<8x128xf32>
    %1161 = arith.mulf %1159, %1160 : vector<8x128xf32>
    %1162 = vector.broadcast %869 : vector<1x128xf32> to vector<8x128xf32>
    %1163 = arith.addf %1161, %1162 : vector<8x128xf32>
    %cst_156 = arith.constant 0.000000e+00 : f32
    %1164 = vector.broadcast %cst_156 : f32 to vector<8x128xf32>
    %1165 = arith.maximumf %1163, %1164 : vector<8x128xf32>
    %1166 = vector.extract_strided_slice %1130 {offsets = [0, 640], sizes = [8, 128], strides = [1, 1]} : vector<8x2048xf32> to vector<8x128xf32>
    %1167 = vector.broadcast %867 : vector<1x128xf32> to vector<8x128xf32>
    %1168 = arith.mulf %1166, %1167 : vector<8x128xf32>
    %1169 = vector.broadcast %869 : vector<1x128xf32> to vector<8x128xf32>
    %1170 = arith.addf %1168, %1169 : vector<8x128xf32>
    %cst_157 = arith.constant 0.000000e+00 : f32
    %1171 = vector.broadcast %cst_157 : f32 to vector<8x128xf32>
    %1172 = arith.maximumf %1170, %1171 : vector<8x128xf32>
    %1173 = vector.extract_strided_slice %1130 {offsets = [0, 768], sizes = [8, 128], strides = [1, 1]} : vector<8x2048xf32> to vector<8x128xf32>
    %1174 = vector.broadcast %867 : vector<1x128xf32> to vector<8x128xf32>
    %1175 = arith.mulf %1173, %1174 : vector<8x128xf32>
    %1176 = vector.broadcast %869 : vector<1x128xf32> to vector<8x128xf32>
    %1177 = arith.addf %1175, %1176 : vector<8x128xf32>
    %cst_158 = arith.constant 0.000000e+00 : f32
    %1178 = vector.broadcast %cst_158 : f32 to vector<8x128xf32>
    %1179 = arith.maximumf %1177, %1178 : vector<8x128xf32>
    %1180 = vector.extract_strided_slice %1130 {offsets = [0, 896], sizes = [8, 128], strides = [1, 1]} : vector<8x2048xf32> to vector<8x128xf32>
    %1181 = vector.broadcast %867 : vector<1x128xf32> to vector<8x128xf32>
    %1182 = arith.mulf %1180, %1181 : vector<8x128xf32>
    %1183 = vector.broadcast %869 : vector<1x128xf32> to vector<8x128xf32>
    %1184 = arith.addf %1182, %1183 : vector<8x128xf32>
    %cst_159 = arith.constant 0.000000e+00 : f32
    %1185 = vector.broadcast %cst_159 : f32 to vector<8x128xf32>
    %1186 = arith.maximumf %1184, %1185 : vector<8x128xf32>
    %1187 = vector.extract_strided_slice %1130 {offsets = [0, 1024], sizes = [8, 128], strides = [1, 1]} : vector<8x2048xf32> to vector<8x128xf32>
    %1188 = vector.broadcast %867 : vector<1x128xf32> to vector<8x128xf32>
    %1189 = arith.mulf %1187, %1188 : vector<8x128xf32>
    %1190 = vector.broadcast %869 : vector<1x128xf32> to vector<8x128xf32>
    %1191 = arith.addf %1189, %1190 : vector<8x128xf32>
    %cst_160 = arith.constant 0.000000e+00 : f32
    %1192 = vector.broadcast %cst_160 : f32 to vector<8x128xf32>
    %1193 = arith.maximumf %1191, %1192 : vector<8x128xf32>
    %1194 = vector.extract_strided_slice %1130 {offsets = [0, 1152], sizes = [8, 128], strides = [1, 1]} : vector<8x2048xf32> to vector<8x128xf32>
    %1195 = vector.broadcast %867 : vector<1x128xf32> to vector<8x128xf32>
    %1196 = arith.mulf %1194, %1195 : vector<8x128xf32>
    %1197 = vector.broadcast %869 : vector<1x128xf32> to vector<8x128xf32>
    %1198 = arith.addf %1196, %1197 : vector<8x128xf32>
    %cst_161 = arith.constant 0.000000e+00 : f32
    %1199 = vector.broadcast %cst_161 : f32 to vector<8x128xf32>
    %1200 = arith.maximumf %1198, %1199 : vector<8x128xf32>
    %1201 = vector.extract_strided_slice %1130 {offsets = [0, 1280], sizes = [8, 128], strides = [1, 1]} : vector<8x2048xf32> to vector<8x128xf32>
    %1202 = vector.broadcast %867 : vector<1x128xf32> to vector<8x128xf32>
    %1203 = arith.mulf %1201, %1202 : vector<8x128xf32>
    %1204 = vector.broadcast %869 : vector<1x128xf32> to vector<8x128xf32>
    %1205 = arith.addf %1203, %1204 : vector<8x128xf32>
    %cst_162 = arith.constant 0.000000e+00 : f32
    %1206 = vector.broadcast %cst_162 : f32 to vector<8x128xf32>
    %1207 = arith.maximumf %1205, %1206 : vector<8x128xf32>
    %1208 = vector.extract_strided_slice %1130 {offsets = [0, 1408], sizes = [8, 128], strides = [1, 1]} : vector<8x2048xf32> to vector<8x128xf32>
    %1209 = vector.broadcast %867 : vector<1x128xf32> to vector<8x128xf32>
    %1210 = arith.mulf %1208, %1209 : vector<8x128xf32>
    %1211 = vector.broadcast %869 : vector<1x128xf32> to vector<8x128xf32>
    %1212 = arith.addf %1210, %1211 : vector<8x128xf32>
    %cst_163 = arith.constant 0.000000e+00 : f32
    %1213 = vector.broadcast %cst_163 : f32 to vector<8x128xf32>
    %1214 = arith.maximumf %1212, %1213 : vector<8x128xf32>
    %1215 = vector.extract_strided_slice %1130 {offsets = [0, 1536], sizes = [8, 128], strides = [1, 1]} : vector<8x2048xf32> to vector<8x128xf32>
    %1216 = vector.broadcast %867 : vector<1x128xf32> to vector<8x128xf32>
    %1217 = arith.mulf %1215, %1216 : vector<8x128xf32>
    %1218 = vector.broadcast %869 : vector<1x128xf32> to vector<8x128xf32>
    %1219 = arith.addf %1217, %1218 : vector<8x128xf32>
    %cst_164 = arith.constant 0.000000e+00 : f32
    %1220 = vector.broadcast %cst_164 : f32 to vector<8x128xf32>
    %1221 = arith.maximumf %1219, %1220 : vector<8x128xf32>
    %1222 = vector.extract_strided_slice %1130 {offsets = [0, 1664], sizes = [8, 128], strides = [1, 1]} : vector<8x2048xf32> to vector<8x128xf32>
    %1223 = vector.broadcast %867 : vector<1x128xf32> to vector<8x128xf32>
    %1224 = arith.mulf %1222, %1223 : vector<8x128xf32>
    %1225 = vector.broadcast %869 : vector<1x128xf32> to vector<8x128xf32>
    %1226 = arith.addf %1224, %1225 : vector<8x128xf32>
    %cst_165 = arith.constant 0.000000e+00 : f32
    %1227 = vector.broadcast %cst_165 : f32 to vector<8x128xf32>
    %1228 = arith.maximumf %1226, %1227 : vector<8x128xf32>
    %1229 = vector.extract_strided_slice %1130 {offsets = [0, 1792], sizes = [8, 128], strides = [1, 1]} : vector<8x2048xf32> to vector<8x128xf32>
    %1230 = vector.broadcast %867 : vector<1x128xf32> to vector<8x128xf32>
    %1231 = arith.mulf %1229, %1230 : vector<8x128xf32>
    %1232 = vector.broadcast %869 : vector<1x128xf32> to vector<8x128xf32>
    %1233 = arith.addf %1231, %1232 : vector<8x128xf32>
    %cst_166 = arith.constant 0.000000e+00 : f32
    %1234 = vector.broadcast %cst_166 : f32 to vector<8x128xf32>
    %1235 = arith.maximumf %1233, %1234 : vector<8x128xf32>
    %1236 = vector.extract_strided_slice %1130 {offsets = [0, 1920], sizes = [8, 128], strides = [1, 1]} : vector<8x2048xf32> to vector<8x128xf32>
    %1237 = vector.broadcast %867 : vector<1x128xf32> to vector<8x128xf32>
    %1238 = arith.mulf %1236, %1237 : vector<8x128xf32>
    %1239 = vector.broadcast %869 : vector<1x128xf32> to vector<8x128xf32>
    %1240 = arith.addf %1238, %1239 : vector<8x128xf32>
    %cst_167 = arith.constant 0.000000e+00 : f32
    %1241 = vector.broadcast %cst_167 : f32 to vector<8x128xf32>
    %1242 = arith.maximumf %1240, %1241 : vector<8x128xf32>
    %1243 = tpu.concatenate %1137, %1144, %1151, %1158, %1165, %1172, %1179, %1186, %1193, %1200, %1207, %1214, %1221, %1228, %1235, %1242 in 0 : vector<8x128xf32>, vector<8x128xf32>, vector<8x128xf32>, vector<8x128xf32>, vector<8x128xf32>, vector<8x128xf32>, vector<8x128xf32>, vector<8x128xf32>, vector<8x128xf32>, vector<8x128xf32>, vector<8x128xf32>, vector<8x128xf32>, vector<8x128xf32>, vector<8x128xf32>, vector<8x128xf32>, vector<8x128xf32> -> vector<128x128xf32>
    %1244 = arith.truncf %1243 : vector<128x128xf32> to vector<128x128xbf16>
    %cst_168 = arith.constant dense<0.000000e+00> : vector<128x128xf32>
    %1245 = tpu.matmul %1244, %9, %cst_168 {dimension_numbers = #tpu.dot_dimension_numbers<[1], [0], [0], [1], [0, 0, 1, 1], [], []>} : vector<128x128xbf16>, vector<128x128xbf16>, vector<128x128xf32> -> vector<128x128xf32>
    %1246 = vector.broadcast %6 : vector<1x128xf32> to vector<128x128xf32>
    %1247 = arith.addf %1245, %1246 : vector<128x128xf32>
    %cst_169 = arith.constant 5.000000e-01 : f32
    %1248 = vector.broadcast %cst_169 : f32 to vector<128x128xf32>
    %1249 = arith.mulf %1247, %1248 : vector<128x128xf32>
    %1250 = math.tanh %1249 : vector<128x128xf32>
    %cst_170 = arith.constant 5.000000e-01 : f32
    %1251 = vector.broadcast %cst_170 : f32 to vector<128x128xf32>
    %1252 = arith.mulf %1250, %1251 : vector<128x128xf32>
    %cst_171 = arith.constant 5.000000e-01 : f32
    %1253 = vector.broadcast %cst_171 : f32 to vector<128x128xf32>
    %1254 = arith.addf %1252, %1253 : vector<128x128xf32>
    %1255 = arith.truncf %1254 : vector<128x128xf32> to vector<128x128xbf16>
    %c256 = arith.constant 256 : index
    %c0_172 = arith.constant 0 : index
    %1256 = vector.load %arg6[%c256, %c0_172] : memref<896x128xbf16, #tpu.memory_space<vmem>>, vector<128x128xbf16>
    tpu.vector_store %arg6[%c256, %c0_172], %1255 {strides = array<i32>} : memref<896x128xbf16, #tpu.memory_space<vmem>>, vector<128x128xbf16>,
    %c24_173 = arith.constant 24 : index
    %c0_174 = arith.constant 0 : index
    %1257 = vector.load %arg7[%c24_173, %c0_174] : memref<56x128xf32, #tpu.memory_space<vmem>>, vector<8x128xf32>
    %1258 = arith.truncf %1257 : vector<8x128xf32> to vector<8x128xbf16>
    %cst_175 = arith.constant dense<0.000000e+00> : vector<8x2048xf32>
    %1259 = tpu.matmul %1258, %8, %cst_175 {dimension_numbers = #tpu.dot_dimension_numbers<[1], [0], [0], [1], [0, 0, 1, 1], [], []>} : vector<8x128xbf16>, vector<128x2048xbf16>, vector<8x2048xf32> -> vector<8x2048xf32>
    %1260 = vector.extract_strided_slice %1259 {offsets = [0, 0], sizes = [8, 128], strides = [1, 1]} : vector<8x2048xf32> to vector<8x128xf32>
    %1261 = vector.broadcast %867 : vector<1x128xf32> to vector<8x128xf32>
    %1262 = arith.mulf %1260, %1261 : vector<8x128xf32>
    %1263 = vector.broadcast %869 : vector<1x128xf32> to vector<8x128xf32>
    %1264 = arith.addf %1262, %1263 : vector<8x128xf32>
    %cst_176 = arith.constant 0.000000e+00 : f32
    %1265 = vector.broadcast %cst_176 : f32 to vector<8x128xf32>
    %1266 = arith.maximumf %1264, %1265 : vector<8x128xf32>
    %1267 = vector.extract_strided_slice %1259 {offsets = [0, 128], sizes = [8, 128], strides = [1, 1]} : vector<8x2048xf32> to vector<8x128xf32>
    %1268 = vector.broadcast %867 : vector<1x128xf32> to vector<8x128xf32>
    %1269 = arith.mulf %1267, %1268 : vector<8x128xf32>
    %1270 = vector.broadcast %869 : vector<1x128xf32> to vector<8x128xf32>
    %1271 = arith.addf %1269, %1270 : vector<8x128xf32>
    %cst_177 = arith.constant 0.000000e+00 : f32
    %1272 = vector.broadcast %cst_177 : f32 to vector<8x128xf32>
    %1273 = arith.maximumf %1271, %1272 : vector<8x128xf32>
    %1274 = vector.extract_strided_slice %1259 {offsets = [0, 256], sizes = [8, 128], strides = [1, 1]} : vector<8x2048xf32> to vector<8x128xf32>
    %1275 = vector.broadcast %867 : vector<1x128xf32> to vector<8x128xf32>
    %1276 = arith.mulf %1274, %1275 : vector<8x128xf32>
    %1277 = vector.broadcast %869 : vector<1x128xf32> to vector<8x128xf32>
    %1278 = arith.addf %1276, %1277 : vector<8x128xf32>
    %cst_178 = arith.constant 0.000000e+00 : f32
    %1279 = vector.broadcast %cst_178 : f32 to vector<8x128xf32>
    %1280 = arith.maximumf %1278, %1279 : vector<8x128xf32>
    %1281 = vector.extract_strided_slice %1259 {offsets = [0, 384], sizes = [8, 128], strides = [1, 1]} : vector<8x2048xf32> to vector<8x128xf32>
    %1282 = vector.broadcast %867 : vector<1x128xf32> to vector<8x128xf32>
    %1283 = arith.mulf %1281, %1282 : vector<8x128xf32>
    %1284 = vector.broadcast %869 : vector<1x128xf32> to vector<8x128xf32>
    %1285 = arith.addf %1283, %1284 : vector<8x128xf32>
    %cst_179 = arith.constant 0.000000e+00 : f32
    %1286 = vector.broadcast %cst_179 : f32 to vector<8x128xf32>
    %1287 = arith.maximumf %1285, %1286 : vector<8x128xf32>
    %1288 = vector.extract_strided_slice %1259 {offsets = [0, 512], sizes = [8, 128], strides = [1, 1]} : vector<8x2048xf32> to vector<8x128xf32>
    %1289 = vector.broadcast %867 : vector<1x128xf32> to vector<8x128xf32>
    %1290 = arith.mulf %1288, %1289 : vector<8x128xf32>
    %1291 = vector.broadcast %869 : vector<1x128xf32> to vector<8x128xf32>
    %1292 = arith.addf %1290, %1291 : vector<8x128xf32>
    %cst_180 = arith.constant 0.000000e+00 : f32
    %1293 = vector.broadcast %cst_180 : f32 to vector<8x128xf32>
    %1294 = arith.maximumf %1292, %1293 : vector<8x128xf32>
    %1295 = vector.extract_strided_slice %1259 {offsets = [0, 640], sizes = [8, 128], strides = [1, 1]} : vector<8x2048xf32> to vector<8x128xf32>
    %1296 = vector.broadcast %867 : vector<1x128xf32> to vector<8x128xf32>
    %1297 = arith.mulf %1295, %1296 : vector<8x128xf32>
    %1298 = vector.broadcast %869 : vector<1x128xf32> to vector<8x128xf32>
    %1299 = arith.addf %1297, %1298 : vector<8x128xf32>
    %cst_181 = arith.constant 0.000000e+00 : f32
    %1300 = vector.broadcast %cst_181 : f32 to vector<8x128xf32>
    %1301 = arith.maximumf %1299, %1300 : vector<8x128xf32>
    %1302 = vector.extract_strided_slice %1259 {offsets = [0, 768], sizes = [8, 128], strides = [1, 1]} : vector<8x2048xf32> to vector<8x128xf32>
    %1303 = vector.broadcast %867 : vector<1x128xf32> to vector<8x128xf32>
    %1304 = arith.mulf %1302, %1303 : vector<8x128xf32>
    %1305 = vector.broadcast %869 : vector<1x128xf32> to vector<8x128xf32>
    %1306 = arith.addf %1304, %1305 : vector<8x128xf32>
    %cst_182 = arith.constant 0.000000e+00 : f32
    %1307 = vector.broadcast %cst_182 : f32 to vector<8x128xf32>
    %1308 = arith.maximumf %1306, %1307 : vector<8x128xf32>
    %1309 = vector.extract_strided_slice %1259 {offsets = [0, 896], sizes = [8, 128], strides = [1, 1]} : vector<8x2048xf32> to vector<8x128xf32>
    %1310 = vector.broadcast %867 : vector<1x128xf32> to vector<8x128xf32>
    %1311 = arith.mulf %1309, %1310 : vector<8x128xf32>
    %1312 = vector.broadcast %869 : vector<1x128xf32> to vector<8x128xf32>
    %1313 = arith.addf %1311, %1312 : vector<8x128xf32>
    %cst_183 = arith.constant 0.000000e+00 : f32
    %1314 = vector.broadcast %cst_183 : f32 to vector<8x128xf32>
    %1315 = arith.maximumf %1313, %1314 : vector<8x128xf32>
    %1316 = vector.extract_strided_slice %1259 {offsets = [0, 1024], sizes = [8, 128], strides = [1, 1]} : vector<8x2048xf32> to vector<8x128xf32>
    %1317 = vector.broadcast %867 : vector<1x128xf32> to vector<8x128xf32>
    %1318 = arith.mulf %1316, %1317 : vector<8x128xf32>
    %1319 = vector.broadcast %869 : vector<1x128xf32> to vector<8x128xf32>
    %1320 = arith.addf %1318, %1319 : vector<8x128xf32>
    %cst_184 = arith.constant 0.000000e+00 : f32
    %1321 = vector.broadcast %cst_184 : f32 to vector<8x128xf32>
    %1322 = arith.maximumf %1320, %1321 : vector<8x128xf32>
    %1323 = vector.extract_strided_slice %1259 {offsets = [0, 1152], sizes = [8, 128], strides = [1, 1]} : vector<8x2048xf32> to vector<8x128xf32>
    %1324 = vector.broadcast %867 : vector<1x128xf32> to vector<8x128xf32>
    %1325 = arith.mulf %1323, %1324 : vector<8x128xf32>
    %1326 = vector.broadcast %869 : vector<1x128xf32> to vector<8x128xf32>
    %1327 = arith.addf %1325, %1326 : vector<8x128xf32>
    %cst_185 = arith.constant 0.000000e+00 : f32
    %1328 = vector.broadcast %cst_185 : f32 to vector<8x128xf32>
    %1329 = arith.maximumf %1327, %1328 : vector<8x128xf32>
    %1330 = vector.extract_strided_slice %1259 {offsets = [0, 1280], sizes = [8, 128], strides = [1, 1]} : vector<8x2048xf32> to vector<8x128xf32>
    %1331 = vector.broadcast %867 : vector<1x128xf32> to vector<8x128xf32>
    %1332 = arith.mulf %1330, %1331 : vector<8x128xf32>
    %1333 = vector.broadcast %869 : vector<1x128xf32> to vector<8x128xf32>
    %1334 = arith.addf %1332, %1333 : vector<8x128xf32>
    %cst_186 = arith.constant 0.000000e+00 : f32
    %1335 = vector.broadcast %cst_186 : f32 to vector<8x128xf32>
    %1336 = arith.maximumf %1334, %1335 : vector<8x128xf32>
    %1337 = vector.extract_strided_slice %1259 {offsets = [0, 1408], sizes = [8, 128], strides = [1, 1]} : vector<8x2048xf32> to vector<8x128xf32>
    %1338 = vector.broadcast %867 : vector<1x128xf32> to vector<8x128xf32>
    %1339 = arith.mulf %1337, %1338 : vector<8x128xf32>
    %1340 = vector.broadcast %869 : vector<1x128xf32> to vector<8x128xf32>
    %1341 = arith.addf %1339, %1340 : vector<8x128xf32>
    %cst_187 = arith.constant 0.000000e+00 : f32
    %1342 = vector.broadcast %cst_187 : f32 to vector<8x128xf32>
    %1343 = arith.maximumf %1341, %1342 : vector<8x128xf32>
    %1344 = vector.extract_strided_slice %1259 {offsets = [0, 1536], sizes = [8, 128], strides = [1, 1]} : vector<8x2048xf32> to vector<8x128xf32>
    %1345 = vector.broadcast %867 : vector<1x128xf32> to vector<8x128xf32>
    %1346 = arith.mulf %1344, %1345 : vector<8x128xf32>
    %1347 = vector.broadcast %869 : vector<1x128xf32> to vector<8x128xf32>
    %1348 = arith.addf %1346, %1347 : vector<8x128xf32>
    %cst_188 = arith.constant 0.000000e+00 : f32
    %1349 = vector.broadcast %cst_188 : f32 to vector<8x128xf32>
    %1350 = arith.maximumf %1348, %1349 : vector<8x128xf32>
    %1351 = vector.extract_strided_slice %1259 {offsets = [0, 1664], sizes = [8, 128], strides = [1, 1]} : vector<8x2048xf32> to vector<8x128xf32>
    %1352 = vector.broadcast %867 : vector<1x128xf32> to vector<8x128xf32>
    %1353 = arith.mulf %1351, %1352 : vector<8x128xf32>
    %1354 = vector.broadcast %869 : vector<1x128xf32> to vector<8x128xf32>
    %1355 = arith.addf %1353, %1354 : vector<8x128xf32>
    %cst_189 = arith.constant 0.000000e+00 : f32
    %1356 = vector.broadcast %cst_189 : f32 to vector<8x128xf32>
    %1357 = arith.maximumf %1355, %1356 : vector<8x128xf32>
    %1358 = vector.extract_strided_slice %1259 {offsets = [0, 1792], sizes = [8, 128], strides = [1, 1]} : vector<8x2048xf32> to vector<8x128xf32>
    %1359 = vector.broadcast %867 : vector<1x128xf32> to vector<8x128xf32>
    %1360 = arith.mulf %1358, %1359 : vector<8x128xf32>
    %1361 = vector.broadcast %869 : vector<1x128xf32> to vector<8x128xf32>
    %1362 = arith.addf %1360, %1361 : vector<8x128xf32>
    %cst_190 = arith.constant 0.000000e+00 : f32
    %1363 = vector.broadcast %cst_190 : f32 to vector<8x128xf32>
    %1364 = arith.maximumf %1362, %1363 : vector<8x128xf32>
    %1365 = vector.extract_strided_slice %1259 {offsets = [0, 1920], sizes = [8, 128], strides = [1, 1]} : vector<8x2048xf32> to vector<8x128xf32>
    %1366 = vector.broadcast %867 : vector<1x128xf32> to vector<8x128xf32>
    %1367 = arith.mulf %1365, %1366 : vector<8x128xf32>
    %1368 = vector.broadcast %869 : vector<1x128xf32> to vector<8x128xf32>
    %1369 = arith.addf %1367, %1368 : vector<8x128xf32>
    %cst_191 = arith.constant 0.000000e+00 : f32
    %1370 = vector.broadcast %cst_191 : f32 to vector<8x128xf32>
    %1371 = arith.maximumf %1369, %1370 : vector<8x128xf32>
    %1372 = tpu.concatenate %1266, %1273, %1280, %1287, %1294, %1301, %1308, %1315, %1322, %1329, %1336, %1343, %1350, %1357, %1364, %1371 in 0 : vector<8x128xf32>, vector<8x128xf32>, vector<8x128xf32>, vector<8x128xf32>, vector<8x128xf32>, vector<8x128xf32>, vector<8x128xf32>, vector<8x128xf32>, vector<8x128xf32>, vector<8x128xf32>, vector<8x128xf32>, vector<8x128xf32>, vector<8x128xf32>, vector<8x128xf32>, vector<8x128xf32>, vector<8x128xf32> -> vector<128x128xf32>
    %1373 = arith.truncf %1372 : vector<128x128xf32> to vector<128x128xbf16>
    %cst_192 = arith.constant dense<0.000000e+00> : vector<128x128xf32>
    %1374 = tpu.matmul %1373, %9, %cst_192 {dimension_numbers = #tpu.dot_dimension_numbers<[1], [0], [0], [1], [0, 0, 1, 1], [], []>} : vector<128x128xbf16>, vector<128x128xbf16>, vector<128x128xf32> -> vector<128x128xf32>
    %1375 = vector.broadcast %6 : vector<1x128xf32> to vector<128x128xf32>
    %1376 = arith.addf %1374, %1375 : vector<128x128xf32>
    %cst_193 = arith.constant 5.000000e-01 : f32
    %1377 = vector.broadcast %cst_193 : f32 to vector<128x128xf32>
    %1378 = arith.mulf %1376, %1377 : vector<128x128xf32>
    %1379 = math.tanh %1378 : vector<128x128xf32>
    %cst_194 = arith.constant 5.000000e-01 : f32
    %1380 = vector.broadcast %cst_194 : f32 to vector<128x128xf32>
    %1381 = arith.mulf %1379, %1380 : vector<128x128xf32>
    %cst_195 = arith.constant 5.000000e-01 : f32
    %1382 = vector.broadcast %cst_195 : f32 to vector<128x128xf32>
    %1383 = arith.addf %1381, %1382 : vector<128x128xf32>
    %1384 = arith.truncf %1383 : vector<128x128xf32> to vector<128x128xbf16>
    %c384 = arith.constant 384 : index
    %c0_196 = arith.constant 0 : index
    %1385 = vector.load %arg6[%c384, %c0_196] : memref<896x128xbf16, #tpu.memory_space<vmem>>, vector<128x128xbf16>
    tpu.vector_store %arg6[%c384, %c0_196], %1384 {strides = array<i32>} : memref<896x128xbf16, #tpu.memory_space<vmem>>, vector<128x128xbf16>,
    %c32_197 = arith.constant 32 : index
    %c0_198 = arith.constant 0 : index
    %1386 = vector.load %arg7[%c32_197, %c0_198] : memref<56x128xf32, #tpu.memory_space<vmem>>, vector<8x128xf32>
    %1387 = arith.truncf %1386 : vector<8x128xf32> to vector<8x128xbf16>
    %cst_199 = arith.constant dense<0.000000e+00> : vector<8x2048xf32>
    %1388 = tpu.matmul %1387, %8, %cst_199 {dimension_numbers = #tpu.dot_dimension_numbers<[1], [0], [0], [1], [0, 0, 1, 1], [], []>} : vector<8x128xbf16>, vector<128x2048xbf16>, vector<8x2048xf32> -> vector<8x2048xf32>
    %1389 = vector.extract_strided_slice %1388 {offsets = [0, 0], sizes = [8, 128], strides = [1, 1]} : vector<8x2048xf32> to vector<8x128xf32>
    %1390 = vector.broadcast %867 : vector<1x128xf32> to vector<8x128xf32>
    %1391 = arith.mulf %1389, %1390 : vector<8x128xf32>
    %1392 = vector.broadcast %869 : vector<1x128xf32> to vector<8x128xf32>
    %1393 = arith.addf %1391, %1392 : vector<8x128xf32>
    %cst_200 = arith.constant 0.000000e+00 : f32
    %1394 = vector.broadcast %cst_200 : f32 to vector<8x128xf32>
    %1395 = arith.maximumf %1393, %1394 : vector<8x128xf32>
    %1396 = vector.extract_strided_slice %1388 {offsets = [0, 128], sizes = [8, 128], strides = [1, 1]} : vector<8x2048xf32> to vector<8x128xf32>
    %1397 = vector.broadcast %867 : vector<1x128xf32> to vector<8x128xf32>
    %1398 = arith.mulf %1396, %1397 : vector<8x128xf32>
    %1399 = vector.broadcast %869 : vector<1x128xf32> to vector<8x128xf32>
    %1400 = arith.addf %1398, %1399 : vector<8x128xf32>
    %cst_201 = arith.constant 0.000000e+00 : f32
    %1401 = vector.broadcast %cst_201 : f32 to vector<8x128xf32>
    %1402 = arith.maximumf %1400, %1401 : vector<8x128xf32>
    %1403 = vector.extract_strided_slice %1388 {offsets = [0, 256], sizes = [8, 128], strides = [1, 1]} : vector<8x2048xf32> to vector<8x128xf32>
    %1404 = vector.broadcast %867 : vector<1x128xf32> to vector<8x128xf32>
    %1405 = arith.mulf %1403, %1404 : vector<8x128xf32>
    %1406 = vector.broadcast %869 : vector<1x128xf32> to vector<8x128xf32>
    %1407 = arith.addf %1405, %1406 : vector<8x128xf32>
    %cst_202 = arith.constant 0.000000e+00 : f32
    %1408 = vector.broadcast %cst_202 : f32 to vector<8x128xf32>
    %1409 = arith.maximumf %1407, %1408 : vector<8x128xf32>
    %1410 = vector.extract_strided_slice %1388 {offsets = [0, 384], sizes = [8, 128], strides = [1, 1]} : vector<8x2048xf32> to vector<8x128xf32>
    %1411 = vector.broadcast %867 : vector<1x128xf32> to vector<8x128xf32>
    %1412 = arith.mulf %1410, %1411 : vector<8x128xf32>
    %1413 = vector.broadcast %869 : vector<1x128xf32> to vector<8x128xf32>
    %1414 = arith.addf %1412, %1413 : vector<8x128xf32>
    %cst_203 = arith.constant 0.000000e+00 : f32
    %1415 = vector.broadcast %cst_203 : f32 to vector<8x128xf32>
    %1416 = arith.maximumf %1414, %1415 : vector<8x128xf32>
    %1417 = vector.extract_strided_slice %1388 {offsets = [0, 512], sizes = [8, 128], strides = [1, 1]} : vector<8x2048xf32> to vector<8x128xf32>
    %1418 = vector.broadcast %867 : vector<1x128xf32> to vector<8x128xf32>
    %1419 = arith.mulf %1417, %1418 : vector<8x128xf32>
    %1420 = vector.broadcast %869 : vector<1x128xf32> to vector<8x128xf32>
    %1421 = arith.addf %1419, %1420 : vector<8x128xf32>
    %cst_204 = arith.constant 0.000000e+00 : f32
    %1422 = vector.broadcast %cst_204 : f32 to vector<8x128xf32>
    %1423 = arith.maximumf %1421, %1422 : vector<8x128xf32>
    %1424 = vector.extract_strided_slice %1388 {offsets = [0, 640], sizes = [8, 128], strides = [1, 1]} : vector<8x2048xf32> to vector<8x128xf32>
    %1425 = vector.broadcast %867 : vector<1x128xf32> to vector<8x128xf32>
    %1426 = arith.mulf %1424, %1425 : vector<8x128xf32>
    %1427 = vector.broadcast %869 : vector<1x128xf32> to vector<8x128xf32>
    %1428 = arith.addf %1426, %1427 : vector<8x128xf32>
    %cst_205 = arith.constant 0.000000e+00 : f32
    %1429 = vector.broadcast %cst_205 : f32 to vector<8x128xf32>
    %1430 = arith.maximumf %1428, %1429 : vector<8x128xf32>
    %1431 = vector.extract_strided_slice %1388 {offsets = [0, 768], sizes = [8, 128], strides = [1, 1]} : vector<8x2048xf32> to vector<8x128xf32>
    %1432 = vector.broadcast %867 : vector<1x128xf32> to vector<8x128xf32>
    %1433 = arith.mulf %1431, %1432 : vector<8x128xf32>
    %1434 = vector.broadcast %869 : vector<1x128xf32> to vector<8x128xf32>
    %1435 = arith.addf %1433, %1434 : vector<8x128xf32>
    %cst_206 = arith.constant 0.000000e+00 : f32
    %1436 = vector.broadcast %cst_206 : f32 to vector<8x128xf32>
    %1437 = arith.maximumf %1435, %1436 : vector<8x128xf32>
    %1438 = vector.extract_strided_slice %1388 {offsets = [0, 896], sizes = [8, 128], strides = [1, 1]} : vector<8x2048xf32> to vector<8x128xf32>
    %1439 = vector.broadcast %867 : vector<1x128xf32> to vector<8x128xf32>
    %1440 = arith.mulf %1438, %1439 : vector<8x128xf32>
    %1441 = vector.broadcast %869 : vector<1x128xf32> to vector<8x128xf32>
    %1442 = arith.addf %1440, %1441 : vector<8x128xf32>
    %cst_207 = arith.constant 0.000000e+00 : f32
    %1443 = vector.broadcast %cst_207 : f32 to vector<8x128xf32>
    %1444 = arith.maximumf %1442, %1443 : vector<8x128xf32>
    %1445 = vector.extract_strided_slice %1388 {offsets = [0, 1024], sizes = [8, 128], strides = [1, 1]} : vector<8x2048xf32> to vector<8x128xf32>
    %1446 = vector.broadcast %867 : vector<1x128xf32> to vector<8x128xf32>
    %1447 = arith.mulf %1445, %1446 : vector<8x128xf32>
    %1448 = vector.broadcast %869 : vector<1x128xf32> to vector<8x128xf32>
    %1449 = arith.addf %1447, %1448 : vector<8x128xf32>
    %cst_208 = arith.constant 0.000000e+00 : f32
    %1450 = vector.broadcast %cst_208 : f32 to vector<8x128xf32>
    %1451 = arith.maximumf %1449, %1450 : vector<8x128xf32>
    %1452 = vector.extract_strided_slice %1388 {offsets = [0, 1152], sizes = [8, 128], strides = [1, 1]} : vector<8x2048xf32> to vector<8x128xf32>
    %1453 = vector.broadcast %867 : vector<1x128xf32> to vector<8x128xf32>
    %1454 = arith.mulf %1452, %1453 : vector<8x128xf32>
    %1455 = vector.broadcast %869 : vector<1x128xf32> to vector<8x128xf32>
    %1456 = arith.addf %1454, %1455 : vector<8x128xf32>
    %cst_209 = arith.constant 0.000000e+00 : f32
    %1457 = vector.broadcast %cst_209 : f32 to vector<8x128xf32>
    %1458 = arith.maximumf %1456, %1457 : vector<8x128xf32>
    %1459 = vector.extract_strided_slice %1388 {offsets = [0, 1280], sizes = [8, 128], strides = [1, 1]} : vector<8x2048xf32> to vector<8x128xf32>
    %1460 = vector.broadcast %867 : vector<1x128xf32> to vector<8x128xf32>
    %1461 = arith.mulf %1459, %1460 : vector<8x128xf32>
    %1462 = vector.broadcast %869 : vector<1x128xf32> to vector<8x128xf32>
    %1463 = arith.addf %1461, %1462 : vector<8x128xf32>
    %cst_210 = arith.constant 0.000000e+00 : f32
    %1464 = vector.broadcast %cst_210 : f32 to vector<8x128xf32>
    %1465 = arith.maximumf %1463, %1464 : vector<8x128xf32>
    %1466 = vector.extract_strided_slice %1388 {offsets = [0, 1408], sizes = [8, 128], strides = [1, 1]} : vector<8x2048xf32> to vector<8x128xf32>
    %1467 = vector.broadcast %867 : vector<1x128xf32> to vector<8x128xf32>
    %1468 = arith.mulf %1466, %1467 : vector<8x128xf32>
    %1469 = vector.broadcast %869 : vector<1x128xf32> to vector<8x128xf32>
    %1470 = arith.addf %1468, %1469 : vector<8x128xf32>
    %cst_211 = arith.constant 0.000000e+00 : f32
    %1471 = vector.broadcast %cst_211 : f32 to vector<8x128xf32>
    %1472 = arith.maximumf %1470, %1471 : vector<8x128xf32>
    %1473 = vector.extract_strided_slice %1388 {offsets = [0, 1536], sizes = [8, 128], strides = [1, 1]} : vector<8x2048xf32> to vector<8x128xf32>
    %1474 = vector.broadcast %867 : vector<1x128xf32> to vector<8x128xf32>
    %1475 = arith.mulf %1473, %1474 : vector<8x128xf32>
    %1476 = vector.broadcast %869 : vector<1x128xf32> to vector<8x128xf32>
    %1477 = arith.addf %1475, %1476 : vector<8x128xf32>
    %cst_212 = arith.constant 0.000000e+00 : f32
    %1478 = vector.broadcast %cst_212 : f32 to vector<8x128xf32>
    %1479 = arith.maximumf %1477, %1478 : vector<8x128xf32>
    %1480 = vector.extract_strided_slice %1388 {offsets = [0, 1664], sizes = [8, 128], strides = [1, 1]} : vector<8x2048xf32> to vector<8x128xf32>
    %1481 = vector.broadcast %867 : vector<1x128xf32> to vector<8x128xf32>
    %1482 = arith.mulf %1480, %1481 : vector<8x128xf32>
    %1483 = vector.broadcast %869 : vector<1x128xf32> to vector<8x128xf32>
    %1484 = arith.addf %1482, %1483 : vector<8x128xf32>
    %cst_213 = arith.constant 0.000000e+00 : f32
    %1485 = vector.broadcast %cst_213 : f32 to vector<8x128xf32>
    %1486 = arith.maximumf %1484, %1485 : vector<8x128xf32>
    %1487 = vector.extract_strided_slice %1388 {offsets = [0, 1792], sizes = [8, 128], strides = [1, 1]} : vector<8x2048xf32> to vector<8x128xf32>
    %1488 = vector.broadcast %867 : vector<1x128xf32> to vector<8x128xf32>
    %1489 = arith.mulf %1487, %1488 : vector<8x128xf32>
    %1490 = vector.broadcast %869 : vector<1x128xf32> to vector<8x128xf32>
    %1491 = arith.addf %1489, %1490 : vector<8x128xf32>
    %cst_214 = arith.constant 0.000000e+00 : f32
    %1492 = vector.broadcast %cst_214 : f32 to vector<8x128xf32>
    %1493 = arith.maximumf %1491, %1492 : vector<8x128xf32>
    %1494 = vector.extract_strided_slice %1388 {offsets = [0, 1920], sizes = [8, 128], strides = [1, 1]} : vector<8x2048xf32> to vector<8x128xf32>
    %1495 = vector.broadcast %867 : vector<1x128xf32> to vector<8x128xf32>
    %1496 = arith.mulf %1494, %1495 : vector<8x128xf32>
    %1497 = vector.broadcast %869 : vector<1x128xf32> to vector<8x128xf32>
    %1498 = arith.addf %1496, %1497 : vector<8x128xf32>
    %cst_215 = arith.constant 0.000000e+00 : f32
    %1499 = vector.broadcast %cst_215 : f32 to vector<8x128xf32>
    %1500 = arith.maximumf %1498, %1499 : vector<8x128xf32>
    %1501 = tpu.concatenate %1395, %1402, %1409, %1416, %1423, %1430, %1437, %1444, %1451, %1458, %1465, %1472, %1479, %1486, %1493, %1500 in 0 : vector<8x128xf32>, vector<8x128xf32>, vector<8x128xf32>, vector<8x128xf32>, vector<8x128xf32>, vector<8x128xf32>, vector<8x128xf32>, vector<8x128xf32>, vector<8x128xf32>, vector<8x128xf32>, vector<8x128xf32>, vector<8x128xf32>, vector<8x128xf32>, vector<8x128xf32>, vector<8x128xf32>, vector<8x128xf32> -> vector<128x128xf32>
    %1502 = arith.truncf %1501 : vector<128x128xf32> to vector<128x128xbf16>
    %cst_216 = arith.constant dense<0.000000e+00> : vector<128x128xf32>
    %1503 = tpu.matmul %1502, %9, %cst_216 {dimension_numbers = #tpu.dot_dimension_numbers<[1], [0], [0], [1], [0, 0, 1, 1], [], []>} : vector<128x128xbf16>, vector<128x128xbf16>, vector<128x128xf32> -> vector<128x128xf32>
    %1504 = vector.broadcast %6 : vector<1x128xf32> to vector<128x128xf32>
    %1505 = arith.addf %1503, %1504 : vector<128x128xf32>
    %cst_217 = arith.constant 5.000000e-01 : f32
    %1506 = vector.broadcast %cst_217 : f32 to vector<128x128xf32>
    %1507 = arith.mulf %1505, %1506 : vector<128x128xf32>
    %1508 = math.tanh %1507 : vector<128x128xf32>
    %cst_218 = arith.constant 5.000000e-01 : f32
    %1509 = vector.broadcast %cst_218 : f32 to vector<128x128xf32>
    %1510 = arith.mulf %1508, %1509 : vector<128x128xf32>
    %cst_219 = arith.constant 5.000000e-01 : f32
    %1511 = vector.broadcast %cst_219 : f32 to vector<128x128xf32>
    %1512 = arith.addf %1510, %1511 : vector<128x128xf32>
    %1513 = arith.truncf %1512 : vector<128x128xf32> to vector<128x128xbf16>
    %c512 = arith.constant 512 : index
    %c0_220 = arith.constant 0 : index
    %1514 = vector.load %arg6[%c512, %c0_220] : memref<896x128xbf16, #tpu.memory_space<vmem>>, vector<128x128xbf16>
    tpu.vector_store %arg6[%c512, %c0_220], %1513 {strides = array<i32>} : memref<896x128xbf16, #tpu.memory_space<vmem>>, vector<128x128xbf16>,
    %c40_221 = arith.constant 40 : index
    %c0_222 = arith.constant 0 : index
    %1515 = vector.load %arg7[%c40_221, %c0_222] : memref<56x128xf32, #tpu.memory_space<vmem>>, vector<8x128xf32>
    %1516 = arith.truncf %1515 : vector<8x128xf32> to vector<8x128xbf16>
    %cst_223 = arith.constant dense<0.000000e+00> : vector<8x2048xf32>
    %1517 = tpu.matmul %1516, %8, %cst_223 {dimension_numbers = #tpu.dot_dimension_numbers<[1], [0], [0], [1], [0, 0, 1, 1], [], []>} : vector<8x128xbf16>, vector<128x2048xbf16>, vector<8x2048xf32> -> vector<8x2048xf32>
    %1518 = vector.extract_strided_slice %1517 {offsets = [0, 0], sizes = [8, 128], strides = [1, 1]} : vector<8x2048xf32> to vector<8x128xf32>
    %1519 = vector.broadcast %867 : vector<1x128xf32> to vector<8x128xf32>
    %1520 = arith.mulf %1518, %1519 : vector<8x128xf32>
    %1521 = vector.broadcast %869 : vector<1x128xf32> to vector<8x128xf32>
    %1522 = arith.addf %1520, %1521 : vector<8x128xf32>
    %cst_224 = arith.constant 0.000000e+00 : f32
    %1523 = vector.broadcast %cst_224 : f32 to vector<8x128xf32>
    %1524 = arith.maximumf %1522, %1523 : vector<8x128xf32>
    %1525 = vector.extract_strided_slice %1517 {offsets = [0, 128], sizes = [8, 128], strides = [1, 1]} : vector<8x2048xf32> to vector<8x128xf32>
    %1526 = vector.broadcast %867 : vector<1x128xf32> to vector<8x128xf32>
    %1527 = arith.mulf %1525, %1526 : vector<8x128xf32>
    %1528 = vector.broadcast %869 : vector<1x128xf32> to vector<8x128xf32>
    %1529 = arith.addf %1527, %1528 : vector<8x128xf32>
    %cst_225 = arith.constant 0.000000e+00 : f32
    %1530 = vector.broadcast %cst_225 : f32 to vector<8x128xf32>
    %1531 = arith.maximumf %1529, %1530 : vector<8x128xf32>
    %1532 = vector.extract_strided_slice %1517 {offsets = [0, 256], sizes = [8, 128], strides = [1, 1]} : vector<8x2048xf32> to vector<8x128xf32>
    %1533 = vector.broadcast %867 : vector<1x128xf32> to vector<8x128xf32>
    %1534 = arith.mulf %1532, %1533 : vector<8x128xf32>
    %1535 = vector.broadcast %869 : vector<1x128xf32> to vector<8x128xf32>
    %1536 = arith.addf %1534, %1535 : vector<8x128xf32>
    %cst_226 = arith.constant 0.000000e+00 : f32
    %1537 = vector.broadcast %cst_226 : f32 to vector<8x128xf32>
    %1538 = arith.maximumf %1536, %1537 : vector<8x128xf32>
    %1539 = vector.extract_strided_slice %1517 {offsets = [0, 384], sizes = [8, 128], strides = [1, 1]} : vector<8x2048xf32> to vector<8x128xf32>
    %1540 = vector.broadcast %867 : vector<1x128xf32> to vector<8x128xf32>
    %1541 = arith.mulf %1539, %1540 : vector<8x128xf32>
    %1542 = vector.broadcast %869 : vector<1x128xf32> to vector<8x128xf32>
    %1543 = arith.addf %1541, %1542 : vector<8x128xf32>
    %cst_227 = arith.constant 0.000000e+00 : f32
    %1544 = vector.broadcast %cst_227 : f32 to vector<8x128xf32>
    %1545 = arith.maximumf %1543, %1544 : vector<8x128xf32>
    %1546 = vector.extract_strided_slice %1517 {offsets = [0, 512], sizes = [8, 128], strides = [1, 1]} : vector<8x2048xf32> to vector<8x128xf32>
    %1547 = vector.broadcast %867 : vector<1x128xf32> to vector<8x128xf32>
    %1548 = arith.mulf %1546, %1547 : vector<8x128xf32>
    %1549 = vector.broadcast %869 : vector<1x128xf32> to vector<8x128xf32>
    %1550 = arith.addf %1548, %1549 : vector<8x128xf32>
    %cst_228 = arith.constant 0.000000e+00 : f32
    %1551 = vector.broadcast %cst_228 : f32 to vector<8x128xf32>
    %1552 = arith.maximumf %1550, %1551 : vector<8x128xf32>
    %1553 = vector.extract_strided_slice %1517 {offsets = [0, 640], sizes = [8, 128], strides = [1, 1]} : vector<8x2048xf32> to vector<8x128xf32>
    %1554 = vector.broadcast %867 : vector<1x128xf32> to vector<8x128xf32>
    %1555 = arith.mulf %1553, %1554 : vector<8x128xf32>
    %1556 = vector.broadcast %869 : vector<1x128xf32> to vector<8x128xf32>
    %1557 = arith.addf %1555, %1556 : vector<8x128xf32>
    %cst_229 = arith.constant 0.000000e+00 : f32
    %1558 = vector.broadcast %cst_229 : f32 to vector<8x128xf32>
    %1559 = arith.maximumf %1557, %1558 : vector<8x128xf32>
    %1560 = vector.extract_strided_slice %1517 {offsets = [0, 768], sizes = [8, 128], strides = [1, 1]} : vector<8x2048xf32> to vector<8x128xf32>
    %1561 = vector.broadcast %867 : vector<1x128xf32> to vector<8x128xf32>
    %1562 = arith.mulf %1560, %1561 : vector<8x128xf32>
    %1563 = vector.broadcast %869 : vector<1x128xf32> to vector<8x128xf32>
    %1564 = arith.addf %1562, %1563 : vector<8x128xf32>
    %cst_230 = arith.constant 0.000000e+00 : f32
    %1565 = vector.broadcast %cst_230 : f32 to vector<8x128xf32>
    %1566 = arith.maximumf %1564, %1565 : vector<8x128xf32>
    %1567 = vector.extract_strided_slice %1517 {offsets = [0, 896], sizes = [8, 128], strides = [1, 1]} : vector<8x2048xf32> to vector<8x128xf32>
    %1568 = vector.broadcast %867 : vector<1x128xf32> to vector<8x128xf32>
    %1569 = arith.mulf %1567, %1568 : vector<8x128xf32>
    %1570 = vector.broadcast %869 : vector<1x128xf32> to vector<8x128xf32>
    %1571 = arith.addf %1569, %1570 : vector<8x128xf32>
    %cst_231 = arith.constant 0.000000e+00 : f32
    %1572 = vector.broadcast %cst_231 : f32 to vector<8x128xf32>
    %1573 = arith.maximumf %1571, %1572 : vector<8x128xf32>
    %1574 = vector.extract_strided_slice %1517 {offsets = [0, 1024], sizes = [8, 128], strides = [1, 1]} : vector<8x2048xf32> to vector<8x128xf32>
    %1575 = vector.broadcast %867 : vector<1x128xf32> to vector<8x128xf32>
    %1576 = arith.mulf %1574, %1575 : vector<8x128xf32>
    %1577 = vector.broadcast %869 : vector<1x128xf32> to vector<8x128xf32>
    %1578 = arith.addf %1576, %1577 : vector<8x128xf32>
    %cst_232 = arith.constant 0.000000e+00 : f32
    %1579 = vector.broadcast %cst_232 : f32 to vector<8x128xf32>
    %1580 = arith.maximumf %1578, %1579 : vector<8x128xf32>
    %1581 = vector.extract_strided_slice %1517 {offsets = [0, 1152], sizes = [8, 128], strides = [1, 1]} : vector<8x2048xf32> to vector<8x128xf32>
    %1582 = vector.broadcast %867 : vector<1x128xf32> to vector<8x128xf32>
    %1583 = arith.mulf %1581, %1582 : vector<8x128xf32>
    %1584 = vector.broadcast %869 : vector<1x128xf32> to vector<8x128xf32>
    %1585 = arith.addf %1583, %1584 : vector<8x128xf32>
    %cst_233 = arith.constant 0.000000e+00 : f32
    %1586 = vector.broadcast %cst_233 : f32 to vector<8x128xf32>
    %1587 = arith.maximumf %1585, %1586 : vector<8x128xf32>
    %1588 = vector.extract_strided_slice %1517 {offsets = [0, 1280], sizes = [8, 128], strides = [1, 1]} : vector<8x2048xf32> to vector<8x128xf32>
    %1589 = vector.broadcast %867 : vector<1x128xf32> to vector<8x128xf32>
    %1590 = arith.mulf %1588, %1589 : vector<8x128xf32>
    %1591 = vector.broadcast %869 : vector<1x128xf32> to vector<8x128xf32>
    %1592 = arith.addf %1590, %1591 : vector<8x128xf32>
    %cst_234 = arith.constant 0.000000e+00 : f32
    %1593 = vector.broadcast %cst_234 : f32 to vector<8x128xf32>
    %1594 = arith.maximumf %1592, %1593 : vector<8x128xf32>
    %1595 = vector.extract_strided_slice %1517 {offsets = [0, 1408], sizes = [8, 128], strides = [1, 1]} : vector<8x2048xf32> to vector<8x128xf32>
    %1596 = vector.broadcast %867 : vector<1x128xf32> to vector<8x128xf32>
    %1597 = arith.mulf %1595, %1596 : vector<8x128xf32>
    %1598 = vector.broadcast %869 : vector<1x128xf32> to vector<8x128xf32>
    %1599 = arith.addf %1597, %1598 : vector<8x128xf32>
    %cst_235 = arith.constant 0.000000e+00 : f32
    %1600 = vector.broadcast %cst_235 : f32 to vector<8x128xf32>
    %1601 = arith.maximumf %1599, %1600 : vector<8x128xf32>
    %1602 = vector.extract_strided_slice %1517 {offsets = [0, 1536], sizes = [8, 128], strides = [1, 1]} : vector<8x2048xf32> to vector<8x128xf32>
    %1603 = vector.broadcast %867 : vector<1x128xf32> to vector<8x128xf32>
    %1604 = arith.mulf %1602, %1603 : vector<8x128xf32>
    %1605 = vector.broadcast %869 : vector<1x128xf32> to vector<8x128xf32>
    %1606 = arith.addf %1604, %1605 : vector<8x128xf32>
    %cst_236 = arith.constant 0.000000e+00 : f32
    %1607 = vector.broadcast %cst_236 : f32 to vector<8x128xf32>
    %1608 = arith.maximumf %1606, %1607 : vector<8x128xf32>
    %1609 = vector.extract_strided_slice %1517 {offsets = [0, 1664], sizes = [8, 128], strides = [1, 1]} : vector<8x2048xf32> to vector<8x128xf32>
    %1610 = vector.broadcast %867 : vector<1x128xf32> to vector<8x128xf32>
    %1611 = arith.mulf %1609, %1610 : vector<8x128xf32>
    %1612 = vector.broadcast %869 : vector<1x128xf32> to vector<8x128xf32>
    %1613 = arith.addf %1611, %1612 : vector<8x128xf32>
    %cst_237 = arith.constant 0.000000e+00 : f32
    %1614 = vector.broadcast %cst_237 : f32 to vector<8x128xf32>
    %1615 = arith.maximumf %1613, %1614 : vector<8x128xf32>
    %1616 = vector.extract_strided_slice %1517 {offsets = [0, 1792], sizes = [8, 128], strides = [1, 1]} : vector<8x2048xf32> to vector<8x128xf32>
    %1617 = vector.broadcast %867 : vector<1x128xf32> to vector<8x128xf32>
    %1618 = arith.mulf %1616, %1617 : vector<8x128xf32>
    %1619 = vector.broadcast %869 : vector<1x128xf32> to vector<8x128xf32>
    %1620 = arith.addf %1618, %1619 : vector<8x128xf32>
    %cst_238 = arith.constant 0.000000e+00 : f32
    %1621 = vector.broadcast %cst_238 : f32 to vector<8x128xf32>
    %1622 = arith.maximumf %1620, %1621 : vector<8x128xf32>
    %1623 = vector.extract_strided_slice %1517 {offsets = [0, 1920], sizes = [8, 128], strides = [1, 1]} : vector<8x2048xf32> to vector<8x128xf32>
    %1624 = vector.broadcast %867 : vector<1x128xf32> to vector<8x128xf32>
    %1625 = arith.mulf %1623, %1624 : vector<8x128xf32>
    %1626 = vector.broadcast %869 : vector<1x128xf32> to vector<8x128xf32>
    %1627 = arith.addf %1625, %1626 : vector<8x128xf32>
    %cst_239 = arith.constant 0.000000e+00 : f32
    %1628 = vector.broadcast %cst_239 : f32 to vector<8x128xf32>
    %1629 = arith.maximumf %1627, %1628 : vector<8x128xf32>
    %1630 = tpu.concatenate %1524, %1531, %1538, %1545, %1552, %1559, %1566, %1573, %1580, %1587, %1594, %1601, %1608, %1615, %1622, %1629 in 0 : vector<8x128xf32>, vector<8x128xf32>, vector<8x128xf32>, vector<8x128xf32>, vector<8x128xf32>, vector<8x128xf32>, vector<8x128xf32>, vector<8x128xf32>, vector<8x128xf32>, vector<8x128xf32>, vector<8x128xf32>, vector<8x128xf32>, vector<8x128xf32>, vector<8x128xf32>, vector<8x128xf32>, vector<8x128xf32> -> vector<128x128xf32>
    %1631 = arith.truncf %1630 : vector<128x128xf32> to vector<128x128xbf16>
    %cst_240 = arith.constant dense<0.000000e+00> : vector<128x128xf32>
    %1632 = tpu.matmul %1631, %9, %cst_240 {dimension_numbers = #tpu.dot_dimension_numbers<[1], [0], [0], [1], [0, 0, 1, 1], [], []>} : vector<128x128xbf16>, vector<128x128xbf16>, vector<128x128xf32> -> vector<128x128xf32>
    %1633 = vector.broadcast %6 : vector<1x128xf32> to vector<128x128xf32>
    %1634 = arith.addf %1632, %1633 : vector<128x128xf32>
    %cst_241 = arith.constant 5.000000e-01 : f32
    %1635 = vector.broadcast %cst_241 : f32 to vector<128x128xf32>
    %1636 = arith.mulf %1634, %1635 : vector<128x128xf32>
    %1637 = math.tanh %1636 : vector<128x128xf32>
    %cst_242 = arith.constant 5.000000e-01 : f32
    %1638 = vector.broadcast %cst_242 : f32 to vector<128x128xf32>
    %1639 = arith.mulf %1637, %1638 : vector<128x128xf32>
    %cst_243 = arith.constant 5.000000e-01 : f32
    %1640 = vector.broadcast %cst_243 : f32 to vector<128x128xf32>
    %1641 = arith.addf %1639, %1640 : vector<128x128xf32>
    %1642 = arith.truncf %1641 : vector<128x128xf32> to vector<128x128xbf16>
    %c640 = arith.constant 640 : index
    %c0_244 = arith.constant 0 : index
    %1643 = vector.load %arg6[%c640, %c0_244] : memref<896x128xbf16, #tpu.memory_space<vmem>>, vector<128x128xbf16>
    tpu.vector_store %arg6[%c640, %c0_244], %1642 {strides = array<i32>} : memref<896x128xbf16, #tpu.memory_space<vmem>>, vector<128x128xbf16>,
    %c48_245 = arith.constant 48 : index
    %c0_246 = arith.constant 0 : index
    %1644 = vector.load %arg7[%c48_245, %c0_246] : memref<56x128xf32, #tpu.memory_space<vmem>>, vector<8x128xf32>
    %1645 = arith.truncf %1644 : vector<8x128xf32> to vector<8x128xbf16>
    %cst_247 = arith.constant dense<0.000000e+00> : vector<8x2048xf32>
    %1646 = tpu.matmul %1645, %8, %cst_247 {dimension_numbers = #tpu.dot_dimension_numbers<[1], [0], [0], [1], [0, 0, 1, 1], [], []>} : vector<8x128xbf16>, vector<128x2048xbf16>, vector<8x2048xf32> -> vector<8x2048xf32>
    %1647 = vector.extract_strided_slice %1646 {offsets = [0, 0], sizes = [8, 128], strides = [1, 1]} : vector<8x2048xf32> to vector<8x128xf32>
    %1648 = vector.broadcast %867 : vector<1x128xf32> to vector<8x128xf32>
    %1649 = arith.mulf %1647, %1648 : vector<8x128xf32>
    %1650 = vector.broadcast %869 : vector<1x128xf32> to vector<8x128xf32>
    %1651 = arith.addf %1649, %1650 : vector<8x128xf32>
    %cst_248 = arith.constant 0.000000e+00 : f32
    %1652 = vector.broadcast %cst_248 : f32 to vector<8x128xf32>
    %1653 = arith.maximumf %1651, %1652 : vector<8x128xf32>
    %1654 = vector.extract_strided_slice %1646 {offsets = [0, 128], sizes = [8, 128], strides = [1, 1]} : vector<8x2048xf32> to vector<8x128xf32>
    %1655 = vector.broadcast %867 : vector<1x128xf32> to vector<8x128xf32>
    %1656 = arith.mulf %1654, %1655 : vector<8x128xf32>
    %1657 = vector.broadcast %869 : vector<1x128xf32> to vector<8x128xf32>
    %1658 = arith.addf %1656, %1657 : vector<8x128xf32>
    %cst_249 = arith.constant 0.000000e+00 : f32
    %1659 = vector.broadcast %cst_249 : f32 to vector<8x128xf32>
    %1660 = arith.maximumf %1658, %1659 : vector<8x128xf32>
    %1661 = vector.extract_strided_slice %1646 {offsets = [0, 256], sizes = [8, 128], strides = [1, 1]} : vector<8x2048xf32> to vector<8x128xf32>
    %1662 = vector.broadcast %867 : vector<1x128xf32> to vector<8x128xf32>
    %1663 = arith.mulf %1661, %1662 : vector<8x128xf32>
    %1664 = vector.broadcast %869 : vector<1x128xf32> to vector<8x128xf32>
    %1665 = arith.addf %1663, %1664 : vector<8x128xf32>
    %cst_250 = arith.constant 0.000000e+00 : f32
    %1666 = vector.broadcast %cst_250 : f32 to vector<8x128xf32>
    %1667 = arith.maximumf %1665, %1666 : vector<8x128xf32>
    %1668 = vector.extract_strided_slice %1646 {offsets = [0, 384], sizes = [8, 128], strides = [1, 1]} : vector<8x2048xf32> to vector<8x128xf32>
    %1669 = vector.broadcast %867 : vector<1x128xf32> to vector<8x128xf32>
    %1670 = arith.mulf %1668, %1669 : vector<8x128xf32>
    %1671 = vector.broadcast %869 : vector<1x128xf32> to vector<8x128xf32>
    %1672 = arith.addf %1670, %1671 : vector<8x128xf32>
    %cst_251 = arith.constant 0.000000e+00 : f32
    %1673 = vector.broadcast %cst_251 : f32 to vector<8x128xf32>
    %1674 = arith.maximumf %1672, %1673 : vector<8x128xf32>
    %1675 = vector.extract_strided_slice %1646 {offsets = [0, 512], sizes = [8, 128], strides = [1, 1]} : vector<8x2048xf32> to vector<8x128xf32>
    %1676 = vector.broadcast %867 : vector<1x128xf32> to vector<8x128xf32>
    %1677 = arith.mulf %1675, %1676 : vector<8x128xf32>
    %1678 = vector.broadcast %869 : vector<1x128xf32> to vector<8x128xf32>
    %1679 = arith.addf %1677, %1678 : vector<8x128xf32>
    %cst_252 = arith.constant 0.000000e+00 : f32
    %1680 = vector.broadcast %cst_252 : f32 to vector<8x128xf32>
    %1681 = arith.maximumf %1679, %1680 : vector<8x128xf32>
    %1682 = vector.extract_strided_slice %1646 {offsets = [0, 640], sizes = [8, 128], strides = [1, 1]} : vector<8x2048xf32> to vector<8x128xf32>
    %1683 = vector.broadcast %867 : vector<1x128xf32> to vector<8x128xf32>
    %1684 = arith.mulf %1682, %1683 : vector<8x128xf32>
    %1685 = vector.broadcast %869 : vector<1x128xf32> to vector<8x128xf32>
    %1686 = arith.addf %1684, %1685 : vector<8x128xf32>
    %cst_253 = arith.constant 0.000000e+00 : f32
    %1687 = vector.broadcast %cst_253 : f32 to vector<8x128xf32>
    %1688 = arith.maximumf %1686, %1687 : vector<8x128xf32>
    %1689 = vector.extract_strided_slice %1646 {offsets = [0, 768], sizes = [8, 128], strides = [1, 1]} : vector<8x2048xf32> to vector<8x128xf32>
    %1690 = vector.broadcast %867 : vector<1x128xf32> to vector<8x128xf32>
    %1691 = arith.mulf %1689, %1690 : vector<8x128xf32>
    %1692 = vector.broadcast %869 : vector<1x128xf32> to vector<8x128xf32>
    %1693 = arith.addf %1691, %1692 : vector<8x128xf32>
    %cst_254 = arith.constant 0.000000e+00 : f32
    %1694 = vector.broadcast %cst_254 : f32 to vector<8x128xf32>
    %1695 = arith.maximumf %1693, %1694 : vector<8x128xf32>
    %1696 = vector.extract_strided_slice %1646 {offsets = [0, 896], sizes = [8, 128], strides = [1, 1]} : vector<8x2048xf32> to vector<8x128xf32>
    %1697 = vector.broadcast %867 : vector<1x128xf32> to vector<8x128xf32>
    %1698 = arith.mulf %1696, %1697 : vector<8x128xf32>
    %1699 = vector.broadcast %869 : vector<1x128xf32> to vector<8x128xf32>
    %1700 = arith.addf %1698, %1699 : vector<8x128xf32>
    %cst_255 = arith.constant 0.000000e+00 : f32
    %1701 = vector.broadcast %cst_255 : f32 to vector<8x128xf32>
    %1702 = arith.maximumf %1700, %1701 : vector<8x128xf32>
    %1703 = vector.extract_strided_slice %1646 {offsets = [0, 1024], sizes = [8, 128], strides = [1, 1]} : vector<8x2048xf32> to vector<8x128xf32>
    %1704 = vector.broadcast %867 : vector<1x128xf32> to vector<8x128xf32>
    %1705 = arith.mulf %1703, %1704 : vector<8x128xf32>
    %1706 = vector.broadcast %869 : vector<1x128xf32> to vector<8x128xf32>
    %1707 = arith.addf %1705, %1706 : vector<8x128xf32>
    %cst_256 = arith.constant 0.000000e+00 : f32
    %1708 = vector.broadcast %cst_256 : f32 to vector<8x128xf32>
    %1709 = arith.maximumf %1707, %1708 : vector<8x128xf32>
    %1710 = vector.extract_strided_slice %1646 {offsets = [0, 1152], sizes = [8, 128], strides = [1, 1]} : vector<8x2048xf32> to vector<8x128xf32>
    %1711 = vector.broadcast %867 : vector<1x128xf32> to vector<8x128xf32>
    %1712 = arith.mulf %1710, %1711 : vector<8x128xf32>
    %1713 = vector.broadcast %869 : vector<1x128xf32> to vector<8x128xf32>
    %1714 = arith.addf %1712, %1713 : vector<8x128xf32>
    %cst_257 = arith.constant 0.000000e+00 : f32
    %1715 = vector.broadcast %cst_257 : f32 to vector<8x128xf32>
    %1716 = arith.maximumf %1714, %1715 : vector<8x128xf32>
    %1717 = vector.extract_strided_slice %1646 {offsets = [0, 1280], sizes = [8, 128], strides = [1, 1]} : vector<8x2048xf32> to vector<8x128xf32>
    %1718 = vector.broadcast %867 : vector<1x128xf32> to vector<8x128xf32>
    %1719 = arith.mulf %1717, %1718 : vector<8x128xf32>
    %1720 = vector.broadcast %869 : vector<1x128xf32> to vector<8x128xf32>
    %1721 = arith.addf %1719, %1720 : vector<8x128xf32>
    %cst_258 = arith.constant 0.000000e+00 : f32
    %1722 = vector.broadcast %cst_258 : f32 to vector<8x128xf32>
    %1723 = arith.maximumf %1721, %1722 : vector<8x128xf32>
    %1724 = vector.extract_strided_slice %1646 {offsets = [0, 1408], sizes = [8, 128], strides = [1, 1]} : vector<8x2048xf32> to vector<8x128xf32>
    %1725 = vector.broadcast %867 : vector<1x128xf32> to vector<8x128xf32>
    %1726 = arith.mulf %1724, %1725 : vector<8x128xf32>
    %1727 = vector.broadcast %869 : vector<1x128xf32> to vector<8x128xf32>
    %1728 = arith.addf %1726, %1727 : vector<8x128xf32>
    %cst_259 = arith.constant 0.000000e+00 : f32
    %1729 = vector.broadcast %cst_259 : f32 to vector<8x128xf32>
    %1730 = arith.maximumf %1728, %1729 : vector<8x128xf32>
    %1731 = vector.extract_strided_slice %1646 {offsets = [0, 1536], sizes = [8, 128], strides = [1, 1]} : vector<8x2048xf32> to vector<8x128xf32>
    %1732 = vector.broadcast %867 : vector<1x128xf32> to vector<8x128xf32>
    %1733 = arith.mulf %1731, %1732 : vector<8x128xf32>
    %1734 = vector.broadcast %869 : vector<1x128xf32> to vector<8x128xf32>
    %1735 = arith.addf %1733, %1734 : vector<8x128xf32>
    %cst_260 = arith.constant 0.000000e+00 : f32
    %1736 = vector.broadcast %cst_260 : f32 to vector<8x128xf32>
    %1737 = arith.maximumf %1735, %1736 : vector<8x128xf32>
    %1738 = vector.extract_strided_slice %1646 {offsets = [0, 1664], sizes = [8, 128], strides = [1, 1]} : vector<8x2048xf32> to vector<8x128xf32>
    %1739 = vector.broadcast %867 : vector<1x128xf32> to vector<8x128xf32>
    %1740 = arith.mulf %1738, %1739 : vector<8x128xf32>
    %1741 = vector.broadcast %869 : vector<1x128xf32> to vector<8x128xf32>
    %1742 = arith.addf %1740, %1741 : vector<8x128xf32>
    %cst_261 = arith.constant 0.000000e+00 : f32
    %1743 = vector.broadcast %cst_261 : f32 to vector<8x128xf32>
    %1744 = arith.maximumf %1742, %1743 : vector<8x128xf32>
    %1745 = vector.extract_strided_slice %1646 {offsets = [0, 1792], sizes = [8, 128], strides = [1, 1]} : vector<8x2048xf32> to vector<8x128xf32>
    %1746 = vector.broadcast %867 : vector<1x128xf32> to vector<8x128xf32>
    %1747 = arith.mulf %1745, %1746 : vector<8x128xf32>
    %1748 = vector.broadcast %869 : vector<1x128xf32> to vector<8x128xf32>
    %1749 = arith.addf %1747, %1748 : vector<8x128xf32>
    %cst_262 = arith.constant 0.000000e+00 : f32
    %1750 = vector.broadcast %cst_262 : f32 to vector<8x128xf32>
    %1751 = arith.maximumf %1749, %1750 : vector<8x128xf32>
    %1752 = vector.extract_strided_slice %1646 {offsets = [0, 1920], sizes = [8, 128], strides = [1, 1]} : vector<8x2048xf32> to vector<8x128xf32>
    %1753 = vector.broadcast %867 : vector<1x128xf32> to vector<8x128xf32>
    %1754 = arith.mulf %1752, %1753 : vector<8x128xf32>
    %1755 = vector.broadcast %869 : vector<1x128xf32> to vector<8x128xf32>
    %1756 = arith.addf %1754, %1755 : vector<8x128xf32>
    %cst_263 = arith.constant 0.000000e+00 : f32
    %1757 = vector.broadcast %cst_263 : f32 to vector<8x128xf32>
    %1758 = arith.maximumf %1756, %1757 : vector<8x128xf32>
    %1759 = tpu.concatenate %1653, %1660, %1667, %1674, %1681, %1688, %1695, %1702, %1709, %1716, %1723, %1730, %1737, %1744, %1751, %1758 in 0 : vector<8x128xf32>, vector<8x128xf32>, vector<8x128xf32>, vector<8x128xf32>, vector<8x128xf32>, vector<8x128xf32>, vector<8x128xf32>, vector<8x128xf32>, vector<8x128xf32>, vector<8x128xf32>, vector<8x128xf32>, vector<8x128xf32>, vector<8x128xf32>, vector<8x128xf32>, vector<8x128xf32>, vector<8x128xf32> -> vector<128x128xf32>
    %1760 = arith.truncf %1759 : vector<128x128xf32> to vector<128x128xbf16>
    %cst_264 = arith.constant dense<0.000000e+00> : vector<128x128xf32>
    %1761 = tpu.matmul %1760, %9, %cst_264 {dimension_numbers = #tpu.dot_dimension_numbers<[1], [0], [0], [1], [0, 0, 1, 1], [], []>} : vector<128x128xbf16>, vector<128x128xbf16>, vector<128x128xf32> -> vector<128x128xf32>
    %1762 = vector.broadcast %6 : vector<1x128xf32> to vector<128x128xf32>
    %1763 = arith.addf %1761, %1762 : vector<128x128xf32>
    %cst_265 = arith.constant 5.000000e-01 : f32
    %1764 = vector.broadcast %cst_265 : f32 to vector<128x128xf32>
    %1765 = arith.mulf %1763, %1764 : vector<128x128xf32>
    %1766 = math.tanh %1765 : vector<128x128xf32>
    %cst_266 = arith.constant 5.000000e-01 : f32
    %1767 = vector.broadcast %cst_266 : f32 to vector<128x128xf32>
    %1768 = arith.mulf %1766, %1767 : vector<128x128xf32>
    %cst_267 = arith.constant 5.000000e-01 : f32
    %1769 = vector.broadcast %cst_267 : f32 to vector<128x128xf32>
    %1770 = arith.addf %1768, %1769 : vector<128x128xf32>
    %1771 = arith.truncf %1770 : vector<128x128xf32> to vector<128x128xbf16>
    %c768 = arith.constant 768 : index
    %c0_268 = arith.constant 0 : index
    %1772 = vector.load %arg6[%c768, %c0_268] : memref<896x128xbf16, #tpu.memory_space<vmem>>, vector<128x128xbf16>
    tpu.vector_store %arg6[%c768, %c0_268], %1771 {strides = array<i32>} : memref<896x128xbf16, #tpu.memory_space<vmem>>, vector<128x128xbf16>,
    return
  }
}

</mosaic_0001>

<llo_original>
// kernel: conv_decoder_forward.1
$region0: #{conv_decoder_forward.1}
  #allocation0 [shape = 'u32[]', space=smem, size = 0x4, offset = 0x4, fixed_abs, tag = 'smem constant byte address 0x4 - core index']
  #allocation1 [shape = 'u32[72,128]{1,0:T(1,128)}', space=vmem, size = 0x9000, scoped, tag = 'internal scratch']
  #allocation2 [shape = 'f32[56,128]{1,0:T(8,128)}', space=vmem, size = 0x7000, scoped, tag = 'scratch operand']
  %s0 = inlined_call_operand.vmem [shape: f32[2,256], index: 0, kind: input, shape index: {}]
  %s1 = inlined_call_operand.hbm [shape: bf16[256,512], index: 1, kind: input, shape index: {}]
  %s2 = inlined_call_operand.hbm [shape: bf16[128,1152], index: 2, kind: input, shape index: {}]
  %s3 = inlined_call_operand.hbm [shape: bf16[128,2048], index: 3, kind: input, shape index: {}]
  %s4 = inlined_call_operand.hbm [shape: bf16[128,128], index: 4, kind: input, shape index: {}]
  %s5 = inlined_call_operand.hbm [shape: f32[8,128], index: 5, kind: input, shape index: {}]
  %s6 = inlined_call_operand.vmem [shape: bf16[896,128], index: 6, kind: output, shape index: {}]
  %s7 = sld [smem:[#allocation0]]
  $region54: #{conv_decoder_forward.1} parent=0
    _
  %s9 = ssub.s32 1, %s7
  %s10 = scalar_select 0, %s9, %s7
  $region1: #{conv_decoder_forward.1} parent=0
    #allocation3 [shape = 'u8[262144]{0}', space=vmem, size = 0x40000, scoped, tag = 'input window, operand 1, single buffered']
    #allocation4 [shape = 's32[1]{0}', space=sflag, size = 0x4, scoped, tag = 'scoped memory for conv_decoder_forward.1']
    #allocation5 [shape = 'u8[294912]{0}', space=vmem, size = 0x48000, scoped, tag = 'input window, operand 2, single buffered']
    #allocation6 [shape = 's32[1]{0}', space=sflag, size = 0x4, scoped, tag = 'scoped memory for conv_decoder_forward.1']
    #allocation7 [shape = 'u8[524288]{0}', space=vmem, size = 0x80000, scoped, tag = 'input window, operand 3, single buffered']
    #allocation8 [shape = 'u8[32768]{0}', space=vmem, size = 0x8000, scoped, tag = 'input window, operand 4, single buffered']
    #allocation9 [shape = 's32[1]{0}', space=sflag, size = 0x4, scoped, tag = 'scoped memory for conv_decoder_forward.1']
    #allocation10 [shape = 'u8[4096]{0}', space=vmem, size = 0x1000, scoped, tag = 'input window, operand 5, single buffered']
    %11 = vsyncpa [#allocation4], 0
    %12 = vsyncpa [#allocation6], 0
    %13 = vsyncpa [#allocation9], 0
    // Predicated region
    $region2: #{conv_decoder_forward.1} parent=1 // pred_check
      _
    $region3: #{conv_decoder_forward.1} parent=1 // pred_check_branch
      %15 = sbr.rel (0) target = $region5
    $region4: #{conv_decoder_forward.1} parent=1 // pred_region
      _
    $region5: #{conv_decoder_forward.1} parent=1 // pred_fallthru
      _
    // Predicated region
    $region6: #{conv_decoder_forward.1} parent=1 // pred_check
      _
    $region7: #{conv_decoder_forward.1} parent=1 // pred_check_branch
      %17 = sbr.rel (0) target = $region9
    $region8: #{conv_decoder_forward.1} parent=1 // pred_region
      %19 = vsyncadd [#allocation4], 0
      %s20 = sshll.u32 %s1, 4
      %s21 = int_to_ptr.hbm [resolvable:$true] %s20
      %s22 = sshll.u32 [#allocation3], 4
      %s23 = int_to_ptr.vmem [resolvable:$true] %s22
      %28 = dma.hbm_to_vmem [thread:$0]  %s21, 8192, %s23, [#allocation4], 256, 256, 16
    $region9: #{conv_decoder_forward.1} parent=1 // pred_fallthru
      _
    // Predicated region
    $region10: #{conv_decoder_forward.1} parent=1 // pred_check
      _
    $region11: #{conv_decoder_forward.1} parent=1 // pred_check_branch
      %30 = sbr.rel (0) target = $region13
    $region12: #{conv_decoder_forward.1} parent=1 // pred_region
      %32 = vsyncadd [#allocation6], 0
      %s33 = sshll.u32 %s2, 4
      %s34 = int_to_ptr.hbm [resolvable:$true] %s33
      %s35 = sshll.u32 [#allocation5], 4
      %s36 = int_to_ptr.vmem [resolvable:$true] %s35
      %41 = dma.hbm_to_vmem [thread:$0]  %s34, 9216, %s36, [#allocation6], 576, 576, 36
    $region13: #{conv_decoder_forward.1} parent=1 // pred_fallthru
      _
    // Predicated region
    $region14: #{conv_decoder_forward.1} parent=1 // pred_check
      _
    $region15: #{conv_decoder_forward.1} parent=1 // pred_check_branch
      %43 = sbr.rel (0) target = $region17
    $region16: #{conv_decoder_forward.1} parent=1 // pred_region
      %45 = vsyncadd [#allocation6], 0
      %s46 = sshll.u32 %s3, 4
      %s47 = int_to_ptr.hbm [resolvable:$true] %s46
      %s48 = sshll.u32 [#allocation7], 4
      %s49 = int_to_ptr.vmem [resolvable:$true] %s48
      %54 = dma.hbm_to_vmem [thread:$0]  %s47, 16384, %s49, [#allocation6], 1024, 1024, 64
    $region17: #{conv_decoder_forward.1} parent=1 // pred_fallthru
      _
    // Predicated region
    $region18: #{conv_decoder_forward.1} parent=1 // pred_check
      _
    $region19: #{conv_decoder_forward.1} parent=1 // pred_check_branch
      %56 = sbr.rel (0) target = $region21
    $region20: #{conv_decoder_forward.1} parent=1 // pred_region
      %58 = vsyncadd [#allocation9], 0
      %s59 = sshll.u32 %s4, 4
      %s60 = int_to_ptr.hbm [resolvable:$true] %s59
      %s61 = sshll.u32 [#allocation8], 4
      %s62 = int_to_ptr.vmem [resolvable:$true] %s61
      %67 = dma.hbm_to_vmem [thread:$0]  %s60, 1024, %s62, [#allocation9], 64, 64, 4
    $region21: #{conv_decoder_forward.1} parent=1 // pred_fallthru
      _
    // Predicated region
    $region22: #{conv_decoder_forward.1} parent=1 // pred_check
      _
    $region23: #{conv_decoder_forward.1} parent=1 // pred_check_branch
      %69 = sbr.rel (0) target = $region25
    $region24: #{conv_decoder_forward.1} parent=1 // pred_region
      %71 = vsyncadd [#allocation9], 0
      %s73 = sshll.u32 %s5, 4
      %s74 = int_to_ptr.hbm [resolvable:$true] %s73
      %s75 = sshll.u32 [#allocation10], 4
      %s76 = int_to_ptr.vmem [resolvable:$true] %s75
      %78 = dma.hbm_to_vmem [thread:$0]  %s74, 128, %s76, [#allocation9]
    $region25: #{conv_decoder_forward.1} parent=1 // pred_fallthru
      _
    // Predicated region
    $region26: #{conv_decoder_forward.1} parent=1 // pred_check
      _
    $region27: #{conv_decoder_forward.1} parent=1 // pred_check_branch
      %80 = sbr.rel (0) target = $region29
    $region28: #{conv_decoder_forward.1} parent=1 // pred_region
      %82 = dma.done [#allocation4], 8192
    $region29: #{conv_decoder_forward.1} parent=1 // pred_fallthru
      _
    // Predicated region
    $region30: #{conv_decoder_forward.1} parent=1 // pred_check
      _
    $region31: #{conv_decoder_forward.1} parent=1 // pred_check_branch
      %84 = sbr.rel (0) target = $region33
    $region32: #{conv_decoder_forward.1} parent=1 // pred_region
      %86 = dma.done [#allocation6], 9216
    $region33: #{conv_decoder_forward.1} parent=1 // pred_fallthru
      _
    // Predicated region
    $region34: #{conv_decoder_forward.1} parent=1 // pred_check
      _
    $region35: #{conv_decoder_forward.1} parent=1 // pred_check_branch
      %88 = sbr.rel (0) target = $region37
    $region36: #{conv_decoder_forward.1} parent=1 // pred_region
      %90 = dma.done [#allocation6], 16384
    $region37: #{conv_decoder_forward.1} parent=1 // pred_fallthru
      _
    // Predicated region
    $region38: #{conv_decoder_forward.1} parent=1 // pred_check
      _
    $region39: #{conv_decoder_forward.1} parent=1 // pred_check_branch
      %92 = sbr.rel (0) target = $region41
    $region40: #{conv_decoder_forward.1} parent=1 // pred_region
      %94 = dma.done [#allocation9], 1024
    $region41: #{conv_decoder_forward.1} parent=1 // pred_fallthru
      _
    // Predicated region
    $region42: #{conv_decoder_forward.1} parent=1 // pred_check
      _
    $region43: #{conv_decoder_forward.1} parent=1 // pred_check_branch
      %96 = sbr.rel (0) target = $region45
    $region44: #{conv_decoder_forward.1} parent=1 // pred_region
      %98 = dma.done [#allocation9], 128
    $region45: #{conv_decoder_forward.1} parent=1 // pred_fallthru
      _
    %v99 = vld [vmem:[#allocation10] sm:$0x1]
    %v100 = vld [vmem:[#allocation10 + $0x1] sm:$0x1]
    %v101 = vld [vmem:[#allocation10 + $0x2] sm:$0x1]
    %v102 = vld [vmem:[#allocation10 + $0x3] sm:$0x1]
    %v103 = vld [vmem:[#allocation10 + $0x4] sm:$0x1]
    %v104 = vld [vmem:[#allocation10 + $0x5] sm:$0x1]
    %v105 = vld [vmem:[#allocation10 + $0x6] sm:$0x1]
    %v106 = vld [vmem:[#allocation5] sm:$0xff]
    %v107 = vld [vmem:[#allocation5 + $0x8] sm:$0xff]
    %v108 = vld [vmem:[#allocation5 + $0x10] sm:$0xff]
    %v109 = vld [vmem:[#allocation5 + $0x18] sm:$0xff]
    %v110 = vld [vmem:[#allocation5 + $0x20] sm:$0xf]
    %v111 = vld [vmem:[#allocation5 + $0x24] sm:$0xff]
    %v112 = vld [vmem:[#allocation5 + $0x2c] sm:$0xff]
    %v113 = vld [vmem:[#allocation5 + $0x34] sm:$0xff]
    %v114 = vld [vmem:[#allocation5 + $0x3c] sm:$0xff]
    %v115 = vld [vmem:[#allocation5 + $0x44] sm:$0xf]
    %v116 = vld [vmem:[#allocation5 + $0x48] sm:$0xff]
    %v117 = vld [vmem:[#allocation5 + $0x50] sm:$0xff]
    %v118 = vld [vmem:[#allocation5 + $0x58] sm:$0xff]
    %v119 = vld [vmem:[#allocation5 + $0x60] sm:$0xff]
    %v120 = vld [vmem:[#allocation5 + $0x68] sm:$0xf]
    %v121 = vld [vmem:[#allocation5 + $0x6c] sm:$0xff]
    %v122 = vld [vmem:[#allocation5 + $0x74] sm:$0xff]
    %v123 = vld [vmem:[#allocation5 + $0x7c] sm:$0xff]
    %v124 = vld [vmem:[#allocation5 + $0x84] sm:$0xff]
    %v125 = vld [vmem:[#allocation5 + $0x8c] sm:$0xf]
    %v126 = vld [vmem:[#allocation5 + $0x90] sm:$0xff]
    %v127 = vld [vmem:[#allocation5 + $0x98] sm:$0xff]
    %v128 = vld [vmem:[#allocation5 + $0xa0] sm:$0xff]
    %v129 = vld [vmem:[#allocation5 + $0xa8] sm:$0xff]
    %v130 = vld [vmem:[#allocation5 + $0xb0] sm:$0xf]
    %v131 = vld [vmem:[#allocation5 + $0xb4] sm:$0xff]
    %v132 = vld [vmem:[#allocation5 + $0xbc] sm:$0xff]
    %v133 = vld [vmem:[#allocation5 + $0xc4] sm:$0xff]
    %v134 = vld [vmem:[#allocation5 + $0xcc] sm:$0xff]
    %v135 = vld [vmem:[#allocation5 + $0xd4] sm:$0xf]
    %v136 = vld [vmem:[#allocation5 + $0xd8] sm:$0xff]
    %v137 = vld [vmem:[#allocation5 + $0xe0] sm:$0xff]
    %v138 = vld [vmem:[#allocation5 + $0xe8] sm:$0xff]
    %v139 = vld [vmem:[#allocation5 + $0xf0] sm:$0xff]
    %v140 = vld [vmem:[#allocation5 + $0xf8] sm:$0xf]
    %v141 = vld [vmem:[#allocation5 + $0xfc] sm:$0xff]
    %v142 = vld [vmem:[#allocation5 + $0x104] sm:$0xff]
    %v143 = vld [vmem:[#allocation5 + $0x10c] sm:$0xff]
    %v144 = vld [vmem:[#allocation5 + $0x114] sm:$0xff]
    %v145 = vld [vmem:[#allocation5 + $0x11c] sm:$0xf]
    %v146 = vld [vmem:[#allocation5 + $0x120] sm:$0xff]
    %v147 = vld [vmem:[#allocation5 + $0x128] sm:$0xff]
    %v148 = vld [vmem:[#allocation5 + $0x130] sm:$0xff]
    %v149 = vld [vmem:[#allocation5 + $0x138] sm:$0xff]
    %v150 = vld [vmem:[#allocation5 + $0x140] sm:$0xf]
    %v151 = vld [vmem:[#allocation5 + $0x144] sm:$0xff]
    %v152 = vld [vmem:[#allocation5 + $0x14c] sm:$0xff]
    %v153 = vld [vmem:[#allocation5 + $0x154] sm:$0xff]
    %v154 = vld [vmem:[#allocation5 + $0x15c] sm:$0xff]
    %v155 = vld [vmem:[#allocation5 + $0x164] sm:$0xf]
    %v156 = vld [vmem:[#allocation5 + $0x168] sm:$0xff]
    %v157 = vld [vmem:[#allocation5 + $0x170] sm:$0xff]
    %v158 = vld [vmem:[#allocation5 + $0x178] sm:$0xff]
    %v159 = vld [vmem:[#allocation5 + $0x180] sm:$0xff]
    %v160 = vld [vmem:[#allocation5 + $0x188] sm:$0xf]
    %v161 = vld [vmem:[#allocation5 + $0x18c] sm:$0xff]
    %v162 = vld [vmem:[#allocation5 + $0x194] sm:$0xff]
    %v163 = vld [vmem:[#allocation5 + $0x19c] sm:$0xff]
    %v164 = vld [vmem:[#allocation5 + $0x1a4] sm:$0xff]
    %v165 = vld [vmem:[#allocation5 + $0x1ac] sm:$0xf]
    %v166 = vld [vmem:[#allocation5 + $0x1b0] sm:$0xff]
    %v167 = vld [vmem:[#allocation5 + $0x1b8] sm:$0xff]
    %v168 = vld [vmem:[#allocation5 + $0x1c0] sm:$0xff]
    %v169 = vld [vmem:[#allocation5 + $0x1c8] sm:$0xff]
    %v170 = vld [vmem:[#allocation5 + $0x1d0] sm:$0xf]
    %v171 = vld [vmem:[#allocation5 + $0x1d4] sm:$0xff]
    %v172 = vld [vmem:[#allocation5 + $0x1dc] sm:$0xff]
    %v173 = vld [vmem:[#allocation5 + $0x1e4] sm:$0xff]
    %v174 = vld [vmem:[#allocation5 + $0x1ec] sm:$0xff]
    %v175 = vld [vmem:[#allocation5 + $0x1f4] sm:$0xf]
    %v176 = vld [vmem:[#allocation5 + $0x1f8] sm:$0xff]
    %v177 = vld [vmem:[#allocation5 + $0x200] sm:$0xff]
    %v178 = vld [vmem:[#allocation5 + $0x208] sm:$0xff]
    %v179 = vld [vmem:[#allocation5 + $0x210] sm:$0xff]
    %v180 = vld [vmem:[#allocation5 + $0x218] sm:$0xf]
    %v181 = vld [vmem:[#allocation5 + $0x21c] sm:$0xff]
    %v182 = vld [vmem:[#allocation5 + $0x224] sm:$0xff]
    %v183 = vld [vmem:[#allocation5 + $0x22c] sm:$0xff]
    %v184 = vld [vmem:[#allocation5 + $0x234] sm:$0xff]
    %v185 = vld [vmem:[#allocation5 + $0x23c] sm:$0xf]
    %v186 = vld [vmem:[#allocation7] sm:$0xff]
    %v187 = vld [vmem:[#allocation7 + $0x8] sm:$0xff]
    %v188 = vld [vmem:[#allocation7 + $0x10] sm:$0xff]
    %v189 = vld [vmem:[#allocation7 + $0x18] sm:$0xff]
    %v190 = vld [vmem:[#allocation7 + $0x20] sm:$0xff]
    %v191 = vld [vmem:[#allocation7 + $0x28] sm:$0xff]
    %v192 = vld [vmem:[#allocation7 + $0x30] sm:$0xff]
    %v193 = vld [vmem:[#allocation7 + $0x38] sm:$0xff]
    %v194 = vld [vmem:[#allocation7 + $0x40] sm:$0xff]
    %v195 = vld [vmem:[#allocation7 + $0x48] sm:$0xff]
    %v196 = vld [vmem:[#allocation7 + $0x50] sm:$0xff]
    %v197 = vld [vmem:[#allocation7 + $0x58] sm:$0xff]
    %v198 = vld [vmem:[#allocation7 + $0x60] sm:$0xff]
    %v199 = vld [vmem:[#allocation7 + $0x68] sm:$0xff]
    %v200 = vld [vmem:[#allocation7 + $0x70] sm:$0xff]
    %v201 = vld [vmem:[#allocation7 + $0x78] sm:$0xff]
    %v202 = vld [vmem:[#allocation7 + $0x80] sm:$0xff]
    %v203 = vld [vmem:[#allocation7 + $0x88] sm:$0xff]
    %v204 = vld [vmem:[#allocation7 + $0x90] sm:$0xff]
    %v205 = vld [vmem:[#allocation7 + $0x98] sm:$0xff]
    %v206 = vld [vmem:[#allocation7 + $0xa0] sm:$0xff]
    %v207 = vld [vmem:[#allocation7 + $0xa8] sm:$0xff]
    %v208 = vld [vmem:[#allocation7 + $0xb0] sm:$0xff]
    %v209 = vld [vmem:[#allocation7 + $0xb8] sm:$0xff]
    %v210 = vld [vmem:[#allocation7 + $0xc0] sm:$0xff]
    %v211 = vld [vmem:[#allocation7 + $0xc8] sm:$0xff]
    %v212 = vld [vmem:[#allocation7 + $0xd0] sm:$0xff]
    %v213 = vld [vmem:[#allocation7 + $0xd8] sm:$0xff]
    %v214 = vld [vmem:[#allocation7 + $0xe0] sm:$0xff]
    %v215 = vld [vmem:[#allocation7 + $0xe8] sm:$0xff]
    %v216 = vld [vmem:[#allocation7 + $0xf0] sm:$0xff]
    %v217 = vld [vmem:[#allocation7 + $0xf8] sm:$0xff]
    %v218 = vld [vmem:[#allocation7 + $0x100] sm:$0xff]
    %v219 = vld [vmem:[#allocation7 + $0x108] sm:$0xff]
    %v220 = vld [vmem:[#allocation7 + $0x110] sm:$0xff]
    %v221 = vld [vmem:[#allocation7 + $0x118] sm:$0xff]
    %v222 = vld [vmem:[#allocation7 + $0x120] sm:$0xff]
    %v223 = vld [vmem:[#allocation7 + $0x128] sm:$0xff]
    %v224 = vld [vmem:[#allocation7 + $0x130] sm:$0xff]
    %v225 = vld [vmem:[#allocation7 + $0x138] sm:$0xff]
    %v226 = vld [vmem:[#allocation7 + $0x140] sm:$0xff]
    %v227 = vld [vmem:[#allocation7 + $0x148] sm:$0xff]
    %v228 = vld [vmem:[#allocation7 + $0x150] sm:$0xff]
    %v229 = vld [vmem:[#allocation7 + $0x158] sm:$0xff]
    %v230 = vld [vmem:[#allocation7 + $0x160] sm:$0xff]
    %v231 = vld [vmem:[#allocation7 + $0x168] sm:$0xff]
    %v232 = vld [vmem:[#allocation7 + $0x170] sm:$0xff]
    %v233 = vld [vmem:[#allocation7 + $0x178] sm:$0xff]
    %v234 = vld [vmem:[#allocation7 + $0x180] sm:$0xff]
    %v235 = vld [vmem:[#allocation7 + $0x188] sm:$0xff]
    %v236 = vld [vmem:[#allocation7 + $0x190] sm:$0xff]
    %v237 = vld [vmem:[#allocation7 + $0x198] sm:$0xff]
    %v238 = vld [vmem:[#allocation7 + $0x1a0] sm:$0xff]
    %v239 = vld [vmem:[#allocation7 + $0x1a8] sm:$0xff]
    %v240 = vld [vmem:[#allocation7 + $0x1b0] sm:$0xff]
    %v241 = vld [vmem:[#allocation7 + $0x1b8] sm:$0xff]
    %v242 = vld [vmem:[#allocation7 + $0x1c0] sm:$0xff]
    %v243 = vld [vmem:[#allocation7 + $0x1c8] sm:$0xff]
    %v244 = vld [vmem:[#allocation7 + $0x1d0] sm:$0xff]
    %v245 = vld [vmem:[#allocation7 + $0x1d8] sm:$0xff]
    %v246 = vld [vmem:[#allocation7 + $0x1e0] sm:$0xff]
    %v247 = vld [vmem:[#allocation7 + $0x1e8] sm:$0xff]
    %v248 = vld [vmem:[#allocation7 + $0x1f0] sm:$0xff]
    %v249 = vld [vmem:[#allocation7 + $0x1f8] sm:$0xff]
    %v250 = vld [vmem:[#allocation7 + $0x200] sm:$0xff]
    %v251 = vld [vmem:[#allocation7 + $0x208] sm:$0xff]
    %v252 = vld [vmem:[#allocation7 + $0x210] sm:$0xff]
    %v253 = vld [vmem:[#allocation7 + $0x218] sm:$0xff]
    %v254 = vld [vmem:[#allocation7 + $0x220] sm:$0xff]
    %v255 = vld [vmem:[#allocation7 + $0x228] sm:$0xff]
    %v256 = vld [vmem:[#allocation7 + $0x230] sm:$0xff]
    %v257 = vld [vmem:[#allocation7 + $0x238] sm:$0xff]
    %v258 = vld [vmem:[#allocation7 + $0x240] sm:$0xff]
    %v259 = vld [vmem:[#allocation7 + $0x248] sm:$0xff]
    %v260 = vld [vmem:[#allocation7 + $0x250] sm:$0xff]
    %v261 = vld [vmem:[#allocation7 + $0x258] sm:$0xff]
    %v262 = vld [vmem:[#allocation7 + $0x260] sm:$0xff]
    %v263 = vld [vmem:[#allocation7 + $0x268] sm:$0xff]
    %v264 = vld [vmem:[#allocation7 + $0x270] sm:$0xff]
    %v265 = vld [vmem:[#allocation7 + $0x278] sm:$0xff]
    %v266 = vld [vmem:[#allocation7 + $0x280] sm:$0xff]
    %v267 = vld [vmem:[#allocation7 + $0x288] sm:$0xff]
    %v268 = vld [vmem:[#allocation7 + $0x290] sm:$0xff]
    %v269 = vld [vmem:[#allocation7 + $0x298] sm:$0xff]
    %v270 = vld [vmem:[#allocation7 + $0x2a0] sm:$0xff]
    %v271 = vld [vmem:[#allocation7 + $0x2a8] sm:$0xff]
    %v272 = vld [vmem:[#allocation7 + $0x2b0] sm:$0xff]
    %v273 = vld [vmem:[#allocation7 + $0x2b8] sm:$0xff]
    %v274 = vld [vmem:[#allocation7 + $0x2c0] sm:$0xff]
    %v275 = vld [vmem:[#allocation7 + $0x2c8] sm:$0xff]
    %v276 = vld [vmem:[#allocation7 + $0x2d0] sm:$0xff]
    %v277 = vld [vmem:[#allocation7 + $0x2d8] sm:$0xff]
    %v278 = vld [vmem:[#allocation7 + $0x2e0] sm:$0xff]
    %v279 = vld [vmem:[#allocation7 + $0x2e8] sm:$0xff]
    %v280 = vld [vmem:[#allocation7 + $0x2f0] sm:$0xff]
    %v281 = vld [vmem:[#allocation7 + $0x2f8] sm:$0xff]
    %v282 = vld [vmem:[#allocation7 + $0x300] sm:$0xff]
    %v283 = vld [vmem:[#allocation7 + $0x308] sm:$0xff]
    %v284 = vld [vmem:[#allocation7 + $0x310] sm:$0xff]
    %v285 = vld [vmem:[#allocation7 + $0x318] sm:$0xff]
    %v286 = vld [vmem:[#allocation7 + $0x320] sm:$0xff]
    %v287 = vld [vmem:[#allocation7 + $0x328] sm:$0xff]
    %v288 = vld [vmem:[#allocation7 + $0x330] sm:$0xff]
    %v289 = vld [vmem:[#allocation7 + $0x338] sm:$0xff]
    %v290 = vld [vmem:[#allocation7 + $0x340] sm:$0xff]
    %v291 = vld [vmem:[#allocation7 + $0x348] sm:$0xff]
    %v292 = vld [vmem:[#allocation7 + $0x350] sm:$0xff]
    %v293 = vld [vmem:[#allocation7 + $0x358] sm:$0xff]
    %v294 = vld [vmem:[#allocation7 + $0x360] sm:$0xff]
    %v295 = vld [vmem:[#allocation7 + $0x368] sm:$0xff]
    %v296 = vld [vmem:[#allocation7 + $0x370] sm:$0xff]
    %v297 = vld [vmem:[#allocation7 + $0x378] sm:$0xff]
    %v298 = vld [vmem:[#allocation7 + $0x380] sm:$0xff]
    %v299 = vld [vmem:[#allocation7 + $0x388] sm:$0xff]
    %v300 = vld [vmem:[#allocation7 + $0x390] sm:$0xff]
    %v301 = vld [vmem:[#allocation7 + $0x398] sm:$0xff]
    %v302 = vld [vmem:[#allocation7 + $0x3a0] sm:$0xff]
    %v303 = vld [vmem:[#allocation7 + $0x3a8] sm:$0xff]
    %v304 = vld [vmem:[#allocation7 + $0x3b0] sm:$0xff]
    %v305 = vld [vmem:[#allocation7 + $0x3b8] sm:$0xff]
    %v306 = vld [vmem:[#allocation7 + $0x3c0] sm:$0xff]
    %v307 = vld [vmem:[#allocation7 + $0x3c8] sm:$0xff]
    %v308 = vld [vmem:[#allocation7 + $0x3d0] sm:$0xff]
    %v309 = vld [vmem:[#allocation7 + $0x3d8] sm:$0xff]
    %v310 = vld [vmem:[#allocation7 + $0x3e0] sm:$0xff]
    %v311 = vld [vmem:[#allocation7 + $0x3e8] sm:$0xff]
    %v312 = vld [vmem:[#allocation7 + $0x3f0] sm:$0xff]
    %v313 = vld [vmem:[#allocation7 + $0x3f8] sm:$0xff]
    %v314 = vld [vmem:[#allocation8] sm:$0xf]
    %v315 = vld [vmem:[#allocation8 + $0x4] sm:$0xf]
    %v316 = vld [vmem:[#allocation8 + $0x8] sm:$0xf]
    %v317 = vld [vmem:[#allocation8 + $0xc] sm:$0xf]
    %v318 = vld [vmem:[#allocation8 + $0x10] sm:$0xf]
    %v319 = vld [vmem:[#allocation8 + $0x14] sm:$0xf]
    %v320 = vld [vmem:[#allocation8 + $0x18] sm:$0xf]
    %v321 = vld [vmem:[#allocation8 + $0x1c] sm:$0xf]
    %v322 = vld [vmem:[#allocation8 + $0x20] sm:$0xf]
    %v323 = vld [vmem:[#allocation8 + $0x24] sm:$0xf]
    %v324 = vld [vmem:[#allocation8 + $0x28] sm:$0xf]
    %v325 = vld [vmem:[#allocation8 + $0x2c] sm:$0xf]
    %v326 = vld [vmem:[#allocation8 + $0x30] sm:$0xf]
    %v327 = vld [vmem:[#allocation8 + $0x34] sm:$0xf]
    %v328 = vld [vmem:[#allocation8 + $0x38] sm:$0xf]
    %v329 = vld [vmem:[#allocation8 + $0x3c] sm:$0xf]
    %v330 = vld [vmem:[%s0] sm:$0xf]
    %332 = vst [vmem:[#allocation1] ss:$4 sm:$0xff] %v330
    %v333 = vld.sshfl [vmem:[#allocation1] sm:$0xff pattern:$0x73625140]
    %v334 = vld.sshfl [vmem:[#allocation1 + $0x8] sm:$0xff pattern:$0x73625140]
    %v337 = vpack.c.bf16 %v333, %v333
    %v338 = vpack.c.bf16 %v334, %v334
    %v339 = vld [vmem:[#allocation3] sm:$0xff]
    %v340 = vld [vmem:[#allocation3 + $0x8] sm:$0xff]
    %v341 = vld [vmem:[#allocation3 + $0x10] sm:$0xff]
    %v342 = vld [vmem:[#allocation3 + $0x18] sm:$0xff]
    %v343 = vld [vmem:[#allocation3 + $0x20] sm:$0xff]
    %v344 = vld [vmem:[#allocation3 + $0x28] sm:$0xff]
    %v345 = vld [vmem:[#allocation3 + $0x30] sm:$0xff]
    %v346 = vld [vmem:[#allocation3 + $0x38] sm:$0xff]
    %v347 = vld [vmem:[#allocation3 + $0x40] sm:$0xff]
    %v348 = vld [vmem:[#allocation3 + $0x48] sm:$0xff]
    %v349 = vld [vmem:[#allocation3 + $0x50] sm:$0xff]
    %v350 = vld [vmem:[#allocation3 + $0x58] sm:$0xff]
    %v351 = vld [vmem:[#allocation3 + $0x60] sm:$0xff]
    %v352 = vld [vmem:[#allocation3 + $0x68] sm:$0xff]
    %v353 = vld [vmem:[#allocation3 + $0x70] sm:$0xff]
    %v354 = vld [vmem:[#allocation3 + $0x78] sm:$0xff]
    %v355 = vld [vmem:[#allocation3 + $0x80] sm:$0xff]
    %v356 = vld [vmem:[#allocation3 + $0x88] sm:$0xff]
    %v357 = vld [vmem:[#allocation3 + $0x90] sm:$0xff]
    %v358 = vld [vmem:[#allocation3 + $0x98] sm:$0xff]
    %v359 = vld [vmem:[#allocation3 + $0xa0] sm:$0xff]
    %v360 = vld [vmem:[#allocation3 + $0xa8] sm:$0xff]
    %v361 = vld [vmem:[#allocation3 + $0xb0] sm:$0xff]
    %v362 = vld [vmem:[#allocation3 + $0xb8] sm:$0xff]
    %v363 = vld [vmem:[#allocation3 + $0xc0] sm:$0xff]
    %v364 = vld [vmem:[#allocation3 + $0xc8] sm:$0xff]
    %v365 = vld [vmem:[#allocation3 + $0xd0] sm:$0xff]
    %v366 = vld [vmem:[#allocation3 + $0xd8] sm:$0xff]
    %v367 = vld [vmem:[#allocation3 + $0xe0] sm:$0xff]
    %v368 = vld [vmem:[#allocation3 + $0xe8] sm:$0xff]
    %v369 = vld [vmem:[#allocation3 + $0xf0] sm:$0xff]
    %v370 = vld [vmem:[#allocation3 + $0xf8] sm:$0xff]
    %v371 = vld [vmem:[#allocation3 + $0x100] sm:$0xff]
    %v372 = vld [vmem:[#allocation3 + $0x108] sm:$0xff]
    %v373 = vld [vmem:[#allocation3 + $0x110] sm:$0xff]
    %v374 = vld [vmem:[#allocation3 + $0x118] sm:$0xff]
    %v375 = vld [vmem:[#allocation3 + $0x120] sm:$0xff]
    %v376 = vld [vmem:[#allocation3 + $0x128] sm:$0xff]
    %v377 = vld [vmem:[#allocation3 + $0x130] sm:$0xff]
    %v378 = vld [vmem:[#allocation3 + $0x138] sm:$0xff]
    %v379 = vld [vmem:[#allocation3 + $0x140] sm:$0xff]
    %v380 = vld [vmem:[#allocation3 + $0x148] sm:$0xff]
    %v381 = vld [vmem:[#allocation3 + $0x150] sm:$0xff]
    %v382 = vld [vmem:[#allocation3 + $0x158] sm:$0xff]
    %v383 = vld [vmem:[#allocation3 + $0x160] sm:$0xff]
    %v384 = vld [vmem:[#allocation3 + $0x168] sm:$0xff]
    %v385 = vld [vmem:[#allocation3 + $0x170] sm:$0xff]
    %v386 = vld [vmem:[#allocation3 + $0x178] sm:$0xff]
    %v387 = vld [vmem:[#allocation3 + $0x180] sm:$0xff]
    %v388 = vld [vmem:[#allocation3 + $0x188] sm:$0xff]
    %v389 = vld [vmem:[#allocation3 + $0x190] sm:$0xff]
    %v390 = vld [vmem:[#allocation3 + $0x198] sm:$0xff]
    %v391 = vld [vmem:[#allocation3 + $0x1a0] sm:$0xff]
    %v392 = vld [vmem:[#allocation3 + $0x1a8] sm:$0xff]
    %v393 = vld [vmem:[#allocation3 + $0x1b0] sm:$0xff]
    %v394 = vld [vmem:[#allocation3 + $0x1b8] sm:$0xff]
    %v395 = vld [vmem:[#allocation3 + $0x1c0] sm:$0xff]
    %v396 = vld [vmem:[#allocation3 + $0x1c8] sm:$0xff]
    %v397 = vld [vmem:[#allocation3 + $0x1d0] sm:$0xff]
    %v398 = vld [vmem:[#allocation3 + $0x1d8] sm:$0xff]
    %v399 = vld [vmem:[#allocation3 + $0x1e0] sm:$0xff]
    %v400 = vld [vmem:[#allocation3 + $0x1e8] sm:$0xff]
    %v401 = vld [vmem:[#allocation3 + $0x1f0] sm:$0xff]
    %v402 = vld [vmem:[#allocation3 + $0x1f8] sm:$0xff]
    %v467 = vunpack.c.l.b16 %v339
    %v468 = vunpack.c.h.b16 %v339
    %v469 = vunpack.c.l.b16 %v340
    %v470 = vunpack.c.h.b16 %v340
    %v471 = vunpack.c.l.b16 %v341
    %v472 = vunpack.c.h.b16 %v341
    %v473 = vunpack.c.l.b16 %v342
    %v474 = vunpack.c.h.b16 %v342
    %v475 = vunpack.c.l.b16 %v343
    %v476 = vunpack.c.h.b16 %v343
    %v477 = vunpack.c.l.b16 %v344
    %v478 = vunpack.c.h.b16 %v344
    %v479 = vunpack.c.l.b16 %v345
    %v480 = vunpack.c.h.b16 %v345
    %v481 = vunpack.c.l.b16 %v346
    %v482 = vunpack.c.h.b16 %v346
    %v483 = vunpack.c.l.b16 %v347
    %v484 = vunpack.c.h.b16 %v347
    %v485 = vunpack.c.l.b16 %v348
    %v486 = vunpack.c.h.b16 %v348
    %v487 = vunpack.c.l.b16 %v349
    %v488 = vunpack.c.h.b16 %v349
    %v489 = vunpack.c.l.b16 %v350
    %v490 = vunpack.c.h.b16 %v350
    %v491 = vunpack.c.l.b16 %v351
    %v492 = vunpack.c.h.b16 %v351
    %v493 = vunpack.c.l.b16 %v352
    %v494 = vunpack.c.h.b16 %v352
    %v495 = vunpack.c.l.b16 %v353
    %v496 = vunpack.c.h.b16 %v353
    %v497 = vunpack.c.l.b16 %v354
    %v498 = vunpack.c.h.b16 %v354
    %v499 = vunpack.c.l.b16 %v355
    %v500 = vunpack.c.h.b16 %v355
    %v501 = vunpack.c.l.b16 %v356
    %v502 = vunpack.c.h.b16 %v356
    %v503 = vunpack.c.l.b16 %v357
    %v504 = vunpack.c.h.b16 %v357
    %v505 = vunpack.c.l.b16 %v358
    %v506 = vunpack.c.h.b16 %v358
    %v507 = vunpack.c.l.b16 %v359
    %v508 = vunpack.c.h.b16 %v359
    %v509 = vunpack.c.l.b16 %v360
    %v510 = vunpack.c.h.b16 %v360
    %v511 = vunpack.c.l.b16 %v361
    %v512 = vunpack.c.h.b16 %v361
    %v513 = vunpack.c.l.b16 %v362
    %v514 = vunpack.c.h.b16 %v362
    %v515 = vunpack.c.l.b16 %v363
    %v516 = vunpack.c.h.b16 %v363
    %v517 = vunpack.c.l.b16 %v364
    %v518 = vunpack.c.h.b16 %v364
    %v519 = vunpack.c.l.b16 %v365
    %v520 = vunpack.c.h.b16 %v365
    %v521 = vunpack.c.l.b16 %v366
    %v522 = vunpack.c.h.b16 %v366
    %v523 = vunpack.c.l.b16 %v367
    %v524 = vunpack.c.h.b16 %v367
    %v525 = vunpack.c.l.b16 %v368
    %v526 = vunpack.c.h.b16 %v368
    %v527 = vunpack.c.l.b16 %v369
    %v528 = vunpack.c.h.b16 %v369
    %v529 = vunpack.c.l.b16 %v370
    %v530 = vunpack.c.h.b16 %v370
    %v531 = vunpack.c.l.b16 %v371
    %v532 = vunpack.c.h.b16 %v371
    %v533 = vunpack.c.l.b16 %v372
    %v534 = vunpack.c.h.b16 %v372
    %v535 = vunpack.c.l.b16 %v373
    %v536 = vunpack.c.h.b16 %v373
    %v537 = vunpack.c.l.b16 %v374
    %v538 = vunpack.c.h.b16 %v374
    %v539 = vunpack.c.l.b16 %v375
    %v540 = vunpack.c.h.b16 %v375
    %v541 = vunpack.c.l.b16 %v376
    %v542 = vunpack.c.h.b16 %v376
    %v543 = vunpack.c.l.b16 %v377
    %v544 = vunpack.c.h.b16 %v377
    %v545 = vunpack.c.l.b16 %v378
    %v546 = vunpack.c.h.b16 %v378
    %v547 = vunpack.c.l.b16 %v379
    %v548 = vunpack.c.h.b16 %v379
    %v549 = vunpack.c.l.b16 %v380
    %v550 = vunpack.c.h.b16 %v380
    %v551 = vunpack.c.l.b16 %v381
    %v552 = vunpack.c.h.b16 %v381
    %v553 = vunpack.c.l.b16 %v382
    %v554 = vunpack.c.h.b16 %v382
    %v555 = vunpack.c.l.b16 %v383
    %v556 = vunpack.c.h.b16 %v383
    %v557 = vunpack.c.l.b16 %v384
    %v558 = vunpack.c.h.b16 %v384
    %v559 = vunpack.c.l.b16 %v385
    %v560 = vunpack.c.h.b16 %v385
    %v561 = vunpack.c.l.b16 %v386
    %v562 = vunpack.c.h.b16 %v386
    %v563 = vunpack.c.l.b16 %v387
    %v564 = vunpack.c.h.b16 %v387
    %v565 = vunpack.c.l.b16 %v388
    %v566 = vunpack.c.h.b16 %v388
    %v567 = vunpack.c.l.b16 %v389
    %v568 = vunpack.c.h.b16 %v389
    %v569 = vunpack.c.l.b16 %v390
    %v570 = vunpack.c.h.b16 %v390
    %v571 = vunpack.c.l.b16 %v391
    %v572 = vunpack.c.h.b16 %v391
    %v573 = vunpack.c.l.b16 %v392
    %v574 = vunpack.c.h.b16 %v392
    %v575 = vunpack.c.l.b16 %v393
    %v576 = vunpack.c.h.b16 %v393
    %v577 = vunpack.c.l.b16 %v394
    %v578 = vunpack.c.h.b16 %v394
    %v579 = vunpack.c.l.b16 %v395
    %v580 = vunpack.c.h.b16 %v395
    %v581 = vunpack.c.l.b16 %v396
    %v582 = vunpack.c.h.b16 %v396
    %v583 = vunpack.c.l.b16 %v397
    %v584 = vunpack.c.h.b16 %v397
    %v585 = vunpack.c.l.b16 %v398
    %v586 = vunpack.c.h.b16 %v398
    %v587 = vunpack.c.l.b16 %v399
    %v588 = vunpack.c.h.b16 %v399
    %v589 = vunpack.c.l.b16 %v400
    %v590 = vunpack.c.h.b16 %v400
    %v591 = vunpack.c.l.b16 %v401
    %v592 = vunpack.c.h.b16 %v401
    %v593 = vunpack.c.l.b16 %v402
    %v594 = vunpack.c.h.b16 %v402
    %v595 = vpack.c.b16 %v471, %v467
    %v596 = vpack.c.b16 %v472, %v468
    %v597 = vpack.c.b16 %v473, %v469
    %v598 = vpack.c.b16 %v474, %v470
    %v599 = vpack.c.b16 %v479, %v475
    %v600 = vpack.c.b16 %v480, %v476
    %v601 = vpack.c.b16 %v481, %v477
    %v602 = vpack.c.b16 %v482, %v478
    %v603 = vpack.c.b16 %v487, %v483
    %v604 = vpack.c.b16 %v488, %v484
    %v605 = vpack.c.b16 %v489, %v485
    %v606 = vpack.c.b16 %v490, %v486
    %v607 = vpack.c.b16 %v495, %v491
    %v608 = vpack.c.b16 %v496, %v492
    %v609 = vpack.c.b16 %v497, %v493
    %v610 = vpack.c.b16 %v498, %v494
    %v611 = vpack.c.b16 %v503, %v499
    %v612 = vpack.c.b16 %v504, %v500
    %v613 = vpack.c.b16 %v505, %v501
    %v614 = vpack.c.b16 %v506, %v502
    %v615 = vpack.c.b16 %v511, %v507
    %v616 = vpack.c.b16 %v512, %v508
    %v617 = vpack.c.b16 %v513, %v509
    %v618 = vpack.c.b16 %v514, %v510
    %v619 = vpack.c.b16 %v519, %v515
    %v620 = vpack.c.b16 %v520, %v516
    %v621 = vpack.c.b16 %v521, %v517
    %v622 = vpack.c.b16 %v522, %v518
    %v623 = vpack.c.b16 %v527, %v523
    %v624 = vpack.c.b16 %v528, %v524
    %v625 = vpack.c.b16 %v529, %v525
    %v626 = vpack.c.b16 %v530, %v526
    %v627 = vpack.c.b16 %v535, %v531
    %v628 = vpack.c.b16 %v536, %v532
    %v629 = vpack.c.b16 %v537, %v533
    %v630 = vpack.c.b16 %v538, %v534
    %v631 = vpack.c.b16 %v543, %v539
    %v632 = vpack.c.b16 %v544, %v540
    %v633 = vpack.c.b16 %v545, %v541
    %v634 = vpack.c.b16 %v546, %v542
    %v635 = vpack.c.b16 %v551, %v547
    %v636 = vpack.c.b16 %v552, %v548
    %v637 = vpack.c.b16 %v553, %v549
    %v638 = vpack.c.b16 %v554, %v550
    %v639 = vpack.c.b16 %v559, %v555
    %v640 = vpack.c.b16 %v560, %v556
    %v641 = vpack.c.b16 %v561, %v557
    %v642 = vpack.c.b16 %v562, %v558
    %v643 = vpack.c.b16 %v567, %v563
    %v644 = vpack.c.b16 %v568, %v564
    %v645 = vpack.c.b16 %v569, %v565
    %v646 = vpack.c.b16 %v570, %v566
    %v647 = vpack.c.b16 %v575, %v571
    %v648 = vpack.c.b16 %v576, %v572
    %v649 = vpack.c.b16 %v577, %v573
    %v650 = vpack.c.b16 %v578, %v574
    %v651 = vpack.c.b16 %v583, %v579
    %v652 = vpack.c.b16 %v584, %v580
    %v653 = vpack.c.b16 %v585, %v581
    %v654 = vpack.c.b16 %v586, %v582
    %v655 = vpack.c.b16 %v591, %v587
    %v656 = vpack.c.b16 %v592, %v588
    %v657 = vpack.c.b16 %v593, %v589
    %v658 = vpack.c.b16 %v594, %v590
    %723 = vmatpush.bf16.msra.mxu0 %v623
    %724 = vmatpush.bf16.msra.mxu0 %v619
    %725 = vmatpush.bf16.msra.mxu0 %v615
    %726 = vmatpush.bf16.msra.mxu0 %v611
    %727 = vmatpush.bf16.msra.mxu0 %v607
    %728 = vmatpush.bf16.msra.mxu0 %v603
    %729 = vmatpush.bf16.msra.mxu0 %v599
    %730 = vmatpush.bf16.msra.mxu0 %v595
    %731 = vmatmul.bf16.gmra.mxu0 %v337
    %v732 = vpop.f32.mrf.mxu0
    %v733 = vadd.f32 0.0, %v732
    %v734 = vpop.f32.mrf.mxu0
    %735 = vdwg.mxu0
    %736 = vmatpush.bf16.msra.mxu0 %v655
    %737 = vmatpush.bf16.msra.mxu0 %v651
    %738 = vmatpush.bf16.msra.mxu0 %v647
    %739 = vmatpush.bf16.msra.mxu0 %v643
    %740 = vmatpush.bf16.msra.mxu0 %v639
    %741 = vmatpush.bf16.msra.mxu0 %v635
    %742 = vmatpush.bf16.msra.mxu0 %v631
    %743 = vmatpush.bf16.msra.mxu0 %v627
    %744 = vmatmul.bf16.gmra.mxu0 %v338
    %v745 = vpop.f32.mrf.mxu0
    %v746 = vadd.f32 %v733, %v745
    %v747 = vpop.f32.mrf.mxu0
    %748 = vdwg.mxu0
    %749 = vmatpush.bf16.msra.mxu0 %v624
    %750 = vmatpush.bf16.msra.mxu0 %v620
    %751 = vmatpush.bf16.msra.mxu0 %v616
    %752 = vmatpush.bf16.msra.mxu0 %v612
    %753 = vmatpush.bf16.msra.mxu0 %v608
    %754 = vmatpush.bf16.msra.mxu0 %v604
    %755 = vmatpush.bf16.msra.mxu0 %v600
    %756 = vmatpush.bf16.msra.mxu0 %v596
    %757 = vmatmul.bf16.gmra.mxu0 %v337
    %v758 = vpop.f32.mrf.mxu0
    %v759 = vadd.f32 0.0, %v758
    %v760 = vpop.f32.mrf.mxu0
    %761 = vdwg.mxu0
    %762 = vmatpush.bf16.msra.mxu0 %v656
    %763 = vmatpush.bf16.msra.mxu0 %v652
    %764 = vmatpush.bf16.msra.mxu0 %v648
    %765 = vmatpush.bf16.msra.mxu0 %v644
    %766 = vmatpush.bf16.msra.mxu0 %v640
    %767 = vmatpush.bf16.msra.mxu0 %v636
    %768 = vmatpush.bf16.msra.mxu0 %v632
    %769 = vmatpush.bf16.msra.mxu0 %v628
    %770 = vmatmul.bf16.gmra.mxu0 %v338
    %v771 = vpop.f32.mrf.mxu0
    %v772 = vadd.f32 %v759, %v771
    %v773 = vpop.f32.mrf.mxu0
    %774 = vdwg.mxu0
    %775 = vmatpush.bf16.msra.mxu0 %v625
    %776 = vmatpush.bf16.msra.mxu0 %v621
    %777 = vmatpush.bf16.msra.mxu0 %v617
    %778 = vmatpush.bf16.msra.mxu0 %v613
    %779 = vmatpush.bf16.msra.mxu0 %v609
    %780 = vmatpush.bf16.msra.mxu0 %v605
    %781 = vmatpush.bf16.msra.mxu0 %v601
    %782 = vmatpush.bf16.msra.mxu0 %v597
    %783 = vmatmul.bf16.gmra.mxu0 %v337
    %v784 = vpop.f32.mrf.mxu0
    %v785 = vadd.f32 0.0, %v784
    %v786 = vpop.f32.mrf.mxu0
    %787 = vdwg.mxu0
    %788 = vmatpush.bf16.msra.mxu0 %v657
    %789 = vmatpush.bf16.msra.mxu0 %v653
    %790 = vmatpush.bf16.msra.mxu0 %v649
    %791 = vmatpush.bf16.msra.mxu0 %v645
    %792 = vmatpush.bf16.msra.mxu0 %v641
    %793 = vmatpush.bf16.msra.mxu0 %v637
    %794 = vmatpush.bf16.msra.mxu0 %v633
    %795 = vmatpush.bf16.msra.mxu0 %v629
    %796 = vmatmul.bf16.gmra.mxu0 %v338
    %v797 = vpop.f32.mrf.mxu0
    %v798 = vadd.f32 %v785, %v797
    %v799 = vpop.f32.mrf.mxu0
    %800 = vdwg.mxu0
    %801 = vmatpush.bf16.msra.mxu0 %v626
    %802 = vmatpush.bf16.msra.mxu0 %v622
    %803 = vmatpush.bf16.msra.mxu0 %v618
    %804 = vmatpush.bf16.msra.mxu0 %v614
    %805 = vmatpush.bf16.msra.mxu0 %v610
    %806 = vmatpush.bf16.msra.mxu0 %v606
    %807 = vmatpush.bf16.msra.mxu0 %v602
    %808 = vmatpush.bf16.msra.mxu0 %v598
    %809 = vmatmul.bf16.gmra.mxu0 %v337
    %v810 = vpop.f32.mrf.mxu0
    %v811 = vadd.f32 0.0, %v810
    %v812 = vpop.f32.mrf.mxu0
    %813 = vdwg.mxu0
    %814 = vmatpush.bf16.msra.mxu0 %v658
    %815 = vmatpush.bf16.msra.mxu0 %v654
    %816 = vmatpush.bf16.msra.mxu0 %v650
    %817 = vmatpush.bf16.msra.mxu0 %v646
    %818 = vmatpush.bf16.msra.mxu0 %v642
    %819 = vmatpush.bf16.msra.mxu0 %v638
    %820 = vmatpush.bf16.msra.mxu0 %v634
    %821 = vmatpush.bf16.msra.mxu0 %v630
    %822 = vmatmul.bf16.gmra.mxu0 %v338
    %v823 = vpop.f32.mrf.mxu0
    %v824 = vadd.f32 %v811, %v823
    %v825 = vpop.f32.mrf.mxu0
    %826 = vdwg.mxu0
    %v827 = vadd.f32 %v746, %v772
    %v828 = vadd.f32 %v827, %v798
    %v829 = vadd.f32 %v828, %v824
    %vm830 = vcmask 1041408
    %v831 = vsel %vm830, %v829, 0.0
    %v832 = vrot.slane %v831, 4
    %v833 = vadd.f32 %v831, %v832
    %v834 = vrot.slane %v833, 2
    %v835 = vadd.f32 %v833, %v834
    %v836 = vrot.slane %v835, 1
    %v837 = vadd.f32 %v835, %v836
    %v838 = vmul.f32 %v746, %v746
    %v839 = vmul.f32 %v772, %v772
    %v840 = vadd.f32 %v838, %v839
    %v841 = vmul.f32 %v798, %v798
    %v842 = vadd.f32 %v840, %v841
    %v843 = vmul.f32 %v824, %v824
    %v844 = vadd.f32 %v842, %v843
    %v845 = vsel %vm830, %v844, 0.0
    %v846 = vrot.slane %v845, 4
    %v847 = vadd.f32 %v845, %v846
    %v848 = vrot.slane %v847, 2
    %v849 = vadd.f32 %v847, %v848
    %v850 = vrot.slane %v849, 1
    %v851 = vadd.f32 %v849, %v850
    %v852 = vmul.f32 %v837, 0.125
    %v853 = vmul.f32 %v851, 0.125
    %v854 = vmul.f32 %v852, %v852
    %v855 = vsub.f32 %v853, %v854
    %v856 = vmax.f32 %v855, 0.0
    %v857 = vadd.f32 %v856, 1e-05
    %v858 = vrsqrt.pop %v857
    %v859 = vmul.f32 %v858, %v857
    %v860 = vmul.f32 %v859, %v858
    %v861 = vmul.f32 0.5, %v860
    %v862 = vsub.f32 1.5, %v861
    %v863 = vmul.f32 %v858, %v862
    %vm864 = vweird.f32 %v857
    %vm865 = vweird.f32 %v858
    %vm866 = vmor %vm864, %vm865
    %v867 = vsel %vm866, %v858, %v863
    %v868 = vmul.f32 %v99, %v867
    %v869 = vmul.f32 %v852, %v868
    %v870 = vsub.f32 %v100, %v869
    %v871 = vperm.slane %v868, 0
    %v872 = vmul.f32 %v746, %v871
    %v873 = vperm.slane %v870, 0
    %v874 = vadd.f32 %v872, %v873
    %v875 = vmax.f32 %v874, 0.0
    %v876 = vpack.c.bf16 %v875, %v875
    %v877 = vmul.f32 %v772, %v871
    %v878 = vadd.f32 %v877, %v873
    %v879 = vmax.f32 %v878, 0.0
    %v880 = vpack.c.bf16 %v879, %v879
    %v881 = vmul.f32 %v798, %v871
    %v882 = vadd.f32 %v881, %v873
    %v883 = vmax.f32 %v882, 0.0
    %v884 = vpack.c.bf16 %v883, %v883
    %v885 = vmul.f32 %v824, %v871
    %v886 = vadd.f32 %v885, %v873
    %v887 = vmax.f32 %v886, 0.0
    %v888 = vpack.c.bf16 %v887, %v887
    %v969 = vunpack.c.l.b16 %v106
    %v970 = vunpack.c.h.b16 %v106
    %v971 = vunpack.c.l.b16 %v107
    %v972 = vunpack.c.h.b16 %v107
    %v973 = vunpack.c.l.b16 %v108
    %v974 = vunpack.c.h.b16 %v108
    %v975 = vunpack.c.l.b16 %v109
    %v976 = vunpack.c.h.b16 %v109
    %v977 = vunpack.c.l.b16 %v110
    %v978 = vunpack.c.l.b16 %v111
    %v979 = vunpack.c.h.b16 %v111
    %v980 = vunpack.c.l.b16 %v112
    %v981 = vunpack.c.h.b16 %v112
    %v982 = vunpack.c.l.b16 %v113
    %v983 = vunpack.c.h.b16 %v113
    %v984 = vunpack.c.l.b16 %v114
    %v985 = vunpack.c.h.b16 %v114
    %v986 = vunpack.c.l.b16 %v115
    %v987 = vunpack.c.l.b16 %v116
    %v988 = vunpack.c.h.b16 %v116
    %v989 = vunpack.c.l.b16 %v117
    %v990 = vunpack.c.h.b16 %v117
    %v991 = vunpack.c.l.b16 %v118
    %v992 = vunpack.c.h.b16 %v118
    %v993 = vunpack.c.l.b16 %v119
    %v994 = vunpack.c.h.b16 %v119
    %v995 = vunpack.c.l.b16 %v120
    %v996 = vunpack.c.l.b16 %v121
    %v997 = vunpack.c.h.b16 %v121
    %v998 = vunpack.c.l.b16 %v122
    %v999 = vunpack.c.h.b16 %v122
    %v1000 = vunpack.c.l.b16 %v123
    %v1001 = vunpack.c.h.b16 %v123
    %v1002 = vunpack.c.l.b16 %v124
    %v1003 = vunpack.c.h.b16 %v124
    %v1004 = vunpack.c.l.b16 %v125
    %v1005 = vunpack.c.l.b16 %v126
    %v1006 = vunpack.c.h.b16 %v126
    %v1007 = vunpack.c.l.b16 %v127
    %v1008 = vunpack.c.h.b16 %v127
    %v1009 = vunpack.c.l.b16 %v128
    %v1010 = vunpack.c.h.b16 %v128
    %v1011 = vunpack.c.l.b16 %v129
    %v1012 = vunpack.c.h.b16 %v129
    %v1013 = vunpack.c.l.b16 %v130
    %v1014 = vunpack.c.l.b16 %v131
    %v1015 = vunpack.c.h.b16 %v131
    %v1016 = vunpack.c.l.b16 %v132
    %v1017 = vunpack.c.h.b16 %v132
    %v1018 = vunpack.c.l.b16 %v133
    %v1019 = vunpack.c.h.b16 %v133
    %v1020 = vunpack.c.l.b16 %v134
    %v1021 = vunpack.c.h.b16 %v134
    %v1022 = vunpack.c.l.b16 %v135
    %v1023 = vunpack.c.l.b16 %v136
    %v1024 = vunpack.c.h.b16 %v136
    %v1025 = vunpack.c.l.b16 %v137
    %v1026 = vunpack.c.h.b16 %v137
    %v1027 = vunpack.c.l.b16 %v138
    %v1028 = vunpack.c.h.b16 %v138
    %v1029 = vunpack.c.l.b16 %v139
    %v1030 = vunpack.c.h.b16 %v139
    %v1031 = vunpack.c.l.b16 %v140
    %v1032 = vunpack.c.l.b16 %v141
    %v1033 = vunpack.c.h.b16 %v141
    %v1034 = vunpack.c.l.b16 %v142
    %v1035 = vunpack.c.h.b16 %v142
    %v1036 = vunpack.c.l.b16 %v143
    %v1037 = vunpack.c.h.b16 %v143
    %v1038 = vunpack.c.l.b16 %v144
    %v1039 = vunpack.c.h.b16 %v144
    %v1040 = vunpack.c.l.b16 %v145
    %v1041 = vunpack.c.l.b16 %v146
    %v1042 = vunpack.c.h.b16 %v146
    %v1043 = vunpack.c.l.b16 %v147
    %v1044 = vunpack.c.h.b16 %v147
    %v1045 = vunpack.c.l.b16 %v148
    %v1046 = vunpack.c.h.b16 %v148
    %v1047 = vunpack.c.l.b16 %v149
    %v1048 = vunpack.c.h.b16 %v149
    %v1049 = vunpack.c.l.b16 %v150
    %v1050 = vunpack.c.l.b16 %v151
    %v1051 = vunpack.c.h.b16 %v151
    %v1052 = vunpack.c.l.b16 %v152
    %v1053 = vunpack.c.h.b16 %v152
    %v1054 = vunpack.c.l.b16 %v153
    %v1055 = vunpack.c.h.b16 %v153
    %v1056 = vunpack.c.l.b16 %v154
    %v1057 = vunpack.c.h.b16 %v154
    %v1058 = vunpack.c.l.b16 %v155
    %v1059 = vunpack.c.l.b16 %v156
    %v1060 = vunpack.c.h.b16 %v156
    %v1061 = vunpack.c.l.b16 %v157
    %v1062 = vunpack.c.h.b16 %v157
    %v1063 = vunpack.c.l.b16 %v158
    %v1064 = vunpack.c.h.b16 %v158
    %v1065 = vunpack.c.l.b16 %v159
    %v1066 = vunpack.c.h.b16 %v159
    %v1067 = vunpack.c.l.b16 %v160
    %v1068 = vunpack.c.l.b16 %v161
    %v1069 = vunpack.c.h.b16 %v161
    %v1070 = vunpack.c.l.b16 %v162
    %v1071 = vunpack.c.h.b16 %v162
    %v1072 = vunpack.c.l.b16 %v163
    %v1073 = vunpack.c.h.b16 %v163
    %v1074 = vunpack.c.l.b16 %v164
    %v1075 = vunpack.c.h.b16 %v164
    %v1076 = vunpack.c.l.b16 %v165
    %v1077 = vunpack.c.l.b16 %v166
    %v1078 = vunpack.c.h.b16 %v166
    %v1079 = vunpack.c.l.b16 %v167
    %v1080 = vunpack.c.h.b16 %v167
    %v1081 = vunpack.c.l.b16 %v168
    %v1082 = vunpack.c.h.b16 %v168
    %v1083 = vunpack.c.l.b16 %v169
    %v1084 = vunpack.c.h.b16 %v169
    %v1085 = vunpack.c.l.b16 %v170
    %v1086 = vunpack.c.l.b16 %v171
    %v1087 = vunpack.c.h.b16 %v171
    %v1088 = vunpack.c.l.b16 %v172
    %v1089 = vunpack.c.h.b16 %v172
    %v1090 = vunpack.c.l.b16 %v173
    %v1091 = vunpack.c.h.b16 %v173
    %v1092 = vunpack.c.l.b16 %v174
    %v1093 = vunpack.c.h.b16 %v174
    %v1094 = vunpack.c.l.b16 %v175
    %v1095 = vunpack.c.l.b16 %v176
    %v1096 = vunpack.c.h.b16 %v176
    %v1097 = vunpack.c.l.b16 %v177
    %v1098 = vunpack.c.h.b16 %v177
    %v1099 = vunpack.c.l.b16 %v178
    %v1100 = vunpack.c.h.b16 %v178
    %v1101 = vunpack.c.l.b16 %v179
    %v1102 = vunpack.c.h.b16 %v179
    %v1103 = vunpack.c.l.b16 %v180
    %v1104 = vunpack.c.l.b16 %v181
    %v1105 = vunpack.c.h.b16 %v181
    %v1106 = vunpack.c.l.b16 %v182
    %v1107 = vunpack.c.h.b16 %v182
    %v1108 = vunpack.c.l.b16 %v183
    %v1109 = vunpack.c.h.b16 %v183
    %v1110 = vunpack.c.l.b16 %v184
    %v1111 = vunpack.c.h.b16 %v184
    %v1112 = vunpack.c.l.b16 %v185
    %v1113 = vpack.c.b16 %v978, %v969
    %v1114 = vpack.c.b16 %v979, %v970
    %v1115 = vpack.c.b16 %v980, %v971
    %v1116 = vpack.c.b16 %v981, %v972
    %v1117 = vpack.c.b16 %v982, %v973
    %v1118 = vpack.c.b16 %v983, %v974
    %v1119 = vpack.c.b16 %v984, %v975
    %v1120 = vpack.c.b16 %v985, %v976
    %v1121 = vpack.c.b16 %v986, %v977
    %v1122 = vpack.c.b16 %v996, %v987
    %v1123 = vpack.c.b16 %v997, %v988
    %v1124 = vpack.c.b16 %v998, %v989
    %v1125 = vpack.c.b16 %v999, %v990
    %v1126 = vpack.c.b16 %v1000, %v991
    %v1127 = vpack.c.b16 %v1001, %v992
    %v1128 = vpack.c.b16 %v1002, %v993
    %v1129 = vpack.c.b16 %v1003, %v994
    %v1130 = vpack.c.b16 %v1004, %v995
    %v1131 = vpack.c.b16 %v1014, %v1005
    %v1132 = vpack.c.b16 %v1015, %v1006
    %v1133 = vpack.c.b16 %v1016, %v1007
    %v1134 = vpack.c.b16 %v1017, %v1008
    %v1135 = vpack.c.b16 %v1018, %v1009
    %v1136 = vpack.c.b16 %v1019, %v1010
    %v1137 = vpack.c.b16 %v1020, %v1011
    %v1138 = vpack.c.b16 %v1021, %v1012
    %v1139 = vpack.c.b16 %v1022, %v1013
    %v1140 = vpack.c.b16 %v1032, %v1023
    %v1141 = vpack.c.b16 %v1033, %v1024
    %v1142 = vpack.c.b16 %v1034, %v1025
    %v1143 = vpack.c.b16 %v1035, %v1026
    %v1144 = vpack.c.b16 %v1036, %v1027
    %v1145 = vpack.c.b16 %v1037, %v1028
    %v1146 = vpack.c.b16 %v1038, %v1029
    %v1147 = vpack.c.b16 %v1039, %v1030
    %v1148 = vpack.c.b16 %v1040, %v1031
    %v1149 = vpack.c.b16 %v1050, %v1041
    %v1150 = vpack.c.b16 %v1051, %v1042
    %v1151 = vpack.c.b16 %v1052, %v1043
    %v1152 = vpack.c.b16 %v1053, %v1044
    %v1153 = vpack.c.b16 %v1054, %v1045
    %v1154 = vpack.c.b16 %v1055, %v1046
    %v1155 = vpack.c.b16 %v1056, %v1047
    %v1156 = vpack.c.b16 %v1057, %v1048
    %v1157 = vpack.c.b16 %v1058, %v1049
    %v1158 = vpack.c.b16 %v1068, %v1059
    %v1159 = vpack.c.b16 %v1069, %v1060
    %v1160 = vpack.c.b16 %v1070, %v1061
    %v1161 = vpack.c.b16 %v1071, %v1062
    %v1162 = vpack.c.b16 %v1072, %v1063
    %v1163 = vpack.c.b16 %v1073, %v1064
    %v1164 = vpack.c.b16 %v1074, %v1065
    %v1165 = vpack.c.b16 %v1075, %v1066
    %v1166 = vpack.c.b16 %v1076, %v1067
    %v1167 = vpack.c.b16 %v1086, %v1077
    %v1168 = vpack.c.b16 %v1087, %v1078
    %v1169 = vpack.c.b16 %v1088, %v1079
    %v1170 = vpack.c.b16 %v1089, %v1080
    %v1171 = vpack.c.b16 %v1090, %v1081
    %v1172 = vpack.c.b16 %v1091, %v1082
    %v1173 = vpack.c.b16 %v1092, %v1083
    %v1174 = vpack.c.b16 %v1093, %v1084
    %v1175 = vpack.c.b16 %v1094, %v1085
    %v1176 = vpack.c.b16 %v1104, %v1095
    %v1177 = vpack.c.b16 %v1105, %v1096
    %v1178 = vpack.c.b16 %v1106, %v1097
    %v1179 = vpack.c.b16 %v1107, %v1098
    %v1180 = vpack.c.b16 %v1108, %v1099
    %v1181 = vpack.c.b16 %v1109, %v1100
    %v1182 = vpack.c.b16 %v1110, %v1101
    %v1183 = vpack.c.b16 %v1111, %v1102
    %v1184 = vpack.c.b16 %v1112, %v1103
    %1257 = vmatpush.bf16.msra.mxu0 %v1176
    %1258 = vmatpush.bf16.msra.mxu0 %v1167
    %1259 = vmatpush.bf16.msra.mxu0 %v1158
    %1260 = vmatpush.bf16.msra.mxu0 %v1149
    %1261 = vmatpush.bf16.msra.mxu0 %v1140
    %1262 = vmatpush.bf16.msra.mxu0 %v1131
    %1263 = vmatpush.bf16.msra.mxu0 %v1122
    %1264 = vmatpush.bf16.msra.mxu0 %v1113
    %1265 = vmatmul.bf16.gmra.mxu0 %v876
    %v1266 = vpop.f32.mrf.mxu0
    %v1267 = vadd.f32 0.0, %v1266
    %v1268 = vpop.f32.mrf.mxu0
    %1269 = vdwg.mxu0
    %1270 = vmatpush.bf16.msra.mxu0 %v1177
    %1271 = vmatpush.bf16.msra.mxu0 %v1168
    %1272 = vmatpush.bf16.msra.mxu0 %v1159
    %1273 = vmatpush.bf16.msra.mxu0 %v1150
    %1274 = vmatpush.bf16.msra.mxu0 %v1141
    %1275 = vmatpush.bf16.msra.mxu0 %v1132
    %1276 = vmatpush.bf16.msra.mxu0 %v1123
    %1277 = vmatpush.bf16.msra.mxu0 %v1114
    %1278 = vmatmul.bf16.gmra.mxu0 %v876
    %v1279 = vpop.f32.mrf.mxu0
    %v1280 = vadd.f32 0.0, %v1279
    %v1281 = vpop.f32.mrf.mxu0
    %1282 = vdwg.mxu0
    %1283 = vmatpush.bf16.msra.mxu0 %v1178
    %1284 = vmatpush.bf16.msra.mxu0 %v1169
    %1285 = vmatpush.bf16.msra.mxu0 %v1160
    %1286 = vmatpush.bf16.msra.mxu0 %v1151
    %1287 = vmatpush.bf16.msra.mxu0 %v1142
    %1288 = vmatpush.bf16.msra.mxu0 %v1133
    %1289 = vmatpush.bf16.msra.mxu0 %v1124
    %1290 = vmatpush.bf16.msra.mxu0 %v1115
    %1291 = vmatmul.bf16.gmra.mxu0 %v876
    %v1292 = vpop.f32.mrf.mxu0
    %v1293 = vadd.f32 0.0, %v1292
    %v1294 = vpop.f32.mrf.mxu0
    %1295 = vdwg.mxu0
    %1296 = vmatpush.bf16.msra.mxu0 %v1179
    %1297 = vmatpush.bf16.msra.mxu0 %v1170
    %1298 = vmatpush.bf16.msra.mxu0 %v1161
    %1299 = vmatpush.bf16.msra.mxu0 %v1152
    %1300 = vmatpush.bf16.msra.mxu0 %v1143
    %1301 = vmatpush.bf16.msra.mxu0 %v1134
    %1302 = vmatpush.bf16.msra.mxu0 %v1125
    %1303 = vmatpush.bf16.msra.mxu0 %v1116
    %1304 = vmatmul.bf16.gmra.mxu0 %v876
    %v1305 = vpop.f32.mrf.mxu0
    %v1306 = vadd.f32 0.0, %v1305
    %v1307 = vpop.f32.mrf.mxu0
    %1308 = vdwg.mxu0
    %1309 = vmatpush.bf16.msra.mxu0 %v1180
    %1310 = vmatpush.bf16.msra.mxu0 %v1171
    %1311 = vmatpush.bf16.msra.mxu0 %v1162
    %1312 = vmatpush.bf16.msra.mxu0 %v1153
    %1313 = vmatpush.bf16.msra.mxu0 %v1144
    %1314 = vmatpush.bf16.msra.mxu0 %v1135
    %1315 = vmatpush.bf16.msra.mxu0 %v1126
    %1316 = vmatpush.bf16.msra.mxu0 %v1117
    %1317 = vmatmul.bf16.gmra.mxu0 %v876
    %v1318 = vpop.f32.mrf.mxu0
    %v1319 = vadd.f32 0.0, %v1318
    %v1320 = vpop.f32.mrf.mxu0
    %1321 = vdwg.mxu0
    %1322 = vmatpush.bf16.msra.mxu0 %v1181
    %1323 = vmatpush.bf16.msra.mxu0 %v1172
    %1324 = vmatpush.bf16.msra.mxu0 %v1163
    %1325 = vmatpush.bf16.msra.mxu0 %v1154
    %1326 = vmatpush.bf16.msra.mxu0 %v1145
    %1327 = vmatpush.bf16.msra.mxu0 %v1136
    %1328 = vmatpush.bf16.msra.mxu0 %v1127
    %1329 = vmatpush.bf16.msra.mxu0 %v1118
    %1330 = vmatmul.bf16.gmra.mxu0 %v876
    %v1331 = vpop.f32.mrf.mxu0
    %v1332 = vadd.f32 0.0, %v1331
    %v1333 = vpop.f32.mrf.mxu0
    %1334 = vdwg.mxu0
    %1335 = vmatpush.bf16.msra.mxu0 %v1182
    %1336 = vmatpush.bf16.msra.mxu0 %v1173
    %1337 = vmatpush.bf16.msra.mxu0 %v1164
    %1338 = vmatpush.bf16.msra.mxu0 %v1155
    %1339 = vmatpush.bf16.msra.mxu0 %v1146
    %1340 = vmatpush.bf16.msra.mxu0 %v1137
    %1341 = vmatpush.bf16.msra.mxu0 %v1128
    %1342 = vmatpush.bf16.msra.mxu0 %v1119
    %1343 = vmatmul.bf16.gmra.mxu0 %v876
    %v1344 = vpop.f32.mrf.mxu0
    %v1345 = vadd.f32 0.0, %v1344
    %v1346 = vpop.f32.mrf.mxu0
    %1347 = vdwg.mxu0
    %1348 = vmatpush.bf16.msra.mxu0 %v1183
    %1349 = vmatpush.bf16.msra.mxu0 %v1174
    %1350 = vmatpush.bf16.msra.mxu0 %v1165
    %1351 = vmatpush.bf16.msra.mxu0 %v1156
    %1352 = vmatpush.bf16.msra.mxu0 %v1147
    %1353 = vmatpush.bf16.msra.mxu0 %v1138
    %1354 = vmatpush.bf16.msra.mxu0 %v1129
    %1355 = vmatpush.bf16.msra.mxu0 %v1120
    %1356 = vmatmul.bf16.gmra.mxu0 %v876
    %v1357 = vpop.f32.mrf.mxu0
    %v1358 = vadd.f32 0.0, %v1357
    %v1359 = vpop.f32.mrf.mxu0
    %1360 = vdwg.mxu0
    %1361 = vmatpush.bf16.msra.mxu0 %v1184
    %1362 = vmatpush.bf16.msra.mxu0 %v1175
    %1363 = vmatpush.bf16.msra.mxu0 %v1166
    %1364 = vmatpush.bf16.msra.mxu0 %v1157
    %1365 = vmatpush.bf16.msra.mxu0 %v1148
    %1366 = vmatpush.bf16.msra.mxu0 %v1139
    %1367 = vmatpush.bf16.msra.mxu0 %v1130
    %1368 = vmatpush.bf16.msra.mxu0 %v1121
    %1369 = vmatmul.bf16.gmra.mxu0 %v876
    %v1370 = vpop.f32.mrf.mxu0
    %v1371 = vadd.f32 0.0, %v1370
    %v1372 = vpop.f32.mrf.mxu0
    %1373 = vdwg.mxu0
    %1374 = vmatpush.bf16.msra.mxu0 %v1176
    %1375 = vmatpush.bf16.msra.mxu0 %v1167
    %1376 = vmatpush.bf16.msra.mxu0 %v1158
    %1377 = vmatpush.bf16.msra.mxu0 %v1149
    %1378 = vmatpush.bf16.msra.mxu0 %v1140
    %1379 = vmatpush.bf16.msra.mxu0 %v1131
    %1380 = vmatpush.bf16.msra.mxu0 %v1122
    %1381 = vmatpush.bf16.msra.mxu0 %v1113
    %1382 = vmatmul.bf16.gmra.mxu0 %v880
    %v1383 = vpop.f32.mrf.mxu0
    %v1384 = vadd.f32 0.0, %v1383
    %v1385 = vpop.f32.mrf.mxu0
    %1386 = vdwg.mxu0
    %1387 = vmatpush.bf16.msra.mxu0 %v1177
    %1388 = vmatpush.bf16.msra.mxu0 %v1168
    %1389 = vmatpush.bf16.msra.mxu0 %v1159
    %1390 = vmatpush.bf16.msra.mxu0 %v1150
    %1391 = vmatpush.bf16.msra.mxu0 %v1141
    %1392 = vmatpush.bf16.msra.mxu0 %v1132
    %1393 = vmatpush.bf16.msra.mxu0 %v1123
    %1394 = vmatpush.bf16.msra.mxu0 %v1114
    %1395 = vmatmul.bf16.gmra.mxu0 %v880
    %v1396 = vpop.f32.mrf.mxu0
    %v1397 = vadd.f32 0.0, %v1396
    %v1398 = vpop.f32.mrf.mxu0
    %1399 = vdwg.mxu0
    %1400 = vmatpush.bf16.msra.mxu0 %v1178
    %1401 = vmatpush.bf16.msra.mxu0 %v1169
    %1402 = vmatpush.bf16.msra.mxu0 %v1160
    %1403 = vmatpush.bf16.msra.mxu0 %v1151
    %1404 = vmatpush.bf16.msra.mxu0 %v1142
    %1405 = vmatpush.bf16.msra.mxu0 %v1133
    %1406 = vmatpush.bf16.msra.mxu0 %v1124
    %1407 = vmatpush.bf16.msra.mxu0 %v1115
    %1408 = vmatmul.bf16.gmra.mxu0 %v880
    %v1409 = vpop.f32.mrf.mxu0
    %v1410 = vadd.f32 0.0, %v1409
    %v1411 = vpop.f32.mrf.mxu0
    %1412 = vdwg.mxu0
    %1413 = vmatpush.bf16.msra.mxu0 %v1179
    %1414 = vmatpush.bf16.msra.mxu0 %v1170
    %1415 = vmatpush.bf16.msra.mxu0 %v1161
    %1416 = vmatpush.bf16.msra.mxu0 %v1152
    %1417 = vmatpush.bf16.msra.mxu0 %v1143
    %1418 = vmatpush.bf16.msra.mxu0 %v1134
    %1419 = vmatpush.bf16.msra.mxu0 %v1125
    %1420 = vmatpush.bf16.msra.mxu0 %v1116
    %1421 = vmatmul.bf16.gmra.mxu0 %v880
    %v1422 = vpop.f32.mrf.mxu0
    %v1423 = vadd.f32 0.0, %v1422
    %v1424 = vpop.f32.mrf.mxu0
    %1425 = vdwg.mxu0
    %1426 = vmatpush.bf16.msra.mxu0 %v1180
    %1427 = vmatpush.bf16.msra.mxu0 %v1171
    %1428 = vmatpush.bf16.msra.mxu0 %v1162
    %1429 = vmatpush.bf16.msra.mxu0 %v1153
    %1430 = vmatpush.bf16.msra.mxu0 %v1144
    %1431 = vmatpush.bf16.msra.mxu0 %v1135
    %1432 = vmatpush.bf16.msra.mxu0 %v1126
    %1433 = vmatpush.bf16.msra.mxu0 %v1117
    %1434 = vmatmul.bf16.gmra.mxu0 %v880
    %v1435 = vpop.f32.mrf.mxu0
    %v1436 = vadd.f32 0.0, %v1435
    %v1437 = vpop.f32.mrf.mxu0
    %1438 = vdwg.mxu0
    %1439 = vmatpush.bf16.msra.mxu0 %v1181
    %1440 = vmatpush.bf16.msra.mxu0 %v1172
    %1441 = vmatpush.bf16.msra.mxu0 %v1163
    %1442 = vmatpush.bf16.msra.mxu0 %v1154
    %1443 = vmatpush.bf16.msra.mxu0 %v1145
    %1444 = vmatpush.bf16.msra.mxu0 %v1136
    %1445 = vmatpush.bf16.msra.mxu0 %v1127
    %1446 = vmatpush.bf16.msra.mxu0 %v1118
    %1447 = vmatmul.bf16.gmra.mxu0 %v880
    %v1448 = vpop.f32.mrf.mxu0
    %v1449 = vadd.f32 0.0, %v1448
    %v1450 = vpop.f32.mrf.mxu0
    %1451 = vdwg.mxu0
    %1452 = vmatpush.bf16.msra.mxu0 %v1182
    %1453 = vmatpush.bf16.msra.mxu0 %v1173
    %1454 = vmatpush.bf16.msra.mxu0 %v1164
    %1455 = vmatpush.bf16.msra.mxu0 %v1155
    %1456 = vmatpush.bf16.msra.mxu0 %v1146
    %1457 = vmatpush.bf16.msra.mxu0 %v1137
    %1458 = vmatpush.bf16.msra.mxu0 %v1128
    %1459 = vmatpush.bf16.msra.mxu0 %v1119
    %1460 = vmatmul.bf16.gmra.mxu0 %v880
    %v1461 = vpop.f32.mrf.mxu0
    %v1462 = vadd.f32 0.0, %v1461
    %v1463 = vpop.f32.mrf.mxu0
    %1464 = vdwg.mxu0
    %1465 = vmatpush.bf16.msra.mxu0 %v1183
    %1466 = vmatpush.bf16.msra.mxu0 %v1174
    %1467 = vmatpush.bf16.msra.mxu0 %v1165
    %1468 = vmatpush.bf16.msra.mxu0 %v1156
    %1469 = vmatpush.bf16.msra.mxu0 %v1147
    %1470 = vmatpush.bf16.msra.mxu0 %v1138
    %1471 = vmatpush.bf16.msra.mxu0 %v1129
    %1472 = vmatpush.bf16.msra.mxu0 %v1120
    %1473 = vmatmul.bf16.gmra.mxu0 %v880
    %v1474 = vpop.f32.mrf.mxu0
    %v1475 = vadd.f32 0.0, %v1474
    %v1476 = vpop.f32.mrf.mxu0
    %1477 = vdwg.mxu0
    %1478 = vmatpush.bf16.msra.mxu0 %v1184
    %1479 = vmatpush.bf16.msra.mxu0 %v1175
    %1480 = vmatpush.bf16.msra.mxu0 %v1166
    %1481 = vmatpush.bf16.msra.mxu0 %v1157
    %1482 = vmatpush.bf16.msra.mxu0 %v1148
    %1483 = vmatpush.bf16.msra.mxu0 %v1139
    %1484 = vmatpush.bf16.msra.mxu0 %v1130
    %1485 = vmatpush.bf16.msra.mxu0 %v1121
    %1486 = vmatmul.bf16.gmra.mxu0 %v880
    %v1487 = vpop.f32.mrf.mxu0
    %v1488 = vadd.f32 0.0, %v1487
    %v1489 = vpop.f32.mrf.mxu0
    %1490 = vdwg.mxu0
    %v1491 = vadd.f32 %v1293, %v1384
    %v1492 = vadd.f32 %v1332, %v1423
    %v1493 = vadd.f32 %v1371, %v1462
    %1494 = vmatpush.bf16.msra.mxu0 %v1176
    %1495 = vmatpush.bf16.msra.mxu0 %v1167
    %1496 = vmatpush.bf16.msra.mxu0 %v1158
    %1497 = vmatpush.bf16.msra.mxu0 %v1149
    %1498 = vmatpush.bf16.msra.mxu0 %v1140
    %1499 = vmatpush.bf16.msra.mxu0 %v1131
    %1500 = vmatpush.bf16.msra.mxu0 %v1122
    %1501 = vmatpush.bf16.msra.mxu0 %v1113
    %1502 = vmatmul.bf16.gmra.mxu0 %v884
    %v1503 = vpop.f32.mrf.mxu0
    %v1504 = vadd.f32 0.0, %v1503
    %v1505 = vpop.f32.mrf.mxu0
    %1506 = vdwg.mxu0
    %1507 = vmatpush.bf16.msra.mxu0 %v1177
    %1508 = vmatpush.bf16.msra.mxu0 %v1168
    %1509 = vmatpush.bf16.msra.mxu0 %v1159
    %1510 = vmatpush.bf16.msra.mxu0 %v1150
    %1511 = vmatpush.bf16.msra.mxu0 %v1141
    %1512 = vmatpush.bf16.msra.mxu0 %v1132
    %1513 = vmatpush.bf16.msra.mxu0 %v1123
    %1514 = vmatpush.bf16.msra.mxu0 %v1114
    %1515 = vmatmul.bf16.gmra.mxu0 %v884
    %v1516 = vpop.f32.mrf.mxu0
    %v1517 = vadd.f32 0.0, %v1516
    %v1518 = vpop.f32.mrf.mxu0
    %1519 = vdwg.mxu0
    %1520 = vmatpush.bf16.msra.mxu0 %v1178
    %1521 = vmatpush.bf16.msra.mxu0 %v1169
    %1522 = vmatpush.bf16.msra.mxu0 %v1160
    %1523 = vmatpush.bf16.msra.mxu0 %v1151
    %1524 = vmatpush.bf16.msra.mxu0 %v1142
    %1525 = vmatpush.bf16.msra.mxu0 %v1133
    %1526 = vmatpush.bf16.msra.mxu0 %v1124
    %1527 = vmatpush.bf16.msra.mxu0 %v1115
    %1528 = vmatmul.bf16.gmra.mxu0 %v884
    %v1529 = vpop.f32.mrf.mxu0
    %v1530 = vadd.f32 0.0, %v1529
    %v1531 = vpop.f32.mrf.mxu0
    %1532 = vdwg.mxu0
    %1533 = vmatpush.bf16.msra.mxu0 %v1179
    %1534 = vmatpush.bf16.msra.mxu0 %v1170
    %1535 = vmatpush.bf16.msra.mxu0 %v1161
    %1536 = vmatpush.bf16.msra.mxu0 %v1152
    %1537 = vmatpush.bf16.msra.mxu0 %v1143
    %1538 = vmatpush.bf16.msra.mxu0 %v1134
    %1539 = vmatpush.bf16.msra.mxu0 %v1125
    %1540 = vmatpush.bf16.msra.mxu0 %v1116
    %1541 = vmatmul.bf16.gmra.mxu0 %v884
    %v1542 = vpop.f32.mrf.mxu0
    %v1543 = vadd.f32 0.0, %v1542
    %v1544 = vpop.f32.mrf.mxu0
    %1545 = vdwg.mxu0
    %1546 = vmatpush.bf16.msra.mxu0 %v1180
    %1547 = vmatpush.bf16.msra.mxu0 %v1171
    %1548 = vmatpush.bf16.msra.mxu0 %v1162
    %1549 = vmatpush.bf16.msra.mxu0 %v1153
    %1550 = vmatpush.bf16.msra.mxu0 %v1144
    %1551 = vmatpush.bf16.msra.mxu0 %v1135
    %1552 = vmatpush.bf16.msra.mxu0 %v1126
    %1553 = vmatpush.bf16.msra.mxu0 %v1117
    %1554 = vmatmul.bf16.gmra.mxu0 %v884
    %v1555 = vpop.f32.mrf.mxu0
    %v1556 = vadd.f32 0.0, %v1555
    %v1557 = vpop.f32.mrf.mxu0
    %1558 = vdwg.mxu0
    %1559 = vmatpush.bf16.msra.mxu0 %v1181
    %1560 = vmatpush.bf16.msra.mxu0 %v1172
    %1561 = vmatpush.bf16.msra.mxu0 %v1163
    %1562 = vmatpush.bf16.msra.mxu0 %v1154
    %1563 = vmatpush.bf16.msra.mxu0 %v1145
    %1564 = vmatpush.bf16.msra.mxu0 %v1136
    %1565 = vmatpush.bf16.msra.mxu0 %v1127
    %1566 = vmatpush.bf16.msra.mxu0 %v1118
    %1567 = vmatmul.bf16.gmra.mxu0 %v884
    %v1568 = vpop.f32.mrf.mxu0
    %v1569 = vadd.f32 0.0, %v1568
    %v1570 = vpop.f32.mrf.mxu0
    %1571 = vdwg.mxu0
    %1572 = vmatpush.bf16.msra.mxu0 %v1182
    %1573 = vmatpush.bf16.msra.mxu0 %v1173
    %1574 = vmatpush.bf16.msra.mxu0 %v1164
    %1575 = vmatpush.bf16.msra.mxu0 %v1155
    %1576 = vmatpush.bf16.msra.mxu0 %v1146
    %1577 = vmatpush.bf16.msra.mxu0 %v1137
    %1578 = vmatpush.bf16.msra.mxu0 %v1128
    %1579 = vmatpush.bf16.msra.mxu0 %v1119
    %1580 = vmatmul.bf16.gmra.mxu0 %v884
    %v1581 = vpop.f32.mrf.mxu0
    %v1582 = vadd.f32 0.0, %v1581
    %v1583 = vpop.f32.mrf.mxu0
    %1584 = vdwg.mxu0
    %1585 = vmatpush.bf16.msra.mxu0 %v1183
    %1586 = vmatpush.bf16.msra.mxu0 %v1174
    %1587 = vmatpush.bf16.msra.mxu0 %v1165
    %1588 = vmatpush.bf16.msra.mxu0 %v1156
    %1589 = vmatpush.bf16.msra.mxu0 %v1147
    %1590 = vmatpush.bf16.msra.mxu0 %v1138
    %1591 = vmatpush.bf16.msra.mxu0 %v1129
    %1592 = vmatpush.bf16.msra.mxu0 %v1120
    %1593 = vmatmul.bf16.gmra.mxu0 %v884
    %v1594 = vpop.f32.mrf.mxu0
    %v1595 = vadd.f32 0.0, %v1594
    %v1596 = vpop.f32.mrf.mxu0
    %1597 = vdwg.mxu0
    %1598 = vmatpush.bf16.msra.mxu0 %v1184
    %1599 = vmatpush.bf16.msra.mxu0 %v1175
    %1600 = vmatpush.bf16.msra.mxu0 %v1166
    %1601 = vmatpush.bf16.msra.mxu0 %v1157
    %1602 = vmatpush.bf16.msra.mxu0 %v1148
    %1603 = vmatpush.bf16.msra.mxu0 %v1139
    %1604 = vmatpush.bf16.msra.mxu0 %v1130
    %1605 = vmatpush.bf16.msra.mxu0 %v1121
    %1606 = vmatmul.bf16.gmra.mxu0 %v884
    %v1607 = vpop.f32.mrf.mxu0
    %v1608 = vadd.f32 0.0, %v1607
    %v1609 = vpop.f32.mrf.mxu0
    %1610 = vdwg.mxu0
    %v1611 = vadd.f32 %v1345, %v1504
    %v1612 = vadd.f32 %v1358, %v1517
    %v1613 = vadd.f32 %v1493, %v1530
    %1614 = vmatpush.bf16.msra.mxu0 %v1176
    %1615 = vmatpush.bf16.msra.mxu0 %v1167
    %1616 = vmatpush.bf16.msra.mxu0 %v1158
    %1617 = vmatpush.bf16.msra.mxu0 %v1149
    %1618 = vmatpush.bf16.msra.mxu0 %v1140
    %1619 = vmatpush.bf16.msra.mxu0 %v1131
    %1620 = vmatpush.bf16.msra.mxu0 %v1122
    %1621 = vmatpush.bf16.msra.mxu0 %v1113
    %1622 = vmatmul.bf16.gmra.mxu0 %v888
    %v1623 = vpop.f32.mrf.mxu0
    %v1624 = vadd.f32 0.0, %v1623
    %v1625 = vpop.f32.mrf.mxu0
    %1626 = vdwg.mxu0
    %1627 = vmatpush.bf16.msra.mxu0 %v1177
    %1628 = vmatpush.bf16.msra.mxu0 %v1168
    %1629 = vmatpush.bf16.msra.mxu0 %v1159
    %1630 = vmatpush.bf16.msra.mxu0 %v1150
    %1631 = vmatpush.bf16.msra.mxu0 %v1141
    %1632 = vmatpush.bf16.msra.mxu0 %v1132
    %1633 = vmatpush.bf16.msra.mxu0 %v1123
    %1634 = vmatpush.bf16.msra.mxu0 %v1114
    %1635 = vmatmul.bf16.gmra.mxu0 %v888
    %v1636 = vpop.f32.mrf.mxu0
    %v1637 = vadd.f32 0.0, %v1636
    %v1638 = vpop.f32.mrf.mxu0
    %1639 = vdwg.mxu0
    %1640 = vmatpush.bf16.msra.mxu0 %v1178
    %1641 = vmatpush.bf16.msra.mxu0 %v1169
    %1642 = vmatpush.bf16.msra.mxu0 %v1160
    %1643 = vmatpush.bf16.msra.mxu0 %v1151
    %1644 = vmatpush.bf16.msra.mxu0 %v1142
    %1645 = vmatpush.bf16.msra.mxu0 %v1133
    %1646 = vmatpush.bf16.msra.mxu0 %v1124
    %1647 = vmatpush.bf16.msra.mxu0 %v1115
    %1648 = vmatmul.bf16.gmra.mxu0 %v888
    %v1649 = vpop.f32.mrf.mxu0
    %v1650 = vadd.f32 0.0, %v1649
    %v1651 = vpop.f32.mrf.mxu0
    %1652 = vdwg.mxu0
    %1653 = vmatpush.bf16.msra.mxu0 %v1179
    %1654 = vmatpush.bf16.msra.mxu0 %v1170
    %1655 = vmatpush.bf16.msra.mxu0 %v1161
    %1656 = vmatpush.bf16.msra.mxu0 %v1152
    %1657 = vmatpush.bf16.msra.mxu0 %v1143
    %1658 = vmatpush.bf16.msra.mxu0 %v1134
    %1659 = vmatpush.bf16.msra.mxu0 %v1125
    %1660 = vmatpush.bf16.msra.mxu0 %v1116
    %1661 = vmatmul.bf16.gmra.mxu0 %v888
    %v1662 = vpop.f32.mrf.mxu0
    %v1663 = vadd.f32 0.0, %v1662
    %v1664 = vpop.f32.mrf.mxu0
    %1665 = vdwg.mxu0
    %1666 = vmatpush.bf16.msra.mxu0 %v1180
    %1667 = vmatpush.bf16.msra.mxu0 %v1171
    %1668 = vmatpush.bf16.msra.mxu0 %v1162
    %1669 = vmatpush.bf16.msra.mxu0 %v1153
    %1670 = vmatpush.bf16.msra.mxu0 %v1144
    %1671 = vmatpush.bf16.msra.mxu0 %v1135
    %1672 = vmatpush.bf16.msra.mxu0 %v1126
    %1673 = vmatpush.bf16.msra.mxu0 %v1117
    %1674 = vmatmul.bf16.gmra.mxu0 %v888
    %v1675 = vpop.f32.mrf.mxu0
    %v1676 = vadd.f32 0.0, %v1675
    %v1677 = vpop.f32.mrf.mxu0
    %1678 = vdwg.mxu0
    %1679 = vmatpush.bf16.msra.mxu0 %v1181
    %1680 = vmatpush.bf16.msra.mxu0 %v1172
    %1681 = vmatpush.bf16.msra.mxu0 %v1163
    %1682 = vmatpush.bf16.msra.mxu0 %v1154
    %1683 = vmatpush.bf16.msra.mxu0 %v1145
    %1684 = vmatpush.bf16.msra.mxu0 %v1136
    %1685 = vmatpush.bf16.msra.mxu0 %v1127
    %1686 = vmatpush.bf16.msra.mxu0 %v1118
    %1687 = vmatmul.bf16.gmra.mxu0 %v888
    %v1688 = vpop.f32.mrf.mxu0
    %v1689 = vadd.f32 0.0, %v1688
    %v1690 = vpop.f32.mrf.mxu0
    %1691 = vdwg.mxu0
    %1692 = vmatpush.bf16.msra.mxu0 %v1182
    %1693 = vmatpush.bf16.msra.mxu0 %v1173
    %1694 = vmatpush.bf16.msra.mxu0 %v1164
    %1695 = vmatpush.bf16.msra.mxu0 %v1155
    %1696 = vmatpush.bf16.msra.mxu0 %v1146
    %1697 = vmatpush.bf16.msra.mxu0 %v1137
    %1698 = vmatpush.bf16.msra.mxu0 %v1128
    %1699 = vmatpush.bf16.msra.mxu0 %v1119
    %1700 = vmatmul.bf16.gmra.mxu0 %v888
    %v1701 = vpop.f32.mrf.mxu0
    %v1702 = vadd.f32 0.0, %v1701
    %v1703 = vpop.f32.mrf.mxu0
    %1704 = vdwg.mxu0
    %1705 = vmatpush.bf16.msra.mxu0 %v1183
    %1706 = vmatpush.bf16.msra.mxu0 %v1174
    %1707 = vmatpush.bf16.msra.mxu0 %v1165
    %1708 = vmatpush.bf16.msra.mxu0 %v1156
    %1709 = vmatpush.bf16.msra.mxu0 %v1147
    %1710 = vmatpush.bf16.msra.mxu0 %v1138
    %1711 = vmatpush.bf16.msra.mxu0 %v1129
    %1712 = vmatpush.bf16.msra.mxu0 %v1120
    %1713 = vmatmul.bf16.gmra.mxu0 %v888
    %v1714 = vpop.f32.mrf.mxu0
    %v1715 = vadd.f32 0.0, %v1714
    %v1716 = vpop.f32.mrf.mxu0
    %1717 = vdwg.mxu0
    %1718 = vmatpush.bf16.msra.mxu0 %v1184
    %1719 = vmatpush.bf16.msra.mxu0 %v1175
    %1720 = vmatpush.bf16.msra.mxu0 %v1166
    %1721 = vmatpush.bf16.msra.mxu0 %v1157
    %1722 = vmatpush.bf16.msra.mxu0 %v1148
    %1723 = vmatpush.bf16.msra.mxu0 %v1139
    %1724 = vmatpush.bf16.msra.mxu0 %v1130
    %1725 = vmatpush.bf16.msra.mxu0 %v1121
    %1726 = vmatmul.bf16.gmra.mxu0 %v888
    %v1727 = vpop.f32.mrf.mxu0
    %v1728 = vadd.f32 0.0, %v1727
    %v1729 = vpop.f32.mrf.mxu0
    %1730 = vdwg.mxu0
    %v1731 = vadd.f32 %v1613, %v1624
    %v1732 = vadd.f32 %v1475, %v1637
    %v1733 = vadd.f32 %v1488, %v1650
    %v1734 = vadd.f32 %v1569, %v1663
    %v1735 = vadd.f32 %v1608, %v1702
    %v1736 = vmul.f32 %v1267, %v1267
    %v1737 = vadd.f32 %v1267, %v1280
    %v1738 = vmul.f32 %v1280, %v1280
    %v1739 = vadd.f32 %v1736, %v1738
    %v1740 = vadd.f32 %v1737, %v1491
    %v1741 = vmul.f32 %v1491, %v1491
    %v1742 = vadd.f32 %v1739, %v1741
    %v1743 = vadd.f32 %v1740, %v1397
    %v1744 = vmul.f32 %v1397, %v1397
    %v1745 = vadd.f32 %v1742, %v1744
    %v1746 = vadd.f32 %v1743, %v1410
    %v1747 = vmul.f32 %v1410, %v1410
    %v1748 = vadd.f32 %v1745, %v1747
    %v1749 = vadd.f32 %v1746, %v1306
    %v1750 = vmul.f32 %v1306, %v1306
    %v1751 = vadd.f32 %v1748, %v1750
    %v1752 = vadd.f32 %v1749, %v1319
    %v1753 = vmul.f32 %v1319, %v1319
    %v1754 = vadd.f32 %v1751, %v1753
    %v1755 = vadd.f32 %v1752, %v1492
    %v1756 = vmul.f32 %v1492, %v1492
    %v1757 = vadd.f32 %v1754, %v1756
    %v1758 = vadd.f32 %v1755, %v1436
    %v1759 = vmul.f32 %v1436, %v1436
    %v1760 = vadd.f32 %v1757, %v1759
    %v1761 = vadd.f32 %v1758, %v1449
    %v1762 = vmul.f32 %v1449, %v1449
    %v1763 = vadd.f32 %v1760, %v1762
    %v1764 = vadd.f32 %v1761, %v1611
    %v1765 = vmul.f32 %v1611, %v1611
    %v1766 = vadd.f32 %v1763, %v1765
    %v1767 = vadd.f32 %v1764, %v1612
    %v1768 = vmul.f32 %v1612, %v1612
    %v1769 = vadd.f32 %v1766, %v1768
    %v1770 = vadd.f32 %v1767, %v1731
    %v1771 = vmul.f32 %v1731, %v1731
    %v1772 = vadd.f32 %v1769, %v1771
    %v1773 = vadd.f32 %v1770, %v1732
    %v1774 = vmul.f32 %v1732, %v1732
    %v1775 = vadd.f32 %v1772, %v1774
    %v1776 = vadd.f32 %v1773, %v1733
    %v1777 = vmul.f32 %v1733, %v1733
    %v1778 = vadd.f32 %v1775, %v1777
    %v1779 = vadd.f32 %v1776, %v1543
    %v1780 = vmul.f32 %v1543, %v1543
    %v1781 = vadd.f32 %v1778, %v1780
    %v1782 = vadd.f32 %v1779, %v1556
    %v1783 = vmul.f32 %v1556, %v1556
    %v1784 = vadd.f32 %v1781, %v1783
    %v1785 = vadd.f32 %v1782, %v1734
    %v1786 = vmul.f32 %v1734, %v1734
    %v1787 = vadd.f32 %v1784, %v1786
    %v1788 = vadd.f32 %v1785, %v1676
    %v1789 = vmul.f32 %v1676, %v1676
    %v1790 = vadd.f32 %v1787, %v1789
    %v1791 = vadd.f32 %v1788, %v1689
    %v1792 = vmul.f32 %v1689, %v1689
    %v1793 = vadd.f32 %v1790, %v1792
    %v1794 = vadd.f32 %v1791, %v1582
    %v1795 = vmul.f32 %v1582, %v1582
    %v1796 = vadd.f32 %v1793, %v1795
    %v1797 = vadd.f32 %v1794, %v1595
    %v1798 = vmul.f32 %v1595, %v1595
    %v1799 = vadd.f32 %v1796, %v1798
    %v1800 = vadd.f32 %v1797, %v1735
    %v1801 = vmul.f32 %v1735, %v1735
    %v1802 = vadd.f32 %v1799, %v1801
    %v1803 = vadd.f32 %v1800, %v1715
    %v1804 = vmul.f32 %v1715, %v1715
    %v1805 = vadd.f32 %v1802, %v1804
    %v1806 = vadd.f32 %v1803, %v1728
    %v1807 = vmul.f32 %v1728, %v1728
    %v1808 = vadd.f32 %v1805, %v1807
    %v1809 = vsel %vm830, %v1806, 0.0
    %v1810 = vrot.slane %v1809, 4
    %v1811 = vadd.f32 %v1809, %v1810
    %v1812 = vrot.slane %v1811, 2
    %v1813 = vadd.f32 %v1811, %v1812
    %v1814 = vrot.slane %v1813, 1
    %v1815 = vadd.f32 %v1813, %v1814
    %v1816 = vsel %vm830, %v1808, 0.0
    %v1817 = vrot.slane %v1816, 4
    %v1818 = vadd.f32 %v1816, %v1817
    %v1819 = vrot.slane %v1818, 2
    %v1820 = vadd.f32 %v1818, %v1819
    %v1821 = vrot.slane %v1820, 1
    %v1822 = vadd.f32 %v1820, %v1821
    %v1823 = vmul.f32 %v1815, 0.02
    %v1824 = vmul.f32 %v1822, 0.02
    %v1825 = vmul.f32 %v1823, %v1823
    %v1826 = vsub.f32 %v1824, %v1825
    %v1827 = vmax.f32 %v1826, 0.0
    %v1828 = vadd.f32 %v1827, 1e-05
    %v1829 = vrsqrt.pop %v1828
    %v1830 = vmul.f32 %v1829, %v1828
    %v1831 = vmul.f32 %v1830, %v1829
    %v1832 = vmul.f32 0.5, %v1831
    %v1833 = vsub.f32 1.5, %v1832
    %v1834 = vmul.f32 %v1829, %v1833
    %vm1835 = vweird.f32 %v1828
    %vm1836 = vweird.f32 %v1829
    %vm1837 = vmor %vm1835, %vm1836
    %v1838 = vsel %vm1837, %v1829, %v1834
    %v1839 = vmul.f32 %v101, %v1838
    %v1840 = vmul.f32 %v1823, %v1839
    %v1841 = vsub.f32 %v102, %v1840
    %v1842 = vperm.slane %v1839, 0
    %v1843 = vmul.f32 %v1267, %v1842
    %v1844 = vperm.slane %v1841, 0
    %v1845 = vadd.f32 %v1843, %v1844
    %v1846 = vmax.f32 %v1845, 0.0
    %v1847 = vmul.f32 %v1280, %v1842
    %v1848 = vadd.f32 %v1847, %v1844
    %v1849 = vmax.f32 %v1848, 0.0
    %v1850 = vmul.f32 %v1491, %v1842
    %v1851 = vadd.f32 %v1850, %v1844
    %v1852 = vmax.f32 %v1851, 0.0
    %v1853 = vmul.f32 %v1397, %v1842
    %v1854 = vadd.f32 %v1853, %v1844
    %v1855 = vmax.f32 %v1854, 0.0
    %v1856 = vmul.f32 %v1410, %v1842
    %v1857 = vadd.f32 %v1856, %v1844
    %v1858 = vmax.f32 %v1857, 0.0
    %v1859 = vmul.f32 %v1306, %v1842
    %v1860 = vadd.f32 %v1859, %v1844
    %v1861 = vmax.f32 %v1860, 0.0
    %v1862 = vmul.f32 %v1319, %v1842
    %v1863 = vadd.f32 %v1862, %v1844
    %v1864 = vmax.f32 %v1863, 0.0
    %v1865 = vmul.f32 %v1492, %v1842
    %v1866 = vadd.f32 %v1865, %v1844
    %v1867 = vmax.f32 %v1866, 0.0
    %v1868 = vmul.f32 %v1436, %v1842
    %v1869 = vadd.f32 %v1868, %v1844
    %v1870 = vmax.f32 %v1869, 0.0
    %v1871 = vmul.f32 %v1449, %v1842
    %v1872 = vadd.f32 %v1871, %v1844
    %v1873 = vmax.f32 %v1872, 0.0
    %v1874 = vmul.f32 %v1611, %v1842
    %v1875 = vadd.f32 %v1874, %v1844
    %v1876 = vmax.f32 %v1875, 0.0
    %v1877 = vmul.f32 %v1612, %v1842
    %v1878 = vadd.f32 %v1877, %v1844
    %v1879 = vmax.f32 %v1878, 0.0
    %v1880 = vmul.f32 %v1731, %v1842
    %v1881 = vadd.f32 %v1880, %v1844
    %v1882 = vmax.f32 %v1881, 0.0
    %v1883 = vmul.f32 %v1732, %v1842
    %v1884 = vadd.f32 %v1883, %v1844
    %v1885 = vmax.f32 %v1884, 0.0
    %v1886 = vmul.f32 %v1733, %v1842
    %v1887 = vadd.f32 %v1886, %v1844
    %v1888 = vmax.f32 %v1887, 0.0
    %v1889 = vmul.f32 %v1543, %v1842
    %v1890 = vadd.f32 %v1889, %v1844
    %v1891 = vmax.f32 %v1890, 0.0
    %v1892 = vmul.f32 %v1556, %v1842
    %v1893 = vadd.f32 %v1892, %v1844
    %v1894 = vmax.f32 %v1893, 0.0
    %v1895 = vmul.f32 %v1734, %v1842
    %v1896 = vadd.f32 %v1895, %v1844
    %v1897 = vmax.f32 %v1896, 0.0
    %v1898 = vmul.f32 %v1676, %v1842
    %v1899 = vadd.f32 %v1898, %v1844
    %v1900 = vmax.f32 %v1899, 0.0
    %v1901 = vmul.f32 %v1689, %v1842
    %v1902 = vadd.f32 %v1901, %v1844
    %v1903 = vmax.f32 %v1902, 0.0
    %v1904 = vmul.f32 %v1582, %v1842
    %v1905 = vadd.f32 %v1904, %v1844
    %v1906 = vmax.f32 %v1905, 0.0
    %v1907 = vmul.f32 %v1595, %v1842
    %v1908 = vadd.f32 %v1907, %v1844
    %v1909 = vmax.f32 %v1908, 0.0
    %v1910 = vmul.f32 %v1735, %v1842
    %v1911 = vadd.f32 %v1910, %v1844
    %v1912 = vmax.f32 %v1911, 0.0
    %v1913 = vmul.f32 %v1715, %v1842
    %v1914 = vadd.f32 %v1913, %v1844
    %v1915 = vmax.f32 %v1914, 0.0
    %v1916 = vmul.f32 %v1728, %v1842
    %v1917 = vadd.f32 %v1916, %v1844
    %v1918 = vmax.f32 %v1917, 0.0
    %v1920 = vrot.slane %v1849, 6
    %v1923 = vrot.slane %v1852, 4
    %v1926 = vrot.slane %v1855, 2
    %v1928 = vsel %vm830, %v1846, %v1920
    %vm1929 = vcmask 1043456
    %v1930 = vsel %vm1929, %v1928, %v1923
    %vm1931 = vcmask 1045504
    %v1932 = vsel %vm1931, %v1930, %v1926
    %1933 = vst [vmem:[#allocation2] sm:$0xff] %v1932
    %v1935 = vrot.slane %v1861, 6
    %v1938 = vrot.slane %v1864, 4
    %v1941 = vrot.slane %v1867, 2
    %v1943 = vsel %vm830, %v1858, %v1935
    %v1944 = vsel %vm1929, %v1943, %v1938
    %v1945 = vsel %vm1931, %v1944, %v1941
    %1946 = vst [vmem:[#allocation2 + $0x8] sm:$0xff] %v1945
    %v1948 = vrot.slane %v1873, 6
    %v1951 = vrot.slane %v1876, 4
    %v1954 = vrot.slane %v1879, 2
    %v1956 = vsel %vm830, %v1870, %v1948
    %v1957 = vsel %vm1929, %v1956, %v1951
    %v1958 = vsel %vm1931, %v1957, %v1954
    %1959 = vst [vmem:[#allocation2 + $0x10] sm:$0xff] %v1958
    %v1961 = vrot.slane %v1885, 6
    %v1964 = vrot.slane %v1888, 4
    %v1967 = vrot.slane %v1891, 2
    %v1969 = vsel %vm830, %v1882, %v1961
    %v1970 = vsel %vm1929, %v1969, %v1964
    %v1971 = vsel %vm1931, %v1970, %v1967
    %1972 = vst [vmem:[#allocation2 + $0x18] sm:$0xff] %v1971
    %v1974 = vrot.slane %v1897, 6
    %v1977 = vrot.slane %v1900, 4
    %v1980 = vrot.slane %v1903, 2
    %v1982 = vsel %vm830, %v1894, %v1974
    %v1983 = vsel %vm1929, %v1982, %v1977
    %v1984 = vsel %vm1931, %v1983, %v1980
    %1985 = vst [vmem:[#allocation2 + $0x20] sm:$0xff] %v1984
    %v1987 = vrot.slane %v1909, 6
    %v1990 = vrot.slane %v1912, 4
    %v1993 = vrot.slane %v1915, 2
    %v1995 = vsel %vm830, %v1906, %v1987
    %v1996 = vsel %vm1929, %v1995, %v1990
    %v1997 = vsel %vm1931, %v1996, %v1993
    %1998 = vst [vmem:[#allocation2 + $0x28] sm:$0xff] %v1997
    %v1999 = vsel %vm830, %v1918, 0.0
    %v2000 = vsel %vm1929, %v1999, 0.0
    %v2001 = vsel %vm1931, %v2000, 0.0
    %2002 = vst [vmem:[#allocation2 + $0x30] sm:$0xff] %v2001
    %v2003 = vld [vmem:[#allocation2] sm:$0xff]
    %v2004 = vpack.c.bf16 %v2003, %v2003
    %v2133 = vunpack.c.l.b16 %v186
    %v2134 = vunpack.c.h.b16 %v186
    %v2135 = vunpack.c.l.b16 %v187
    %v2136 = vunpack.c.h.b16 %v187
    %v2137 = vunpack.c.l.b16 %v188
    %v2138 = vunpack.c.h.b16 %v188
    %v2139 = vunpack.c.l.b16 %v189
    %v2140 = vunpack.c.h.b16 %v189
    %v2141 = vunpack.c.l.b16 %v190
    %v2142 = vunpack.c.h.b16 %v190
    %v2143 = vunpack.c.l.b16 %v191
    %v2144 = vunpack.c.h.b16 %v191
    %v2145 = vunpack.c.l.b16 %v192
    %v2146 = vunpack.c.h.b16 %v192
    %v2147 = vunpack.c.l.b16 %v193
    %v2148 = vunpack.c.h.b16 %v193
    %v2149 = vunpack.c.l.b16 %v194
    %v2150 = vunpack.c.h.b16 %v194
    %v2151 = vunpack.c.l.b16 %v195
    %v2152 = vunpack.c.h.b16 %v195
    %v2153 = vunpack.c.l.b16 %v196
    %v2154 = vunpack.c.h.b16 %v196
    %v2155 = vunpack.c.l.b16 %v197
    %v2156 = vunpack.c.h.b16 %v197
    %v2157 = vunpack.c.l.b16 %v198
    %v2158 = vunpack.c.h.b16 %v198
    %v2159 = vunpack.c.l.b16 %v199
    %v2160 = vunpack.c.h.b16 %v199
    %v2161 = vunpack.c.l.b16 %v200
    %v2162 = vunpack.c.h.b16 %v200
    %v2163 = vunpack.c.l.b16 %v201
    %v2164 = vunpack.c.h.b16 %v201
    %v2165 = vunpack.c.l.b16 %v202
    %v2166 = vunpack.c.h.b16 %v202
    %v2167 = vunpack.c.l.b16 %v203
    %v2168 = vunpack.c.h.b16 %v203
    %v2169 = vunpack.c.l.b16 %v204
    %v2170 = vunpack.c.h.b16 %v204
    %v2171 = vunpack.c.l.b16 %v205
    %v2172 = vunpack.c.h.b16 %v205
    %v2173 = vunpack.c.l.b16 %v206
    %v2174 = vunpack.c.h.b16 %v206
    %v2175 = vunpack.c.l.b16 %v207
    %v2176 = vunpack.c.h.b16 %v207
    %v2177 = vunpack.c.l.b16 %v208
    %v2178 = vunpack.c.h.b16 %v208
    %v2179 = vunpack.c.l.b16 %v209
    %v2180 = vunpack.c.h.b16 %v209
    %v2181 = vunpack.c.l.b16 %v210
    %v2182 = vunpack.c.h.b16 %v210
    %v2183 = vunpack.c.l.b16 %v211
    %v2184 = vunpack.c.h.b16 %v211
    %v2185 = vunpack.c.l.b16 %v212
    %v2186 = vunpack.c.h.b16 %v212
    %v2187 = vunpack.c.l.b16 %v213
    %v2188 = vunpack.c.h.b16 %v213
    %v2189 = vunpack.c.l.b16 %v214
    %v2190 = vunpack.c.h.b16 %v214
    %v2191 = vunpack.c.l.b16 %v215
    %v2192 = vunpack.c.h.b16 %v215
    %v2193 = vunpack.c.l.b16 %v216
    %v2194 = vunpack.c.h.b16 %v216
    %v2195 = vunpack.c.l.b16 %v217
    %v2196 = vunpack.c.h.b16 %v217
    %v2197 = vunpack.c.l.b16 %v218
    %v2198 = vunpack.c.h.b16 %v218
    %v2199 = vunpack.c.l.b16 %v219
    %v2200 = vunpack.c.h.b16 %v219
    %v2201 = vunpack.c.l.b16 %v220
    %v2202 = vunpack.c.h.b16 %v220
    %v2203 = vunpack.c.l.b16 %v221
    %v2204 = vunpack.c.h.b16 %v221
    %v2205 = vunpack.c.l.b16 %v222
    %v2206 = vunpack.c.h.b16 %v222
    %v2207 = vunpack.c.l.b16 %v223
    %v2208 = vunpack.c.h.b16 %v223
    %v2209 = vunpack.c.l.b16 %v224
    %v2210 = vunpack.c.h.b16 %v224
    %v2211 = vunpack.c.l.b16 %v225
    %v2212 = vunpack.c.h.b16 %v225
    %v2213 = vunpack.c.l.b16 %v226
    %v2214 = vunpack.c.h.b16 %v226
    %v2215 = vunpack.c.l.b16 %v227
    %v2216 = vunpack.c.h.b16 %v227
    %v2217 = vunpack.c.l.b16 %v228
    %v2218 = vunpack.c.h.b16 %v228
    %v2219 = vunpack.c.l.b16 %v229
    %v2220 = vunpack.c.h.b16 %v229
    %v2221 = vunpack.c.l.b16 %v230
    %v2222 = vunpack.c.h.b16 %v230
    %v2223 = vunpack.c.l.b16 %v231
    %v2224 = vunpack.c.h.b16 %v231
    %v2225 = vunpack.c.l.b16 %v232
    %v2226 = vunpack.c.h.b16 %v232
    %v2227 = vunpack.c.l.b16 %v233
    %v2228 = vunpack.c.h.b16 %v233
    %v2229 = vunpack.c.l.b16 %v234
    %v2230 = vunpack.c.h.b16 %v234
    %v2231 = vunpack.c.l.b16 %v235
    %v2232 = vunpack.c.h.b16 %v235
    %v2233 = vunpack.c.l.b16 %v236
    %v2234 = vunpack.c.h.b16 %v236
    %v2235 = vunpack.c.l.b16 %v237
    %v2236 = vunpack.c.h.b16 %v237
    %v2237 = vunpack.c.l.b16 %v238
    %v2238 = vunpack.c.h.b16 %v238
    %v2239 = vunpack.c.l.b16 %v239
    %v2240 = vunpack.c.h.b16 %v239
    %v2241 = vunpack.c.l.b16 %v240
    %v2242 = vunpack.c.h.b16 %v240
    %v2243 = vunpack.c.l.b16 %v241
    %v2244 = vunpack.c.h.b16 %v241
    %v2245 = vunpack.c.l.b16 %v242
    %v2246 = vunpack.c.h.b16 %v242
    %v2247 = vunpack.c.l.b16 %v243
    %v2248 = vunpack.c.h.b16 %v243
    %v2249 = vunpack.c.l.b16 %v244
    %v2250 = vunpack.c.h.b16 %v244
    %v2251 = vunpack.c.l.b16 %v245
    %v2252 = vunpack.c.h.b16 %v245
    %v2253 = vunpack.c.l.b16 %v246
    %v2254 = vunpack.c.h.b16 %v246
    %v2255 = vunpack.c.l.b16 %v247
    %v2256 = vunpack.c.h.b16 %v247
    %v2257 = vunpack.c.l.b16 %v248
    %v2258 = vunpack.c.h.b16 %v248
    %v2259 = vunpack.c.l.b16 %v249
    %v2260 = vunpack.c.h.b16 %v249
    %v2261 = vunpack.c.l.b16 %v250
    %v2262 = vunpack.c.h.b16 %v250
    %v2263 = vunpack.c.l.b16 %v251
    %v2264 = vunpack.c.h.b16 %v251
    %v2265 = vunpack.c.l.b16 %v252
    %v2266 = vunpack.c.h.b16 %v252
    %v2267 = vunpack.c.l.b16 %v253
    %v2268 = vunpack.c.h.b16 %v253
    %v2269 = vunpack.c.l.b16 %v254
    %v2270 = vunpack.c.h.b16 %v254
    %v2271 = vunpack.c.l.b16 %v255
    %v2272 = vunpack.c.h.b16 %v255
    %v2273 = vunpack.c.l.b16 %v256
    %v2274 = vunpack.c.h.b16 %v256
    %v2275 = vunpack.c.l.b16 %v257
    %v2276 = vunpack.c.h.b16 %v257
    %v2277 = vunpack.c.l.b16 %v258
    %v2278 = vunpack.c.h.b16 %v258
    %v2279 = vunpack.c.l.b16 %v259
    %v2280 = vunpack.c.h.b16 %v259
    %v2281 = vunpack.c.l.b16 %v260
    %v2282 = vunpack.c.h.b16 %v260
    %v2283 = vunpack.c.l.b16 %v261
    %v2284 = vunpack.c.h.b16 %v261
    %v2285 = vunpack.c.l.b16 %v262
    %v2286 = vunpack.c.h.b16 %v262
    %v2287 = vunpack.c.l.b16 %v263
    %v2288 = vunpack.c.h.b16 %v263
    %v2289 = vunpack.c.l.b16 %v264
    %v2290 = vunpack.c.h.b16 %v264
    %v2291 = vunpack.c.l.b16 %v265
    %v2292 = vunpack.c.h.b16 %v265
    %v2293 = vunpack.c.l.b16 %v266
    %v2294 = vunpack.c.h.b16 %v266
    %v2295 = vunpack.c.l.b16 %v267
    %v2296 = vunpack.c.h.b16 %v267
    %v2297 = vunpack.c.l.b16 %v268
    %v2298 = vunpack.c.h.b16 %v268
    %v2299 = vunpack.c.l.b16 %v269
    %v2300 = vunpack.c.h.b16 %v269
    %v2301 = vunpack.c.l.b16 %v270
    %v2302 = vunpack.c.h.b16 %v270
    %v2303 = vunpack.c.l.b16 %v271
    %v2304 = vunpack.c.h.b16 %v271
    %v2305 = vunpack.c.l.b16 %v272
    %v2306 = vunpack.c.h.b16 %v272
    %v2307 = vunpack.c.l.b16 %v273
    %v2308 = vunpack.c.h.b16 %v273
    %v2309 = vunpack.c.l.b16 %v274
    %v2310 = vunpack.c.h.b16 %v274
    %v2311 = vunpack.c.l.b16 %v275
    %v2312 = vunpack.c.h.b16 %v275
    %v2313 = vunpack.c.l.b16 %v276
    %v2314 = vunpack.c.h.b16 %v276
    %v2315 = vunpack.c.l.b16 %v277
    %v2316 = vunpack.c.h.b16 %v277
    %v2317 = vunpack.c.l.b16 %v278
    %v2318 = vunpack.c.h.b16 %v278
    %v2319 = vunpack.c.l.b16 %v279
    %v2320 = vunpack.c.h.b16 %v279
    %v2321 = vunpack.c.l.b16 %v280
    %v2322 = vunpack.c.h.b16 %v280
    %v2323 = vunpack.c.l.b16 %v281
    %v2324 = vunpack.c.h.b16 %v281
    %v2325 = vunpack.c.l.b16 %v282
    %v2326 = vunpack.c.h.b16 %v282
    %v2327 = vunpack.c.l.b16 %v283
    %v2328 = vunpack.c.h.b16 %v283
    %v2329 = vunpack.c.l.b16 %v284
    %v2330 = vunpack.c.h.b16 %v284
    %v2331 = vunpack.c.l.b16 %v285
    %v2332 = vunpack.c.h.b16 %v285
    %v2333 = vunpack.c.l.b16 %v286
    %v2334 = vunpack.c.h.b16 %v286
    %v2335 = vunpack.c.l.b16 %v287
    %v2336 = vunpack.c.h.b16 %v287
    %v2337 = vunpack.c.l.b16 %v288
    %v2338 = vunpack.c.h.b16 %v288
    %v2339 = vunpack.c.l.b16 %v289
    %v2340 = vunpack.c.h.b16 %v289
    %v2341 = vunpack.c.l.b16 %v290
    %v2342 = vunpack.c.h.b16 %v290
    %v2343 = vunpack.c.l.b16 %v291
    %v2344 = vunpack.c.h.b16 %v291
    %v2345 = vunpack.c.l.b16 %v292
    %v2346 = vunpack.c.h.b16 %v292
    %v2347 = vunpack.c.l.b16 %v293
    %v2348 = vunpack.c.h.b16 %v293
    %v2349 = vunpack.c.l.b16 %v294
    %v2350 = vunpack.c.h.b16 %v294
    %v2351 = vunpack.c.l.b16 %v295
    %v2352 = vunpack.c.h.b16 %v295
    %v2353 = vunpack.c.l.b16 %v296
    %v2354 = vunpack.c.h.b16 %v296
    %v2355 = vunpack.c.l.b16 %v297
    %v2356 = vunpack.c.h.b16 %v297
    %v2357 = vunpack.c.l.b16 %v298
    %v2358 = vunpack.c.h.b16 %v298
    %v2359 = vunpack.c.l.b16 %v299
    %v2360 = vunpack.c.h.b16 %v299
    %v2361 = vunpack.c.l.b16 %v300
    %v2362 = vunpack.c.h.b16 %v300
    %v2363 = vunpack.c.l.b16 %v301
    %v2364 = vunpack.c.h.b16 %v301
    %v2365 = vunpack.c.l.b16 %v302
    %v2366 = vunpack.c.h.b16 %v302
    %v2367 = vunpack.c.l.b16 %v303
    %v2368 = vunpack.c.h.b16 %v303
    %v2369 = vunpack.c.l.b16 %v304
    %v2370 = vunpack.c.h.b16 %v304
    %v2371 = vunpack.c.l.b16 %v305
    %v2372 = vunpack.c.h.b16 %v305
    %v2373 = vunpack.c.l.b16 %v306
    %v2374 = vunpack.c.h.b16 %v306
    %v2375 = vunpack.c.l.b16 %v307
    %v2376 = vunpack.c.h.b16 %v307
    %v2377 = vunpack.c.l.b16 %v308
    %v2378 = vunpack.c.h.b16 %v308
    %v2379 = vunpack.c.l.b16 %v309
    %v2380 = vunpack.c.h.b16 %v309
    %v2381 = vunpack.c.l.b16 %v310
    %v2382 = vunpack.c.h.b16 %v310
    %v2383 = vunpack.c.l.b16 %v311
    %v2384 = vunpack.c.h.b16 %v311
    %v2385 = vunpack.c.l.b16 %v312
    %v2386 = vunpack.c.h.b16 %v312
    %v2387 = vunpack.c.l.b16 %v313
    %v2388 = vunpack.c.h.b16 %v313
    %v2389 = vpack.c.b16 %v2149, %v2133
    %v2390 = vpack.c.b16 %v2150, %v2134
    %v2391 = vpack.c.b16 %v2151, %v2135
    %v2392 = vpack.c.b16 %v2152, %v2136
    %v2393 = vpack.c.b16 %v2153, %v2137
    %v2394 = vpack.c.b16 %v2154, %v2138
    %v2395 = vpack.c.b16 %v2155, %v2139
    %v2396 = vpack.c.b16 %v2156, %v2140
    %v2397 = vpack.c.b16 %v2157, %v2141
    %v2398 = vpack.c.b16 %v2158, %v2142
    %v2399 = vpack.c.b16 %v2159, %v2143
    %v2400 = vpack.c.b16 %v2160, %v2144
    %v2401 = vpack.c.b16 %v2161, %v2145
    %v2402 = vpack.c.b16 %v2162, %v2146
    %v2403 = vpack.c.b16 %v2163, %v2147
    %v2404 = vpack.c.b16 %v2164, %v2148
    %v2405 = vpack.c.b16 %v2181, %v2165
    %v2406 = vpack.c.b16 %v2182, %v2166
    %v2407 = vpack.c.b16 %v2183, %v2167
    %v2408 = vpack.c.b16 %v2184, %v2168
    %v2409 = vpack.c.b16 %v2185, %v2169
    %v2410 = vpack.c.b16 %v2186, %v2170
    %v2411 = vpack.c.b16 %v2187, %v2171
    %v2412 = vpack.c.b16 %v2188, %v2172
    %v2413 = vpack.c.b16 %v2189, %v2173
    %v2414 = vpack.c.b16 %v2190, %v2174
    %v2415 = vpack.c.b16 %v2191, %v2175
    %v2416 = vpack.c.b16 %v2192, %v2176
    %v2417 = vpack.c.b16 %v2193, %v2177
    %v2418 = vpack.c.b16 %v2194, %v2178
    %v2419 = vpack.c.b16 %v2195, %v2179
    %v2420 = vpack.c.b16 %v2196, %v2180
    %v2421 = vpack.c.b16 %v2213, %v2197
    %v2422 = vpack.c.b16 %v2214, %v2198
    %v2423 = vpack.c.b16 %v2215, %v2199
    %v2424 = vpack.c.b16 %v2216, %v2200
    %v2425 = vpack.c.b16 %v2217, %v2201
    %v2426 = vpack.c.b16 %v2218, %v2202
    %v2427 = vpack.c.b16 %v2219, %v2203
    %v2428 = vpack.c.b16 %v2220, %v2204
    %v2429 = vpack.c.b16 %v2221, %v2205
    %v2430 = vpack.c.b16 %v2222, %v2206
    %v2431 = vpack.c.b16 %v2223, %v2207
    %v2432 = vpack.c.b16 %v2224, %v2208
    %v2433 = vpack.c.b16 %v2225, %v2209
    %v2434 = vpack.c.b16 %v2226, %v2210
    %v2435 = vpack.c.b16 %v2227, %v2211
    %v2436 = vpack.c.b16 %v2228, %v2212
    %v2437 = vpack.c.b16 %v2245, %v2229
    %v2438 = vpack.c.b16 %v2246, %v2230
    %v2439 = vpack.c.b16 %v2247, %v2231
    %v2440 = vpack.c.b16 %v2248, %v2232
    %v2441 = vpack.c.b16 %v2249, %v2233
    %v2442 = vpack.c.b16 %v2250, %v2234
    %v2443 = vpack.c.b16 %v2251, %v2235
    %v2444 = vpack.c.b16 %v2252, %v2236
    %v2445 = vpack.c.b16 %v2253, %v2237
    %v2446 = vpack.c.b16 %v2254, %v2238
    %v2447 = vpack.c.b16 %v2255, %v2239
    %v2448 = vpack.c.b16 %v2256, %v2240
    %v2449 = vpack.c.b16 %v2257, %v2241
    %v2450 = vpack.c.b16 %v2258, %v2242
    %v2451 = vpack.c.b16 %v2259, %v2243
    %v2452 = vpack.c.b16 %v2260, %v2244
    %v2453 = vpack.c.b16 %v2277, %v2261
    %v2454 = vpack.c.b16 %v2278, %v2262
    %v2455 = vpack.c.b16 %v2279, %v2263
    %v2456 = vpack.c.b16 %v2280, %v2264
    %v2457 = vpack.c.b16 %v2281, %v2265
    %v2458 = vpack.c.b16 %v2282, %v2266
    %v2459 = vpack.c.b16 %v2283, %v2267
    %v2460 = vpack.c.b16 %v2284, %v2268
    %v2461 = vpack.c.b16 %v2285, %v2269
    %v2462 = vpack.c.b16 %v2286, %v2270
    %v2463 = vpack.c.b16 %v2287, %v2271
    %v2464 = vpack.c.b16 %v2288, %v2272
    %v2465 = vpack.c.b16 %v2289, %v2273
    %v2466 = vpack.c.b16 %v2290, %v2274
    %v2467 = vpack.c.b16 %v2291, %v2275
    %v2468 = vpack.c.b16 %v2292, %v2276
    %v2469 = vpack.c.b16 %v2309, %v2293
    %v2470 = vpack.c.b16 %v2310, %v2294
    %v2471 = vpack.c.b16 %v2311, %v2295
    %v2472 = vpack.c.b16 %v2312, %v2296
    %v2473 = vpack.c.b16 %v2313, %v2297
    %v2474 = vpack.c.b16 %v2314, %v2298
    %v2475 = vpack.c.b16 %v2315, %v2299
    %v2476 = vpack.c.b16 %v2316, %v2300
    %v2477 = vpack.c.b16 %v2317, %v2301
    %v2478 = vpack.c.b16 %v2318, %v2302
    %v2479 = vpack.c.b16 %v2319, %v2303
    %v2480 = vpack.c.b16 %v2320, %v2304
    %v2481 = vpack.c.b16 %v2321, %v2305
    %v2482 = vpack.c.b16 %v2322, %v2306
    %v2483 = vpack.c.b16 %v2323, %v2307
    %v2484 = vpack.c.b16 %v2324, %v2308
    %v2485 = vpack.c.b16 %v2341, %v2325
    %v2486 = vpack.c.b16 %v2342, %v2326
    %v2487 = vpack.c.b16 %v2343, %v2327
    %v2488 = vpack.c.b16 %v2344, %v2328
    %v2489 = vpack.c.b16 %v2345, %v2329
    %v2490 = vpack.c.b16 %v2346, %v2330
    %v2491 = vpack.c.b16 %v2347, %v2331
    %v2492 = vpack.c.b16 %v2348, %v2332
    %v2493 = vpack.c.b16 %v2349, %v2333
    %v2494 = vpack.c.b16 %v2350, %v2334
    %v2495 = vpack.c.b16 %v2351, %v2335
    %v2496 = vpack.c.b16 %v2352, %v2336
    %v2497 = vpack.c.b16 %v2353, %v2337
    %v2498 = vpack.c.b16 %v2354, %v2338
    %v2499 = vpack.c.b16 %v2355, %v2339
    %v2500 = vpack.c.b16 %v2356, %v2340
    %v2501 = vpack.c.b16 %v2373, %v2357
    %v2502 = vpack.c.b16 %v2374, %v2358
    %v2503 = vpack.c.b16 %v2375, %v2359
    %v2504 = vpack.c.b16 %v2376, %v2360
    %v2505 = vpack.c.b16 %v2377, %v2361
    %v2506 = vpack.c.b16 %v2378, %v2362
    %v2507 = vpack.c.b16 %v2379, %v2363
    %v2508 = vpack.c.b16 %v2380, %v2364
    %v2509 = vpack.c.b16 %v2381, %v2365
    %v2510 = vpack.c.b16 %v2382, %v2366
    %v2511 = vpack.c.b16 %v2383, %v2367
    %v2512 = vpack.c.b16 %v2384, %v2368
    %v2513 = vpack.c.b16 %v2385, %v2369
    %v2514 = vpack.c.b16 %v2386, %v2370
    %v2515 = vpack.c.b16 %v2387, %v2371
    %v2516 = vpack.c.b16 %v2388, %v2372
    %2645 = vmatpush.bf16.msra.mxu0 %v2501
    %2646 = vmatpush.bf16.msra.mxu0 %v2485
    %2647 = vmatpush.bf16.msra.mxu0 %v2469
    %2648 = vmatpush.bf16.msra.mxu0 %v2453
    %2649 = vmatpush.bf16.msra.mxu0 %v2437
    %2650 = vmatpush.bf16.msra.mxu0 %v2421
    %2651 = vmatpush.bf16.msra.mxu0 %v2405
    %2652 = vmatpush.bf16.msra.mxu0 %v2389
    %2653 = vmatmul.bf16.gmra.mxu0 %v2004
    %v2654 = vpop.f32.mrf.mxu0
    %v2655 = vadd.f32 0.0, %v2654
    %v2656 = vpop.f32.mrf.mxu0
    %2657 = vdwg.mxu0
    %2658 = vmatpush.bf16.msra.mxu0 %v2502
    %2659 = vmatpush.bf16.msra.mxu0 %v2486
    %2660 = vmatpush.bf16.msra.mxu0 %v2470
    %2661 = vmatpush.bf16.msra.mxu0 %v2454
    %2662 = vmatpush.bf16.msra.mxu0 %v2438
    %2663 = vmatpush.bf16.msra.mxu0 %v2422
    %2664 = vmatpush.bf16.msra.mxu0 %v2406
    %2665 = vmatpush.bf16.msra.mxu0 %v2390
    %2666 = vmatmul.bf16.gmra.mxu0 %v2004
    %v2667 = vpop.f32.mrf.mxu0
    %v2668 = vadd.f32 0.0, %v2667
    %v2669 = vpop.f32.mrf.mxu0
    %2670 = vdwg.mxu0
    %2671 = vmatpush.bf16.msra.mxu0 %v2503
    %2672 = vmatpush.bf16.msra.mxu0 %v2487
    %2673 = vmatpush.bf16.msra.mxu0 %v2471
    %2674 = vmatpush.bf16.msra.mxu0 %v2455
    %2675 = vmatpush.bf16.msra.mxu0 %v2439
    %2676 = vmatpush.bf16.msra.mxu0 %v2423
    %2677 = vmatpush.bf16.msra.mxu0 %v2407
    %2678 = vmatpush.bf16.msra.mxu0 %v2391
    %2679 = vmatmul.bf16.gmra.mxu0 %v2004
    %v2680 = vpop.f32.mrf.mxu0
    %v2681 = vadd.f32 0.0, %v2680
    %v2682 = vpop.f32.mrf.mxu0
    %2683 = vdwg.mxu0
    %2684 = vmatpush.bf16.msra.mxu0 %v2504
    %2685 = vmatpush.bf16.msra.mxu0 %v2488
    %2686 = vmatpush.bf16.msra.mxu0 %v2472
    %2687 = vmatpush.bf16.msra.mxu0 %v2456
    %2688 = vmatpush.bf16.msra.mxu0 %v2440
    %2689 = vmatpush.bf16.msra.mxu0 %v2424
    %2690 = vmatpush.bf16.msra.mxu0 %v2408
    %2691 = vmatpush.bf16.msra.mxu0 %v2392
    %2692 = vmatmul.bf16.gmra.mxu0 %v2004
    %v2693 = vpop.f32.mrf.mxu0
    %v2694 = vadd.f32 0.0, %v2693
    %v2695 = vpop.f32.mrf.mxu0
    %2696 = vdwg.mxu0
    %2697 = vmatpush.bf16.msra.mxu0 %v2505
    %2698 = vmatpush.bf16.msra.mxu0 %v2489
    %2699 = vmatpush.bf16.msra.mxu0 %v2473
    %2700 = vmatpush.bf16.msra.mxu0 %v2457
    %2701 = vmatpush.bf16.msra.mxu0 %v2441
    %2702 = vmatpush.bf16.msra.mxu0 %v2425
    %2703 = vmatpush.bf16.msra.mxu0 %v2409
    %2704 = vmatpush.bf16.msra.mxu0 %v2393
    %2705 = vmatmul.bf16.gmra.mxu0 %v2004
    %v2706 = vpop.f32.mrf.mxu0
    %v2707 = vadd.f32 0.0, %v2706
    %v2708 = vpop.f32.mrf.mxu0
    %2709 = vdwg.mxu0
    %2710 = vmatpush.bf16.msra.mxu0 %v2506
    %2711 = vmatpush.bf16.msra.mxu0 %v2490
    %2712 = vmatpush.bf16.msra.mxu0 %v2474
    %2713 = vmatpush.bf16.msra.mxu0 %v2458
    %2714 = vmatpush.bf16.msra.mxu0 %v2442
    %2715 = vmatpush.bf16.msra.mxu0 %v2426
    %2716 = vmatpush.bf16.msra.mxu0 %v2410
    %2717 = vmatpush.bf16.msra.mxu0 %v2394
    %2718 = vmatmul.bf16.gmra.mxu0 %v2004
    %v2719 = vpop.f32.mrf.mxu0
    %v2720 = vadd.f32 0.0, %v2719
    %v2721 = vpop.f32.mrf.mxu0
    %2722 = vdwg.mxu0
    %2723 = vmatpush.bf16.msra.mxu0 %v2507
    %2724 = vmatpush.bf16.msra.mxu0 %v2491
    %2725 = vmatpush.bf16.msra.mxu0 %v2475
    %2726 = vmatpush.bf16.msra.mxu0 %v2459
    %2727 = vmatpush.bf16.msra.mxu0 %v2443
    %2728 = vmatpush.bf16.msra.mxu0 %v2427
    %2729 = vmatpush.bf16.msra.mxu0 %v2411
    %2730 = vmatpush.bf16.msra.mxu0 %v2395
    %2731 = vmatmul.bf16.gmra.mxu0 %v2004
    %v2732 = vpop.f32.mrf.mxu0
    %v2733 = vadd.f32 0.0, %v2732
    %v2734 = vpop.f32.mrf.mxu0
    %2735 = vdwg.mxu0
    %2736 = vmatpush.bf16.msra.mxu0 %v2508
    %2737 = vmatpush.bf16.msra.mxu0 %v2492
    %2738 = vmatpush.bf16.msra.mxu0 %v2476
    %2739 = vmatpush.bf16.msra.mxu0 %v2460
    %2740 = vmatpush.bf16.msra.mxu0 %v2444
    %2741 = vmatpush.bf16.msra.mxu0 %v2428
    %2742 = vmatpush.bf16.msra.mxu0 %v2412
    %2743 = vmatpush.bf16.msra.mxu0 %v2396
    %2744 = vmatmul.bf16.gmra.mxu0 %v2004
    %v2745 = vpop.f32.mrf.mxu0
    %v2746 = vadd.f32 0.0, %v2745
    %v2747 = vpop.f32.mrf.mxu0
    %2748 = vdwg.mxu0
    %2749 = vmatpush.bf16.msra.mxu0 %v2509
    %2750 = vmatpush.bf16.msra.mxu0 %v2493
    %2751 = vmatpush.bf16.msra.mxu0 %v2477
    %2752 = vmatpush.bf16.msra.mxu0 %v2461
    %2753 = vmatpush.bf16.msra.mxu0 %v2445
    %2754 = vmatpush.bf16.msra.mxu0 %v2429
    %2755 = vmatpush.bf16.msra.mxu0 %v2413
    %2756 = vmatpush.bf16.msra.mxu0 %v2397
    %2757 = vmatmul.bf16.gmra.mxu0 %v2004
    %v2758 = vpop.f32.mrf.mxu0
    %v2759 = vadd.f32 0.0, %v2758
    %v2760 = vpop.f32.mrf.mxu0
    %2761 = vdwg.mxu0
    %2762 = vmatpush.bf16.msra.mxu0 %v2510
    %2763 = vmatpush.bf16.msra.mxu0 %v2494
    %2764 = vmatpush.bf16.msra.mxu0 %v2478
    %2765 = vmatpush.bf16.msra.mxu0 %v2462
    %2766 = vmatpush.bf16.msra.mxu0 %v2446
    %2767 = vmatpush.bf16.msra.mxu0 %v2430
    %2768 = vmatpush.bf16.msra.mxu0 %v2414
    %2769 = vmatpush.bf16.msra.mxu0 %v2398
    %2770 = vmatmul.bf16.gmra.mxu0 %v2004
    %v2771 = vpop.f32.mrf.mxu0
    %v2772 = vadd.f32 0.0, %v2771
    %v2773 = vpop.f32.mrf.mxu0
    %2774 = vdwg.mxu0
    %2775 = vmatpush.bf16.msra.mxu0 %v2511
    %2776 = vmatpush.bf16.msra.mxu0 %v2495
    %2777 = vmatpush.bf16.msra.mxu0 %v2479
    %2778 = vmatpush.bf16.msra.mxu0 %v2463
    %2779 = vmatpush.bf16.msra.mxu0 %v2447
    %2780 = vmatpush.bf16.msra.mxu0 %v2431
    %2781 = vmatpush.bf16.msra.mxu0 %v2415
    %2782 = vmatpush.bf16.msra.mxu0 %v2399
    %2783 = vmatmul.bf16.gmra.mxu0 %v2004
    %v2784 = vpop.f32.mrf.mxu0
    %v2785 = vadd.f32 0.0, %v2784
    %v2786 = vpop.f32.mrf.mxu0
    %2787 = vdwg.mxu0
    %2788 = vmatpush.bf16.msra.mxu0 %v2512
    %2789 = vmatpush.bf16.msra.mxu0 %v2496
    %2790 = vmatpush.bf16.msra.mxu0 %v2480
    %2791 = vmatpush.bf16.msra.mxu0 %v2464
    %2792 = vmatpush.bf16.msra.mxu0 %v2448
    %2793 = vmatpush.bf16.msra.mxu0 %v2432
    %2794 = vmatpush.bf16.msra.mxu0 %v2416
    %2795 = vmatpush.bf16.msra.mxu0 %v2400
    %2796 = vmatmul.bf16.gmra.mxu0 %v2004
    %v2797 = vpop.f32.mrf.mxu0
    %v2798 = vadd.f32 0.0, %v2797
    %v2799 = vpop.f32.mrf.mxu0
    %2800 = vdwg.mxu0
    %2801 = vmatpush.bf16.msra.mxu0 %v2513
    %2802 = vmatpush.bf16.msra.mxu0 %v2497
    %2803 = vmatpush.bf16.msra.mxu0 %v2481
    %2804 = vmatpush.bf16.msra.mxu0 %v2465
    %2805 = vmatpush.bf16.msra.mxu0 %v2449
    %2806 = vmatpush.bf16.msra.mxu0 %v2433
    %2807 = vmatpush.bf16.msra.mxu0 %v2417
    %2808 = vmatpush.bf16.msra.mxu0 %v2401
    %2809 = vmatmul.bf16.gmra.mxu0 %v2004
    %v2810 = vpop.f32.mrf.mxu0
    %v2811 = vadd.f32 0.0, %v2810
    %v2812 = vpop.f32.mrf.mxu0
    %2813 = vdwg.mxu0
    %2814 = vmatpush.bf16.msra.mxu0 %v2514
    %2815 = vmatpush.bf16.msra.mxu0 %v2498
    %2816 = vmatpush.bf16.msra.mxu0 %v2482
    %2817 = vmatpush.bf16.msra.mxu0 %v2466
    %2818 = vmatpush.bf16.msra.mxu0 %v2450
    %2819 = vmatpush.bf16.msra.mxu0 %v2434
    %2820 = vmatpush.bf16.msra.mxu0 %v2418
    %2821 = vmatpush.bf16.msra.mxu0 %v2402
    %2822 = vmatmul.bf16.gmra.mxu0 %v2004
    %v2823 = vpop.f32.mrf.mxu0
    %v2824 = vadd.f32 0.0, %v2823
    %v2825 = vpop.f32.mrf.mxu0
    %2826 = vdwg.mxu0
    %2827 = vmatpush.bf16.msra.mxu0 %v2515
    %2828 = vmatpush.bf16.msra.mxu0 %v2499
    %2829 = vmatpush.bf16.msra.mxu0 %v2483
    %2830 = vmatpush.bf16.msra.mxu0 %v2467
    %2831 = vmatpush.bf16.msra.mxu0 %v2451
    %2832 = vmatpush.bf16.msra.mxu0 %v2435
    %2833 = vmatpush.bf16.msra.mxu0 %v2419
    %2834 = vmatpush.bf16.msra.mxu0 %v2403
    %2835 = vmatmul.bf16.gmra.mxu0 %v2004
    %v2836 = vpop.f32.mrf.mxu0
    %v2837 = vadd.f32 0.0, %v2836
    %v2838 = vpop.f32.mrf.mxu0
    %2839 = vdwg.mxu0
    %2840 = vmatpush.bf16.msra.mxu0 %v2516
    %2841 = vmatpush.bf16.msra.mxu0 %v2500
    %2842 = vmatpush.bf16.msra.mxu0 %v2484
    %2843 = vmatpush.bf16.msra.mxu0 %v2468
    %2844 = vmatpush.bf16.msra.mxu0 %v2452
    %2845 = vmatpush.bf16.msra.mxu0 %v2436
    %2846 = vmatpush.bf16.msra.mxu0 %v2420
    %2847 = vmatpush.bf16.msra.mxu0 %v2404
    %2848 = vmatmul.bf16.gmra.mxu0 %v2004
    %v2849 = vpop.f32.mrf.mxu0
    %v2850 = vadd.f32 0.0, %v2849
    %v2851 = vpop.f32.mrf.mxu0
    %2852 = vdwg.mxu0
    %v2853 = vmul.f32 %v2655, %v2655
    %v2854 = vadd.f32 %v2655, %v2668
    %v2855 = vmul.f32 %v2668, %v2668
    %v2856 = vadd.f32 %v2853, %v2855
    %v2857 = vadd.f32 %v2854, %v2681
    %v2858 = vmul.f32 %v2681, %v2681
    %v2859 = vadd.f32 %v2856, %v2858
    %v2860 = vadd.f32 %v2857, %v2694
    %v2861 = vmul.f32 %v2694, %v2694
    %v2862 = vadd.f32 %v2859, %v2861
    %v2863 = vadd.f32 %v2860, %v2707
    %v2864 = vmul.f32 %v2707, %v2707
    %v2865 = vadd.f32 %v2862, %v2864
    %v2866 = vadd.f32 %v2863, %v2720
    %v2867 = vmul.f32 %v2720, %v2720
    %v2868 = vadd.f32 %v2865, %v2867
    %v2869 = vadd.f32 %v2866, %v2733
    %v2870 = vmul.f32 %v2733, %v2733
    %v2871 = vadd.f32 %v2868, %v2870
    %v2872 = vadd.f32 %v2869, %v2746
    %v2873 = vmul.f32 %v2746, %v2746
    %v2874 = vadd.f32 %v2871, %v2873
    %v2875 = vadd.f32 %v2872, %v2759
    %v2876 = vmul.f32 %v2759, %v2759
    %v2877 = vadd.f32 %v2874, %v2876
    %v2878 = vadd.f32 %v2875, %v2772
    %v2879 = vmul.f32 %v2772, %v2772
    %v2880 = vadd.f32 %v2877, %v2879
    %v2881 = vadd.f32 %v2878, %v2785
    %v2882 = vmul.f32 %v2785, %v2785
    %v2883 = vadd.f32 %v2880, %v2882
    %v2884 = vadd.f32 %v2881, %v2798
    %v2885 = vmul.f32 %v2798, %v2798
    %v2886 = vadd.f32 %v2883, %v2885
    %v2887 = vadd.f32 %v2884, %v2811
    %v2888 = vmul.f32 %v2811, %v2811
    %v2889 = vadd.f32 %v2886, %v2888
    %v2890 = vadd.f32 %v2887, %v2824
    %v2891 = vmul.f32 %v2824, %v2824
    %v2892 = vadd.f32 %v2889, %v2891
    %v2893 = vadd.f32 %v2890, %v2837
    %v2894 = vmul.f32 %v2837, %v2837
    %v2895 = vadd.f32 %v2892, %v2894
    %v2896 = vadd.f32 %v2893, %v2850
    %v2897 = vmul.f32 %v2850, %v2850
    %v2898 = vadd.f32 %v2895, %v2897
    %v2899 = vadd.f32 %v2896, 0.0
    %v2900 = vadd.f32 %v2898, 0.0
    %v2901 = vld [vmem:[#allocation2 + $0x8] sm:$0xff]
    %v2902 = vpack.c.bf16 %v2901, %v2901
    %2903 = vmatpush.bf16.msra.mxu0 %v2501
    %2904 = vmatpush.bf16.msra.mxu0 %v2485
    %2905 = vmatpush.bf16.msra.mxu0 %v2469
    %2906 = vmatpush.bf16.msra.mxu0 %v2453
    %2907 = vmatpush.bf16.msra.mxu0 %v2437
    %2908 = vmatpush.bf16.msra.mxu0 %v2421
    %2909 = vmatpush.bf16.msra.mxu0 %v2405
    %2910 = vmatpush.bf16.msra.mxu0 %v2389
    %2911 = vmatmul.bf16.gmra.mxu0 %v2902
    %v2912 = vpop.f32.mrf.mxu0
    %v2913 = vadd.f32 0.0, %v2912
    %v2914 = vpop.f32.mrf.mxu0
    %2915 = vdwg.mxu0
    %2916 = vmatpush.bf16.msra.mxu0 %v2502
    %2917 = vmatpush.bf16.msra.mxu0 %v2486
    %2918 = vmatpush.bf16.msra.mxu0 %v2470
    %2919 = vmatpush.bf16.msra.mxu0 %v2454
    %2920 = vmatpush.bf16.msra.mxu0 %v2438
    %2921 = vmatpush.bf16.msra.mxu0 %v2422
    %2922 = vmatpush.bf16.msra.mxu0 %v2406
    %2923 = vmatpush.bf16.msra.mxu0 %v2390
    %2924 = vmatmul.bf16.gmra.mxu0 %v2902
    %v2925 = vpop.f32.mrf.mxu0
    %v2926 = vadd.f32 0.0, %v2925
    %v2927 = vpop.f32.mrf.mxu0
    %2928 = vdwg.mxu0
    %2929 = vmatpush.bf16.msra.mxu0 %v2503
    %2930 = vmatpush.bf16.msra.mxu0 %v2487
    %2931 = vmatpush.bf16.msra.mxu0 %v2471
    %2932 = vmatpush.bf16.msra.mxu0 %v2455
    %2933 = vmatpush.bf16.msra.mxu0 %v2439
    %2934 = vmatpush.bf16.msra.mxu0 %v2423
    %2935 = vmatpush.bf16.msra.mxu0 %v2407
    %2936 = vmatpush.bf16.msra.mxu0 %v2391
    %2937 = vmatmul.bf16.gmra.mxu0 %v2902
    %v2938 = vpop.f32.mrf.mxu0
    %v2939 = vadd.f32 0.0, %v2938
    %v2940 = vpop.f32.mrf.mxu0
    %2941 = vdwg.mxu0
    %2942 = vmatpush.bf16.msra.mxu0 %v2504
    %2943 = vmatpush.bf16.msra.mxu0 %v2488
    %2944 = vmatpush.bf16.msra.mxu0 %v2472
    %2945 = vmatpush.bf16.msra.mxu0 %v2456
    %2946 = vmatpush.bf16.msra.mxu0 %v2440
    %2947 = vmatpush.bf16.msra.mxu0 %v2424
    %2948 = vmatpush.bf16.msra.mxu0 %v2408
    %2949 = vmatpush.bf16.msra.mxu0 %v2392
    %2950 = vmatmul.bf16.gmra.mxu0 %v2902
    %v2951 = vpop.f32.mrf.mxu0
    %v2952 = vadd.f32 0.0, %v2951
    %v2953 = vpop.f32.mrf.mxu0
    %2954 = vdwg.mxu0
    %2955 = vmatpush.bf16.msra.mxu0 %v2505
    %2956 = vmatpush.bf16.msra.mxu0 %v2489
    %2957 = vmatpush.bf16.msra.mxu0 %v2473
    %2958 = vmatpush.bf16.msra.mxu0 %v2457
    %2959 = vmatpush.bf16.msra.mxu0 %v2441
    %2960 = vmatpush.bf16.msra.mxu0 %v2425
    %2961 = vmatpush.bf16.msra.mxu0 %v2409
    %2962 = vmatpush.bf16.msra.mxu0 %v2393
    %2963 = vmatmul.bf16.gmra.mxu0 %v2902
    %v2964 = vpop.f32.mrf.mxu0
    %v2965 = vadd.f32 0.0, %v2964
    %v2966 = vpop.f32.mrf.mxu0
    %2967 = vdwg.mxu0
    %2968 = vmatpush.bf16.msra.mxu0 %v2506
    %2969 = vmatpush.bf16.msra.mxu0 %v2490
    %2970 = vmatpush.bf16.msra.mxu0 %v2474
    %2971 = vmatpush.bf16.msra.mxu0 %v2458
    %2972 = vmatpush.bf16.msra.mxu0 %v2442
    %2973 = vmatpush.bf16.msra.mxu0 %v2426
    %2974 = vmatpush.bf16.msra.mxu0 %v2410
    %2975 = vmatpush.bf16.msra.mxu0 %v2394
    %2976 = vmatmul.bf16.gmra.mxu0 %v2902
    %v2977 = vpop.f32.mrf.mxu0
    %v2978 = vadd.f32 0.0, %v2977
    %v2979 = vpop.f32.mrf.mxu0
    %2980 = vdwg.mxu0
    %2981 = vmatpush.bf16.msra.mxu0 %v2507
    %2982 = vmatpush.bf16.msra.mxu0 %v2491
    %2983 = vmatpush.bf16.msra.mxu0 %v2475
    %2984 = vmatpush.bf16.msra.mxu0 %v2459
    %2985 = vmatpush.bf16.msra.mxu0 %v2443
    %2986 = vmatpush.bf16.msra.mxu0 %v2427
    %2987 = vmatpush.bf16.msra.mxu0 %v2411
    %2988 = vmatpush.bf16.msra.mxu0 %v2395
    %2989 = vmatmul.bf16.gmra.mxu0 %v2902
    %v2990 = vpop.f32.mrf.mxu0
    %v2991 = vadd.f32 0.0, %v2990
    %v2992 = vpop.f32.mrf.mxu0
    %2993 = vdwg.mxu0
    %2994 = vmatpush.bf16.msra.mxu0 %v2508
    %2995 = vmatpush.bf16.msra.mxu0 %v2492
    %2996 = vmatpush.bf16.msra.mxu0 %v2476
    %2997 = vmatpush.bf16.msra.mxu0 %v2460
    %2998 = vmatpush.bf16.msra.mxu0 %v2444
    %2999 = vmatpush.bf16.msra.mxu0 %v2428
    %3000 = vmatpush.bf16.msra.mxu0 %v2412
    %3001 = vmatpush.bf16.msra.mxu0 %v2396
    %3002 = vmatmul.bf16.gmra.mxu0 %v2902
    %v3003 = vpop.f32.mrf.mxu0
    %v3004 = vadd.f32 0.0, %v3003
    %v3005 = vpop.f32.mrf.mxu0
    %3006 = vdwg.mxu0
    %3007 = vmatpush.bf16.msra.mxu0 %v2509
    %3008 = vmatpush.bf16.msra.mxu0 %v2493
    %3009 = vmatpush.bf16.msra.mxu0 %v2477
    %3010 = vmatpush.bf16.msra.mxu0 %v2461
    %3011 = vmatpush.bf16.msra.mxu0 %v2445
    %3012 = vmatpush.bf16.msra.mxu0 %v2429
    %3013 = vmatpush.bf16.msra.mxu0 %v2413
    %3014 = vmatpush.bf16.msra.mxu0 %v2397
    %3015 = vmatmul.bf16.gmra.mxu0 %v2902
    %v3016 = vpop.f32.mrf.mxu0
    %v3017 = vadd.f32 0.0, %v3016
    %v3018 = vpop.f32.mrf.mxu0
    %3019 = vdwg.mxu0
    %3020 = vmatpush.bf16.msra.mxu0 %v2510
    %3021 = vmatpush.bf16.msra.mxu0 %v2494
    %3022 = vmatpush.bf16.msra.mxu0 %v2478
    %3023 = vmatpush.bf16.msra.mxu0 %v2462
    %3024 = vmatpush.bf16.msra.mxu0 %v2446
    %3025 = vmatpush.bf16.msra.mxu0 %v2430
    %3026 = vmatpush.bf16.msra.mxu0 %v2414
    %3027 = vmatpush.bf16.msra.mxu0 %v2398
    %3028 = vmatmul.bf16.gmra.mxu0 %v2902
    %v3029 = vpop.f32.mrf.mxu0
    %v3030 = vadd.f32 0.0, %v3029
    %v3031 = vpop.f32.mrf.mxu0
    %3032 = vdwg.mxu0
    %3033 = vmatpush.bf16.msra.mxu0 %v2511
    %3034 = vmatpush.bf16.msra.mxu0 %v2495
    %3035 = vmatpush.bf16.msra.mxu0 %v2479
    %3036 = vmatpush.bf16.msra.mxu0 %v2463
    %3037 = vmatpush.bf16.msra.mxu0 %v2447
    %3038 = vmatpush.bf16.msra.mxu0 %v2431
    %3039 = vmatpush.bf16.msra.mxu0 %v2415
    %3040 = vmatpush.bf16.msra.mxu0 %v2399
    %3041 = vmatmul.bf16.gmra.mxu0 %v2902
    %v3042 = vpop.f32.mrf.mxu0
    %v3043 = vadd.f32 0.0, %v3042
    %v3044 = vpop.f32.mrf.mxu0
    %3045 = vdwg.mxu0
    %3046 = vmatpush.bf16.msra.mxu0 %v2512
    %3047 = vmatpush.bf16.msra.mxu0 %v2496
    %3048 = vmatpush.bf16.msra.mxu0 %v2480
    %3049 = vmatpush.bf16.msra.mxu0 %v2464
    %3050 = vmatpush.bf16.msra.mxu0 %v2448
    %3051 = vmatpush.bf16.msra.mxu0 %v2432
    %3052 = vmatpush.bf16.msra.mxu0 %v2416
    %3053 = vmatpush.bf16.msra.mxu0 %v2400
    %3054 = vmatmul.bf16.gmra.mxu0 %v2902
    %v3055 = vpop.f32.mrf.mxu0
    %v3056 = vadd.f32 0.0, %v3055
    %v3057 = vpop.f32.mrf.mxu0
    %3058 = vdwg.mxu0
    %3059 = vmatpush.bf16.msra.mxu0 %v2513
    %3060 = vmatpush.bf16.msra.mxu0 %v2497
    %3061 = vmatpush.bf16.msra.mxu0 %v2481
    %3062 = vmatpush.bf16.msra.mxu0 %v2465
    %3063 = vmatpush.bf16.msra.mxu0 %v2449
    %3064 = vmatpush.bf16.msra.mxu0 %v2433
    %3065 = vmatpush.bf16.msra.mxu0 %v2417
    %3066 = vmatpush.bf16.msra.mxu0 %v2401
    %3067 = vmatmul.bf16.gmra.mxu0 %v2902
    %v3068 = vpop.f32.mrf.mxu0
    %v3069 = vadd.f32 0.0, %v3068
    %v3070 = vpop.f32.mrf.mxu0
    %3071 = vdwg.mxu0
    %3072 = vmatpush.bf16.msra.mxu0 %v2514
    %3073 = vmatpush.bf16.msra.mxu0 %v2498
    %3074 = vmatpush.bf16.msra.mxu0 %v2482
    %3075 = vmatpush.bf16.msra.mxu0 %v2466
    %3076 = vmatpush.bf16.msra.mxu0 %v2450
    %3077 = vmatpush.bf16.msra.mxu0 %v2434
    %3078 = vmatpush.bf16.msra.mxu0 %v2418
    %3079 = vmatpush.bf16.msra.mxu0 %v2402
    %3080 = vmatmul.bf16.gmra.mxu0 %v2902
    %v3081 = vpop.f32.mrf.mxu0
    %v3082 = vadd.f32 0.0, %v3081
    %v3083 = vpop.f32.mrf.mxu0
    %3084 = vdwg.mxu0
    %3085 = vmatpush.bf16.msra.mxu0 %v2515
    %3086 = vmatpush.bf16.msra.mxu0 %v2499
    %3087 = vmatpush.bf16.msra.mxu0 %v2483
    %3088 = vmatpush.bf16.msra.mxu0 %v2467
    %3089 = vmatpush.bf16.msra.mxu0 %v2451
    %3090 = vmatpush.bf16.msra.mxu0 %v2435
    %3091 = vmatpush.bf16.msra.mxu0 %v2419
    %3092 = vmatpush.bf16.msra.mxu0 %v2403
    %3093 = vmatmul.bf16.gmra.mxu0 %v2902
    %v3094 = vpop.f32.mrf.mxu0
    %v3095 = vadd.f32 0.0, %v3094
    %v3096 = vpop.f32.mrf.mxu0
    %3097 = vdwg.mxu0
    %3098 = vmatpush.bf16.msra.mxu0 %v2516
    %3099 = vmatpush.bf16.msra.mxu0 %v2500
    %3100 = vmatpush.bf16.msra.mxu0 %v2484
    %3101 = vmatpush.bf16.msra.mxu0 %v2468
    %3102 = vmatpush.bf16.msra.mxu0 %v2452
    %3103 = vmatpush.bf16.msra.mxu0 %v2436
    %3104 = vmatpush.bf16.msra.mxu0 %v2420
    %3105 = vmatpush.bf16.msra.mxu0 %v2404
    %3106 = vmatmul.bf16.gmra.mxu0 %v2902
    %v3107 = vpop.f32.mrf.mxu0
    %v3108 = vadd.f32 0.0, %v3107
    %v3109 = vpop.f32.mrf.mxu0
    %3110 = vdwg.mxu0
    %v3111 = vmul.f32 %v2913, %v2913
    %v3112 = vadd.f32 %v2913, %v2926
    %v3113 = vmul.f32 %v2926, %v2926
    %v3114 = vadd.f32 %v3111, %v3113
    %v3115 = vadd.f32 %v3112, %v2939
    %v3116 = vmul.f32 %v2939, %v2939
    %v3117 = vadd.f32 %v3114, %v3116
    %v3118 = vadd.f32 %v3115, %v2952
    %v3119 = vmul.f32 %v2952, %v2952
    %v3120 = vadd.f32 %v3117, %v3119
    %v3121 = vadd.f32 %v3118, %v2965
    %v3122 = vmul.f32 %v2965, %v2965
    %v3123 = vadd.f32 %v3120, %v3122
    %v3124 = vadd.f32 %v3121, %v2978
    %v3125 = vmul.f32 %v2978, %v2978
    %v3126 = vadd.f32 %v3123, %v3125
    %v3127 = vadd.f32 %v3124, %v2991
    %v3128 = vmul.f32 %v2991, %v2991
    %v3129 = vadd.f32 %v3126, %v3128
    %v3130 = vadd.f32 %v3127, %v3004
    %v3131 = vmul.f32 %v3004, %v3004
    %v3132 = vadd.f32 %v3129, %v3131
    %v3133 = vadd.f32 %v3130, %v3017
    %v3134 = vmul.f32 %v3017, %v3017
    %v3135 = vadd.f32 %v3132, %v3134
    %v3136 = vadd.f32 %v3133, %v3030
    %v3137 = vmul.f32 %v3030, %v3030
    %v3138 = vadd.f32 %v3135, %v3137
    %v3139 = vadd.f32 %v3136, %v3043
    %v3140 = vmul.f32 %v3043, %v3043
    %v3141 = vadd.f32 %v3138, %v3140
    %v3142 = vadd.f32 %v3139, %v3056
    %v3143 = vmul.f32 %v3056, %v3056
    %v3144 = vadd.f32 %v3141, %v3143
    %v3145 = vadd.f32 %v3142, %v3069
    %v3146 = vmul.f32 %v3069, %v3069
    %v3147 = vadd.f32 %v3144, %v3146
    %v3148 = vadd.f32 %v3145, %v3082
    %v3149 = vmul.f32 %v3082, %v3082
    %v3150 = vadd.f32 %v3147, %v3149
    %v3151 = vadd.f32 %v3148, %v3095
    %v3152 = vmul.f32 %v3095, %v3095
    %v3153 = vadd.f32 %v3150, %v3152
    %v3154 = vadd.f32 %v3151, %v3108
    %v3155 = vmul.f32 %v3108, %v3108
    %v3156 = vadd.f32 %v3153, %v3155
    %v3157 = vadd.f32 %v2899, %v3154
    %v3158 = vadd.f32 %v2900, %v3156
    %v3159 = vld [vmem:[#allocation2 + $0x10] sm:$0xff]
    %v3160 = vpack.c.bf16 %v3159, %v3159
    %3161 = vmatpush.bf16.msra.mxu0 %v2501
    %3162 = vmatpush.bf16.msra.mxu0 %v2485
    %3163 = vmatpush.bf16.msra.mxu0 %v2469
    %3164 = vmatpush.bf16.msra.mxu0 %v2453
    %3165 = vmatpush.bf16.msra.mxu0 %v2437
    %3166 = vmatpush.bf16.msra.mxu0 %v2421
    %3167 = vmatpush.bf16.msra.mxu0 %v2405
    %3168 = vmatpush.bf16.msra.mxu0 %v2389
    %3169 = vmatmul.bf16.gmra.mxu0 %v3160
    %v3170 = vpop.f32.mrf.mxu0
    %v3171 = vadd.f32 0.0, %v3170
    %v3172 = vpop.f32.mrf.mxu0
    %3173 = vdwg.mxu0
    %3174 = vmatpush.bf16.msra.mxu0 %v2502
    %3175 = vmatpush.bf16.msra.mxu0 %v2486
    %3176 = vmatpush.bf16.msra.mxu0 %v2470
    %3177 = vmatpush.bf16.msra.mxu0 %v2454
    %3178 = vmatpush.bf16.msra.mxu0 %v2438
    %3179 = vmatpush.bf16.msra.mxu0 %v2422
    %3180 = vmatpush.bf16.msra.mxu0 %v2406
    %3181 = vmatpush.bf16.msra.mxu0 %v2390
    %3182 = vmatmul.bf16.gmra.mxu0 %v3160
    %v3183 = vpop.f32.mrf.mxu0
    %v3184 = vadd.f32 0.0, %v3183
    %v3185 = vpop.f32.mrf.mxu0
    %3186 = vdwg.mxu0
    %3187 = vmatpush.bf16.msra.mxu0 %v2503
    %3188 = vmatpush.bf16.msra.mxu0 %v2487
    %3189 = vmatpush.bf16.msra.mxu0 %v2471
    %3190 = vmatpush.bf16.msra.mxu0 %v2455
    %3191 = vmatpush.bf16.msra.mxu0 %v2439
    %3192 = vmatpush.bf16.msra.mxu0 %v2423
    %3193 = vmatpush.bf16.msra.mxu0 %v2407
    %3194 = vmatpush.bf16.msra.mxu0 %v2391
    %3195 = vmatmul.bf16.gmra.mxu0 %v3160
    %v3196 = vpop.f32.mrf.mxu0
    %v3197 = vadd.f32 0.0, %v3196
    %v3198 = vpop.f32.mrf.mxu0
    %3199 = vdwg.mxu0
    %3200 = vmatpush.bf16.msra.mxu0 %v2504
    %3201 = vmatpush.bf16.msra.mxu0 %v2488
    %3202 = vmatpush.bf16.msra.mxu0 %v2472
    %3203 = vmatpush.bf16.msra.mxu0 %v2456
    %3204 = vmatpush.bf16.msra.mxu0 %v2440
    %3205 = vmatpush.bf16.msra.mxu0 %v2424
    %3206 = vmatpush.bf16.msra.mxu0 %v2408
    %3207 = vmatpush.bf16.msra.mxu0 %v2392
    %3208 = vmatmul.bf16.gmra.mxu0 %v3160
    %v3209 = vpop.f32.mrf.mxu0
    %v3210 = vadd.f32 0.0, %v3209
    %v3211 = vpop.f32.mrf.mxu0
    %3212 = vdwg.mxu0
    %3213 = vmatpush.bf16.msra.mxu0 %v2505
    %3214 = vmatpush.bf16.msra.mxu0 %v2489
    %3215 = vmatpush.bf16.msra.mxu0 %v2473
    %3216 = vmatpush.bf16.msra.mxu0 %v2457
    %3217 = vmatpush.bf16.msra.mxu0 %v2441
    %3218 = vmatpush.bf16.msra.mxu0 %v2425
    %3219 = vmatpush.bf16.msra.mxu0 %v2409
    %3220 = vmatpush.bf16.msra.mxu0 %v2393
    %3221 = vmatmul.bf16.gmra.mxu0 %v3160
    %v3222 = vpop.f32.mrf.mxu0
    %v3223 = vadd.f32 0.0, %v3222
    %v3224 = vpop.f32.mrf.mxu0
    %3225 = vdwg.mxu0
    %3226 = vmatpush.bf16.msra.mxu0 %v2506
    %3227 = vmatpush.bf16.msra.mxu0 %v2490
    %3228 = vmatpush.bf16.msra.mxu0 %v2474
    %3229 = vmatpush.bf16.msra.mxu0 %v2458
    %3230 = vmatpush.bf16.msra.mxu0 %v2442
    %3231 = vmatpush.bf16.msra.mxu0 %v2426
    %3232 = vmatpush.bf16.msra.mxu0 %v2410
    %3233 = vmatpush.bf16.msra.mxu0 %v2394
    %3234 = vmatmul.bf16.gmra.mxu0 %v3160
    %v3235 = vpop.f32.mrf.mxu0
    %v3236 = vadd.f32 0.0, %v3235
    %v3237 = vpop.f32.mrf.mxu0
    %3238 = vdwg.mxu0
    %3239 = vmatpush.bf16.msra.mxu0 %v2507
    %3240 = vmatpush.bf16.msra.mxu0 %v2491
    %3241 = vmatpush.bf16.msra.mxu0 %v2475
    %3242 = vmatpush.bf16.msra.mxu0 %v2459
    %3243 = vmatpush.bf16.msra.mxu0 %v2443
    %3244 = vmatpush.bf16.msra.mxu0 %v2427
    %3245 = vmatpush.bf16.msra.mxu0 %v2411
    %3246 = vmatpush.bf16.msra.mxu0 %v2395
    %3247 = vmatmul.bf16.gmra.mxu0 %v3160
    %v3248 = vpop.f32.mrf.mxu0
    %v3249 = vadd.f32 0.0, %v3248
    %v3250 = vpop.f32.mrf.mxu0
    %3251 = vdwg.mxu0
    %3252 = vmatpush.bf16.msra.mxu0 %v2508
    %3253 = vmatpush.bf16.msra.mxu0 %v2492
    %3254 = vmatpush.bf16.msra.mxu0 %v2476
    %3255 = vmatpush.bf16.msra.mxu0 %v2460
    %3256 = vmatpush.bf16.msra.mxu0 %v2444
    %3257 = vmatpush.bf16.msra.mxu0 %v2428
    %3258 = vmatpush.bf16.msra.mxu0 %v2412
    %3259 = vmatpush.bf16.msra.mxu0 %v2396
    %3260 = vmatmul.bf16.gmra.mxu0 %v3160
    %v3261 = vpop.f32.mrf.mxu0
    %v3262 = vadd.f32 0.0, %v3261
    %v3263 = vpop.f32.mrf.mxu0
    %3264 = vdwg.mxu0
    %3265 = vmatpush.bf16.msra.mxu0 %v2509
    %3266 = vmatpush.bf16.msra.mxu0 %v2493
    %3267 = vmatpush.bf16.msra.mxu0 %v2477
    %3268 = vmatpush.bf16.msra.mxu0 %v2461
    %3269 = vmatpush.bf16.msra.mxu0 %v2445
    %3270 = vmatpush.bf16.msra.mxu0 %v2429
    %3271 = vmatpush.bf16.msra.mxu0 %v2413
    %3272 = vmatpush.bf16.msra.mxu0 %v2397
    %3273 = vmatmul.bf16.gmra.mxu0 %v3160
    %v3274 = vpop.f32.mrf.mxu0
    %v3275 = vadd.f32 0.0, %v3274
    %v3276 = vpop.f32.mrf.mxu0
    %3277 = vdwg.mxu0
    %3278 = vmatpush.bf16.msra.mxu0 %v2510
    %3279 = vmatpush.bf16.msra.mxu0 %v2494
    %3280 = vmatpush.bf16.msra.mxu0 %v2478
    %3281 = vmatpush.bf16.msra.mxu0 %v2462
    %3282 = vmatpush.bf16.msra.mxu0 %v2446
    %3283 = vmatpush.bf16.msra.mxu0 %v2430
    %3284 = vmatpush.bf16.msra.mxu0 %v2414
    %3285 = vmatpush.bf16.msra.mxu0 %v2398
    %3286 = vmatmul.bf16.gmra.mxu0 %v3160
    %v3287 = vpop.f32.mrf.mxu0
    %v3288 = vadd.f32 0.0, %v3287
    %v3289 = vpop.f32.mrf.mxu0
    %3290 = vdwg.mxu0
    %3291 = vmatpush.bf16.msra.mxu0 %v2511
    %3292 = vmatpush.bf16.msra.mxu0 %v2495
    %3293 = vmatpush.bf16.msra.mxu0 %v2479
    %3294 = vmatpush.bf16.msra.mxu0 %v2463
    %3295 = vmatpush.bf16.msra.mxu0 %v2447
    %3296 = vmatpush.bf16.msra.mxu0 %v2431
    %3297 = vmatpush.bf16.msra.mxu0 %v2415
    %3298 = vmatpush.bf16.msra.mxu0 %v2399
    %3299 = vmatmul.bf16.gmra.mxu0 %v3160
    %v3300 = vpop.f32.mrf.mxu0
    %v3301 = vadd.f32 0.0, %v3300
    %v3302 = vpop.f32.mrf.mxu0
    %3303 = vdwg.mxu0
    %3304 = vmatpush.bf16.msra.mxu0 %v2512
    %3305 = vmatpush.bf16.msra.mxu0 %v2496
    %3306 = vmatpush.bf16.msra.mxu0 %v2480
    %3307 = vmatpush.bf16.msra.mxu0 %v2464
    %3308 = vmatpush.bf16.msra.mxu0 %v2448
    %3309 = vmatpush.bf16.msra.mxu0 %v2432
    %3310 = vmatpush.bf16.msra.mxu0 %v2416
    %3311 = vmatpush.bf16.msra.mxu0 %v2400
    %3312 = vmatmul.bf16.gmra.mxu0 %v3160
    %v3313 = vpop.f32.mrf.mxu0
    %v3314 = vadd.f32 0.0, %v3313
    %v3315 = vpop.f32.mrf.mxu0
    %3316 = vdwg.mxu0
    %3317 = vmatpush.bf16.msra.mxu0 %v2513
    %3318 = vmatpush.bf16.msra.mxu0 %v2497
    %3319 = vmatpush.bf16.msra.mxu0 %v2481
    %3320 = vmatpush.bf16.msra.mxu0 %v2465
    %3321 = vmatpush.bf16.msra.mxu0 %v2449
    %3322 = vmatpush.bf16.msra.mxu0 %v2433
    %3323 = vmatpush.bf16.msra.mxu0 %v2417
    %3324 = vmatpush.bf16.msra.mxu0 %v2401
    %3325 = vmatmul.bf16.gmra.mxu0 %v3160
    %v3326 = vpop.f32.mrf.mxu0
    %v3327 = vadd.f32 0.0, %v3326
    %v3328 = vpop.f32.mrf.mxu0
    %3329 = vdwg.mxu0
    %3330 = vmatpush.bf16.msra.mxu0 %v2514
    %3331 = vmatpush.bf16.msra.mxu0 %v2498
    %3332 = vmatpush.bf16.msra.mxu0 %v2482
    %3333 = vmatpush.bf16.msra.mxu0 %v2466
    %3334 = vmatpush.bf16.msra.mxu0 %v2450
    %3335 = vmatpush.bf16.msra.mxu0 %v2434
    %3336 = vmatpush.bf16.msra.mxu0 %v2418
    %3337 = vmatpush.bf16.msra.mxu0 %v2402
    %3338 = vmatmul.bf16.gmra.mxu0 %v3160
    %v3339 = vpop.f32.mrf.mxu0
    %v3340 = vadd.f32 0.0, %v3339
    %v3341 = vpop.f32.mrf.mxu0
    %3342 = vdwg.mxu0
    %3343 = vmatpush.bf16.msra.mxu0 %v2515
    %3344 = vmatpush.bf16.msra.mxu0 %v2499
    %3345 = vmatpush.bf16.msra.mxu0 %v2483
    %3346 = vmatpush.bf16.msra.mxu0 %v2467
    %3347 = vmatpush.bf16.msra.mxu0 %v2451
    %3348 = vmatpush.bf16.msra.mxu0 %v2435
    %3349 = vmatpush.bf16.msra.mxu0 %v2419
    %3350 = vmatpush.bf16.msra.mxu0 %v2403
    %3351 = vmatmul.bf16.gmra.mxu0 %v3160
    %v3352 = vpop.f32.mrf.mxu0
    %v3353 = vadd.f32 0.0, %v3352
    %v3354 = vpop.f32.mrf.mxu0
    %3355 = vdwg.mxu0
    %3356 = vmatpush.bf16.msra.mxu0 %v2516
    %3357 = vmatpush.bf16.msra.mxu0 %v2500
    %3358 = vmatpush.bf16.msra.mxu0 %v2484
    %3359 = vmatpush.bf16.msra.mxu0 %v2468
    %3360 = vmatpush.bf16.msra.mxu0 %v2452
    %3361 = vmatpush.bf16.msra.mxu0 %v2436
    %3362 = vmatpush.bf16.msra.mxu0 %v2420
    %3363 = vmatpush.bf16.msra.mxu0 %v2404
    %3364 = vmatmul.bf16.gmra.mxu0 %v3160
    %v3365 = vpop.f32.mrf.mxu0
    %v3366 = vadd.f32 0.0, %v3365
    %v3367 = vpop.f32.mrf.mxu0
    %3368 = vdwg.mxu0
    %v3369 = vmul.f32 %v3171, %v3171
    %v3370 = vadd.f32 %v3171, %v3184
    %v3371 = vmul.f32 %v3184, %v3184
    %v3372 = vadd.f32 %v3369, %v3371
    %v3373 = vadd.f32 %v3370, %v3197
    %v3374 = vmul.f32 %v3197, %v3197
    %v3375 = vadd.f32 %v3372, %v3374
    %v3376 = vadd.f32 %v3373, %v3210
    %v3377 = vmul.f32 %v3210, %v3210
    %v3378 = vadd.f32 %v3375, %v3377
    %v3379 = vadd.f32 %v3376, %v3223
    %v3380 = vmul.f32 %v3223, %v3223
    %v3381 = vadd.f32 %v3378, %v3380
    %v3382 = vadd.f32 %v3379, %v3236
    %v3383 = vmul.f32 %v3236, %v3236
    %v3384 = vadd.f32 %v3381, %v3383
    %v3385 = vadd.f32 %v3382, %v3249
    %v3386 = vmul.f32 %v3249, %v3249
    %v3387 = vadd.f32 %v3384, %v3386
    %v3388 = vadd.f32 %v3385, %v3262
    %v3389 = vmul.f32 %v3262, %v3262
    %v3390 = vadd.f32 %v3387, %v3389
    %v3391 = vadd.f32 %v3388, %v3275
    %v3392 = vmul.f32 %v3275, %v3275
    %v3393 = vadd.f32 %v3390, %v3392
    %v3394 = vadd.f32 %v3391, %v3288
    %v3395 = vmul.f32 %v3288, %v3288
    %v3396 = vadd.f32 %v3393, %v3395
    %v3397 = vadd.f32 %v3394, %v3301
    %v3398 = vmul.f32 %v3301, %v3301
    %v3399 = vadd.f32 %v3396, %v3398
    %v3400 = vadd.f32 %v3397, %v3314
    %v3401 = vmul.f32 %v3314, %v3314
    %v3402 = vadd.f32 %v3399, %v3401
    %v3403 = vadd.f32 %v3400, %v3327
    %v3404 = vmul.f32 %v3327, %v3327
    %v3405 = vadd.f32 %v3402, %v3404
    %v3406 = vadd.f32 %v3403, %v3340
    %v3407 = vmul.f32 %v3340, %v3340
    %v3408 = vadd.f32 %v3405, %v3407
    %v3409 = vadd.f32 %v3406, %v3353
    %v3410 = vmul.f32 %v3353, %v3353
    %v3411 = vadd.f32 %v3408, %v3410
    %v3412 = vadd.f32 %v3409, %v3366
    %v3413 = vmul.f32 %v3366, %v3366
    %v3414 = vadd.f32 %v3411, %v3413
    %v3415 = vadd.f32 %v3157, %v3412
    %v3416 = vadd.f32 %v3158, %v3414
    %v3417 = vld [vmem:[#allocation2 + $0x18] sm:$0xff]
    %v3418 = vpack.c.bf16 %v3417, %v3417
    %3419 = vmatpush.bf16.msra.mxu0 %v2501
    %3420 = vmatpush.bf16.msra.mxu0 %v2485
    %3421 = vmatpush.bf16.msra.mxu0 %v2469
    %3422 = vmatpush.bf16.msra.mxu0 %v2453
    %3423 = vmatpush.bf16.msra.mxu0 %v2437
    %3424 = vmatpush.bf16.msra.mxu0 %v2421
    %3425 = vmatpush.bf16.msra.mxu0 %v2405
    %3426 = vmatpush.bf16.msra.mxu0 %v2389
    %3427 = vmatmul.bf16.gmra.mxu0 %v3418
    %v3428 = vpop.f32.mrf.mxu0
    %v3429 = vadd.f32 0.0, %v3428
    %v3430 = vpop.f32.mrf.mxu0
    %3431 = vdwg.mxu0
    %3432 = vmatpush.bf16.msra.mxu0 %v2502
    %3433 = vmatpush.bf16.msra.mxu0 %v2486
    %3434 = vmatpush.bf16.msra.mxu0 %v2470
    %3435 = vmatpush.bf16.msra.mxu0 %v2454
    %3436 = vmatpush.bf16.msra.mxu0 %v2438
    %3437 = vmatpush.bf16.msra.mxu0 %v2422
    %3438 = vmatpush.bf16.msra.mxu0 %v2406
    %3439 = vmatpush.bf16.msra.mxu0 %v2390
    %3440 = vmatmul.bf16.gmra.mxu0 %v3418
    %v3441 = vpop.f32.mrf.mxu0
    %v3442 = vadd.f32 0.0, %v3441
    %v3443 = vpop.f32.mrf.mxu0
    %3444 = vdwg.mxu0
    %3445 = vmatpush.bf16.msra.mxu0 %v2503
    %3446 = vmatpush.bf16.msra.mxu0 %v2487
    %3447 = vmatpush.bf16.msra.mxu0 %v2471
    %3448 = vmatpush.bf16.msra.mxu0 %v2455
    %3449 = vmatpush.bf16.msra.mxu0 %v2439
    %3450 = vmatpush.bf16.msra.mxu0 %v2423
    %3451 = vmatpush.bf16.msra.mxu0 %v2407
    %3452 = vmatpush.bf16.msra.mxu0 %v2391
    %3453 = vmatmul.bf16.gmra.mxu0 %v3418
    %v3454 = vpop.f32.mrf.mxu0
    %v3455 = vadd.f32 0.0, %v3454
    %v3456 = vpop.f32.mrf.mxu0
    %3457 = vdwg.mxu0
    %3458 = vmatpush.bf16.msra.mxu0 %v2504
    %3459 = vmatpush.bf16.msra.mxu0 %v2488
    %3460 = vmatpush.bf16.msra.mxu0 %v2472
    %3461 = vmatpush.bf16.msra.mxu0 %v2456
    %3462 = vmatpush.bf16.msra.mxu0 %v2440
    %3463 = vmatpush.bf16.msra.mxu0 %v2424
    %3464 = vmatpush.bf16.msra.mxu0 %v2408
    %3465 = vmatpush.bf16.msra.mxu0 %v2392
    %3466 = vmatmul.bf16.gmra.mxu0 %v3418
    %v3467 = vpop.f32.mrf.mxu0
    %v3468 = vadd.f32 0.0, %v3467
    %v3469 = vpop.f32.mrf.mxu0
    %3470 = vdwg.mxu0
    %3471 = vmatpush.bf16.msra.mxu0 %v2505
    %3472 = vmatpush.bf16.msra.mxu0 %v2489
    %3473 = vmatpush.bf16.msra.mxu0 %v2473
    %3474 = vmatpush.bf16.msra.mxu0 %v2457
    %3475 = vmatpush.bf16.msra.mxu0 %v2441
    %3476 = vmatpush.bf16.msra.mxu0 %v2425
    %3477 = vmatpush.bf16.msra.mxu0 %v2409
    %3478 = vmatpush.bf16.msra.mxu0 %v2393
    %3479 = vmatmul.bf16.gmra.mxu0 %v3418
    %v3480 = vpop.f32.mrf.mxu0
    %v3481 = vadd.f32 0.0, %v3480
    %v3482 = vpop.f32.mrf.mxu0
    %3483 = vdwg.mxu0
    %3484 = vmatpush.bf16.msra.mxu0 %v2506
    %3485 = vmatpush.bf16.msra.mxu0 %v2490
    %3486 = vmatpush.bf16.msra.mxu0 %v2474
    %3487 = vmatpush.bf16.msra.mxu0 %v2458
    %3488 = vmatpush.bf16.msra.mxu0 %v2442
    %3489 = vmatpush.bf16.msra.mxu0 %v2426
    %3490 = vmatpush.bf16.msra.mxu0 %v2410
    %3491 = vmatpush.bf16.msra.mxu0 %v2394
    %3492 = vmatmul.bf16.gmra.mxu0 %v3418
    %v3493 = vpop.f32.mrf.mxu0
    %v3494 = vadd.f32 0.0, %v3493
    %v3495 = vpop.f32.mrf.mxu0
    %3496 = vdwg.mxu0
    %3497 = vmatpush.bf16.msra.mxu0 %v2507
    %3498 = vmatpush.bf16.msra.mxu0 %v2491
    %3499 = vmatpush.bf16.msra.mxu0 %v2475
    %3500 = vmatpush.bf16.msra.mxu0 %v2459
    %3501 = vmatpush.bf16.msra.mxu0 %v2443
    %3502 = vmatpush.bf16.msra.mxu0 %v2427
    %3503 = vmatpush.bf16.msra.mxu0 %v2411
    %3504 = vmatpush.bf16.msra.mxu0 %v2395
    %3505 = vmatmul.bf16.gmra.mxu0 %v3418
    %v3506 = vpop.f32.mrf.mxu0
    %v3507 = vadd.f32 0.0, %v3506
    %v3508 = vpop.f32.mrf.mxu0
    %3509 = vdwg.mxu0
    %3510 = vmatpush.bf16.msra.mxu0 %v2508
    %3511 = vmatpush.bf16.msra.mxu0 %v2492
    %3512 = vmatpush.bf16.msra.mxu0 %v2476
    %3513 = vmatpush.bf16.msra.mxu0 %v2460
    %3514 = vmatpush.bf16.msra.mxu0 %v2444
    %3515 = vmatpush.bf16.msra.mxu0 %v2428
    %3516 = vmatpush.bf16.msra.mxu0 %v2412
    %3517 = vmatpush.bf16.msra.mxu0 %v2396
    %3518 = vmatmul.bf16.gmra.mxu0 %v3418
    %v3519 = vpop.f32.mrf.mxu0
    %v3520 = vadd.f32 0.0, %v3519
    %v3521 = vpop.f32.mrf.mxu0
    %3522 = vdwg.mxu0
    %3523 = vmatpush.bf16.msra.mxu0 %v2509
    %3524 = vmatpush.bf16.msra.mxu0 %v2493
    %3525 = vmatpush.bf16.msra.mxu0 %v2477
    %3526 = vmatpush.bf16.msra.mxu0 %v2461
    %3527 = vmatpush.bf16.msra.mxu0 %v2445
    %3528 = vmatpush.bf16.msra.mxu0 %v2429
    %3529 = vmatpush.bf16.msra.mxu0 %v2413
    %3530 = vmatpush.bf16.msra.mxu0 %v2397
    %3531 = vmatmul.bf16.gmra.mxu0 %v3418
    %v3532 = vpop.f32.mrf.mxu0
    %v3533 = vadd.f32 0.0, %v3532
    %v3534 = vpop.f32.mrf.mxu0
    %3535 = vdwg.mxu0
    %3536 = vmatpush.bf16.msra.mxu0 %v2510
    %3537 = vmatpush.bf16.msra.mxu0 %v2494
    %3538 = vmatpush.bf16.msra.mxu0 %v2478
    %3539 = vmatpush.bf16.msra.mxu0 %v2462
    %3540 = vmatpush.bf16.msra.mxu0 %v2446
    %3541 = vmatpush.bf16.msra.mxu0 %v2430
    %3542 = vmatpush.bf16.msra.mxu0 %v2414
    %3543 = vmatpush.bf16.msra.mxu0 %v2398
    %3544 = vmatmul.bf16.gmra.mxu0 %v3418
    %v3545 = vpop.f32.mrf.mxu0
    %v3546 = vadd.f32 0.0, %v3545
    %v3547 = vpop.f32.mrf.mxu0
    %3548 = vdwg.mxu0
    %3549 = vmatpush.bf16.msra.mxu0 %v2511
    %3550 = vmatpush.bf16.msra.mxu0 %v2495
    %3551 = vmatpush.bf16.msra.mxu0 %v2479
    %3552 = vmatpush.bf16.msra.mxu0 %v2463
    %3553 = vmatpush.bf16.msra.mxu0 %v2447
    %3554 = vmatpush.bf16.msra.mxu0 %v2431
    %3555 = vmatpush.bf16.msra.mxu0 %v2415
    %3556 = vmatpush.bf16.msra.mxu0 %v2399
    %3557 = vmatmul.bf16.gmra.mxu0 %v3418
    %v3558 = vpop.f32.mrf.mxu0
    %v3559 = vadd.f32 0.0, %v3558
    %v3560 = vpop.f32.mrf.mxu0
    %3561 = vdwg.mxu0
    %3562 = vmatpush.bf16.msra.mxu0 %v2512
    %3563 = vmatpush.bf16.msra.mxu0 %v2496
    %3564 = vmatpush.bf16.msra.mxu0 %v2480
    %3565 = vmatpush.bf16.msra.mxu0 %v2464
    %3566 = vmatpush.bf16.msra.mxu0 %v2448
    %3567 = vmatpush.bf16.msra.mxu0 %v2432
    %3568 = vmatpush.bf16.msra.mxu0 %v2416
    %3569 = vmatpush.bf16.msra.mxu0 %v2400
    %3570 = vmatmul.bf16.gmra.mxu0 %v3418
    %v3571 = vpop.f32.mrf.mxu0
    %v3572 = vadd.f32 0.0, %v3571
    %v3573 = vpop.f32.mrf.mxu0
    %3574 = vdwg.mxu0
    %3575 = vmatpush.bf16.msra.mxu0 %v2513
    %3576 = vmatpush.bf16.msra.mxu0 %v2497
    %3577 = vmatpush.bf16.msra.mxu0 %v2481
    %3578 = vmatpush.bf16.msra.mxu0 %v2465
    %3579 = vmatpush.bf16.msra.mxu0 %v2449
    %3580 = vmatpush.bf16.msra.mxu0 %v2433
    %3581 = vmatpush.bf16.msra.mxu0 %v2417
    %3582 = vmatpush.bf16.msra.mxu0 %v2401
    %3583 = vmatmul.bf16.gmra.mxu0 %v3418
    %v3584 = vpop.f32.mrf.mxu0
    %v3585 = vadd.f32 0.0, %v3584
    %v3586 = vpop.f32.mrf.mxu0
    %3587 = vdwg.mxu0
    %3588 = vmatpush.bf16.msra.mxu0 %v2514
    %3589 = vmatpush.bf16.msra.mxu0 %v2498
    %3590 = vmatpush.bf16.msra.mxu0 %v2482
    %3591 = vmatpush.bf16.msra.mxu0 %v2466
    %3592 = vmatpush.bf16.msra.mxu0 %v2450
    %3593 = vmatpush.bf16.msra.mxu0 %v2434
    %3594 = vmatpush.bf16.msra.mxu0 %v2418
    %3595 = vmatpush.bf16.msra.mxu0 %v2402
    %3596 = vmatmul.bf16.gmra.mxu0 %v3418
    %v3597 = vpop.f32.mrf.mxu0
    %v3598 = vadd.f32 0.0, %v3597
    %v3599 = vpop.f32.mrf.mxu0
    %3600 = vdwg.mxu0
    %3601 = vmatpush.bf16.msra.mxu0 %v2515
    %3602 = vmatpush.bf16.msra.mxu0 %v2499
    %3603 = vmatpush.bf16.msra.mxu0 %v2483
    %3604 = vmatpush.bf16.msra.mxu0 %v2467
    %3605 = vmatpush.bf16.msra.mxu0 %v2451
    %3606 = vmatpush.bf16.msra.mxu0 %v2435
    %3607 = vmatpush.bf16.msra.mxu0 %v2419
    %3608 = vmatpush.bf16.msra.mxu0 %v2403
    %3609 = vmatmul.bf16.gmra.mxu0 %v3418
    %v3610 = vpop.f32.mrf.mxu0
    %v3611 = vadd.f32 0.0, %v3610
    %v3612 = vpop.f32.mrf.mxu0
    %3613 = vdwg.mxu0
    %3614 = vmatpush.bf16.msra.mxu0 %v2516
    %3615 = vmatpush.bf16.msra.mxu0 %v2500
    %3616 = vmatpush.bf16.msra.mxu0 %v2484
    %3617 = vmatpush.bf16.msra.mxu0 %v2468
    %3618 = vmatpush.bf16.msra.mxu0 %v2452
    %3619 = vmatpush.bf16.msra.mxu0 %v2436
    %3620 = vmatpush.bf16.msra.mxu0 %v2420
    %3621 = vmatpush.bf16.msra.mxu0 %v2404
    %3622 = vmatmul.bf16.gmra.mxu0 %v3418
    %v3623 = vpop.f32.mrf.mxu0
    %v3624 = vadd.f32 0.0, %v3623
    %v3625 = vpop.f32.mrf.mxu0
    %3626 = vdwg.mxu0
    %v3627 = vmul.f32 %v3429, %v3429
    %v3628 = vadd.f32 %v3429, %v3442
    %v3629 = vmul.f32 %v3442, %v3442
    %v3630 = vadd.f32 %v3627, %v3629
    %v3631 = vadd.f32 %v3628, %v3455
    %v3632 = vmul.f32 %v3455, %v3455
    %v3633 = vadd.f32 %v3630, %v3632
    %v3634 = vadd.f32 %v3631, %v3468
    %v3635 = vmul.f32 %v3468, %v3468
    %v3636 = vadd.f32 %v3633, %v3635
    %v3637 = vadd.f32 %v3634, %v3481
    %v3638 = vmul.f32 %v3481, %v3481
    %v3639 = vadd.f32 %v3636, %v3638
    %v3640 = vadd.f32 %v3637, %v3494
    %v3641 = vmul.f32 %v3494, %v3494
    %v3642 = vadd.f32 %v3639, %v3641
    %v3643 = vadd.f32 %v3640, %v3507
    %v3644 = vmul.f32 %v3507, %v3507
    %v3645 = vadd.f32 %v3642, %v3644
    %v3646 = vadd.f32 %v3643, %v3520
    %v3647 = vmul.f32 %v3520, %v3520
    %v3648 = vadd.f32 %v3645, %v3647
    %v3649 = vadd.f32 %v3646, %v3533
    %v3650 = vmul.f32 %v3533, %v3533
    %v3651 = vadd.f32 %v3648, %v3650
    %v3652 = vadd.f32 %v3649, %v3546
    %v3653 = vmul.f32 %v3546, %v3546
    %v3654 = vadd.f32 %v3651, %v3653
    %v3655 = vadd.f32 %v3652, %v3559
    %v3656 = vmul.f32 %v3559, %v3559
    %v3657 = vadd.f32 %v3654, %v3656
    %v3658 = vadd.f32 %v3655, %v3572
    %v3659 = vmul.f32 %v3572, %v3572
    %v3660 = vadd.f32 %v3657, %v3659
    %v3661 = vadd.f32 %v3658, %v3585
    %v3662 = vmul.f32 %v3585, %v3585
    %v3663 = vadd.f32 %v3660, %v3662
    %v3664 = vadd.f32 %v3661, %v3598
    %v3665 = vmul.f32 %v3598, %v3598
    %v3666 = vadd.f32 %v3663, %v3665
    %v3667 = vadd.f32 %v3664, %v3611
    %v3668 = vmul.f32 %v3611, %v3611
    %v3669 = vadd.f32 %v3666, %v3668
    %v3670 = vadd.f32 %v3667, %v3624
    %v3671 = vmul.f32 %v3624, %v3624
    %v3672 = vadd.f32 %v3669, %v3671
    %v3673 = vadd.f32 %v3415, %v3670
    %v3674 = vadd.f32 %v3416, %v3672
    %v3675 = vld [vmem:[#allocation2 + $0x20] sm:$0xff]
    %v3676 = vpack.c.bf16 %v3675, %v3675
    %3677 = vmatpush.bf16.msra.mxu0 %v2501
    %3678 = vmatpush.bf16.msra.mxu0 %v2485
    %3679 = vmatpush.bf16.msra.mxu0 %v2469
    %3680 = vmatpush.bf16.msra.mxu0 %v2453
    %3681 = vmatpush.bf16.msra.mxu0 %v2437
    %3682 = vmatpush.bf16.msra.mxu0 %v2421
    %3683 = vmatpush.bf16.msra.mxu0 %v2405
    %3684 = vmatpush.bf16.msra.mxu0 %v2389
    %3685 = vmatmul.bf16.gmra.mxu0 %v3676
    %v3686 = vpop.f32.mrf.mxu0
    %v3687 = vadd.f32 0.0, %v3686
    %v3688 = vpop.f32.mrf.mxu0
    %3689 = vdwg.mxu0
    %3690 = vmatpush.bf16.msra.mxu0 %v2502
    %3691 = vmatpush.bf16.msra.mxu0 %v2486
    %3692 = vmatpush.bf16.msra.mxu0 %v2470
    %3693 = vmatpush.bf16.msra.mxu0 %v2454
    %3694 = vmatpush.bf16.msra.mxu0 %v2438
    %3695 = vmatpush.bf16.msra.mxu0 %v2422
    %3696 = vmatpush.bf16.msra.mxu0 %v2406
    %3697 = vmatpush.bf16.msra.mxu0 %v2390
    %3698 = vmatmul.bf16.gmra.mxu0 %v3676
    %v3699 = vpop.f32.mrf.mxu0
    %v3700 = vadd.f32 0.0, %v3699
    %v3701 = vpop.f32.mrf.mxu0
    %3702 = vdwg.mxu0
    %3703 = vmatpush.bf16.msra.mxu0 %v2503
    %3704 = vmatpush.bf16.msra.mxu0 %v2487
    %3705 = vmatpush.bf16.msra.mxu0 %v2471
    %3706 = vmatpush.bf16.msra.mxu0 %v2455
    %3707 = vmatpush.bf16.msra.mxu0 %v2439
    %3708 = vmatpush.bf16.msra.mxu0 %v2423
    %3709 = vmatpush.bf16.msra.mxu0 %v2407
    %3710 = vmatpush.bf16.msra.mxu0 %v2391
    %3711 = vmatmul.bf16.gmra.mxu0 %v3676
    %v3712 = vpop.f32.mrf.mxu0
    %v3713 = vadd.f32 0.0, %v3712
    %v3714 = vpop.f32.mrf.mxu0
    %3715 = vdwg.mxu0
    %3716 = vmatpush.bf16.msra.mxu0 %v2504
    %3717 = vmatpush.bf16.msra.mxu0 %v2488
    %3718 = vmatpush.bf16.msra.mxu0 %v2472
    %3719 = vmatpush.bf16.msra.mxu0 %v2456
    %3720 = vmatpush.bf16.msra.mxu0 %v2440
    %3721 = vmatpush.bf16.msra.mxu0 %v2424
    %3722 = vmatpush.bf16.msra.mxu0 %v2408
    %3723 = vmatpush.bf16.msra.mxu0 %v2392
    %3724 = vmatmul.bf16.gmra.mxu0 %v3676
    %v3725 = vpop.f32.mrf.mxu0
    %v3726 = vadd.f32 0.0, %v3725
    %v3727 = vpop.f32.mrf.mxu0
    %3728 = vdwg.mxu0
    %3729 = vmatpush.bf16.msra.mxu0 %v2505
    %3730 = vmatpush.bf16.msra.mxu0 %v2489
    %3731 = vmatpush.bf16.msra.mxu0 %v2473
    %3732 = vmatpush.bf16.msra.mxu0 %v2457
    %3733 = vmatpush.bf16.msra.mxu0 %v2441
    %3734 = vmatpush.bf16.msra.mxu0 %v2425
    %3735 = vmatpush.bf16.msra.mxu0 %v2409
    %3736 = vmatpush.bf16.msra.mxu0 %v2393
    %3737 = vmatmul.bf16.gmra.mxu0 %v3676
    %v3738 = vpop.f32.mrf.mxu0
    %v3739 = vadd.f32 0.0, %v3738
    %v3740 = vpop.f32.mrf.mxu0
    %3741 = vdwg.mxu0
    %3742 = vmatpush.bf16.msra.mxu0 %v2506
    %3743 = vmatpush.bf16.msra.mxu0 %v2490
    %3744 = vmatpush.bf16.msra.mxu0 %v2474
    %3745 = vmatpush.bf16.msra.mxu0 %v2458
    %3746 = vmatpush.bf16.msra.mxu0 %v2442
    %3747 = vmatpush.bf16.msra.mxu0 %v2426
    %3748 = vmatpush.bf16.msra.mxu0 %v2410
    %3749 = vmatpush.bf16.msra.mxu0 %v2394
    %3750 = vmatmul.bf16.gmra.mxu0 %v3676
    %v3751 = vpop.f32.mrf.mxu0
    %v3752 = vadd.f32 0.0, %v3751
    %v3753 = vpop.f32.mrf.mxu0
    %3754 = vdwg.mxu0
    %3755 = vmatpush.bf16.msra.mxu0 %v2507
    %3756 = vmatpush.bf16.msra.mxu0 %v2491
    %3757 = vmatpush.bf16.msra.mxu0 %v2475
    %3758 = vmatpush.bf16.msra.mxu0 %v2459
    %3759 = vmatpush.bf16.msra.mxu0 %v2443
    %3760 = vmatpush.bf16.msra.mxu0 %v2427
    %3761 = vmatpush.bf16.msra.mxu0 %v2411
    %3762 = vmatpush.bf16.msra.mxu0 %v2395
    %3763 = vmatmul.bf16.gmra.mxu0 %v3676
    %v3764 = vpop.f32.mrf.mxu0
    %v3765 = vadd.f32 0.0, %v3764
    %v3766 = vpop.f32.mrf.mxu0
    %3767 = vdwg.mxu0
    %3768 = vmatpush.bf16.msra.mxu0 %v2508
    %3769 = vmatpush.bf16.msra.mxu0 %v2492
    %3770 = vmatpush.bf16.msra.mxu0 %v2476
    %3771 = vmatpush.bf16.msra.mxu0 %v2460
    %3772 = vmatpush.bf16.msra.mxu0 %v2444
    %3773 = vmatpush.bf16.msra.mxu0 %v2428
    %3774 = vmatpush.bf16.msra.mxu0 %v2412
    %3775 = vmatpush.bf16.msra.mxu0 %v2396
    %3776 = vmatmul.bf16.gmra.mxu0 %v3676
    %v3777 = vpop.f32.mrf.mxu0
    %v3778 = vadd.f32 0.0, %v3777
    %v3779 = vpop.f32.mrf.mxu0
    %3780 = vdwg.mxu0
    %3781 = vmatpush.bf16.msra.mxu0 %v2509
    %3782 = vmatpush.bf16.msra.mxu0 %v2493
    %3783 = vmatpush.bf16.msra.mxu0 %v2477
    %3784 = vmatpush.bf16.msra.mxu0 %v2461
    %3785 = vmatpush.bf16.msra.mxu0 %v2445
    %3786 = vmatpush.bf16.msra.mxu0 %v2429
    %3787 = vmatpush.bf16.msra.mxu0 %v2413
    %3788 = vmatpush.bf16.msra.mxu0 %v2397
    %3789 = vmatmul.bf16.gmra.mxu0 %v3676
    %v3790 = vpop.f32.mrf.mxu0
    %v3791 = vadd.f32 0.0, %v3790
    %v3792 = vpop.f32.mrf.mxu0
    %3793 = vdwg.mxu0
    %3794 = vmatpush.bf16.msra.mxu0 %v2510
    %3795 = vmatpush.bf16.msra.mxu0 %v2494
    %3796 = vmatpush.bf16.msra.mxu0 %v2478
    %3797 = vmatpush.bf16.msra.mxu0 %v2462
    %3798 = vmatpush.bf16.msra.mxu0 %v2446
    %3799 = vmatpush.bf16.msra.mxu0 %v2430
    %3800 = vmatpush.bf16.msra.mxu0 %v2414
    %3801 = vmatpush.bf16.msra.mxu0 %v2398
    %3802 = vmatmul.bf16.gmra.mxu0 %v3676
    %v3803 = vpop.f32.mrf.mxu0
    %v3804 = vadd.f32 0.0, %v3803
    %v3805 = vpop.f32.mrf.mxu0
    %3806 = vdwg.mxu0
    %3807 = vmatpush.bf16.msra.mxu0 %v2511
    %3808 = vmatpush.bf16.msra.mxu0 %v2495
    %3809 = vmatpush.bf16.msra.mxu0 %v2479
    %3810 = vmatpush.bf16.msra.mxu0 %v2463
    %3811 = vmatpush.bf16.msra.mxu0 %v2447
    %3812 = vmatpush.bf16.msra.mxu0 %v2431
    %3813 = vmatpush.bf16.msra.mxu0 %v2415
    %3814 = vmatpush.bf16.msra.mxu0 %v2399
    %3815 = vmatmul.bf16.gmra.mxu0 %v3676
    %v3816 = vpop.f32.mrf.mxu0
    %v3817 = vadd.f32 0.0, %v3816
    %v3818 = vpop.f32.mrf.mxu0
    %3819 = vdwg.mxu0
    %3820 = vmatpush.bf16.msra.mxu0 %v2512
    %3821 = vmatpush.bf16.msra.mxu0 %v2496
    %3822 = vmatpush.bf16.msra.mxu0 %v2480
    %3823 = vmatpush.bf16.msra.mxu0 %v2464
    %3824 = vmatpush.bf16.msra.mxu0 %v2448
    %3825 = vmatpush.bf16.msra.mxu0 %v2432
    %3826 = vmatpush.bf16.msra.mxu0 %v2416
    %3827 = vmatpush.bf16.msra.mxu0 %v2400
    %3828 = vmatmul.bf16.gmra.mxu0 %v3676
    %v3829 = vpop.f32.mrf.mxu0
    %v3830 = vadd.f32 0.0, %v3829
    %v3831 = vpop.f32.mrf.mxu0
    %3832 = vdwg.mxu0
    %3833 = vmatpush.bf16.msra.mxu0 %v2513
    %3834 = vmatpush.bf16.msra.mxu0 %v2497
    %3835 = vmatpush.bf16.msra.mxu0 %v2481
    %3836 = vmatpush.bf16.msra.mxu0 %v2465
    %3837 = vmatpush.bf16.msra.mxu0 %v2449
    %3838 = vmatpush.bf16.msra.mxu0 %v2433
    %3839 = vmatpush.bf16.msra.mxu0 %v2417
    %3840 = vmatpush.bf16.msra.mxu0 %v2401
    %3841 = vmatmul.bf16.gmra.mxu0 %v3676
    %v3842 = vpop.f32.mrf.mxu0
    %v3843 = vadd.f32 0.0, %v3842
    %v3844 = vpop.f32.mrf.mxu0
    %3845 = vdwg.mxu0
    %3846 = vmatpush.bf16.msra.mxu0 %v2514
    %3847 = vmatpush.bf16.msra.mxu0 %v2498
    %3848 = vmatpush.bf16.msra.mxu0 %v2482
    %3849 = vmatpush.bf16.msra.mxu0 %v2466
    %3850 = vmatpush.bf16.msra.mxu0 %v2450
    %3851 = vmatpush.bf16.msra.mxu0 %v2434
    %3852 = vmatpush.bf16.msra.mxu0 %v2418
    %3853 = vmatpush.bf16.msra.mxu0 %v2402
    %3854 = vmatmul.bf16.gmra.mxu0 %v3676
    %v3855 = vpop.f32.mrf.mxu0
    %v3856 = vadd.f32 0.0, %v3855
    %v3857 = vpop.f32.mrf.mxu0
    %3858 = vdwg.mxu0
    %3859 = vmatpush.bf16.msra.mxu0 %v2515
    %3860 = vmatpush.bf16.msra.mxu0 %v2499
    %3861 = vmatpush.bf16.msra.mxu0 %v2483
    %3862 = vmatpush.bf16.msra.mxu0 %v2467
    %3863 = vmatpush.bf16.msra.mxu0 %v2451
    %3864 = vmatpush.bf16.msra.mxu0 %v2435
    %3865 = vmatpush.bf16.msra.mxu0 %v2419
    %3866 = vmatpush.bf16.msra.mxu0 %v2403
    %3867 = vmatmul.bf16.gmra.mxu0 %v3676
    %v3868 = vpop.f32.mrf.mxu0
    %v3869 = vadd.f32 0.0, %v3868
    %v3870 = vpop.f32.mrf.mxu0
    %3871 = vdwg.mxu0
    %3872 = vmatpush.bf16.msra.mxu0 %v2516
    %3873 = vmatpush.bf16.msra.mxu0 %v2500
    %3874 = vmatpush.bf16.msra.mxu0 %v2484
    %3875 = vmatpush.bf16.msra.mxu0 %v2468
    %3876 = vmatpush.bf16.msra.mxu0 %v2452
    %3877 = vmatpush.bf16.msra.mxu0 %v2436
    %3878 = vmatpush.bf16.msra.mxu0 %v2420
    %3879 = vmatpush.bf16.msra.mxu0 %v2404
    %3880 = vmatmul.bf16.gmra.mxu0 %v3676
    %v3881 = vpop.f32.mrf.mxu0
    %v3882 = vadd.f32 0.0, %v3881
    %v3883 = vpop.f32.mrf.mxu0
    %3884 = vdwg.mxu0
    %v3885 = vmul.f32 %v3687, %v3687
    %v3886 = vadd.f32 %v3687, %v3700
    %v3887 = vmul.f32 %v3700, %v3700
    %v3888 = vadd.f32 %v3885, %v3887
    %v3889 = vadd.f32 %v3886, %v3713
    %v3890 = vmul.f32 %v3713, %v3713
    %v3891 = vadd.f32 %v3888, %v3890
    %v3892 = vadd.f32 %v3889, %v3726
    %v3893 = vmul.f32 %v3726, %v3726
    %v3894 = vadd.f32 %v3891, %v3893
    %v3895 = vadd.f32 %v3892, %v3739
    %v3896 = vmul.f32 %v3739, %v3739
    %v3897 = vadd.f32 %v3894, %v3896
    %v3898 = vadd.f32 %v3895, %v3752
    %v3899 = vmul.f32 %v3752, %v3752
    %v3900 = vadd.f32 %v3897, %v3899
    %v3901 = vadd.f32 %v3898, %v3765
    %v3902 = vmul.f32 %v3765, %v3765
    %v3903 = vadd.f32 %v3900, %v3902
    %v3904 = vadd.f32 %v3901, %v3778
    %v3905 = vmul.f32 %v3778, %v3778
    %v3906 = vadd.f32 %v3903, %v3905
    %v3907 = vadd.f32 %v3904, %v3791
    %v3908 = vmul.f32 %v3791, %v3791
    %v3909 = vadd.f32 %v3906, %v3908
    %v3910 = vadd.f32 %v3907, %v3804
    %v3911 = vmul.f32 %v3804, %v3804
    %v3912 = vadd.f32 %v3909, %v3911
    %v3913 = vadd.f32 %v3910, %v3817
    %v3914 = vmul.f32 %v3817, %v3817
    %v3915 = vadd.f32 %v3912, %v3914
    %v3916 = vadd.f32 %v3913, %v3830
    %v3917 = vmul.f32 %v3830, %v3830
    %v3918 = vadd.f32 %v3915, %v3917
    %v3919 = vadd.f32 %v3916, %v3843
    %v3920 = vmul.f32 %v3843, %v3843
    %v3921 = vadd.f32 %v3918, %v3920
    %v3922 = vadd.f32 %v3919, %v3856
    %v3923 = vmul.f32 %v3856, %v3856
    %v3924 = vadd.f32 %v3921, %v3923
    %v3925 = vadd.f32 %v3922, %v3869
    %v3926 = vmul.f32 %v3869, %v3869
    %v3927 = vadd.f32 %v3924, %v3926
    %v3928 = vadd.f32 %v3925, %v3882
    %v3929 = vmul.f32 %v3882, %v3882
    %v3930 = vadd.f32 %v3927, %v3929
    %v3931 = vadd.f32 %v3673, %v3928
    %v3932 = vadd.f32 %v3674, %v3930
    %v3933 = vld [vmem:[#allocation2 + $0x28] sm:$0xff]
    %v3934 = vpack.c.bf16 %v3933, %v3933
    %3935 = vmatpush.bf16.msra.mxu0 %v2501
    %3936 = vmatpush.bf16.msra.mxu0 %v2485
    %3937 = vmatpush.bf16.msra.mxu0 %v2469
    %3938 = vmatpush.bf16.msra.mxu0 %v2453
    %3939 = vmatpush.bf16.msra.mxu0 %v2437
    %3940 = vmatpush.bf16.msra.mxu0 %v2421
    %3941 = vmatpush.bf16.msra.mxu0 %v2405
    %3942 = vmatpush.bf16.msra.mxu0 %v2389
    %3943 = vmatmul.bf16.gmra.mxu0 %v3934
    %v3944 = vpop.f32.mrf.mxu0
    %v3945 = vadd.f32 0.0, %v3944
    %v3946 = vpop.f32.mrf.mxu0
    %3947 = vdwg.mxu0
    %3948 = vmatpush.bf16.msra.mxu0 %v2502
    %3949 = vmatpush.bf16.msra.mxu0 %v2486
    %3950 = vmatpush.bf16.msra.mxu0 %v2470
    %3951 = vmatpush.bf16.msra.mxu0 %v2454
    %3952 = vmatpush.bf16.msra.mxu0 %v2438
    %3953 = vmatpush.bf16.msra.mxu0 %v2422
    %3954 = vmatpush.bf16.msra.mxu0 %v2406
    %3955 = vmatpush.bf16.msra.mxu0 %v2390
    %3956 = vmatmul.bf16.gmra.mxu0 %v3934
    %v3957 = vpop.f32.mrf.mxu0
    %v3958 = vadd.f32 0.0, %v3957
    %v3959 = vpop.f32.mrf.mxu0
    %3960 = vdwg.mxu0
    %3961 = vmatpush.bf16.msra.mxu0 %v2503
    %3962 = vmatpush.bf16.msra.mxu0 %v2487
    %3963 = vmatpush.bf16.msra.mxu0 %v2471
    %3964 = vmatpush.bf16.msra.mxu0 %v2455
    %3965 = vmatpush.bf16.msra.mxu0 %v2439
    %3966 = vmatpush.bf16.msra.mxu0 %v2423
    %3967 = vmatpush.bf16.msra.mxu0 %v2407
    %3968 = vmatpush.bf16.msra.mxu0 %v2391
    %3969 = vmatmul.bf16.gmra.mxu0 %v3934
    %v3970 = vpop.f32.mrf.mxu0
    %v3971 = vadd.f32 0.0, %v3970
    %v3972 = vpop.f32.mrf.mxu0
    %3973 = vdwg.mxu0
    %3974 = vmatpush.bf16.msra.mxu0 %v2504
    %3975 = vmatpush.bf16.msra.mxu0 %v2488
    %3976 = vmatpush.bf16.msra.mxu0 %v2472
    %3977 = vmatpush.bf16.msra.mxu0 %v2456
    %3978 = vmatpush.bf16.msra.mxu0 %v2440
    %3979 = vmatpush.bf16.msra.mxu0 %v2424
    %3980 = vmatpush.bf16.msra.mxu0 %v2408
    %3981 = vmatpush.bf16.msra.mxu0 %v2392
    %3982 = vmatmul.bf16.gmra.mxu0 %v3934
    %v3983 = vpop.f32.mrf.mxu0
    %v3984 = vadd.f32 0.0, %v3983
    %v3985 = vpop.f32.mrf.mxu0
    %3986 = vdwg.mxu0
    %3987 = vmatpush.bf16.msra.mxu0 %v2505
    %3988 = vmatpush.bf16.msra.mxu0 %v2489
    %3989 = vmatpush.bf16.msra.mxu0 %v2473
    %3990 = vmatpush.bf16.msra.mxu0 %v2457
    %3991 = vmatpush.bf16.msra.mxu0 %v2441
    %3992 = vmatpush.bf16.msra.mxu0 %v2425
    %3993 = vmatpush.bf16.msra.mxu0 %v2409
    %3994 = vmatpush.bf16.msra.mxu0 %v2393
    %3995 = vmatmul.bf16.gmra.mxu0 %v3934
    %v3996 = vpop.f32.mrf.mxu0
    %v3997 = vadd.f32 0.0, %v3996
    %v3998 = vpop.f32.mrf.mxu0
    %3999 = vdwg.mxu0
    %4000 = vmatpush.bf16.msra.mxu0 %v2506
    %4001 = vmatpush.bf16.msra.mxu0 %v2490
    %4002 = vmatpush.bf16.msra.mxu0 %v2474
    %4003 = vmatpush.bf16.msra.mxu0 %v2458
    %4004 = vmatpush.bf16.msra.mxu0 %v2442
    %4005 = vmatpush.bf16.msra.mxu0 %v2426
    %4006 = vmatpush.bf16.msra.mxu0 %v2410
    %4007 = vmatpush.bf16.msra.mxu0 %v2394
    %4008 = vmatmul.bf16.gmra.mxu0 %v3934
    %v4009 = vpop.f32.mrf.mxu0
    %v4010 = vadd.f32 0.0, %v4009
    %v4011 = vpop.f32.mrf.mxu0
    %4012 = vdwg.mxu0
    %4013 = vmatpush.bf16.msra.mxu0 %v2507
    %4014 = vmatpush.bf16.msra.mxu0 %v2491
    %4015 = vmatpush.bf16.msra.mxu0 %v2475
    %4016 = vmatpush.bf16.msra.mxu0 %v2459
    %4017 = vmatpush.bf16.msra.mxu0 %v2443
    %4018 = vmatpush.bf16.msra.mxu0 %v2427
    %4019 = vmatpush.bf16.msra.mxu0 %v2411
    %4020 = vmatpush.bf16.msra.mxu0 %v2395
    %4021 = vmatmul.bf16.gmra.mxu0 %v3934
    %v4022 = vpop.f32.mrf.mxu0
    %v4023 = vadd.f32 0.0, %v4022
    %v4024 = vpop.f32.mrf.mxu0
    %4025 = vdwg.mxu0
    %4026 = vmatpush.bf16.msra.mxu0 %v2508
    %4027 = vmatpush.bf16.msra.mxu0 %v2492
    %4028 = vmatpush.bf16.msra.mxu0 %v2476
    %4029 = vmatpush.bf16.msra.mxu0 %v2460
    %4030 = vmatpush.bf16.msra.mxu0 %v2444
    %4031 = vmatpush.bf16.msra.mxu0 %v2428
    %4032 = vmatpush.bf16.msra.mxu0 %v2412
    %4033 = vmatpush.bf16.msra.mxu0 %v2396
    %4034 = vmatmul.bf16.gmra.mxu0 %v3934
    %v4035 = vpop.f32.mrf.mxu0
    %v4036 = vadd.f32 0.0, %v4035
    %v4037 = vpop.f32.mrf.mxu0
    %4038 = vdwg.mxu0
    %4039 = vmatpush.bf16.msra.mxu0 %v2509
    %4040 = vmatpush.bf16.msra.mxu0 %v2493
    %4041 = vmatpush.bf16.msra.mxu0 %v2477
    %4042 = vmatpush.bf16.msra.mxu0 %v2461
    %4043 = vmatpush.bf16.msra.mxu0 %v2445
    %4044 = vmatpush.bf16.msra.mxu0 %v2429
    %4045 = vmatpush.bf16.msra.mxu0 %v2413
    %4046 = vmatpush.bf16.msra.mxu0 %v2397
    %4047 = vmatmul.bf16.gmra.mxu0 %v3934
    %v4048 = vpop.f32.mrf.mxu0
    %v4049 = vadd.f32 0.0, %v4048
    %v4050 = vpop.f32.mrf.mxu0
    %4051 = vdwg.mxu0
    %4052 = vmatpush.bf16.msra.mxu0 %v2510
    %4053 = vmatpush.bf16.msra.mxu0 %v2494
    %4054 = vmatpush.bf16.msra.mxu0 %v2478
    %4055 = vmatpush.bf16.msra.mxu0 %v2462
    %4056 = vmatpush.bf16.msra.mxu0 %v2446
    %4057 = vmatpush.bf16.msra.mxu0 %v2430
    %4058 = vmatpush.bf16.msra.mxu0 %v2414
    %4059 = vmatpush.bf16.msra.mxu0 %v2398
    %4060 = vmatmul.bf16.gmra.mxu0 %v3934
    %v4061 = vpop.f32.mrf.mxu0
    %v4062 = vadd.f32 0.0, %v4061
    %v4063 = vpop.f32.mrf.mxu0
    %4064 = vdwg.mxu0
    %4065 = vmatpush.bf16.msra.mxu0 %v2511
    %4066 = vmatpush.bf16.msra.mxu0 %v2495
    %4067 = vmatpush.bf16.msra.mxu0 %v2479
    %4068 = vmatpush.bf16.msra.mxu0 %v2463
    %4069 = vmatpush.bf16.msra.mxu0 %v2447
    %4070 = vmatpush.bf16.msra.mxu0 %v2431
    %4071 = vmatpush.bf16.msra.mxu0 %v2415
    %4072 = vmatpush.bf16.msra.mxu0 %v2399
    %4073 = vmatmul.bf16.gmra.mxu0 %v3934
    %v4074 = vpop.f32.mrf.mxu0
    %v4075 = vadd.f32 0.0, %v4074
    %v4076 = vpop.f32.mrf.mxu0
    %4077 = vdwg.mxu0
    %4078 = vmatpush.bf16.msra.mxu0 %v2512
    %4079 = vmatpush.bf16.msra.mxu0 %v2496
    %4080 = vmatpush.bf16.msra.mxu0 %v2480
    %4081 = vmatpush.bf16.msra.mxu0 %v2464
    %4082 = vmatpush.bf16.msra.mxu0 %v2448
    %4083 = vmatpush.bf16.msra.mxu0 %v2432
    %4084 = vmatpush.bf16.msra.mxu0 %v2416
    %4085 = vmatpush.bf16.msra.mxu0 %v2400
    %4086 = vmatmul.bf16.gmra.mxu0 %v3934
    %v4087 = vpop.f32.mrf.mxu0
    %v4088 = vadd.f32 0.0, %v4087
    %v4089 = vpop.f32.mrf.mxu0
    %4090 = vdwg.mxu0
    %4091 = vmatpush.bf16.msra.mxu0 %v2513
    %4092 = vmatpush.bf16.msra.mxu0 %v2497
    %4093 = vmatpush.bf16.msra.mxu0 %v2481
    %4094 = vmatpush.bf16.msra.mxu0 %v2465
    %4095 = vmatpush.bf16.msra.mxu0 %v2449
    %4096 = vmatpush.bf16.msra.mxu0 %v2433
    %4097 = vmatpush.bf16.msra.mxu0 %v2417
    %4098 = vmatpush.bf16.msra.mxu0 %v2401
    %4099 = vmatmul.bf16.gmra.mxu0 %v3934
    %v4100 = vpop.f32.mrf.mxu0
    %v4101 = vadd.f32 0.0, %v4100
    %v4102 = vpop.f32.mrf.mxu0
    %4103 = vdwg.mxu0
    %4104 = vmatpush.bf16.msra.mxu0 %v2514
    %4105 = vmatpush.bf16.msra.mxu0 %v2498
    %4106 = vmatpush.bf16.msra.mxu0 %v2482
    %4107 = vmatpush.bf16.msra.mxu0 %v2466
    %4108 = vmatpush.bf16.msra.mxu0 %v2450
    %4109 = vmatpush.bf16.msra.mxu0 %v2434
    %4110 = vmatpush.bf16.msra.mxu0 %v2418
    %4111 = vmatpush.bf16.msra.mxu0 %v2402
    %4112 = vmatmul.bf16.gmra.mxu0 %v3934
    %v4113 = vpop.f32.mrf.mxu0
    %v4114 = vadd.f32 0.0, %v4113
    %v4115 = vpop.f32.mrf.mxu0
    %4116 = vdwg.mxu0
    %4117 = vmatpush.bf16.msra.mxu0 %v2515
    %4118 = vmatpush.bf16.msra.mxu0 %v2499
    %4119 = vmatpush.bf16.msra.mxu0 %v2483
    %4120 = vmatpush.bf16.msra.mxu0 %v2467
    %4121 = vmatpush.bf16.msra.mxu0 %v2451
    %4122 = vmatpush.bf16.msra.mxu0 %v2435
    %4123 = vmatpush.bf16.msra.mxu0 %v2419
    %4124 = vmatpush.bf16.msra.mxu0 %v2403
    %4125 = vmatmul.bf16.gmra.mxu0 %v3934
    %v4126 = vpop.f32.mrf.mxu0
    %v4127 = vadd.f32 0.0, %v4126
    %v4128 = vpop.f32.mrf.mxu0
    %4129 = vdwg.mxu0
    %4130 = vmatpush.bf16.msra.mxu0 %v2516
    %4131 = vmatpush.bf16.msra.mxu0 %v2500
    %4132 = vmatpush.bf16.msra.mxu0 %v2484
    %4133 = vmatpush.bf16.msra.mxu0 %v2468
    %4134 = vmatpush.bf16.msra.mxu0 %v2452
    %4135 = vmatpush.bf16.msra.mxu0 %v2436
    %4136 = vmatpush.bf16.msra.mxu0 %v2420
    %4137 = vmatpush.bf16.msra.mxu0 %v2404
    %4138 = vmatmul.bf16.gmra.mxu0 %v3934
    %v4139 = vpop.f32.mrf.mxu0
    %v4140 = vadd.f32 0.0, %v4139
    %v4141 = vpop.f32.mrf.mxu0
    %4142 = vdwg.mxu0
    %v4143 = vmul.f32 %v3945, %v3945
    %v4144 = vadd.f32 %v3945, %v3958
    %v4145 = vmul.f32 %v3958, %v3958
    %v4146 = vadd.f32 %v4143, %v4145
    %v4147 = vadd.f32 %v4144, %v3971
    %v4148 = vmul.f32 %v3971, %v3971
    %v4149 = vadd.f32 %v4146, %v4148
    %v4150 = vadd.f32 %v4147, %v3984
    %v4151 = vmul.f32 %v3984, %v3984
    %v4152 = vadd.f32 %v4149, %v4151
    %v4153 = vadd.f32 %v4150, %v3997
    %v4154 = vmul.f32 %v3997, %v3997
    %v4155 = vadd.f32 %v4152, %v4154
    %v4156 = vadd.f32 %v4153, %v4010
    %v4157 = vmul.f32 %v4010, %v4010
    %v4158 = vadd.f32 %v4155, %v4157
    %v4159 = vadd.f32 %v4156, %v4023
    %v4160 = vmul.f32 %v4023, %v4023
    %v4161 = vadd.f32 %v4158, %v4160
    %v4162 = vadd.f32 %v4159, %v4036
    %v4163 = vmul.f32 %v4036, %v4036
    %v4164 = vadd.f32 %v4161, %v4163
    %v4165 = vadd.f32 %v4162, %v4049
    %v4166 = vmul.f32 %v4049, %v4049
    %v4167 = vadd.f32 %v4164, %v4166
    %v4168 = vadd.f32 %v4165, %v4062
    %v4169 = vmul.f32 %v4062, %v4062
    %v4170 = vadd.f32 %v4167, %v4169
    %v4171 = vadd.f32 %v4168, %v4075
    %v4172 = vmul.f32 %v4075, %v4075
    %v4173 = vadd.f32 %v4170, %v4172
    %v4174 = vadd.f32 %v4171, %v4088
    %v4175 = vmul.f32 %v4088, %v4088
    %v4176 = vadd.f32 %v4173, %v4175
    %v4177 = vadd.f32 %v4174, %v4101
    %v4178 = vmul.f32 %v4101, %v4101
    %v4179 = vadd.f32 %v4176, %v4178
    %v4180 = vadd.f32 %v4177, %v4114
    %v4181 = vmul.f32 %v4114, %v4114
    %v4182 = vadd.f32 %v4179, %v4181
    %v4183 = vadd.f32 %v4180, %v4127
    %v4184 = vmul.f32 %v4127, %v4127
    %v4185 = vadd.f32 %v4182, %v4184
    %v4186 = vadd.f32 %v4183, %v4140
    %v4187 = vmul.f32 %v4140, %v4140
    %v4188 = vadd.f32 %v4185, %v4187
    %v4189 = vadd.f32 %v3931, %v4186
    %v4190 = vadd.f32 %v3932, %v4188
    %v4191 = vld [vmem:[#allocation2 + $0x30] sm:$0xff]
    %v4192 = vpack.c.bf16 %v4191, %v4191
    %4193 = vmatpush.bf16.msra.mxu0 %v2501
    %4194 = vmatpush.bf16.msra.mxu0 %v2485
    %4195 = vmatpush.bf16.msra.mxu0 %v2469
    %4196 = vmatpush.bf16.msra.mxu0 %v2453
    %4197 = vmatpush.bf16.msra.mxu0 %v2437
    %4198 = vmatpush.bf16.msra.mxu0 %v2421
    %4199 = vmatpush.bf16.msra.mxu0 %v2405
    %4200 = vmatpush.bf16.msra.mxu0 %v2389
    %4201 = vmatmul.bf16.gmra.mxu0 %v4192
    %v4202 = vpop.f32.mrf.mxu0
    %v4203 = vadd.f32 0.0, %v4202
    %v4204 = vpop.f32.mrf.mxu0
    %4205 = vdwg.mxu0
    %4206 = vmatpush.bf16.msra.mxu0 %v2502
    %4207 = vmatpush.bf16.msra.mxu0 %v2486
    %4208 = vmatpush.bf16.msra.mxu0 %v2470
    %4209 = vmatpush.bf16.msra.mxu0 %v2454
    %4210 = vmatpush.bf16.msra.mxu0 %v2438
    %4211 = vmatpush.bf16.msra.mxu0 %v2422
    %4212 = vmatpush.bf16.msra.mxu0 %v2406
    %4213 = vmatpush.bf16.msra.mxu0 %v2390
    %4214 = vmatmul.bf16.gmra.mxu0 %v4192
    %v4215 = vpop.f32.mrf.mxu0
    %v4216 = vadd.f32 0.0, %v4215
    %v4217 = vpop.f32.mrf.mxu0
    %4218 = vdwg.mxu0
    %4219 = vmatpush.bf16.msra.mxu0 %v2503
    %4220 = vmatpush.bf16.msra.mxu0 %v2487
    %4221 = vmatpush.bf16.msra.mxu0 %v2471
    %4222 = vmatpush.bf16.msra.mxu0 %v2455
    %4223 = vmatpush.bf16.msra.mxu0 %v2439
    %4224 = vmatpush.bf16.msra.mxu0 %v2423
    %4225 = vmatpush.bf16.msra.mxu0 %v2407
    %4226 = vmatpush.bf16.msra.mxu0 %v2391
    %4227 = vmatmul.bf16.gmra.mxu0 %v4192
    %v4228 = vpop.f32.mrf.mxu0
    %v4229 = vadd.f32 0.0, %v4228
    %v4230 = vpop.f32.mrf.mxu0
    %4231 = vdwg.mxu0
    %4232 = vmatpush.bf16.msra.mxu0 %v2504
    %4233 = vmatpush.bf16.msra.mxu0 %v2488
    %4234 = vmatpush.bf16.msra.mxu0 %v2472
    %4235 = vmatpush.bf16.msra.mxu0 %v2456
    %4236 = vmatpush.bf16.msra.mxu0 %v2440
    %4237 = vmatpush.bf16.msra.mxu0 %v2424
    %4238 = vmatpush.bf16.msra.mxu0 %v2408
    %4239 = vmatpush.bf16.msra.mxu0 %v2392
    %4240 = vmatmul.bf16.gmra.mxu0 %v4192
    %v4241 = vpop.f32.mrf.mxu0
    %v4242 = vadd.f32 0.0, %v4241
    %v4243 = vpop.f32.mrf.mxu0
    %4244 = vdwg.mxu0
    %4245 = vmatpush.bf16.msra.mxu0 %v2505
    %4246 = vmatpush.bf16.msra.mxu0 %v2489
    %4247 = vmatpush.bf16.msra.mxu0 %v2473
    %4248 = vmatpush.bf16.msra.mxu0 %v2457
    %4249 = vmatpush.bf16.msra.mxu0 %v2441
    %4250 = vmatpush.bf16.msra.mxu0 %v2425
    %4251 = vmatpush.bf16.msra.mxu0 %v2409
    %4252 = vmatpush.bf16.msra.mxu0 %v2393
    %4253 = vmatmul.bf16.gmra.mxu0 %v4192
    %v4254 = vpop.f32.mrf.mxu0
    %v4255 = vadd.f32 0.0, %v4254
    %v4256 = vpop.f32.mrf.mxu0
    %4257 = vdwg.mxu0
    %4258 = vmatpush.bf16.msra.mxu0 %v2506
    %4259 = vmatpush.bf16.msra.mxu0 %v2490
    %4260 = vmatpush.bf16.msra.mxu0 %v2474
    %4261 = vmatpush.bf16.msra.mxu0 %v2458
    %4262 = vmatpush.bf16.msra.mxu0 %v2442
    %4263 = vmatpush.bf16.msra.mxu0 %v2426
    %4264 = vmatpush.bf16.msra.mxu0 %v2410
    %4265 = vmatpush.bf16.msra.mxu0 %v2394
    %4266 = vmatmul.bf16.gmra.mxu0 %v4192
    %v4267 = vpop.f32.mrf.mxu0
    %v4268 = vadd.f32 0.0, %v4267
    %v4269 = vpop.f32.mrf.mxu0
    %4270 = vdwg.mxu0
    %4271 = vmatpush.bf16.msra.mxu0 %v2507
    %4272 = vmatpush.bf16.msra.mxu0 %v2491
    %4273 = vmatpush.bf16.msra.mxu0 %v2475
    %4274 = vmatpush.bf16.msra.mxu0 %v2459
    %4275 = vmatpush.bf16.msra.mxu0 %v2443
    %4276 = vmatpush.bf16.msra.mxu0 %v2427
    %4277 = vmatpush.bf16.msra.mxu0 %v2411
    %4278 = vmatpush.bf16.msra.mxu0 %v2395
    %4279 = vmatmul.bf16.gmra.mxu0 %v4192
    %v4280 = vpop.f32.mrf.mxu0
    %v4281 = vadd.f32 0.0, %v4280
    %v4282 = vpop.f32.mrf.mxu0
    %4283 = vdwg.mxu0
    %4284 = vmatpush.bf16.msra.mxu0 %v2508
    %4285 = vmatpush.bf16.msra.mxu0 %v2492
    %4286 = vmatpush.bf16.msra.mxu0 %v2476
    %4287 = vmatpush.bf16.msra.mxu0 %v2460
    %4288 = vmatpush.bf16.msra.mxu0 %v2444
    %4289 = vmatpush.bf16.msra.mxu0 %v2428
    %4290 = vmatpush.bf16.msra.mxu0 %v2412
    %4291 = vmatpush.bf16.msra.mxu0 %v2396
    %4292 = vmatmul.bf16.gmra.mxu0 %v4192
    %v4293 = vpop.f32.mrf.mxu0
    %v4294 = vadd.f32 0.0, %v4293
    %v4295 = vpop.f32.mrf.mxu0
    %4296 = vdwg.mxu0
    %4297 = vmatpush.bf16.msra.mxu0 %v2509
    %4298 = vmatpush.bf16.msra.mxu0 %v2493
    %4299 = vmatpush.bf16.msra.mxu0 %v2477
    %4300 = vmatpush.bf16.msra.mxu0 %v2461
    %4301 = vmatpush.bf16.msra.mxu0 %v2445
    %4302 = vmatpush.bf16.msra.mxu0 %v2429
    %4303 = vmatpush.bf16.msra.mxu0 %v2413
    %4304 = vmatpush.bf16.msra.mxu0 %v2397
    %4305 = vmatmul.bf16.gmra.mxu0 %v4192
    %v4306 = vpop.f32.mrf.mxu0
    %v4307 = vadd.f32 0.0, %v4306
    %v4308 = vpop.f32.mrf.mxu0
    %4309 = vdwg.mxu0
    %4310 = vmatpush.bf16.msra.mxu0 %v2510
    %4311 = vmatpush.bf16.msra.mxu0 %v2494
    %4312 = vmatpush.bf16.msra.mxu0 %v2478
    %4313 = vmatpush.bf16.msra.mxu0 %v2462
    %4314 = vmatpush.bf16.msra.mxu0 %v2446
    %4315 = vmatpush.bf16.msra.mxu0 %v2430
    %4316 = vmatpush.bf16.msra.mxu0 %v2414
    %4317 = vmatpush.bf16.msra.mxu0 %v2398
    %4318 = vmatmul.bf16.gmra.mxu0 %v4192
    %v4319 = vpop.f32.mrf.mxu0
    %v4320 = vadd.f32 0.0, %v4319
    %v4321 = vpop.f32.mrf.mxu0
    %4322 = vdwg.mxu0
    %4323 = vmatpush.bf16.msra.mxu0 %v2511
    %4324 = vmatpush.bf16.msra.mxu0 %v2495
    %4325 = vmatpush.bf16.msra.mxu0 %v2479
    %4326 = vmatpush.bf16.msra.mxu0 %v2463
    %4327 = vmatpush.bf16.msra.mxu0 %v2447
    %4328 = vmatpush.bf16.msra.mxu0 %v2431
    %4329 = vmatpush.bf16.msra.mxu0 %v2415
    %4330 = vmatpush.bf16.msra.mxu0 %v2399
    %4331 = vmatmul.bf16.gmra.mxu0 %v4192
    %v4332 = vpop.f32.mrf.mxu0
    %v4333 = vadd.f32 0.0, %v4332
    %v4334 = vpop.f32.mrf.mxu0
    %4335 = vdwg.mxu0
    %4336 = vmatpush.bf16.msra.mxu0 %v2512
    %4337 = vmatpush.bf16.msra.mxu0 %v2496
    %4338 = vmatpush.bf16.msra.mxu0 %v2480
    %4339 = vmatpush.bf16.msra.mxu0 %v2464
    %4340 = vmatpush.bf16.msra.mxu0 %v2448
    %4341 = vmatpush.bf16.msra.mxu0 %v2432
    %4342 = vmatpush.bf16.msra.mxu0 %v2416
    %4343 = vmatpush.bf16.msra.mxu0 %v2400
    %4344 = vmatmul.bf16.gmra.mxu0 %v4192
    %v4345 = vpop.f32.mrf.mxu0
    %v4346 = vadd.f32 0.0, %v4345
    %v4347 = vpop.f32.mrf.mxu0
    %4348 = vdwg.mxu0
    %4349 = vmatpush.bf16.msra.mxu0 %v2513
    %4350 = vmatpush.bf16.msra.mxu0 %v2497
    %4351 = vmatpush.bf16.msra.mxu0 %v2481
    %4352 = vmatpush.bf16.msra.mxu0 %v2465
    %4353 = vmatpush.bf16.msra.mxu0 %v2449
    %4354 = vmatpush.bf16.msra.mxu0 %v2433
    %4355 = vmatpush.bf16.msra.mxu0 %v2417
    %4356 = vmatpush.bf16.msra.mxu0 %v2401
    %4357 = vmatmul.bf16.gmra.mxu0 %v4192
    %v4358 = vpop.f32.mrf.mxu0
    %v4359 = vadd.f32 0.0, %v4358
    %v4360 = vpop.f32.mrf.mxu0
    %4361 = vdwg.mxu0
    %4362 = vmatpush.bf16.msra.mxu0 %v2514
    %4363 = vmatpush.bf16.msra.mxu0 %v2498
    %4364 = vmatpush.bf16.msra.mxu0 %v2482
    %4365 = vmatpush.bf16.msra.mxu0 %v2466
    %4366 = vmatpush.bf16.msra.mxu0 %v2450
    %4367 = vmatpush.bf16.msra.mxu0 %v2434
    %4368 = vmatpush.bf16.msra.mxu0 %v2418
    %4369 = vmatpush.bf16.msra.mxu0 %v2402
    %4370 = vmatmul.bf16.gmra.mxu0 %v4192
    %v4371 = vpop.f32.mrf.mxu0
    %v4372 = vadd.f32 0.0, %v4371
    %v4373 = vpop.f32.mrf.mxu0
    %4374 = vdwg.mxu0
    %4375 = vmatpush.bf16.msra.mxu0 %v2515
    %4376 = vmatpush.bf16.msra.mxu0 %v2499
    %4377 = vmatpush.bf16.msra.mxu0 %v2483
    %4378 = vmatpush.bf16.msra.mxu0 %v2467
    %4379 = vmatpush.bf16.msra.mxu0 %v2451
    %4380 = vmatpush.bf16.msra.mxu0 %v2435
    %4381 = vmatpush.bf16.msra.mxu0 %v2419
    %4382 = vmatpush.bf16.msra.mxu0 %v2403
    %4383 = vmatmul.bf16.gmra.mxu0 %v4192
    %v4384 = vpop.f32.mrf.mxu0
    %v4385 = vadd.f32 0.0, %v4384
    %v4386 = vpop.f32.mrf.mxu0
    %4387 = vdwg.mxu0
    %4388 = vmatpush.bf16.msra.mxu0 %v2516
    %4389 = vmatpush.bf16.msra.mxu0 %v2500
    %4390 = vmatpush.bf16.msra.mxu0 %v2484
    %4391 = vmatpush.bf16.msra.mxu0 %v2468
    %4392 = vmatpush.bf16.msra.mxu0 %v2452
    %4393 = vmatpush.bf16.msra.mxu0 %v2436
    %4394 = vmatpush.bf16.msra.mxu0 %v2420
    %4395 = vmatpush.bf16.msra.mxu0 %v2404
    %4396 = vmatmul.bf16.gmra.mxu0 %v4192
    %v4397 = vpop.f32.mrf.mxu0
    %v4398 = vadd.f32 0.0, %v4397
    %v4399 = vpop.f32.mrf.mxu0
    %4400 = vdwg.mxu0
    %v4401 = vmul.f32 %v4203, %v4203
    %v4402 = vadd.f32 %v4203, %v4216
    %v4403 = vmul.f32 %v4216, %v4216
    %v4404 = vadd.f32 %v4401, %v4403
    %v4405 = vadd.f32 %v4402, %v4229
    %v4406 = vmul.f32 %v4229, %v4229
    %v4407 = vadd.f32 %v4404, %v4406
    %v4408 = vadd.f32 %v4405, %v4242
    %v4409 = vmul.f32 %v4242, %v4242
    %v4410 = vadd.f32 %v4407, %v4409
    %v4411 = vadd.f32 %v4408, %v4255
    %v4412 = vmul.f32 %v4255, %v4255
    %v4413 = vadd.f32 %v4410, %v4412
    %v4414 = vadd.f32 %v4411, %v4268
    %v4415 = vmul.f32 %v4268, %v4268
    %v4416 = vadd.f32 %v4413, %v4415
    %v4417 = vadd.f32 %v4414, %v4281
    %v4418 = vmul.f32 %v4281, %v4281
    %v4419 = vadd.f32 %v4416, %v4418
    %v4420 = vadd.f32 %v4417, %v4294
    %v4421 = vmul.f32 %v4294, %v4294
    %v4422 = vadd.f32 %v4419, %v4421
    %v4423 = vadd.f32 %v4420, %v4307
    %v4424 = vmul.f32 %v4307, %v4307
    %v4425 = vadd.f32 %v4422, %v4424
    %v4426 = vadd.f32 %v4423, %v4320
    %v4427 = vmul.f32 %v4320, %v4320
    %v4428 = vadd.f32 %v4425, %v4427
    %v4429 = vadd.f32 %v4426, %v4333
    %v4430 = vmul.f32 %v4333, %v4333
    %v4431 = vadd.f32 %v4428, %v4430
    %v4432 = vadd.f32 %v4429, %v4346
    %v4433 = vmul.f32 %v4346, %v4346
    %v4434 = vadd.f32 %v4431, %v4433
    %v4435 = vadd.f32 %v4432, %v4359
    %v4436 = vmul.f32 %v4359, %v4359
    %v4437 = vadd.f32 %v4434, %v4436
    %v4438 = vadd.f32 %v4435, %v4372
    %v4439 = vmul.f32 %v4372, %v4372
    %v4440 = vadd.f32 %v4437, %v4439
    %v4441 = vadd.f32 %v4438, %v4385
    %v4442 = vmul.f32 %v4385, %v4385
    %v4443 = vadd.f32 %v4440, %v4442
    %v4444 = vadd.f32 %v4441, %v4398
    %v4445 = vmul.f32 %v4398, %v4398
    %v4446 = vadd.f32 %v4443, %v4445
    %v4447 = vadd.f32 %v4189, %v4444
    %v4448 = vadd.f32 %v4190, %v4446
    %v4449 = vrot.slane %v4447, 4
    %v4450 = vadd.f32 %v4447, %v4449
    %v4451 = vrot.slane %v4450, 2
    %v4452 = vadd.f32 %v4450, %v4451
    %v4453 = vrot.slane %v4452, 1
    %v4454 = vadd.f32 %v4452, %v4453
    %v4455 = vrot.slane %v4448, 4
    %v4456 = vadd.f32 %v4448, %v4455
    %v4457 = vrot.slane %v4456, 2
    %v4458 = vadd.f32 %v4456, %v4457
    %v4459 = vrot.slane %v4458, 1
    %v4460 = vadd.f32 %v4458, %v4459
    %v4461 = vmul.f32 %v4454, 0.00125
    %v4462 = vmul.f32 %v4460, 0.00125
    %v4463 = vmul.f32 %v4461, %v4461
    %v4464 = vsub.f32 %v4462, %v4463
    %v4465 = vmax.f32 %v4464, 0.0
    %v4466 = vadd.f32 %v4465, 1e-05
    %v4467 = vrsqrt.pop %v4466
    %v4468 = vmul.f32 %v4467, %v4466
    %v4469 = vmul.f32 %v4468, %v4467
    %v4470 = vmul.f32 0.5, %v4469
    %v4471 = vsub.f32 1.5, %v4470
    %v4472 = vmul.f32 %v4467, %v4471
    %vm4473 = vweird.f32 %v4466
    %vm4474 = vweird.f32 %v4467
    %vm4475 = vmor %vm4473, %vm4474
    %v4476 = vsel %vm4475, %v4467, %v4472
    %v4477 = vmul.f32 %v103, %v4476
    %v4478 = vmul.f32 %v4461, %v4477
    %v4479 = vsub.f32 %v104, %v4478
    %v4480 = vperm.slane %v4477, 0
    %v4481 = vmul.f32 %v2655, %v4480
    %v4482 = vperm.slane %v4479, 0
    %v4483 = vadd.f32 %v4481, %v4482
    %v4484 = vmax.f32 %v4483, 0.0
    %v4485 = vmul.f32 %v2668, %v4480
    %v4486 = vadd.f32 %v4485, %v4482
    %v4487 = vmax.f32 %v4486, 0.0
    %v4488 = vmul.f32 %v2681, %v4480
    %v4489 = vadd.f32 %v4488, %v4482
    %v4490 = vmax.f32 %v4489, 0.0
    %v4491 = vmul.f32 %v2694, %v4480
    %v4492 = vadd.f32 %v4491, %v4482
    %v4493 = vmax.f32 %v4492, 0.0
    %v4494 = vmul.f32 %v2707, %v4480
    %v4495 = vadd.f32 %v4494, %v4482
    %v4496 = vmax.f32 %v4495, 0.0
    %v4497 = vmul.f32 %v2720, %v4480
    %v4498 = vadd.f32 %v4497, %v4482
    %v4499 = vmax.f32 %v4498, 0.0
    %v4500 = vmul.f32 %v2733, %v4480
    %v4501 = vadd.f32 %v4500, %v4482
    %v4502 = vmax.f32 %v4501, 0.0
    %v4503 = vmul.f32 %v2746, %v4480
    %v4504 = vadd.f32 %v4503, %v4482
    %v4505 = vmax.f32 %v4504, 0.0
    %v4506 = vmul.f32 %v2759, %v4480
    %v4507 = vadd.f32 %v4506, %v4482
    %v4508 = vmax.f32 %v4507, 0.0
    %v4509 = vmul.f32 %v2772, %v4480
    %v4510 = vadd.f32 %v4509, %v4482
    %v4511 = vmax.f32 %v4510, 0.0
    %v4512 = vmul.f32 %v2785, %v4480
    %v4513 = vadd.f32 %v4512, %v4482
    %v4514 = vmax.f32 %v4513, 0.0
    %v4515 = vmul.f32 %v2798, %v4480
    %v4516 = vadd.f32 %v4515, %v4482
    %v4517 = vmax.f32 %v4516, 0.0
    %v4518 = vmul.f32 %v2811, %v4480
    %v4519 = vadd.f32 %v4518, %v4482
    %v4520 = vmax.f32 %v4519, 0.0
    %v4521 = vmul.f32 %v2824, %v4480
    %v4522 = vadd.f32 %v4521, %v4482
    %v4523 = vmax.f32 %v4522, 0.0
    %v4524 = vmul.f32 %v2837, %v4480
    %v4525 = vadd.f32 %v4524, %v4482
    %v4526 = vmax.f32 %v4525, 0.0
    %v4527 = vmul.f32 %v2850, %v4480
    %v4528 = vadd.f32 %v4527, %v4482
    %v4529 = vmax.f32 %v4528, 0.0
    %v4530 = vpack.c.bf16 %v4487, %v4484
    %v4531 = vpack.c.bf16 %v4493, %v4490
    %v4532 = vpack.c.bf16 %v4499, %v4496
    %v4533 = vpack.c.bf16 %v4505, %v4502
    %v4534 = vpack.c.bf16 %v4511, %v4508
    %v4535 = vpack.c.bf16 %v4517, %v4514
    %v4536 = vpack.c.bf16 %v4523, %v4520
    %v4537 = vpack.c.bf16 %v4529, %v4526
    %v4538 = vperm.slane %v105, 0
    %v4555 = vunpack.c.l.b16 %v314
    %v4556 = vunpack.c.l.b16 %v315
    %v4557 = vunpack.c.l.b16 %v316
    %v4558 = vunpack.c.l.b16 %v317
    %v4559 = vunpack.c.l.b16 %v318
    %v4560 = vunpack.c.l.b16 %v319
    %v4561 = vunpack.c.l.b16 %v320
    %v4562 = vunpack.c.l.b16 %v321
    %v4563 = vunpack.c.l.b16 %v322
    %v4564 = vunpack.c.l.b16 %v323
    %v4565 = vunpack.c.l.b16 %v324
    %v4566 = vunpack.c.l.b16 %v325
    %v4567 = vunpack.c.l.b16 %v326
    %v4568 = vunpack.c.l.b16 %v327
    %v4569 = vunpack.c.l.b16 %v328
    %v4570 = vunpack.c.l.b16 %v329
    %v4571 = vpack.c.b16 %v4556, %v4555
    %v4572 = vpack.c.b16 %v4558, %v4557
    %v4573 = vpack.c.b16 %v4560, %v4559
    %v4574 = vpack.c.b16 %v4562, %v4561
    %v4575 = vpack.c.b16 %v4564, %v4563
    %v4576 = vpack.c.b16 %v4566, %v4565
    %v4577 = vpack.c.b16 %v4568, %v4567
    %v4578 = vpack.c.b16 %v4570, %v4569
    %4587 = vmatpush.bf16.msra.mxu0 %v4578
    %4588 = vmatpush.bf16.msra.mxu0 %v4577
    %4589 = vmatpush.bf16.msra.mxu0 %v4576
    %4590 = vmatpush.bf16.msra.mxu0 %v4575
    %4591 = vmatpush.bf16.msra.mxu0 %v4574
    %4592 = vmatpush.bf16.msra.mxu0 %v4573
    %4593 = vmatpush.bf16.msra.mxu0 %v4572
    %4594 = vmatpush.bf16.msra.mxu0 %v4571
    %4595 = vmatmul.bf16.gmra.mxu0 %v4530
    %v4596 = vpop.f32.mrf.mxu0
    %v4597 = vadd.f32 %v4538, %v4596
    %v4598 = vpop.f32.mrf.mxu0
    %v4599 = vadd.f32 %v4538, %v4598
    %4600 = vmatmul.bf16.gmra.mxu0 %v4531
    %v4601 = vpop.f32.mrf.mxu0
    %v4602 = vadd.f32 %v4538, %v4601
    %v4603 = vpop.f32.mrf.mxu0
    %v4604 = vadd.f32 %v4538, %v4603
    %4605 = vmatmul.bf16.gmra.mxu0 %v4532
    %v4606 = vpop.f32.mrf.mxu0
    %v4607 = vadd.f32 %v4538, %v4606
    %v4608 = vpop.f32.mrf.mxu0
    %v4609 = vadd.f32 %v4538, %v4608
    %4610 = vmatmul.bf16.gmra.mxu0 %v4533
    %v4611 = vpop.f32.mrf.mxu0
    %v4612 = vadd.f32 %v4538, %v4611
    %v4613 = vpop.f32.mrf.mxu0
    %v4614 = vadd.f32 %v4538, %v4613
    %4615 = vmatmul.bf16.gmra.mxu0 %v4534
    %v4616 = vpop.f32.mrf.mxu0
    %v4617 = vadd.f32 %v4538, %v4616
    %v4618 = vpop.f32.mrf.mxu0
    %v4619 = vadd.f32 %v4538, %v4618
    %4620 = vmatmul.bf16.gmra.mxu0 %v4535
    %v4621 = vpop.f32.mrf.mxu0
    %v4622 = vadd.f32 %v4538, %v4621
    %v4623 = vpop.f32.mrf.mxu0
    %v4624 = vadd.f32 %v4538, %v4623
    %4625 = vmatmul.bf16.gmra.mxu0 %v4536
    %v4626 = vpop.f32.mrf.mxu0
    %v4627 = vadd.f32 %v4538, %v4626
    %v4628 = vpop.f32.mrf.mxu0
    %v4629 = vadd.f32 %v4538, %v4628
    %4630 = vmatmul.bf16.gmra.mxu0 %v4537
    %v4631 = vpop.f32.mrf.mxu0
    %v4632 = vadd.f32 %v4538, %v4631
    %v4633 = vpop.f32.mrf.mxu0
    %v4634 = vadd.f32 %v4538, %v4633
    %4635 = vdwg.mxu0
    %v4636 = vmul.f32 %v4597, 0.5
    %v4637 = vmul.f32 %v4599, 0.5
    %v4638 = vmul.f32 %v4602, 0.5
    %v4639 = vmul.f32 %v4604, 0.5
    %v4640 = vmul.f32 %v4607, 0.5
    %v4641 = vmul.f32 %v4609, 0.5
    %v4642 = vmul.f32 %v4612, 0.5
    %v4643 = vmul.f32 %v4614, 0.5
    %v4644 = vmul.f32 %v4617, 0.5
    %v4645 = vmul.f32 %v4619, 0.5
    %v4646 = vmul.f32 %v4622, 0.5
    %v4647 = vmul.f32 %v4624, 0.5
    %v4648 = vmul.f32 %v4627, 0.5
    %v4649 = vmul.f32 %v4629, 0.5
    %v4650 = vmul.f32 %v4632, 0.5
    %v4651 = vmul.f32 %v4634, 0.5
    %v4652 = vtanh.pop %v4636
    %v4653 = vtanh.pop %v4637
    %v4654 = vtanh.pop %v4638
    %v4655 = vtanh.pop %v4639
    %v4656 = vtanh.pop %v4640
    %v4657 = vtanh.pop %v4641
    %v4658 = vtanh.pop %v4642
    %v4659 = vtanh.pop %v4643
    %v4660 = vtanh.pop %v4644
    %v4661 = vtanh.pop %v4645
    %v4662 = vtanh.pop %v4646
    %v4663 = vtanh.pop %v4647
    %v4664 = vtanh.pop %v4648
    %v4665 = vtanh.pop %v4649
    %v4666 = vtanh.pop %v4650
    %v4667 = vtanh.pop %v4651
    %v4668 = vmul.f32 %v4652, 0.5
    %v4669 = vmul.f32 %v4653, 0.5
    %v4670 = vmul.f32 %v4654, 0.5
    %v4671 = vmul.f32 %v4655, 0.5
    %v4672 = vmul.f32 %v4656, 0.5
    %v4673 = vmul.f32 %v4657, 0.5
    %v4674 = vmul.f32 %v4658, 0.5
    %v4675 = vmul.f32 %v4659, 0.5
    %v4676 = vmul.f32 %v4660, 0.5
    %v4677 = vmul.f32 %v4661, 0.5
    %v4678 = vmul.f32 %v4662, 0.5
    %v4679 = vmul.f32 %v4663, 0.5
    %v4680 = vmul.f32 %v4664, 0.5
    %v4681 = vmul.f32 %v4665, 0.5
    %v4682 = vmul.f32 %v4666, 0.5
    %v4683 = vmul.f32 %v4667, 0.5
    %v4684 = vadd.f32 %v4668, 0.5
    %v4685 = vadd.f32 %v4669, 0.5
    %v4686 = vadd.f32 %v4670, 0.5
    %v4687 = vadd.f32 %v4671, 0.5
    %v4688 = vadd.f32 %v4672, 0.5
    %v4689 = vadd.f32 %v4673, 0.5
    %v4690 = vadd.f32 %v4674, 0.5
    %v4691 = vadd.f32 %v4675, 0.5
    %v4692 = vadd.f32 %v4676, 0.5
    %v4693 = vadd.f32 %v4677, 0.5
    %v4694 = vadd.f32 %v4678, 0.5
    %v4695 = vadd.f32 %v4679, 0.5
    %v4696 = vadd.f32 %v4680, 0.5
    %v4697 = vadd.f32 %v4681, 0.5
    %v4698 = vadd.f32 %v4682, 0.5
    %v4699 = vadd.f32 %v4683, 0.5
    %v4700 = vpack.c.bf16 %v4684, %v4684
    %v4701 = vpack.c.bf16 %v4685, %v4685
    %v4702 = vpack.c.bf16 %v4686, %v4686
    %v4703 = vpack.c.bf16 %v4687, %v4687
    %v4704 = vpack.c.bf16 %v4688, %v4688
    %v4705 = vpack.c.bf16 %v4689, %v4689
    %v4706 = vpack.c.bf16 %v4690, %v4690
    %v4707 = vpack.c.bf16 %v4691, %v4691
    %v4708 = vpack.c.bf16 %v4692, %v4692
    %v4709 = vpack.c.bf16 %v4693, %v4693
    %v4710 = vpack.c.bf16 %v4694, %v4694
    %v4711 = vpack.c.bf16 %v4695, %v4695
    %v4712 = vpack.c.bf16 %v4696, %v4696
    %v4713 = vpack.c.bf16 %v4697, %v4697
    %v4714 = vpack.c.bf16 %v4698, %v4698
    %v4715 = vpack.c.bf16 %v4699, %v4699
    %4716 = vst [vmem:[%s6] sm:$0xf] %v4700
    %4717 = vst [vmem:[%s6 + $0x4] sm:$0xf] %v4701
    %4718 = vst [vmem:[%s6 + $0x8] sm:$0xf] %v4702
    %4719 = vst [vmem:[%s6 + $0xc] sm:$0xf] %v4703
    %4720 = vst [vmem:[%s6 + $0x10] sm:$0xf] %v4704
    %4721 = vst [vmem:[%s6 + $0x14] sm:$0xf] %v4705
    %4722 = vst [vmem:[%s6 + $0x18] sm:$0xf] %v4706
    %4723 = vst [vmem:[%s6 + $0x1c] sm:$0xf] %v4707
    %4724 = vst [vmem:[%s6 + $0x20] sm:$0xf] %v4708
    %4725 = vst [vmem:[%s6 + $0x24] sm:$0xf] %v4709
    %4726 = vst [vmem:[%s6 + $0x28] sm:$0xf] %v4710
    %4727 = vst [vmem:[%s6 + $0x2c] sm:$0xf] %v4711
    %4728 = vst [vmem:[%s6 + $0x30] sm:$0xf] %v4712
    %4729 = vst [vmem:[%s6 + $0x34] sm:$0xf] %v4713
    %4730 = vst [vmem:[%s6 + $0x38] sm:$0xf] %v4714
    %4731 = vst [vmem:[%s6 + $0x3c] sm:$0xf] %v4715
    %v4732 = vld [vmem:[#allocation2 + $0x8] sm:$0xff]
    %v4733 = vpack.c.bf16 %v4732, %v4732
    %4734 = vmatpush.bf16.msra.mxu0 %v2501
    %4735 = vmatpush.bf16.msra.mxu0 %v2485
    %4736 = vmatpush.bf16.msra.mxu0 %v2469
    %4737 = vmatpush.bf16.msra.mxu0 %v2453
    %4738 = vmatpush.bf16.msra.mxu0 %v2437
    %4739 = vmatpush.bf16.msra.mxu0 %v2421
    %4740 = vmatpush.bf16.msra.mxu0 %v2405
    %4741 = vmatpush.bf16.msra.mxu0 %v2389
    %4742 = vmatmul.bf16.gmra.mxu0 %v4733
    %v4743 = vpop.f32.mrf.mxu0
    %v4744 = vadd.f32 0.0, %v4743
    %v4745 = vpop.f32.mrf.mxu0
    %4746 = vdwg.mxu0
    %4747 = vmatpush.bf16.msra.mxu0 %v2502
    %4748 = vmatpush.bf16.msra.mxu0 %v2486
    %4749 = vmatpush.bf16.msra.mxu0 %v2470
    %4750 = vmatpush.bf16.msra.mxu0 %v2454
    %4751 = vmatpush.bf16.msra.mxu0 %v2438
    %4752 = vmatpush.bf16.msra.mxu0 %v2422
    %4753 = vmatpush.bf16.msra.mxu0 %v2406
    %4754 = vmatpush.bf16.msra.mxu0 %v2390
    %4755 = vmatmul.bf16.gmra.mxu0 %v4733
    %v4756 = vpop.f32.mrf.mxu0
    %v4757 = vadd.f32 0.0, %v4756
    %v4758 = vpop.f32.mrf.mxu0
    %4759 = vdwg.mxu0
    %4760 = vmatpush.bf16.msra.mxu0 %v2503
    %4761 = vmatpush.bf16.msra.mxu0 %v2487
    %4762 = vmatpush.bf16.msra.mxu0 %v2471
    %4763 = vmatpush.bf16.msra.mxu0 %v2455
    %4764 = vmatpush.bf16.msra.mxu0 %v2439
    %4765 = vmatpush.bf16.msra.mxu0 %v2423
    %4766 = vmatpush.bf16.msra.mxu0 %v2407
    %4767 = vmatpush.bf16.msra.mxu0 %v2391
    %4768 = vmatmul.bf16.gmra.mxu0 %v4733
    %v4769 = vpop.f32.mrf.mxu0
    %v4770 = vadd.f32 0.0, %v4769
    %v4771 = vpop.f32.mrf.mxu0
    %4772 = vdwg.mxu0
    %4773 = vmatpush.bf16.msra.mxu0 %v2504
    %4774 = vmatpush.bf16.msra.mxu0 %v2488
    %4775 = vmatpush.bf16.msra.mxu0 %v2472
    %4776 = vmatpush.bf16.msra.mxu0 %v2456
    %4777 = vmatpush.bf16.msra.mxu0 %v2440
    %4778 = vmatpush.bf16.msra.mxu0 %v2424
    %4779 = vmatpush.bf16.msra.mxu0 %v2408
    %4780 = vmatpush.bf16.msra.mxu0 %v2392
    %4781 = vmatmul.bf16.gmra.mxu0 %v4733
    %v4782 = vpop.f32.mrf.mxu0
    %v4783 = vadd.f32 0.0, %v4782
    %v4784 = vpop.f32.mrf.mxu0
    %4785 = vdwg.mxu0
    %4786 = vmatpush.bf16.msra.mxu0 %v2505
    %4787 = vmatpush.bf16.msra.mxu0 %v2489
    %4788 = vmatpush.bf16.msra.mxu0 %v2473
    %4789 = vmatpush.bf16.msra.mxu0 %v2457
    %4790 = vmatpush.bf16.msra.mxu0 %v2441
    %4791 = vmatpush.bf16.msra.mxu0 %v2425
    %4792 = vmatpush.bf16.msra.mxu0 %v2409
    %4793 = vmatpush.bf16.msra.mxu0 %v2393
    %4794 = vmatmul.bf16.gmra.mxu0 %v4733
    %v4795 = vpop.f32.mrf.mxu0
    %v4796 = vadd.f32 0.0, %v4795
    %v4797 = vpop.f32.mrf.mxu0
    %4798 = vdwg.mxu0
    %4799 = vmatpush.bf16.msra.mxu0 %v2506
    %4800 = vmatpush.bf16.msra.mxu0 %v2490
    %4801 = vmatpush.bf16.msra.mxu0 %v2474
    %4802 = vmatpush.bf16.msra.mxu0 %v2458
    %4803 = vmatpush.bf16.msra.mxu0 %v2442
    %4804 = vmatpush.bf16.msra.mxu0 %v2426
    %4805 = vmatpush.bf16.msra.mxu0 %v2410
    %4806 = vmatpush.bf16.msra.mxu0 %v2394
    %4807 = vmatmul.bf16.gmra.mxu0 %v4733
    %v4808 = vpop.f32.mrf.mxu0
    %v4809 = vadd.f32 0.0, %v4808
    %v4810 = vpop.f32.mrf.mxu0
    %4811 = vdwg.mxu0
    %4812 = vmatpush.bf16.msra.mxu0 %v2507
    %4813 = vmatpush.bf16.msra.mxu0 %v2491
    %4814 = vmatpush.bf16.msra.mxu0 %v2475
    %4815 = vmatpush.bf16.msra.mxu0 %v2459
    %4816 = vmatpush.bf16.msra.mxu0 %v2443
    %4817 = vmatpush.bf16.msra.mxu0 %v2427
    %4818 = vmatpush.bf16.msra.mxu0 %v2411
    %4819 = vmatpush.bf16.msra.mxu0 %v2395
    %4820 = vmatmul.bf16.gmra.mxu0 %v4733
    %v4821 = vpop.f32.mrf.mxu0
    %v4822 = vadd.f32 0.0, %v4821
    %v4823 = vpop.f32.mrf.mxu0
    %4824 = vdwg.mxu0
    %4825 = vmatpush.bf16.msra.mxu0 %v2508
    %4826 = vmatpush.bf16.msra.mxu0 %v2492
    %4827 = vmatpush.bf16.msra.mxu0 %v2476
    %4828 = vmatpush.bf16.msra.mxu0 %v2460
    %4829 = vmatpush.bf16.msra.mxu0 %v2444
    %4830 = vmatpush.bf16.msra.mxu0 %v2428
    %4831 = vmatpush.bf16.msra.mxu0 %v2412
    %4832 = vmatpush.bf16.msra.mxu0 %v2396
    %4833 = vmatmul.bf16.gmra.mxu0 %v4733
    %v4834 = vpop.f32.mrf.mxu0
    %v4835 = vadd.f32 0.0, %v4834
    %v4836 = vpop.f32.mrf.mxu0
    %4837 = vdwg.mxu0
    %4838 = vmatpush.bf16.msra.mxu0 %v2509
    %4839 = vmatpush.bf16.msra.mxu0 %v2493
    %4840 = vmatpush.bf16.msra.mxu0 %v2477
    %4841 = vmatpush.bf16.msra.mxu0 %v2461
    %4842 = vmatpush.bf16.msra.mxu0 %v2445
    %4843 = vmatpush.bf16.msra.mxu0 %v2429
    %4844 = vmatpush.bf16.msra.mxu0 %v2413
    %4845 = vmatpush.bf16.msra.mxu0 %v2397
    %4846 = vmatmul.bf16.gmra.mxu0 %v4733
    %v4847 = vpop.f32.mrf.mxu0
    %v4848 = vadd.f32 0.0, %v4847
    %v4849 = vpop.f32.mrf.mxu0
    %4850 = vdwg.mxu0
    %4851 = vmatpush.bf16.msra.mxu0 %v2510
    %4852 = vmatpush.bf16.msra.mxu0 %v2494
    %4853 = vmatpush.bf16.msra.mxu0 %v2478
    %4854 = vmatpush.bf16.msra.mxu0 %v2462
    %4855 = vmatpush.bf16.msra.mxu0 %v2446
    %4856 = vmatpush.bf16.msra.mxu0 %v2430
    %4857 = vmatpush.bf16.msra.mxu0 %v2414
    %4858 = vmatpush.bf16.msra.mxu0 %v2398
    %4859 = vmatmul.bf16.gmra.mxu0 %v4733
    %v4860 = vpop.f32.mrf.mxu0
    %v4861 = vadd.f32 0.0, %v4860
    %v4862 = vpop.f32.mrf.mxu0
    %4863 = vdwg.mxu0
    %4864 = vmatpush.bf16.msra.mxu0 %v2511
    %4865 = vmatpush.bf16.msra.mxu0 %v2495
    %4866 = vmatpush.bf16.msra.mxu0 %v2479
    %4867 = vmatpush.bf16.msra.mxu0 %v2463
    %4868 = vmatpush.bf16.msra.mxu0 %v2447
    %4869 = vmatpush.bf16.msra.mxu0 %v2431
    %4870 = vmatpush.bf16.msra.mxu0 %v2415
    %4871 = vmatpush.bf16.msra.mxu0 %v2399
    %4872 = vmatmul.bf16.gmra.mxu0 %v4733
    %v4873 = vpop.f32.mrf.mxu0
    %v4874 = vadd.f32 0.0, %v4873
    %v4875 = vpop.f32.mrf.mxu0
    %4876 = vdwg.mxu0
    %4877 = vmatpush.bf16.msra.mxu0 %v2512
    %4878 = vmatpush.bf16.msra.mxu0 %v2496
    %4879 = vmatpush.bf16.msra.mxu0 %v2480
    %4880 = vmatpush.bf16.msra.mxu0 %v2464
    %4881 = vmatpush.bf16.msra.mxu0 %v2448
    %4882 = vmatpush.bf16.msra.mxu0 %v2432
    %4883 = vmatpush.bf16.msra.mxu0 %v2416
    %4884 = vmatpush.bf16.msra.mxu0 %v2400
    %4885 = vmatmul.bf16.gmra.mxu0 %v4733
    %v4886 = vpop.f32.mrf.mxu0
    %v4887 = vadd.f32 0.0, %v4886
    %v4888 = vpop.f32.mrf.mxu0
    %4889 = vdwg.mxu0
    %4890 = vmatpush.bf16.msra.mxu0 %v2513
    %4891 = vmatpush.bf16.msra.mxu0 %v2497
    %4892 = vmatpush.bf16.msra.mxu0 %v2481
    %4893 = vmatpush.bf16.msra.mxu0 %v2465
    %4894 = vmatpush.bf16.msra.mxu0 %v2449
    %4895 = vmatpush.bf16.msra.mxu0 %v2433
    %4896 = vmatpush.bf16.msra.mxu0 %v2417
    %4897 = vmatpush.bf16.msra.mxu0 %v2401
    %4898 = vmatmul.bf16.gmra.mxu0 %v4733
    %v4899 = vpop.f32.mrf.mxu0
    %v4900 = vadd.f32 0.0, %v4899
    %v4901 = vpop.f32.mrf.mxu0
    %4902 = vdwg.mxu0
    %4903 = vmatpush.bf16.msra.mxu0 %v2514
    %4904 = vmatpush.bf16.msra.mxu0 %v2498
    %4905 = vmatpush.bf16.msra.mxu0 %v2482
    %4906 = vmatpush.bf16.msra.mxu0 %v2466
    %4907 = vmatpush.bf16.msra.mxu0 %v2450
    %4908 = vmatpush.bf16.msra.mxu0 %v2434
    %4909 = vmatpush.bf16.msra.mxu0 %v2418
    %4910 = vmatpush.bf16.msra.mxu0 %v2402
    %4911 = vmatmul.bf16.gmra.mxu0 %v4733
    %v4912 = vpop.f32.mrf.mxu0
    %v4913 = vadd.f32 0.0, %v4912
    %v4914 = vpop.f32.mrf.mxu0
    %4915 = vdwg.mxu0
    %4916 = vmatpush.bf16.msra.mxu0 %v2515
    %4917 = vmatpush.bf16.msra.mxu0 %v2499
    %4918 = vmatpush.bf16.msra.mxu0 %v2483
    %4919 = vmatpush.bf16.msra.mxu0 %v2467
    %4920 = vmatpush.bf16.msra.mxu0 %v2451
    %4921 = vmatpush.bf16.msra.mxu0 %v2435
    %4922 = vmatpush.bf16.msra.mxu0 %v2419
    %4923 = vmatpush.bf16.msra.mxu0 %v2403
    %4924 = vmatmul.bf16.gmra.mxu0 %v4733
    %v4925 = vpop.f32.mrf.mxu0
    %v4926 = vadd.f32 0.0, %v4925
    %v4927 = vpop.f32.mrf.mxu0
    %4928 = vdwg.mxu0
    %4929 = vmatpush.bf16.msra.mxu0 %v2516
    %4930 = vmatpush.bf16.msra.mxu0 %v2500
    %4931 = vmatpush.bf16.msra.mxu0 %v2484
    %4932 = vmatpush.bf16.msra.mxu0 %v2468
    %4933 = vmatpush.bf16.msra.mxu0 %v2452
    %4934 = vmatpush.bf16.msra.mxu0 %v2436
    %4935 = vmatpush.bf16.msra.mxu0 %v2420
    %4936 = vmatpush.bf16.msra.mxu0 %v2404
    %4937 = vmatmul.bf16.gmra.mxu0 %v4733
    %v4938 = vpop.f32.mrf.mxu0
    %v4939 = vadd.f32 0.0, %v4938
    %v4940 = vpop.f32.mrf.mxu0
    %4941 = vdwg.mxu0
    %v4942 = vmul.f32 %v4744, %v4480
    %v4943 = vadd.f32 %v4942, %v4482
    %v4944 = vmax.f32 %v4943, 0.0
    %v4945 = vmul.f32 %v4757, %v4480
    %v4946 = vadd.f32 %v4945, %v4482
    %v4947 = vmax.f32 %v4946, 0.0
    %v4948 = vmul.f32 %v4770, %v4480
    %v4949 = vadd.f32 %v4948, %v4482
    %v4950 = vmax.f32 %v4949, 0.0
    %v4951 = vmul.f32 %v4783, %v4480
    %v4952 = vadd.f32 %v4951, %v4482
    %v4953 = vmax.f32 %v4952, 0.0
    %v4954 = vmul.f32 %v4796, %v4480
    %v4955 = vadd.f32 %v4954, %v4482
    %v4956 = vmax.f32 %v4955, 0.0
    %v4957 = vmul.f32 %v4809, %v4480
    %v4958 = vadd.f32 %v4957, %v4482
    %v4959 = vmax.f32 %v4958, 0.0
    %v4960 = vmul.f32 %v4822, %v4480
    %v4961 = vadd.f32 %v4960, %v4482
    %v4962 = vmax.f32 %v4961, 0.0
    %v4963 = vmul.f32 %v4835, %v4480
    %v4964 = vadd.f32 %v4963, %v4482
    %v4965 = vmax.f32 %v4964, 0.0
    %v4966 = vmul.f32 %v4848, %v4480
    %v4967 = vadd.f32 %v4966, %v4482
    %v4968 = vmax.f32 %v4967, 0.0
    %v4969 = vmul.f32 %v4861, %v4480
    %v4970 = vadd.f32 %v4969, %v4482
    %v4971 = vmax.f32 %v4970, 0.0
    %v4972 = vmul.f32 %v4874, %v4480
    %v4973 = vadd.f32 %v4972, %v4482
    %v4974 = vmax.f32 %v4973, 0.0
    %v4975 = vmul.f32 %v4887, %v4480
    %v4976 = vadd.f32 %v4975, %v4482
    %v4977 = vmax.f32 %v4976, 0.0
    %v4978 = vmul.f32 %v4900, %v4480
    %v4979 = vadd.f32 %v4978, %v4482
    %v4980 = vmax.f32 %v4979, 0.0
    %v4981 = vmul.f32 %v4913, %v4480
    %v4982 = vadd.f32 %v4981, %v4482
    %v4983 = vmax.f32 %v4982, 0.0
    %v4984 = vmul.f32 %v4926, %v4480
    %v4985 = vadd.f32 %v4984, %v4482
    %v4986 = vmax.f32 %v4985, 0.0
    %v4987 = vmul.f32 %v4939, %v4480
    %v4988 = vadd.f32 %v4987, %v4482
    %v4989 = vmax.f32 %v4988, 0.0
    %v4990 = vpack.c.bf16 %v4947, %v4944
    %v4991 = vpack.c.bf16 %v4953, %v4950
    %v4992 = vpack.c.bf16 %v4959, %v4956
    %v4993 = vpack.c.bf16 %v4965, %v4962
    %v4994 = vpack.c.bf16 %v4971, %v4968
    %v4995 = vpack.c.bf16 %v4977, %v4974
    %v4996 = vpack.c.bf16 %v4983, %v4980
    %v4997 = vpack.c.bf16 %v4989, %v4986
    %4998 = vmatpush.bf16.msra.mxu0 %v4578
    %4999 = vmatpush.bf16.msra.mxu0 %v4577
    %5000 = vmatpush.bf16.msra.mxu0 %v4576
    %5001 = vmatpush.bf16.msra.mxu0 %v4575
    %5002 = vmatpush.bf16.msra.mxu0 %v4574
    %5003 = vmatpush.bf16.msra.mxu0 %v4573
    %5004 = vmatpush.bf16.msra.mxu0 %v4572
    %5005 = vmatpush.bf16.msra.mxu0 %v4571
    %5006 = vmatmul.bf16.gmra.mxu0 %v4990
    %v5007 = vpop.f32.mrf.mxu0
    %v5008 = vadd.f32 %v4538, %v5007
    %v5009 = vpop.f32.mrf.mxu0
    %v5010 = vadd.f32 %v4538, %v5009
    %5011 = vmatmul.bf16.gmra.mxu0 %v4991
    %v5012 = vpop.f32.mrf.mxu0
    %v5013 = vadd.f32 %v4538, %v5012
    %v5014 = vpop.f32.mrf.mxu0
    %v5015 = vadd.f32 %v4538, %v5014
    %5016 = vmatmul.bf16.gmra.mxu0 %v4992
    %v5017 = vpop.f32.mrf.mxu0
    %v5018 = vadd.f32 %v4538, %v5017
    %v5019 = vpop.f32.mrf.mxu0
    %v5020 = vadd.f32 %v4538, %v5019
    %5021 = vmatmul.bf16.gmra.mxu0 %v4993
    %v5022 = vpop.f32.mrf.mxu0
    %v5023 = vadd.f32 %v4538, %v5022
    %v5024 = vpop.f32.mrf.mxu0
    %v5025 = vadd.f32 %v4538, %v5024
    %5026 = vmatmul.bf16.gmra.mxu0 %v4994
    %v5027 = vpop.f32.mrf.mxu0
    %v5028 = vadd.f32 %v4538, %v5027
    %v5029 = vpop.f32.mrf.mxu0
    %v5030 = vadd.f32 %v4538, %v5029
    %5031 = vmatmul.bf16.gmra.mxu0 %v4995
    %v5032 = vpop.f32.mrf.mxu0
    %v5033 = vadd.f32 %v4538, %v5032
    %v5034 = vpop.f32.mrf.mxu0
    %v5035 = vadd.f32 %v4538, %v5034
    %5036 = vmatmul.bf16.gmra.mxu0 %v4996
    %v5037 = vpop.f32.mrf.mxu0
    %v5038 = vadd.f32 %v4538, %v5037
    %v5039 = vpop.f32.mrf.mxu0
    %v5040 = vadd.f32 %v4538, %v5039
    %5041 = vmatmul.bf16.gmra.mxu0 %v4997
    %v5042 = vpop.f32.mrf.mxu0
    %v5043 = vadd.f32 %v4538, %v5042
    %v5044 = vpop.f32.mrf.mxu0
    %v5045 = vadd.f32 %v4538, %v5044
    %5046 = vdwg.mxu0
    %v5047 = vmul.f32 %v5008, 0.5
    %v5048 = vmul.f32 %v5010, 0.5
    %v5049 = vmul.f32 %v5013, 0.5
    %v5050 = vmul.f32 %v5015, 0.5
    %v5051 = vmul.f32 %v5018, 0.5
    %v5052 = vmul.f32 %v5020, 0.5
    %v5053 = vmul.f32 %v5023, 0.5
    %v5054 = vmul.f32 %v5025, 0.5
    %v5055 = vmul.f32 %v5028, 0.5
    %v5056 = vmul.f32 %v5030, 0.5
    %v5057 = vmul.f32 %v5033, 0.5
    %v5058 = vmul.f32 %v5035, 0.5
    %v5059 = vmul.f32 %v5038, 0.5
    %v5060 = vmul.f32 %v5040, 0.5
    %v5061 = vmul.f32 %v5043, 0.5
    %v5062 = vmul.f32 %v5045, 0.5
    %v5063 = vtanh.pop %v5047
    %v5064 = vtanh.pop %v5048
    %v5065 = vtanh.pop %v5049
    %v5066 = vtanh.pop %v5050
    %v5067 = vtanh.pop %v5051
    %v5068 = vtanh.pop %v5052
    %v5069 = vtanh.pop %v5053
    %v5070 = vtanh.pop %v5054
    %v5071 = vtanh.pop %v5055
    %v5072 = vtanh.pop %v5056
    %v5073 = vtanh.pop %v5057
    %v5074 = vtanh.pop %v5058
    %v5075 = vtanh.pop %v5059
    %v5076 = vtanh.pop %v5060
    %v5077 = vtanh.pop %v5061
    %v5078 = vtanh.pop %v5062
    %v5079 = vmul.f32 %v5063, 0.5
    %v5080 = vmul.f32 %v5064, 0.5
    %v5081 = vmul.f32 %v5065, 0.5
    %v5082 = vmul.f32 %v5066, 0.5
    %v5083 = vmul.f32 %v5067, 0.5
    %v5084 = vmul.f32 %v5068, 0.5
    %v5085 = vmul.f32 %v5069, 0.5
    %v5086 = vmul.f32 %v5070, 0.5
    %v5087 = vmul.f32 %v5071, 0.5
    %v5088 = vmul.f32 %v5072, 0.5
    %v5089 = vmul.f32 %v5073, 0.5
    %v5090 = vmul.f32 %v5074, 0.5
    %v5091 = vmul.f32 %v5075, 0.5
    %v5092 = vmul.f32 %v5076, 0.5
    %v5093 = vmul.f32 %v5077, 0.5
    %v5094 = vmul.f32 %v5078, 0.5
    %v5095 = vadd.f32 %v5079, 0.5
    %v5096 = vadd.f32 %v5080, 0.5
    %v5097 = vadd.f32 %v5081, 0.5
    %v5098 = vadd.f32 %v5082, 0.5
    %v5099 = vadd.f32 %v5083, 0.5
    %v5100 = vadd.f32 %v5084, 0.5
    %v5101 = vadd.f32 %v5085, 0.5
    %v5102 = vadd.f32 %v5086, 0.5
    %v5103 = vadd.f32 %v5087, 0.5
    %v5104 = vadd.f32 %v5088, 0.5
    %v5105 = vadd.f32 %v5089, 0.5
    %v5106 = vadd.f32 %v5090, 0.5
    %v5107 = vadd.f32 %v5091, 0.5
    %v5108 = vadd.f32 %v5092, 0.5
    %v5109 = vadd.f32 %v5093, 0.5
    %v5110 = vadd.f32 %v5094, 0.5
    %v5111 = vpack.c.bf16 %v5095, %v5095
    %v5112 = vpack.c.bf16 %v5096, %v5096
    %v5113 = vpack.c.bf16 %v5097, %v5097
    %v5114 = vpack.c.bf16 %v5098, %v5098
    %v5115 = vpack.c.bf16 %v5099, %v5099
    %v5116 = vpack.c.bf16 %v5100, %v5100
    %v5117 = vpack.c.bf16 %v5101, %v5101
    %v5118 = vpack.c.bf16 %v5102, %v5102
    %v5119 = vpack.c.bf16 %v5103, %v5103
    %v5120 = vpack.c.bf16 %v5104, %v5104
    %v5121 = vpack.c.bf16 %v5105, %v5105
    %v5122 = vpack.c.bf16 %v5106, %v5106
    %v5123 = vpack.c.bf16 %v5107, %v5107
    %v5124 = vpack.c.bf16 %v5108, %v5108
    %v5125 = vpack.c.bf16 %v5109, %v5109
    %v5126 = vpack.c.bf16 %v5110, %v5110
    %5127 = vst [vmem:[%s6 + $0x40] sm:$0xf] %v5111
    %5128 = vst [vmem:[%s6 + $0x44] sm:$0xf] %v5112
    %5129 = vst [vmem:[%s6 + $0x48] sm:$0xf] %v5113
    %5130 = vst [vmem:[%s6 + $0x4c] sm:$0xf] %v5114
    %5131 = vst [vmem:[%s6 + $0x50] sm:$0xf] %v5115
    %5132 = vst [vmem:[%s6 + $0x54] sm:$0xf] %v5116
    %5133 = vst [vmem:[%s6 + $0x58] sm:$0xf] %v5117
    %5134 = vst [vmem:[%s6 + $0x5c] sm:$0xf] %v5118
    %5135 = vst [vmem:[%s6 + $0x60] sm:$0xf] %v5119
    %5136 = vst [vmem:[%s6 + $0x64] sm:$0xf] %v5120
    %5137 = vst [vmem:[%s6 + $0x68] sm:$0xf] %v5121
    %5138 = vst [vmem:[%s6 + $0x6c] sm:$0xf] %v5122
    %5139 = vst [vmem:[%s6 + $0x70] sm:$0xf] %v5123
    %5140 = vst [vmem:[%s6 + $0x74] sm:$0xf] %v5124
    %5141 = vst [vmem:[%s6 + $0x78] sm:$0xf] %v5125
    %5142 = vst [vmem:[%s6 + $0x7c] sm:$0xf] %v5126
    %v5143 = vld [vmem:[#allocation2 + $0x10] sm:$0xff]
    %v5144 = vpack.c.bf16 %v5143, %v5143
    %5145 = vmatpush.bf16.msra.mxu0 %v2501
    %5146 = vmatpush.bf16.msra.mxu0 %v2485
    %5147 = vmatpush.bf16.msra.mxu0 %v2469
    %5148 = vmatpush.bf16.msra.mxu0 %v2453
    %5149 = vmatpush.bf16.msra.mxu0 %v2437
    %5150 = vmatpush.bf16.msra.mxu0 %v2421
    %5151 = vmatpush.bf16.msra.mxu0 %v2405
    %5152 = vmatpush.bf16.msra.mxu0 %v2389
    %5153 = vmatmul.bf16.gmra.mxu0 %v5144
    %v5154 = vpop.f32.mrf.mxu0
    %v5155 = vadd.f32 0.0, %v5154
    %v5156 = vpop.f32.mrf.mxu0
    %5157 = vdwg.mxu0
    %5158 = vmatpush.bf16.msra.mxu0 %v2502
    %5159 = vmatpush.bf16.msra.mxu0 %v2486
    %5160 = vmatpush.bf16.msra.mxu0 %v2470
    %5161 = vmatpush.bf16.msra.mxu0 %v2454
    %5162 = vmatpush.bf16.msra.mxu0 %v2438
    %5163 = vmatpush.bf16.msra.mxu0 %v2422
    %5164 = vmatpush.bf16.msra.mxu0 %v2406
    %5165 = vmatpush.bf16.msra.mxu0 %v2390
    %5166 = vmatmul.bf16.gmra.mxu0 %v5144
    %v5167 = vpop.f32.mrf.mxu0
    %v5168 = vadd.f32 0.0, %v5167
    %v5169 = vpop.f32.mrf.mxu0
    %5170 = vdwg.mxu0
    %5171 = vmatpush.bf16.msra.mxu0 %v2503
    %5172 = vmatpush.bf16.msra.mxu0 %v2487
    %5173 = vmatpush.bf16.msra.mxu0 %v2471
    %5174 = vmatpush.bf16.msra.mxu0 %v2455
    %5175 = vmatpush.bf16.msra.mxu0 %v2439
    %5176 = vmatpush.bf16.msra.mxu0 %v2423
    %5177 = vmatpush.bf16.msra.mxu0 %v2407
    %5178 = vmatpush.bf16.msra.mxu0 %v2391
    %5179 = vmatmul.bf16.gmra.mxu0 %v5144
    %v5180 = vpop.f32.mrf.mxu0
    %v5181 = vadd.f32 0.0, %v5180
    %v5182 = vpop.f32.mrf.mxu0
    %5183 = vdwg.mxu0
    %5184 = vmatpush.bf16.msra.mxu0 %v2504
    %5185 = vmatpush.bf16.msra.mxu0 %v2488
    %5186 = vmatpush.bf16.msra.mxu0 %v2472
    %5187 = vmatpush.bf16.msra.mxu0 %v2456
    %5188 = vmatpush.bf16.msra.mxu0 %v2440
    %5189 = vmatpush.bf16.msra.mxu0 %v2424
    %5190 = vmatpush.bf16.msra.mxu0 %v2408
    %5191 = vmatpush.bf16.msra.mxu0 %v2392
    %5192 = vmatmul.bf16.gmra.mxu0 %v5144
    %v5193 = vpop.f32.mrf.mxu0
    %v5194 = vadd.f32 0.0, %v5193
    %v5195 = vpop.f32.mrf.mxu0
    %5196 = vdwg.mxu0
    %5197 = vmatpush.bf16.msra.mxu0 %v2505
    %5198 = vmatpush.bf16.msra.mxu0 %v2489
    %5199 = vmatpush.bf16.msra.mxu0 %v2473
    %5200 = vmatpush.bf16.msra.mxu0 %v2457
    %5201 = vmatpush.bf16.msra.mxu0 %v2441
    %5202 = vmatpush.bf16.msra.mxu0 %v2425
    %5203 = vmatpush.bf16.msra.mxu0 %v2409
    %5204 = vmatpush.bf16.msra.mxu0 %v2393
    %5205 = vmatmul.bf16.gmra.mxu0 %v5144
    %v5206 = vpop.f32.mrf.mxu0
    %v5207 = vadd.f32 0.0, %v5206
    %v5208 = vpop.f32.mrf.mxu0
    %5209 = vdwg.mxu0
    %5210 = vmatpush.bf16.msra.mxu0 %v2506
    %5211 = vmatpush.bf16.msra.mxu0 %v2490
    %5212 = vmatpush.bf16.msra.mxu0 %v2474
    %5213 = vmatpush.bf16.msra.mxu0 %v2458
    %5214 = vmatpush.bf16.msra.mxu0 %v2442
    %5215 = vmatpush.bf16.msra.mxu0 %v2426
    %5216 = vmatpush.bf16.msra.mxu0 %v2410
    %5217 = vmatpush.bf16.msra.mxu0 %v2394
    %5218 = vmatmul.bf16.gmra.mxu0 %v5144
    %v5219 = vpop.f32.mrf.mxu0
    %v5220 = vadd.f32 0.0, %v5219
    %v5221 = vpop.f32.mrf.mxu0
    %5222 = vdwg.mxu0
    %5223 = vmatpush.bf16.msra.mxu0 %v2507
    %5224 = vmatpush.bf16.msra.mxu0 %v2491
    %5225 = vmatpush.bf16.msra.mxu0 %v2475
    %5226 = vmatpush.bf16.msra.mxu0 %v2459
    %5227 = vmatpush.bf16.msra.mxu0 %v2443
    %5228 = vmatpush.bf16.msra.mxu0 %v2427
    %5229 = vmatpush.bf16.msra.mxu0 %v2411
    %5230 = vmatpush.bf16.msra.mxu0 %v2395
    %5231 = vmatmul.bf16.gmra.mxu0 %v5144
    %v5232 = vpop.f32.mrf.mxu0
    %v5233 = vadd.f32 0.0, %v5232
    %v5234 = vpop.f32.mrf.mxu0
    %5235 = vdwg.mxu0
    %5236 = vmatpush.bf16.msra.mxu0 %v2508
    %5237 = vmatpush.bf16.msra.mxu0 %v2492
    %5238 = vmatpush.bf16.msra.mxu0 %v2476
    %5239 = vmatpush.bf16.msra.mxu0 %v2460
    %5240 = vmatpush.bf16.msra.mxu0 %v2444
    %5241 = vmatpush.bf16.msra.mxu0 %v2428
    %5242 = vmatpush.bf16.msra.mxu0 %v2412
    %5243 = vmatpush.bf16.msra.mxu0 %v2396
    %5244 = vmatmul.bf16.gmra.mxu0 %v5144
    %v5245 = vpop.f32.mrf.mxu0
    %v5246 = vadd.f32 0.0, %v5245
    %v5247 = vpop.f32.mrf.mxu0
    %5248 = vdwg.mxu0
    %5249 = vmatpush.bf16.msra.mxu0 %v2509
    %5250 = vmatpush.bf16.msra.mxu0 %v2493
    %5251 = vmatpush.bf16.msra.mxu0 %v2477
    %5252 = vmatpush.bf16.msra.mxu0 %v2461
    %5253 = vmatpush.bf16.msra.mxu0 %v2445
    %5254 = vmatpush.bf16.msra.mxu0 %v2429
    %5255 = vmatpush.bf16.msra.mxu0 %v2413
    %5256 = vmatpush.bf16.msra.mxu0 %v2397
    %5257 = vmatmul.bf16.gmra.mxu0 %v5144
    %v5258 = vpop.f32.mrf.mxu0
    %v5259 = vadd.f32 0.0, %v5258
    %v5260 = vpop.f32.mrf.mxu0
    %5261 = vdwg.mxu0
    %5262 = vmatpush.bf16.msra.mxu0 %v2510
    %5263 = vmatpush.bf16.msra.mxu0 %v2494
    %5264 = vmatpush.bf16.msra.mxu0 %v2478
    %5265 = vmatpush.bf16.msra.mxu0 %v2462
    %5266 = vmatpush.bf16.msra.mxu0 %v2446
    %5267 = vmatpush.bf16.msra.mxu0 %v2430
    %5268 = vmatpush.bf16.msra.mxu0 %v2414
    %5269 = vmatpush.bf16.msra.mxu0 %v2398
    %5270 = vmatmul.bf16.gmra.mxu0 %v5144
    %v5271 = vpop.f32.mrf.mxu0
    %v5272 = vadd.f32 0.0, %v5271
    %v5273 = vpop.f32.mrf.mxu0
    %5274 = vdwg.mxu0
    %5275 = vmatpush.bf16.msra.mxu0 %v2511
    %5276 = vmatpush.bf16.msra.mxu0 %v2495
    %5277 = vmatpush.bf16.msra.mxu0 %v2479
    %5278 = vmatpush.bf16.msra.mxu0 %v2463
    %5279 = vmatpush.bf16.msra.mxu0 %v2447
    %5280 = vmatpush.bf16.msra.mxu0 %v2431
    %5281 = vmatpush.bf16.msra.mxu0 %v2415
    %5282 = vmatpush.bf16.msra.mxu0 %v2399
    %5283 = vmatmul.bf16.gmra.mxu0 %v5144
    %v5284 = vpop.f32.mrf.mxu0
    %v5285 = vadd.f32 0.0, %v5284
    %v5286 = vpop.f32.mrf.mxu0
    %5287 = vdwg.mxu0
    %5288 = vmatpush.bf16.msra.mxu0 %v2512
    %5289 = vmatpush.bf16.msra.mxu0 %v2496
    %5290 = vmatpush.bf16.msra.mxu0 %v2480
    %5291 = vmatpush.bf16.msra.mxu0 %v2464
    %5292 = vmatpush.bf16.msra.mxu0 %v2448
    %5293 = vmatpush.bf16.msra.mxu0 %v2432
    %5294 = vmatpush.bf16.msra.mxu0 %v2416
    %5295 = vmatpush.bf16.msra.mxu0 %v2400
    %5296 = vmatmul.bf16.gmra.mxu0 %v5144
    %v5297 = vpop.f32.mrf.mxu0
    %v5298 = vadd.f32 0.0, %v5297
    %v5299 = vpop.f32.mrf.mxu0
    %5300 = vdwg.mxu0
    %5301 = vmatpush.bf16.msra.mxu0 %v2513
    %5302 = vmatpush.bf16.msra.mxu0 %v2497
    %5303 = vmatpush.bf16.msra.mxu0 %v2481
    %5304 = vmatpush.bf16.msra.mxu0 %v2465
    %5305 = vmatpush.bf16.msra.mxu0 %v2449
    %5306 = vmatpush.bf16.msra.mxu0 %v2433
    %5307 = vmatpush.bf16.msra.mxu0 %v2417
    %5308 = vmatpush.bf16.msra.mxu0 %v2401
    %5309 = vmatmul.bf16.gmra.mxu0 %v5144
    %v5310 = vpop.f32.mrf.mxu0
    %v5311 = vadd.f32 0.0, %v5310
    %v5312 = vpop.f32.mrf.mxu0
    %5313 = vdwg.mxu0
    %5314 = vmatpush.bf16.msra.mxu0 %v2514
    %5315 = vmatpush.bf16.msra.mxu0 %v2498
    %5316 = vmatpush.bf16.msra.mxu0 %v2482
    %5317 = vmatpush.bf16.msra.mxu0 %v2466
    %5318 = vmatpush.bf16.msra.mxu0 %v2450
    %5319 = vmatpush.bf16.msra.mxu0 %v2434
    %5320 = vmatpush.bf16.msra.mxu0 %v2418
    %5321 = vmatpush.bf16.msra.mxu0 %v2402
    %5322 = vmatmul.bf16.gmra.mxu0 %v5144
    %v5323 = vpop.f32.mrf.mxu0
    %v5324 = vadd.f32 0.0, %v5323
    %v5325 = vpop.f32.mrf.mxu0
    %5326 = vdwg.mxu0
    %5327 = vmatpush.bf16.msra.mxu0 %v2515
    %5328 = vmatpush.bf16.msra.mxu0 %v2499
    %5329 = vmatpush.bf16.msra.mxu0 %v2483
    %5330 = vmatpush.bf16.msra.mxu0 %v2467
    %5331 = vmatpush.bf16.msra.mxu0 %v2451
    %5332 = vmatpush.bf16.msra.mxu0 %v2435
    %5333 = vmatpush.bf16.msra.mxu0 %v2419
    %5334 = vmatpush.bf16.msra.mxu0 %v2403
    %5335 = vmatmul.bf16.gmra.mxu0 %v5144
    %v5336 = vpop.f32.mrf.mxu0
    %v5337 = vadd.f32 0.0, %v5336
    %v5338 = vpop.f32.mrf.mxu0
    %5339 = vdwg.mxu0
    %5340 = vmatpush.bf16.msra.mxu0 %v2516
    %5341 = vmatpush.bf16.msra.mxu0 %v2500
    %5342 = vmatpush.bf16.msra.mxu0 %v2484
    %5343 = vmatpush.bf16.msra.mxu0 %v2468
    %5344 = vmatpush.bf16.msra.mxu0 %v2452
    %5345 = vmatpush.bf16.msra.mxu0 %v2436
    %5346 = vmatpush.bf16.msra.mxu0 %v2420
    %5347 = vmatpush.bf16.msra.mxu0 %v2404
    %5348 = vmatmul.bf16.gmra.mxu0 %v5144
    %v5349 = vpop.f32.mrf.mxu0
    %v5350 = vadd.f32 0.0, %v5349
    %v5351 = vpop.f32.mrf.mxu0
    %5352 = vdwg.mxu0
    %v5353 = vmul.f32 %v5155, %v4480
    %v5354 = vadd.f32 %v5353, %v4482
    %v5355 = vmax.f32 %v5354, 0.0
    %v5356 = vmul.f32 %v5168, %v4480
    %v5357 = vadd.f32 %v5356, %v4482
    %v5358 = vmax.f32 %v5357, 0.0
    %v5359 = vmul.f32 %v5181, %v4480
    %v5360 = vadd.f32 %v5359, %v4482
    %v5361 = vmax.f32 %v5360, 0.0
    %v5362 = vmul.f32 %v5194, %v4480
    %v5363 = vadd.f32 %v5362, %v4482
    %v5364 = vmax.f32 %v5363, 0.0
    %v5365 = vmul.f32 %v5207, %v4480
    %v5366 = vadd.f32 %v5365, %v4482
    %v5367 = vmax.f32 %v5366, 0.0
    %v5368 = vmul.f32 %v5220, %v4480
    %v5369 = vadd.f32 %v5368, %v4482
    %v5370 = vmax.f32 %v5369, 0.0
    %v5371 = vmul.f32 %v5233, %v4480
    %v5372 = vadd.f32 %v5371, %v4482
    %v5373 = vmax.f32 %v5372, 0.0
    %v5374 = vmul.f32 %v5246, %v4480
    %v5375 = vadd.f32 %v5374, %v4482
    %v5376 = vmax.f32 %v5375, 0.0
    %v5377 = vmul.f32 %v5259, %v4480
    %v5378 = vadd.f32 %v5377, %v4482
    %v5379 = vmax.f32 %v5378, 0.0
    %v5380 = vmul.f32 %v5272, %v4480
    %v5381 = vadd.f32 %v5380, %v4482
    %v5382 = vmax.f32 %v5381, 0.0
    %v5383 = vmul.f32 %v5285, %v4480
    %v5384 = vadd.f32 %v5383, %v4482
    %v5385 = vmax.f32 %v5384, 0.0
    %v5386 = vmul.f32 %v5298, %v4480
    %v5387 = vadd.f32 %v5386, %v4482
    %v5388 = vmax.f32 %v5387, 0.0
    %v5389 = vmul.f32 %v5311, %v4480
    %v5390 = vadd.f32 %v5389, %v4482
    %v5391 = vmax.f32 %v5390, 0.0
    %v5392 = vmul.f32 %v5324, %v4480
    %v5393 = vadd.f32 %v5392, %v4482
    %v5394 = vmax.f32 %v5393, 0.0
    %v5395 = vmul.f32 %v5337, %v4480
    %v5396 = vadd.f32 %v5395, %v4482
    %v5397 = vmax.f32 %v5396, 0.0
    %v5398 = vmul.f32 %v5350, %v4480
    %v5399 = vadd.f32 %v5398, %v4482
    %v5400 = vmax.f32 %v5399, 0.0
    %v5401 = vpack.c.bf16 %v5358, %v5355
    %v5402 = vpack.c.bf16 %v5364, %v5361
    %v5403 = vpack.c.bf16 %v5370, %v5367
    %v5404 = vpack.c.bf16 %v5376, %v5373
    %v5405 = vpack.c.bf16 %v5382, %v5379
    %v5406 = vpack.c.bf16 %v5388, %v5385
    %v5407 = vpack.c.bf16 %v5394, %v5391
    %v5408 = vpack.c.bf16 %v5400, %v5397
    %5409 = vmatpush.bf16.msra.mxu0 %v4578
    %5410 = vmatpush.bf16.msra.mxu0 %v4577
    %5411 = vmatpush.bf16.msra.mxu0 %v4576
    %5412 = vmatpush.bf16.msra.mxu0 %v4575
    %5413 = vmatpush.bf16.msra.mxu0 %v4574
    %5414 = vmatpush.bf16.msra.mxu0 %v4573
    %5415 = vmatpush.bf16.msra.mxu0 %v4572
    %5416 = vmatpush.bf16.msra.mxu0 %v4571
    %5417 = vmatmul.bf16.gmra.mxu0 %v5401
    %v5418 = vpop.f32.mrf.mxu0
    %v5419 = vadd.f32 %v4538, %v5418
    %v5420 = vpop.f32.mrf.mxu0
    %v5421 = vadd.f32 %v4538, %v5420
    %5422 = vmatmul.bf16.gmra.mxu0 %v5402
    %v5423 = vpop.f32.mrf.mxu0
    %v5424 = vadd.f32 %v4538, %v5423
    %v5425 = vpop.f32.mrf.mxu0
    %v5426 = vadd.f32 %v4538, %v5425
    %5427 = vmatmul.bf16.gmra.mxu0 %v5403
    %v5428 = vpop.f32.mrf.mxu0
    %v5429 = vadd.f32 %v4538, %v5428
    %v5430 = vpop.f32.mrf.mxu0
    %v5431 = vadd.f32 %v4538, %v5430
    %5432 = vmatmul.bf16.gmra.mxu0 %v5404
    %v5433 = vpop.f32.mrf.mxu0
    %v5434 = vadd.f32 %v4538, %v5433
    %v5435 = vpop.f32.mrf.mxu0
    %v5436 = vadd.f32 %v4538, %v5435
    %5437 = vmatmul.bf16.gmra.mxu0 %v5405
    %v5438 = vpop.f32.mrf.mxu0
    %v5439 = vadd.f32 %v4538, %v5438
    %v5440 = vpop.f32.mrf.mxu0
    %v5441 = vadd.f32 %v4538, %v5440
    %5442 = vmatmul.bf16.gmra.mxu0 %v5406
    %v5443 = vpop.f32.mrf.mxu0
    %v5444 = vadd.f32 %v4538, %v5443
    %v5445 = vpop.f32.mrf.mxu0
    %v5446 = vadd.f32 %v4538, %v5445
    %5447 = vmatmul.bf16.gmra.mxu0 %v5407
    %v5448 = vpop.f32.mrf.mxu0
    %v5449 = vadd.f32 %v4538, %v5448
    %v5450 = vpop.f32.mrf.mxu0
    %v5451 = vadd.f32 %v4538, %v5450
    %5452 = vmatmul.bf16.gmra.mxu0 %v5408
    %v5453 = vpop.f32.mrf.mxu0
    %v5454 = vadd.f32 %v4538, %v5453
    %v5455 = vpop.f32.mrf.mxu0
    %v5456 = vadd.f32 %v4538, %v5455
    %5457 = vdwg.mxu0
    %v5458 = vmul.f32 %v5419, 0.5
    %v5459 = vmul.f32 %v5421, 0.5
    %v5460 = vmul.f32 %v5424, 0.5
    %v5461 = vmul.f32 %v5426, 0.5
    %v5462 = vmul.f32 %v5429, 0.5
    %v5463 = vmul.f32 %v5431, 0.5
    %v5464 = vmul.f32 %v5434, 0.5
    %v5465 = vmul.f32 %v5436, 0.5
    %v5466 = vmul.f32 %v5439, 0.5
    %v5467 = vmul.f32 %v5441, 0.5
    %v5468 = vmul.f32 %v5444, 0.5
    %v5469 = vmul.f32 %v5446, 0.5
    %v5470 = vmul.f32 %v5449, 0.5
    %v5471 = vmul.f32 %v5451, 0.5
    %v5472 = vmul.f32 %v5454, 0.5
    %v5473 = vmul.f32 %v5456, 0.5
    %v5474 = vtanh.pop %v5458
    %v5475 = vtanh.pop %v5459
    %v5476 = vtanh.pop %v5460
    %v5477 = vtanh.pop %v5461
    %v5478 = vtanh.pop %v5462
    %v5479 = vtanh.pop %v5463
    %v5480 = vtanh.pop %v5464
    %v5481 = vtanh.pop %v5465
    %v5482 = vtanh.pop %v5466
    %v5483 = vtanh.pop %v5467
    %v5484 = vtanh.pop %v5468
    %v5485 = vtanh.pop %v5469
    %v5486 = vtanh.pop %v5470
    %v5487 = vtanh.pop %v5471
    %v5488 = vtanh.pop %v5472
    %v5489 = vtanh.pop %v5473
    %v5490 = vmul.f32 %v5474, 0.5
    %v5491 = vmul.f32 %v5475, 0.5
    %v5492 = vmul.f32 %v5476, 0.5
    %v5493 = vmul.f32 %v5477, 0.5
    %v5494 = vmul.f32 %v5478, 0.5
    %v5495 = vmul.f32 %v5479, 0.5
    %v5496 = vmul.f32 %v5480, 0.5
    %v5497 = vmul.f32 %v5481, 0.5
    %v5498 = vmul.f32 %v5482, 0.5
    %v5499 = vmul.f32 %v5483, 0.5
    %v5500 = vmul.f32 %v5484, 0.5
    %v5501 = vmul.f32 %v5485, 0.5
    %v5502 = vmul.f32 %v5486, 0.5
    %v5503 = vmul.f32 %v5487, 0.5
    %v5504 = vmul.f32 %v5488, 0.5
    %v5505 = vmul.f32 %v5489, 0.5
    %v5506 = vadd.f32 %v5490, 0.5
    %v5507 = vadd.f32 %v5491, 0.5
    %v5508 = vadd.f32 %v5492, 0.5
    %v5509 = vadd.f32 %v5493, 0.5
    %v5510 = vadd.f32 %v5494, 0.5
    %v5511 = vadd.f32 %v5495, 0.5
    %v5512 = vadd.f32 %v5496, 0.5
    %v5513 = vadd.f32 %v5497, 0.5
    %v5514 = vadd.f32 %v5498, 0.5
    %v5515 = vadd.f32 %v5499, 0.5
    %v5516 = vadd.f32 %v5500, 0.5
    %v5517 = vadd.f32 %v5501, 0.5
    %v5518 = vadd.f32 %v5502, 0.5
    %v5519 = vadd.f32 %v5503, 0.5
    %v5520 = vadd.f32 %v5504, 0.5
    %v5521 = vadd.f32 %v5505, 0.5
    %v5522 = vpack.c.bf16 %v5506, %v5506
    %v5523 = vpack.c.bf16 %v5507, %v5507
    %v5524 = vpack.c.bf16 %v5508, %v5508
    %v5525 = vpack.c.bf16 %v5509, %v5509
    %v5526 = vpack.c.bf16 %v5510, %v5510
    %v5527 = vpack.c.bf16 %v5511, %v5511
    %v5528 = vpack.c.bf16 %v5512, %v5512
    %v5529 = vpack.c.bf16 %v5513, %v5513
    %v5530 = vpack.c.bf16 %v5514, %v5514
    %v5531 = vpack.c.bf16 %v5515, %v5515
    %v5532 = vpack.c.bf16 %v5516, %v5516
    %v5533 = vpack.c.bf16 %v5517, %v5517
    %v5534 = vpack.c.bf16 %v5518, %v5518
    %v5535 = vpack.c.bf16 %v5519, %v5519
    %v5536 = vpack.c.bf16 %v5520, %v5520
    %v5537 = vpack.c.bf16 %v5521, %v5521
    %5538 = vst [vmem:[%s6 + $0x80] sm:$0xf] %v5522
    %5539 = vst [vmem:[%s6 + $0x84] sm:$0xf] %v5523
    %5540 = vst [vmem:[%s6 + $0x88] sm:$0xf] %v5524
    %5541 = vst [vmem:[%s6 + $0x8c] sm:$0xf] %v5525
    %5542 = vst [vmem:[%s6 + $0x90] sm:$0xf] %v5526
    %5543 = vst [vmem:[%s6 + $0x94] sm:$0xf] %v5527
    %5544 = vst [vmem:[%s6 + $0x98] sm:$0xf] %v5528
    %5545 = vst [vmem:[%s6 + $0x9c] sm:$0xf] %v5529
    %5546 = vst [vmem:[%s6 + $0xa0] sm:$0xf] %v5530
    %5547 = vst [vmem:[%s6 + $0xa4] sm:$0xf] %v5531
    %5548 = vst [vmem:[%s6 + $0xa8] sm:$0xf] %v5532
    %5549 = vst [vmem:[%s6 + $0xac] sm:$0xf] %v5533
    %5550 = vst [vmem:[%s6 + $0xb0] sm:$0xf] %v5534
    %5551 = vst [vmem:[%s6 + $0xb4] sm:$0xf] %v5535
    %5552 = vst [vmem:[%s6 + $0xb8] sm:$0xf] %v5536
    %5553 = vst [vmem:[%s6 + $0xbc] sm:$0xf] %v5537
    %v5554 = vld [vmem:[#allocation2 + $0x18] sm:$0xff]
    %v5555 = vpack.c.bf16 %v5554, %v5554
    %5556 = vmatpush.bf16.msra.mxu0 %v2501
    %5557 = vmatpush.bf16.msra.mxu0 %v2485
    %5558 = vmatpush.bf16.msra.mxu0 %v2469
    %5559 = vmatpush.bf16.msra.mxu0 %v2453
    %5560 = vmatpush.bf16.msra.mxu0 %v2437
    %5561 = vmatpush.bf16.msra.mxu0 %v2421
    %5562 = vmatpush.bf16.msra.mxu0 %v2405
    %5563 = vmatpush.bf16.msra.mxu0 %v2389
    %5564 = vmatmul.bf16.gmra.mxu0 %v5555
    %v5565 = vpop.f32.mrf.mxu0
    %v5566 = vadd.f32 0.0, %v5565
    %v5567 = vpop.f32.mrf.mxu0
    %5568 = vdwg.mxu0
    %5569 = vmatpush.bf16.msra.mxu0 %v2502
    %5570 = vmatpush.bf16.msra.mxu0 %v2486
    %5571 = vmatpush.bf16.msra.mxu0 %v2470
    %5572 = vmatpush.bf16.msra.mxu0 %v2454
    %5573 = vmatpush.bf16.msra.mxu0 %v2438
    %5574 = vmatpush.bf16.msra.mxu0 %v2422
    %5575 = vmatpush.bf16.msra.mxu0 %v2406
    %5576 = vmatpush.bf16.msra.mxu0 %v2390
    %5577 = vmatmul.bf16.gmra.mxu0 %v5555
    %v5578 = vpop.f32.mrf.mxu0
    %v5579 = vadd.f32 0.0, %v5578
    %v5580 = vpop.f32.mrf.mxu0
    %5581 = vdwg.mxu0
    %5582 = vmatpush.bf16.msra.mxu0 %v2503
    %5583 = vmatpush.bf16.msra.mxu0 %v2487
    %5584 = vmatpush.bf16.msra.mxu0 %v2471
    %5585 = vmatpush.bf16.msra.mxu0 %v2455
    %5586 = vmatpush.bf16.msra.mxu0 %v2439
    %5587 = vmatpush.bf16.msra.mxu0 %v2423
    %5588 = vmatpush.bf16.msra.mxu0 %v2407
    %5589 = vmatpush.bf16.msra.mxu0 %v2391
    %5590 = vmatmul.bf16.gmra.mxu0 %v5555
    %v5591 = vpop.f32.mrf.mxu0
    %v5592 = vadd.f32 0.0, %v5591
    %v5593 = vpop.f32.mrf.mxu0
    %5594 = vdwg.mxu0
    %5595 = vmatpush.bf16.msra.mxu0 %v2504
    %5596 = vmatpush.bf16.msra.mxu0 %v2488
    %5597 = vmatpush.bf16.msra.mxu0 %v2472
    %5598 = vmatpush.bf16.msra.mxu0 %v2456
    %5599 = vmatpush.bf16.msra.mxu0 %v2440
    %5600 = vmatpush.bf16.msra.mxu0 %v2424
    %5601 = vmatpush.bf16.msra.mxu0 %v2408
    %5602 = vmatpush.bf16.msra.mxu0 %v2392
    %5603 = vmatmul.bf16.gmra.mxu0 %v5555
    %v5604 = vpop.f32.mrf.mxu0
    %v5605 = vadd.f32 0.0, %v5604
    %v5606 = vpop.f32.mrf.mxu0
    %5607 = vdwg.mxu0
    %5608 = vmatpush.bf16.msra.mxu0 %v2505
    %5609 = vmatpush.bf16.msra.mxu0 %v2489
    %5610 = vmatpush.bf16.msra.mxu0 %v2473
    %5611 = vmatpush.bf16.msra.mxu0 %v2457
    %5612 = vmatpush.bf16.msra.mxu0 %v2441
    %5613 = vmatpush.bf16.msra.mxu0 %v2425
    %5614 = vmatpush.bf16.msra.mxu0 %v2409
    %5615 = vmatpush.bf16.msra.mxu0 %v2393
    %5616 = vmatmul.bf16.gmra.mxu0 %v5555
    %v5617 = vpop.f32.mrf.mxu0
    %v5618 = vadd.f32 0.0, %v5617
    %v5619 = vpop.f32.mrf.mxu0
    %5620 = vdwg.mxu0
    %5621 = vmatpush.bf16.msra.mxu0 %v2506
    %5622 = vmatpush.bf16.msra.mxu0 %v2490
    %5623 = vmatpush.bf16.msra.mxu0 %v2474
    %5624 = vmatpush.bf16.msra.mxu0 %v2458
    %5625 = vmatpush.bf16.msra.mxu0 %v2442
    %5626 = vmatpush.bf16.msra.mxu0 %v2426
    %5627 = vmatpush.bf16.msra.mxu0 %v2410
    %5628 = vmatpush.bf16.msra.mxu0 %v2394
    %5629 = vmatmul.bf16.gmra.mxu0 %v5555
    %v5630 = vpop.f32.mrf.mxu0
    %v5631 = vadd.f32 0.0, %v5630
    %v5632 = vpop.f32.mrf.mxu0
    %5633 = vdwg.mxu0
    %5634 = vmatpush.bf16.msra.mxu0 %v2507
    %5635 = vmatpush.bf16.msra.mxu0 %v2491
    %5636 = vmatpush.bf16.msra.mxu0 %v2475
    %5637 = vmatpush.bf16.msra.mxu0 %v2459
    %5638 = vmatpush.bf16.msra.mxu0 %v2443
    %5639 = vmatpush.bf16.msra.mxu0 %v2427
    %5640 = vmatpush.bf16.msra.mxu0 %v2411
    %5641 = vmatpush.bf16.msra.mxu0 %v2395
    %5642 = vmatmul.bf16.gmra.mxu0 %v5555
    %v5643 = vpop.f32.mrf.mxu0
    %v5644 = vadd.f32 0.0, %v5643
    %v5645 = vpop.f32.mrf.mxu0
    %5646 = vdwg.mxu0
    %5647 = vmatpush.bf16.msra.mxu0 %v2508
    %5648 = vmatpush.bf16.msra.mxu0 %v2492
    %5649 = vmatpush.bf16.msra.mxu0 %v2476
    %5650 = vmatpush.bf16.msra.mxu0 %v2460
    %5651 = vmatpush.bf16.msra.mxu0 %v2444
    %5652 = vmatpush.bf16.msra.mxu0 %v2428
    %5653 = vmatpush.bf16.msra.mxu0 %v2412
    %5654 = vmatpush.bf16.msra.mxu0 %v2396
    %5655 = vmatmul.bf16.gmra.mxu0 %v5555
    %v5656 = vpop.f32.mrf.mxu0
    %v5657 = vadd.f32 0.0, %v5656
    %v5658 = vpop.f32.mrf.mxu0
    %5659 = vdwg.mxu0
    %5660 = vmatpush.bf16.msra.mxu0 %v2509
    %5661 = vmatpush.bf16.msra.mxu0 %v2493
    %5662 = vmatpush.bf16.msra.mxu0 %v2477
    %5663 = vmatpush.bf16.msra.mxu0 %v2461
    %5664 = vmatpush.bf16.msra.mxu0 %v2445
    %5665 = vmatpush.bf16.msra.mxu0 %v2429
    %5666 = vmatpush.bf16.msra.mxu0 %v2413
    %5667 = vmatpush.bf16.msra.mxu0 %v2397
    %5668 = vmatmul.bf16.gmra.mxu0 %v5555
    %v5669 = vpop.f32.mrf.mxu0
    %v5670 = vadd.f32 0.0, %v5669
    %v5671 = vpop.f32.mrf.mxu0
    %5672 = vdwg.mxu0
    %5673 = vmatpush.bf16.msra.mxu0 %v2510
    %5674 = vmatpush.bf16.msra.mxu0 %v2494
    %5675 = vmatpush.bf16.msra.mxu0 %v2478
    %5676 = vmatpush.bf16.msra.mxu0 %v2462
    %5677 = vmatpush.bf16.msra.mxu0 %v2446
    %5678 = vmatpush.bf16.msra.mxu0 %v2430
    %5679 = vmatpush.bf16.msra.mxu0 %v2414
    %5680 = vmatpush.bf16.msra.mxu0 %v2398
    %5681 = vmatmul.bf16.gmra.mxu0 %v5555
    %v5682 = vpop.f32.mrf.mxu0
    %v5683 = vadd.f32 0.0, %v5682
    %v5684 = vpop.f32.mrf.mxu0
    %5685 = vdwg.mxu0
    %5686 = vmatpush.bf16.msra.mxu0 %v2511
    %5687 = vmatpush.bf16.msra.mxu0 %v2495
    %5688 = vmatpush.bf16.msra.mxu0 %v2479
    %5689 = vmatpush.bf16.msra.mxu0 %v2463
    %5690 = vmatpush.bf16.msra.mxu0 %v2447
    %5691 = vmatpush.bf16.msra.mxu0 %v2431
    %5692 = vmatpush.bf16.msra.mxu0 %v2415
    %5693 = vmatpush.bf16.msra.mxu0 %v2399
    %5694 = vmatmul.bf16.gmra.mxu0 %v5555
    %v5695 = vpop.f32.mrf.mxu0
    %v5696 = vadd.f32 0.0, %v5695
    %v5697 = vpop.f32.mrf.mxu0
    %5698 = vdwg.mxu0
    %5699 = vmatpush.bf16.msra.mxu0 %v2512
    %5700 = vmatpush.bf16.msra.mxu0 %v2496
    %5701 = vmatpush.bf16.msra.mxu0 %v2480
    %5702 = vmatpush.bf16.msra.mxu0 %v2464
    %5703 = vmatpush.bf16.msra.mxu0 %v2448
    %5704 = vmatpush.bf16.msra.mxu0 %v2432
    %5705 = vmatpush.bf16.msra.mxu0 %v2416
    %5706 = vmatpush.bf16.msra.mxu0 %v2400
    %5707 = vmatmul.bf16.gmra.mxu0 %v5555
    %v5708 = vpop.f32.mrf.mxu0
    %v5709 = vadd.f32 0.0, %v5708
    %v5710 = vpop.f32.mrf.mxu0
    %5711 = vdwg.mxu0
    %5712 = vmatpush.bf16.msra.mxu0 %v2513
    %5713 = vmatpush.bf16.msra.mxu0 %v2497
    %5714 = vmatpush.bf16.msra.mxu0 %v2481
    %5715 = vmatpush.bf16.msra.mxu0 %v2465
    %5716 = vmatpush.bf16.msra.mxu0 %v2449
    %5717 = vmatpush.bf16.msra.mxu0 %v2433
    %5718 = vmatpush.bf16.msra.mxu0 %v2417
    %5719 = vmatpush.bf16.msra.mxu0 %v2401
    %5720 = vmatmul.bf16.gmra.mxu0 %v5555
    %v5721 = vpop.f32.mrf.mxu0
    %v5722 = vadd.f32 0.0, %v5721
    %v5723 = vpop.f32.mrf.mxu0
    %5724 = vdwg.mxu0
    %5725 = vmatpush.bf16.msra.mxu0 %v2514
    %5726 = vmatpush.bf16.msra.mxu0 %v2498
    %5727 = vmatpush.bf16.msra.mxu0 %v2482
    %5728 = vmatpush.bf16.msra.mxu0 %v2466
    %5729 = vmatpush.bf16.msra.mxu0 %v2450
    %5730 = vmatpush.bf16.msra.mxu0 %v2434
    %5731 = vmatpush.bf16.msra.mxu0 %v2418
    %5732 = vmatpush.bf16.msra.mxu0 %v2402
    %5733 = vmatmul.bf16.gmra.mxu0 %v5555
    %v5734 = vpop.f32.mrf.mxu0
    %v5735 = vadd.f32 0.0, %v5734
    %v5736 = vpop.f32.mrf.mxu0
    %5737 = vdwg.mxu0
    %5738 = vmatpush.bf16.msra.mxu0 %v2515
    %5739 = vmatpush.bf16.msra.mxu0 %v2499
    %5740 = vmatpush.bf16.msra.mxu0 %v2483
    %5741 = vmatpush.bf16.msra.mxu0 %v2467
    %5742 = vmatpush.bf16.msra.mxu0 %v2451
    %5743 = vmatpush.bf16.msra.mxu0 %v2435
    %5744 = vmatpush.bf16.msra.mxu0 %v2419
    %5745 = vmatpush.bf16.msra.mxu0 %v2403
    %5746 = vmatmul.bf16.gmra.mxu0 %v5555
    %v5747 = vpop.f32.mrf.mxu0
    %v5748 = vadd.f32 0.0, %v5747
    %v5749 = vpop.f32.mrf.mxu0
    %5750 = vdwg.mxu0
    %5751 = vmatpush.bf16.msra.mxu0 %v2516
    %5752 = vmatpush.bf16.msra.mxu0 %v2500
    %5753 = vmatpush.bf16.msra.mxu0 %v2484
    %5754 = vmatpush.bf16.msra.mxu0 %v2468
    %5755 = vmatpush.bf16.msra.mxu0 %v2452
    %5756 = vmatpush.bf16.msra.mxu0 %v2436
    %5757 = vmatpush.bf16.msra.mxu0 %v2420
    %5758 = vmatpush.bf16.msra.mxu0 %v2404
    %5759 = vmatmul.bf16.gmra.mxu0 %v5555
    %v5760 = vpop.f32.mrf.mxu0
    %v5761 = vadd.f32 0.0, %v5760
    %v5762 = vpop.f32.mrf.mxu0
    %5763 = vdwg.mxu0
    %v5764 = vmul.f32 %v5566, %v4480
    %v5765 = vadd.f32 %v5764, %v4482
    %v5766 = vmax.f32 %v5765, 0.0
    %v5767 = vmul.f32 %v5579, %v4480
    %v5768 = vadd.f32 %v5767, %v4482
    %v5769 = vmax.f32 %v5768, 0.0
    %v5770 = vmul.f32 %v5592, %v4480
    %v5771 = vadd.f32 %v5770, %v4482
    %v5772 = vmax.f32 %v5771, 0.0
    %v5773 = vmul.f32 %v5605, %v4480
    %v5774 = vadd.f32 %v5773, %v4482
    %v5775 = vmax.f32 %v5774, 0.0
    %v5776 = vmul.f32 %v5618, %v4480
    %v5777 = vadd.f32 %v5776, %v4482
    %v5778 = vmax.f32 %v5777, 0.0
    %v5779 = vmul.f32 %v5631, %v4480
    %v5780 = vadd.f32 %v5779, %v4482
    %v5781 = vmax.f32 %v5780, 0.0
    %v5782 = vmul.f32 %v5644, %v4480
    %v5783 = vadd.f32 %v5782, %v4482
    %v5784 = vmax.f32 %v5783, 0.0
    %v5785 = vmul.f32 %v5657, %v4480
    %v5786 = vadd.f32 %v5785, %v4482
    %v5787 = vmax.f32 %v5786, 0.0
    %v5788 = vmul.f32 %v5670, %v4480
    %v5789 = vadd.f32 %v5788, %v4482
    %v5790 = vmax.f32 %v5789, 0.0
    %v5791 = vmul.f32 %v5683, %v4480
    %v5792 = vadd.f32 %v5791, %v4482
    %v5793 = vmax.f32 %v5792, 0.0
    %v5794 = vmul.f32 %v5696, %v4480
    %v5795 = vadd.f32 %v5794, %v4482
    %v5796 = vmax.f32 %v5795, 0.0
    %v5797 = vmul.f32 %v5709, %v4480
    %v5798 = vadd.f32 %v5797, %v4482
    %v5799 = vmax.f32 %v5798, 0.0
    %v5800 = vmul.f32 %v5722, %v4480
    %v5801 = vadd.f32 %v5800, %v4482
    %v5802 = vmax.f32 %v5801, 0.0
    %v5803 = vmul.f32 %v5735, %v4480
    %v5804 = vadd.f32 %v5803, %v4482
    %v5805 = vmax.f32 %v5804, 0.0
    %v5806 = vmul.f32 %v5748, %v4480
    %v5807 = vadd.f32 %v5806, %v4482
    %v5808 = vmax.f32 %v5807, 0.0
    %v5809 = vmul.f32 %v5761, %v4480
    %v5810 = vadd.f32 %v5809, %v4482
    %v5811 = vmax.f32 %v5810, 0.0
    %v5812 = vpack.c.bf16 %v5769, %v5766
    %v5813 = vpack.c.bf16 %v5775, %v5772
    %v5814 = vpack.c.bf16 %v5781, %v5778
    %v5815 = vpack.c.bf16 %v5787, %v5784
    %v5816 = vpack.c.bf16 %v5793, %v5790
    %v5817 = vpack.c.bf16 %v5799, %v5796
    %v5818 = vpack.c.bf16 %v5805, %v5802
    %v5819 = vpack.c.bf16 %v5811, %v5808
    %5820 = vmatpush.bf16.msra.mxu0 %v4578
    %5821 = vmatpush.bf16.msra.mxu0 %v4577
    %5822 = vmatpush.bf16.msra.mxu0 %v4576
    %5823 = vmatpush.bf16.msra.mxu0 %v4575
    %5824 = vmatpush.bf16.msra.mxu0 %v4574
    %5825 = vmatpush.bf16.msra.mxu0 %v4573
    %5826 = vmatpush.bf16.msra.mxu0 %v4572
    %5827 = vmatpush.bf16.msra.mxu0 %v4571
    %5828 = vmatmul.bf16.gmra.mxu0 %v5812
    %v5829 = vpop.f32.mrf.mxu0
    %v5830 = vadd.f32 %v4538, %v5829
    %v5831 = vpop.f32.mrf.mxu0
    %v5832 = vadd.f32 %v4538, %v5831
    %5833 = vmatmul.bf16.gmra.mxu0 %v5813
    %v5834 = vpop.f32.mrf.mxu0
    %v5835 = vadd.f32 %v4538, %v5834
    %v5836 = vpop.f32.mrf.mxu0
    %v5837 = vadd.f32 %v4538, %v5836
    %5838 = vmatmul.bf16.gmra.mxu0 %v5814
    %v5839 = vpop.f32.mrf.mxu0
    %v5840 = vadd.f32 %v4538, %v5839
    %v5841 = vpop.f32.mrf.mxu0
    %v5842 = vadd.f32 %v4538, %v5841
    %5843 = vmatmul.bf16.gmra.mxu0 %v5815
    %v5844 = vpop.f32.mrf.mxu0
    %v5845 = vadd.f32 %v4538, %v5844
    %v5846 = vpop.f32.mrf.mxu0
    %v5847 = vadd.f32 %v4538, %v5846
    %5848 = vmatmul.bf16.gmra.mxu0 %v5816
    %v5849 = vpop.f32.mrf.mxu0
    %v5850 = vadd.f32 %v4538, %v5849
    %v5851 = vpop.f32.mrf.mxu0
    %v5852 = vadd.f32 %v4538, %v5851
    %5853 = vmatmul.bf16.gmra.mxu0 %v5817
    %v5854 = vpop.f32.mrf.mxu0
    %v5855 = vadd.f32 %v4538, %v5854
    %v5856 = vpop.f32.mrf.mxu0
    %v5857 = vadd.f32 %v4538, %v5856
    %5858 = vmatmul.bf16.gmra.mxu0 %v5818
    %v5859 = vpop.f32.mrf.mxu0
    %v5860 = vadd.f32 %v4538, %v5859
    %v5861 = vpop.f32.mrf.mxu0
    %v5862 = vadd.f32 %v4538, %v5861
    %5863 = vmatmul.bf16.gmra.mxu0 %v5819
    %v5864 = vpop.f32.mrf.mxu0
    %v5865 = vadd.f32 %v4538, %v5864
    %v5866 = vpop.f32.mrf.mxu0
    %v5867 = vadd.f32 %v4538, %v5866
    %5868 = vdwg.mxu0
    %v5869 = vmul.f32 %v5830, 0.5
    %v5870 = vmul.f32 %v5832, 0.5
    %v5871 = vmul.f32 %v5835, 0.5
    %v5872 = vmul.f32 %v5837, 0.5
    %v5873 = vmul.f32 %v5840, 0.5
    %v5874 = vmul.f32 %v5842, 0.5
    %v5875 = vmul.f32 %v5845, 0.5
    %v5876 = vmul.f32 %v5847, 0.5
    %v5877 = vmul.f32 %v5850, 0.5
    %v5878 = vmul.f32 %v5852, 0.5
    %v5879 = vmul.f32 %v5855, 0.5
    %v5880 = vmul.f32 %v5857, 0.5
    %v5881 = vmul.f32 %v5860, 0.5
    %v5882 = vmul.f32 %v5862, 0.5
    %v5883 = vmul.f32 %v5865, 0.5
    %v5884 = vmul.f32 %v5867, 0.5
    %v5885 = vtanh.pop %v5869
    %v5886 = vtanh.pop %v5870
    %v5887 = vtanh.pop %v5871
    %v5888 = vtanh.pop %v5872
    %v5889 = vtanh.pop %v5873
    %v5890 = vtanh.pop %v5874
    %v5891 = vtanh.pop %v5875
    %v5892 = vtanh.pop %v5876
    %v5893 = vtanh.pop %v5877
    %v5894 = vtanh.pop %v5878
    %v5895 = vtanh.pop %v5879
    %v5896 = vtanh.pop %v5880
    %v5897 = vtanh.pop %v5881
    %v5898 = vtanh.pop %v5882
    %v5899 = vtanh.pop %v5883
    %v5900 = vtanh.pop %v5884
    %v5901 = vmul.f32 %v5885, 0.5
    %v5902 = vmul.f32 %v5886, 0.5
    %v5903 = vmul.f32 %v5887, 0.5
    %v5904 = vmul.f32 %v5888, 0.5
    %v5905 = vmul.f32 %v5889, 0.5
    %v5906 = vmul.f32 %v5890, 0.5
    %v5907 = vmul.f32 %v5891, 0.5
    %v5908 = vmul.f32 %v5892, 0.5
    %v5909 = vmul.f32 %v5893, 0.5
    %v5910 = vmul.f32 %v5894, 0.5
    %v5911 = vmul.f32 %v5895, 0.5
    %v5912 = vmul.f32 %v5896, 0.5
    %v5913 = vmul.f32 %v5897, 0.5
    %v5914 = vmul.f32 %v5898, 0.5
    %v5915 = vmul.f32 %v5899, 0.5
    %v5916 = vmul.f32 %v5900, 0.5
    %v5917 = vadd.f32 %v5901, 0.5
    %v5918 = vadd.f32 %v5902, 0.5
    %v5919 = vadd.f32 %v5903, 0.5
    %v5920 = vadd.f32 %v5904, 0.5
    %v5921 = vadd.f32 %v5905, 0.5
    %v5922 = vadd.f32 %v5906, 0.5
    %v5923 = vadd.f32 %v5907, 0.5
    %v5924 = vadd.f32 %v5908, 0.5
    %v5925 = vadd.f32 %v5909, 0.5
    %v5926 = vadd.f32 %v5910, 0.5
    %v5927 = vadd.f32 %v5911, 0.5
    %v5928 = vadd.f32 %v5912, 0.5
    %v5929 = vadd.f32 %v5913, 0.5
    %v5930 = vadd.f32 %v5914, 0.5
    %v5931 = vadd.f32 %v5915, 0.5
    %v5932 = vadd.f32 %v5916, 0.5
    %v5933 = vpack.c.bf16 %v5917, %v5917
    %v5934 = vpack.c.bf16 %v5918, %v5918
    %v5935 = vpack.c.bf16 %v5919, %v5919
    %v5936 = vpack.c.bf16 %v5920, %v5920
    %v5937 = vpack.c.bf16 %v5921, %v5921
    %v5938 = vpack.c.bf16 %v5922, %v5922
    %v5939 = vpack.c.bf16 %v5923, %v5923
    %v5940 = vpack.c.bf16 %v5924, %v5924
    %v5941 = vpack.c.bf16 %v5925, %v5925
    %v5942 = vpack.c.bf16 %v5926, %v5926
    %v5943 = vpack.c.bf16 %v5927, %v5927
    %v5944 = vpack.c.bf16 %v5928, %v5928
    %v5945 = vpack.c.bf16 %v5929, %v5929
    %v5946 = vpack.c.bf16 %v5930, %v5930
    %v5947 = vpack.c.bf16 %v5931, %v5931
    %v5948 = vpack.c.bf16 %v5932, %v5932
    %5949 = vst [vmem:[%s6 + $0xc0] sm:$0xf] %v5933
    %5950 = vst [vmem:[%s6 + $0xc4] sm:$0xf] %v5934
    %5951 = vst [vmem:[%s6 + $0xc8] sm:$0xf] %v5935
    %5952 = vst [vmem:[%s6 + $0xcc] sm:$0xf] %v5936
    %5953 = vst [vmem:[%s6 + $0xd0] sm:$0xf] %v5937
    %5954 = vst [vmem:[%s6 + $0xd4] sm:$0xf] %v5938
    %5955 = vst [vmem:[%s6 + $0xd8] sm:$0xf] %v5939
    %5956 = vst [vmem:[%s6 + $0xdc] sm:$0xf] %v5940
    %5957 = vst [vmem:[%s6 + $0xe0] sm:$0xf] %v5941
    %5958 = vst [vmem:[%s6 + $0xe4] sm:$0xf] %v5942
    %5959 = vst [vmem:[%s6 + $0xe8] sm:$0xf] %v5943
    %5960 = vst [vmem:[%s6 + $0xec] sm:$0xf] %v5944
    %5961 = vst [vmem:[%s6 + $0xf0] sm:$0xf] %v5945
    %5962 = vst [vmem:[%s6 + $0xf4] sm:$0xf] %v5946
    %5963 = vst [vmem:[%s6 + $0xf8] sm:$0xf] %v5947
    %5964 = vst [vmem:[%s6 + $0xfc] sm:$0xf] %v5948
    %v5965 = vld [vmem:[#allocation2 + $0x20] sm:$0xff]
    %v5966 = vpack.c.bf16 %v5965, %v5965
    %5967 = vmatpush.bf16.msra.mxu0 %v2501
    %5968 = vmatpush.bf16.msra.mxu0 %v2485
    %5969 = vmatpush.bf16.msra.mxu0 %v2469
    %5970 = vmatpush.bf16.msra.mxu0 %v2453
    %5971 = vmatpush.bf16.msra.mxu0 %v2437
    %5972 = vmatpush.bf16.msra.mxu0 %v2421
    %5973 = vmatpush.bf16.msra.mxu0 %v2405
    %5974 = vmatpush.bf16.msra.mxu0 %v2389
    %5975 = vmatmul.bf16.gmra.mxu0 %v5966
    %v5976 = vpop.f32.mrf.mxu0
    %v5977 = vadd.f32 0.0, %v5976
    %v5978 = vpop.f32.mrf.mxu0
    %5979 = vdwg.mxu0
    %5980 = vmatpush.bf16.msra.mxu0 %v2502
    %5981 = vmatpush.bf16.msra.mxu0 %v2486
    %5982 = vmatpush.bf16.msra.mxu0 %v2470
    %5983 = vmatpush.bf16.msra.mxu0 %v2454
    %5984 = vmatpush.bf16.msra.mxu0 %v2438
    %5985 = vmatpush.bf16.msra.mxu0 %v2422
    %5986 = vmatpush.bf16.msra.mxu0 %v2406
    %5987 = vmatpush.bf16.msra.mxu0 %v2390
    %5988 = vmatmul.bf16.gmra.mxu0 %v5966
    %v5989 = vpop.f32.mrf.mxu0
    %v5990 = vadd.f32 0.0, %v5989
    %v5991 = vpop.f32.mrf.mxu0
    %5992 = vdwg.mxu0
    %5993 = vmatpush.bf16.msra.mxu0 %v2503
    %5994 = vmatpush.bf16.msra.mxu0 %v2487
    %5995 = vmatpush.bf16.msra.mxu0 %v2471
    %5996 = vmatpush.bf16.msra.mxu0 %v2455
    %5997 = vmatpush.bf16.msra.mxu0 %v2439
    %5998 = vmatpush.bf16.msra.mxu0 %v2423
    %5999 = vmatpush.bf16.msra.mxu0 %v2407
    %6000 = vmatpush.bf16.msra.mxu0 %v2391
    %6001 = vmatmul.bf16.gmra.mxu0 %v5966
    %v6002 = vpop.f32.mrf.mxu0
    %v6003 = vadd.f32 0.0, %v6002
    %v6004 = vpop.f32.mrf.mxu0
    %6005 = vdwg.mxu0
    %6006 = vmatpush.bf16.msra.mxu0 %v2504
    %6007 = vmatpush.bf16.msra.mxu0 %v2488
    %6008 = vmatpush.bf16.msra.mxu0 %v2472
    %6009 = vmatpush.bf16.msra.mxu0 %v2456
    %6010 = vmatpush.bf16.msra.mxu0 %v2440
    %6011 = vmatpush.bf16.msra.mxu0 %v2424
    %6012 = vmatpush.bf16.msra.mxu0 %v2408
    %6013 = vmatpush.bf16.msra.mxu0 %v2392
    %6014 = vmatmul.bf16.gmra.mxu0 %v5966
    %v6015 = vpop.f32.mrf.mxu0
    %v6016 = vadd.f32 0.0, %v6015
    %v6017 = vpop.f32.mrf.mxu0
    %6018 = vdwg.mxu0
    %6019 = vmatpush.bf16.msra.mxu0 %v2505
    %6020 = vmatpush.bf16.msra.mxu0 %v2489
    %6021 = vmatpush.bf16.msra.mxu0 %v2473
    %6022 = vmatpush.bf16.msra.mxu0 %v2457
    %6023 = vmatpush.bf16.msra.mxu0 %v2441
    %6024 = vmatpush.bf16.msra.mxu0 %v2425
    %6025 = vmatpush.bf16.msra.mxu0 %v2409
    %6026 = vmatpush.bf16.msra.mxu0 %v2393
    %6027 = vmatmul.bf16.gmra.mxu0 %v5966
    %v6028 = vpop.f32.mrf.mxu0
    %v6029 = vadd.f32 0.0, %v6028
    %v6030 = vpop.f32.mrf.mxu0
    %6031 = vdwg.mxu0
    %6032 = vmatpush.bf16.msra.mxu0 %v2506
    %6033 = vmatpush.bf16.msra.mxu0 %v2490
    %6034 = vmatpush.bf16.msra.mxu0 %v2474
    %6035 = vmatpush.bf16.msra.mxu0 %v2458
    %6036 = vmatpush.bf16.msra.mxu0 %v2442
    %6037 = vmatpush.bf16.msra.mxu0 %v2426
    %6038 = vmatpush.bf16.msra.mxu0 %v2410
    %6039 = vmatpush.bf16.msra.mxu0 %v2394
    %6040 = vmatmul.bf16.gmra.mxu0 %v5966
    %v6041 = vpop.f32.mrf.mxu0
    %v6042 = vadd.f32 0.0, %v6041
    %v6043 = vpop.f32.mrf.mxu0
    %6044 = vdwg.mxu0
    %6045 = vmatpush.bf16.msra.mxu0 %v2507
    %6046 = vmatpush.bf16.msra.mxu0 %v2491
    %6047 = vmatpush.bf16.msra.mxu0 %v2475
    %6048 = vmatpush.bf16.msra.mxu0 %v2459
    %6049 = vmatpush.bf16.msra.mxu0 %v2443
    %6050 = vmatpush.bf16.msra.mxu0 %v2427
    %6051 = vmatpush.bf16.msra.mxu0 %v2411
    %6052 = vmatpush.bf16.msra.mxu0 %v2395
    %6053 = vmatmul.bf16.gmra.mxu0 %v5966
    %v6054 = vpop.f32.mrf.mxu0
    %v6055 = vadd.f32 0.0, %v6054
    %v6056 = vpop.f32.mrf.mxu0
    %6057 = vdwg.mxu0
    %6058 = vmatpush.bf16.msra.mxu0 %v2508
    %6059 = vmatpush.bf16.msra.mxu0 %v2492
    %6060 = vmatpush.bf16.msra.mxu0 %v2476
    %6061 = vmatpush.bf16.msra.mxu0 %v2460
    %6062 = vmatpush.bf16.msra.mxu0 %v2444
    %6063 = vmatpush.bf16.msra.mxu0 %v2428
    %6064 = vmatpush.bf16.msra.mxu0 %v2412
    %6065 = vmatpush.bf16.msra.mxu0 %v2396
    %6066 = vmatmul.bf16.gmra.mxu0 %v5966
    %v6067 = vpop.f32.mrf.mxu0
    %v6068 = vadd.f32 0.0, %v6067
    %v6069 = vpop.f32.mrf.mxu0
    %6070 = vdwg.mxu0
    %6071 = vmatpush.bf16.msra.mxu0 %v2509
    %6072 = vmatpush.bf16.msra.mxu0 %v2493
    %6073 = vmatpush.bf16.msra.mxu0 %v2477
    %6074 = vmatpush.bf16.msra.mxu0 %v2461
    %6075 = vmatpush.bf16.msra.mxu0 %v2445
    %6076 = vmatpush.bf16.msra.mxu0 %v2429
    %6077 = vmatpush.bf16.msra.mxu0 %v2413
    %6078 = vmatpush.bf16.msra.mxu0 %v2397
    %6079 = vmatmul.bf16.gmra.mxu0 %v5966
    %v6080 = vpop.f32.mrf.mxu0
    %v6081 = vadd.f32 0.0, %v6080
    %v6082 = vpop.f32.mrf.mxu0
    %6083 = vdwg.mxu0
    %6084 = vmatpush.bf16.msra.mxu0 %v2510
    %6085 = vmatpush.bf16.msra.mxu0 %v2494
    %6086 = vmatpush.bf16.msra.mxu0 %v2478
    %6087 = vmatpush.bf16.msra.mxu0 %v2462
    %6088 = vmatpush.bf16.msra.mxu0 %v2446
    %6089 = vmatpush.bf16.msra.mxu0 %v2430
    %6090 = vmatpush.bf16.msra.mxu0 %v2414
    %6091 = vmatpush.bf16.msra.mxu0 %v2398
    %6092 = vmatmul.bf16.gmra.mxu0 %v5966
    %v6093 = vpop.f32.mrf.mxu0
    %v6094 = vadd.f32 0.0, %v6093
    %v6095 = vpop.f32.mrf.mxu0
    %6096 = vdwg.mxu0
    %6097 = vmatpush.bf16.msra.mxu0 %v2511
    %6098 = vmatpush.bf16.msra.mxu0 %v2495
    %6099 = vmatpush.bf16.msra.mxu0 %v2479
    %6100 = vmatpush.bf16.msra.mxu0 %v2463
    %6101 = vmatpush.bf16.msra.mxu0 %v2447
    %6102 = vmatpush.bf16.msra.mxu0 %v2431
    %6103 = vmatpush.bf16.msra.mxu0 %v2415
    %6104 = vmatpush.bf16.msra.mxu0 %v2399
    %6105 = vmatmul.bf16.gmra.mxu0 %v5966
    %v6106 = vpop.f32.mrf.mxu0
    %v6107 = vadd.f32 0.0, %v6106
    %v6108 = vpop.f32.mrf.mxu0
    %6109 = vdwg.mxu0
    %6110 = vmatpush.bf16.msra.mxu0 %v2512
    %6111 = vmatpush.bf16.msra.mxu0 %v2496
    %6112 = vmatpush.bf16.msra.mxu0 %v2480
    %6113 = vmatpush.bf16.msra.mxu0 %v2464
    %6114 = vmatpush.bf16.msra.mxu0 %v2448
    %6115 = vmatpush.bf16.msra.mxu0 %v2432
    %6116 = vmatpush.bf16.msra.mxu0 %v2416
    %6117 = vmatpush.bf16.msra.mxu0 %v2400
    %6118 = vmatmul.bf16.gmra.mxu0 %v5966
    %v6119 = vpop.f32.mrf.mxu0
    %v6120 = vadd.f32 0.0, %v6119
    %v6121 = vpop.f32.mrf.mxu0
    %6122 = vdwg.mxu0
    %6123 = vmatpush.bf16.msra.mxu0 %v2513
    %6124 = vmatpush.bf16.msra.mxu0 %v2497
    %6125 = vmatpush.bf16.msra.mxu0 %v2481
    %6126 = vmatpush.bf16.msra.mxu0 %v2465
    %6127 = vmatpush.bf16.msra.mxu0 %v2449
    %6128 = vmatpush.bf16.msra.mxu0 %v2433
    %6129 = vmatpush.bf16.msra.mxu0 %v2417
    %6130 = vmatpush.bf16.msra.mxu0 %v2401
    %6131 = vmatmul.bf16.gmra.mxu0 %v5966
    %v6132 = vpop.f32.mrf.mxu0
    %v6133 = vadd.f32 0.0, %v6132
    %v6134 = vpop.f32.mrf.mxu0
    %6135 = vdwg.mxu0
    %6136 = vmatpush.bf16.msra.mxu0 %v2514
    %6137 = vmatpush.bf16.msra.mxu0 %v2498
    %6138 = vmatpush.bf16.msra.mxu0 %v2482
    %6139 = vmatpush.bf16.msra.mxu0 %v2466
    %6140 = vmatpush.bf16.msra.mxu0 %v2450
    %6141 = vmatpush.bf16.msra.mxu0 %v2434
    %6142 = vmatpush.bf16.msra.mxu0 %v2418
    %6143 = vmatpush.bf16.msra.mxu0 %v2402
    %6144 = vmatmul.bf16.gmra.mxu0 %v5966
    %v6145 = vpop.f32.mrf.mxu0
    %v6146 = vadd.f32 0.0, %v6145
    %v6147 = vpop.f32.mrf.mxu0
    %6148 = vdwg.mxu0
    %6149 = vmatpush.bf16.msra.mxu0 %v2515
    %6150 = vmatpush.bf16.msra.mxu0 %v2499
    %6151 = vmatpush.bf16.msra.mxu0 %v2483
    %6152 = vmatpush.bf16.msra.mxu0 %v2467
    %6153 = vmatpush.bf16.msra.mxu0 %v2451
    %6154 = vmatpush.bf16.msra.mxu0 %v2435
    %6155 = vmatpush.bf16.msra.mxu0 %v2419
    %6156 = vmatpush.bf16.msra.mxu0 %v2403
    %6157 = vmatmul.bf16.gmra.mxu0 %v5966
    %v6158 = vpop.f32.mrf.mxu0
    %v6159 = vadd.f32 0.0, %v6158
    %v6160 = vpop.f32.mrf.mxu0
    %6161 = vdwg.mxu0
    %6162 = vmatpush.bf16.msra.mxu0 %v2516
    %6163 = vmatpush.bf16.msra.mxu0 %v2500
    %6164 = vmatpush.bf16.msra.mxu0 %v2484
    %6165 = vmatpush.bf16.msra.mxu0 %v2468
    %6166 = vmatpush.bf16.msra.mxu0 %v2452
    %6167 = vmatpush.bf16.msra.mxu0 %v2436
    %6168 = vmatpush.bf16.msra.mxu0 %v2420
    %6169 = vmatpush.bf16.msra.mxu0 %v2404
    %6170 = vmatmul.bf16.gmra.mxu0 %v5966
    %v6171 = vpop.f32.mrf.mxu0
    %v6172 = vadd.f32 0.0, %v6171
    %v6173 = vpop.f32.mrf.mxu0
    %6174 = vdwg.mxu0
    %v6175 = vmul.f32 %v5977, %v4480
    %v6176 = vadd.f32 %v6175, %v4482
    %v6177 = vmax.f32 %v6176, 0.0
    %v6178 = vmul.f32 %v5990, %v4480
    %v6179 = vadd.f32 %v6178, %v4482
    %v6180 = vmax.f32 %v6179, 0.0
    %v6181 = vmul.f32 %v6003, %v4480
    %v6182 = vadd.f32 %v6181, %v4482
    %v6183 = vmax.f32 %v6182, 0.0
    %v6184 = vmul.f32 %v6016, %v4480
    %v6185 = vadd.f32 %v6184, %v4482
    %v6186 = vmax.f32 %v6185, 0.0
    %v6187 = vmul.f32 %v6029, %v4480
    %v6188 = vadd.f32 %v6187, %v4482
    %v6189 = vmax.f32 %v6188, 0.0
    %v6190 = vmul.f32 %v6042, %v4480
    %v6191 = vadd.f32 %v6190, %v4482
    %v6192 = vmax.f32 %v6191, 0.0
    %v6193 = vmul.f32 %v6055, %v4480
    %v6194 = vadd.f32 %v6193, %v4482
    %v6195 = vmax.f32 %v6194, 0.0
    %v6196 = vmul.f32 %v6068, %v4480
    %v6197 = vadd.f32 %v6196, %v4482
    %v6198 = vmax.f32 %v6197, 0.0
    %v6199 = vmul.f32 %v6081, %v4480
    %v6200 = vadd.f32 %v6199, %v4482
    %v6201 = vmax.f32 %v6200, 0.0
    %v6202 = vmul.f32 %v6094, %v4480
    %v6203 = vadd.f32 %v6202, %v4482
    %v6204 = vmax.f32 %v6203, 0.0
    %v6205 = vmul.f32 %v6107, %v4480
    %v6206 = vadd.f32 %v6205, %v4482
    %v6207 = vmax.f32 %v6206, 0.0
    %v6208 = vmul.f32 %v6120, %v4480
    %v6209 = vadd.f32 %v6208, %v4482
    %v6210 = vmax.f32 %v6209, 0.0
    %v6211 = vmul.f32 %v6133, %v4480
    %v6212 = vadd.f32 %v6211, %v4482
    %v6213 = vmax.f32 %v6212, 0.0
    %v6214 = vmul.f32 %v6146, %v4480
    %v6215 = vadd.f32 %v6214, %v4482
    %v6216 = vmax.f32 %v6215, 0.0
    %v6217 = vmul.f32 %v6159, %v4480
    %v6218 = vadd.f32 %v6217, %v4482
    %v6219 = vmax.f32 %v6218, 0.0
    %v6220 = vmul.f32 %v6172, %v4480
    %v6221 = vadd.f32 %v6220, %v4482
    %v6222 = vmax.f32 %v6221, 0.0
    %v6223 = vpack.c.bf16 %v6180, %v6177
    %v6224 = vpack.c.bf16 %v6186, %v6183
    %v6225 = vpack.c.bf16 %v6192, %v6189
    %v6226 = vpack.c.bf16 %v6198, %v6195
    %v6227 = vpack.c.bf16 %v6204, %v6201
    %v6228 = vpack.c.bf16 %v6210, %v6207
    %v6229 = vpack.c.bf16 %v6216, %v6213
    %v6230 = vpack.c.bf16 %v6222, %v6219
    %6231 = vmatpush.bf16.msra.mxu0 %v4578
    %6232 = vmatpush.bf16.msra.mxu0 %v4577
    %6233 = vmatpush.bf16.msra.mxu0 %v4576
    %6234 = vmatpush.bf16.msra.mxu0 %v4575
    %6235 = vmatpush.bf16.msra.mxu0 %v4574
    %6236 = vmatpush.bf16.msra.mxu0 %v4573
    %6237 = vmatpush.bf16.msra.mxu0 %v4572
    %6238 = vmatpush.bf16.msra.mxu0 %v4571
    %6239 = vmatmul.bf16.gmra.mxu0 %v6223
    %v6240 = vpop.f32.mrf.mxu0
    %v6241 = vadd.f32 %v4538, %v6240
    %v6242 = vpop.f32.mrf.mxu0
    %v6243 = vadd.f32 %v4538, %v6242
    %6244 = vmatmul.bf16.gmra.mxu0 %v6224
    %v6245 = vpop.f32.mrf.mxu0
    %v6246 = vadd.f32 %v4538, %v6245
    %v6247 = vpop.f32.mrf.mxu0
    %v6248 = vadd.f32 %v4538, %v6247
    %6249 = vmatmul.bf16.gmra.mxu0 %v6225
    %v6250 = vpop.f32.mrf.mxu0
    %v6251 = vadd.f32 %v4538, %v6250
    %v6252 = vpop.f32.mrf.mxu0
    %v6253 = vadd.f32 %v4538, %v6252
    %6254 = vmatmul.bf16.gmra.mxu0 %v6226
    %v6255 = vpop.f32.mrf.mxu0
    %v6256 = vadd.f32 %v4538, %v6255
    %v6257 = vpop.f32.mrf.mxu0
    %v6258 = vadd.f32 %v4538, %v6257
    %6259 = vmatmul.bf16.gmra.mxu0 %v6227
    %v6260 = vpop.f32.mrf.mxu0
    %v6261 = vadd.f32 %v4538, %v6260
    %v6262 = vpop.f32.mrf.mxu0
    %v6263 = vadd.f32 %v4538, %v6262
    %6264 = vmatmul.bf16.gmra.mxu0 %v6228
    %v6265 = vpop.f32.mrf.mxu0
    %v6266 = vadd.f32 %v4538, %v6265
    %v6267 = vpop.f32.mrf.mxu0
    %v6268 = vadd.f32 %v4538, %v6267
    %6269 = vmatmul.bf16.gmra.mxu0 %v6229
    %v6270 = vpop.f32.mrf.mxu0
    %v6271 = vadd.f32 %v4538, %v6270
    %v6272 = vpop.f32.mrf.mxu0
    %v6273 = vadd.f32 %v4538, %v6272
    %6274 = vmatmul.bf16.gmra.mxu0 %v6230
    %v6275 = vpop.f32.mrf.mxu0
    %v6276 = vadd.f32 %v4538, %v6275
    %v6277 = vpop.f32.mrf.mxu0
    %v6278 = vadd.f32 %v4538, %v6277
    %6279 = vdwg.mxu0
    %v6280 = vmul.f32 %v6241, 0.5
    %v6281 = vmul.f32 %v6243, 0.5
    %v6282 = vmul.f32 %v6246, 0.5
    %v6283 = vmul.f32 %v6248, 0.5
    %v6284 = vmul.f32 %v6251, 0.5
    %v6285 = vmul.f32 %v6253, 0.5
    %v6286 = vmul.f32 %v6256, 0.5
    %v6287 = vmul.f32 %v6258, 0.5
    %v6288 = vmul.f32 %v6261, 0.5
    %v6289 = vmul.f32 %v6263, 0.5
    %v6290 = vmul.f32 %v6266, 0.5
    %v6291 = vmul.f32 %v6268, 0.5
    %v6292 = vmul.f32 %v6271, 0.5
    %v6293 = vmul.f32 %v6273, 0.5
    %v6294 = vmul.f32 %v6276, 0.5
    %v6295 = vmul.f32 %v6278, 0.5
    %v6296 = vtanh.pop %v6280
    %v6297 = vtanh.pop %v6281
    %v6298 = vtanh.pop %v6282
    %v6299 = vtanh.pop %v6283
    %v6300 = vtanh.pop %v6284
    %v6301 = vtanh.pop %v6285
    %v6302 = vtanh.pop %v6286
    %v6303 = vtanh.pop %v6287
    %v6304 = vtanh.pop %v6288
    %v6305 = vtanh.pop %v6289
    %v6306 = vtanh.pop %v6290
    %v6307 = vtanh.pop %v6291
    %v6308 = vtanh.pop %v6292
    %v6309 = vtanh.pop %v6293
    %v6310 = vtanh.pop %v6294
    %v6311 = vtanh.pop %v6295
    %v6312 = vmul.f32 %v6296, 0.5
    %v6313 = vmul.f32 %v6297, 0.5
    %v6314 = vmul.f32 %v6298, 0.5
    %v6315 = vmul.f32 %v6299, 0.5
    %v6316 = vmul.f32 %v6300, 0.5
    %v6317 = vmul.f32 %v6301, 0.5
    %v6318 = vmul.f32 %v6302, 0.5
    %v6319 = vmul.f32 %v6303, 0.5
    %v6320 = vmul.f32 %v6304, 0.5
    %v6321 = vmul.f32 %v6305, 0.5
    %v6322 = vmul.f32 %v6306, 0.5
    %v6323 = vmul.f32 %v6307, 0.5
    %v6324 = vmul.f32 %v6308, 0.5
    %v6325 = vmul.f32 %v6309, 0.5
    %v6326 = vmul.f32 %v6310, 0.5
    %v6327 = vmul.f32 %v6311, 0.5
    %v6328 = vadd.f32 %v6312, 0.5
    %v6329 = vadd.f32 %v6313, 0.5
    %v6330 = vadd.f32 %v6314, 0.5
    %v6331 = vadd.f32 %v6315, 0.5
    %v6332 = vadd.f32 %v6316, 0.5
    %v6333 = vadd.f32 %v6317, 0.5
    %v6334 = vadd.f32 %v6318, 0.5
    %v6335 = vadd.f32 %v6319, 0.5
    %v6336 = vadd.f32 %v6320, 0.5
    %v6337 = vadd.f32 %v6321, 0.5
    %v6338 = vadd.f32 %v6322, 0.5
    %v6339 = vadd.f32 %v6323, 0.5
    %v6340 = vadd.f32 %v6324, 0.5
    %v6341 = vadd.f32 %v6325, 0.5
    %v6342 = vadd.f32 %v6326, 0.5
    %v6343 = vadd.f32 %v6327, 0.5
    %v6344 = vpack.c.bf16 %v6328, %v6328
    %v6345 = vpack.c.bf16 %v6329, %v6329
    %v6346 = vpack.c.bf16 %v6330, %v6330
    %v6347 = vpack.c.bf16 %v6331, %v6331
    %v6348 = vpack.c.bf16 %v6332, %v6332
    %v6349 = vpack.c.bf16 %v6333, %v6333
    %v6350 = vpack.c.bf16 %v6334, %v6334
    %v6351 = vpack.c.bf16 %v6335, %v6335
    %v6352 = vpack.c.bf16 %v6336, %v6336
    %v6353 = vpack.c.bf16 %v6337, %v6337
    %v6354 = vpack.c.bf16 %v6338, %v6338
    %v6355 = vpack.c.bf16 %v6339, %v6339
    %v6356 = vpack.c.bf16 %v6340, %v6340
    %v6357 = vpack.c.bf16 %v6341, %v6341
    %v6358 = vpack.c.bf16 %v6342, %v6342
    %v6359 = vpack.c.bf16 %v6343, %v6343
    %6360 = vst [vmem:[%s6 + $0x100] sm:$0xf] %v6344
    %6361 = vst [vmem:[%s6 + $0x104] sm:$0xf] %v6345
    %6362 = vst [vmem:[%s6 + $0x108] sm:$0xf] %v6346
    %6363 = vst [vmem:[%s6 + $0x10c] sm:$0xf] %v6347
    %6364 = vst [vmem:[%s6 + $0x110] sm:$0xf] %v6348
    %6365 = vst [vmem:[%s6 + $0x114] sm:$0xf] %v6349
    %6366 = vst [vmem:[%s6 + $0x118] sm:$0xf] %v6350
    %6367 = vst [vmem:[%s6 + $0x11c] sm:$0xf] %v6351
    %6368 = vst [vmem:[%s6 + $0x120] sm:$0xf] %v6352
    %6369 = vst [vmem:[%s6 + $0x124] sm:$0xf] %v6353
    %6370 = vst [vmem:[%s6 + $0x128] sm:$0xf] %v6354
    %6371 = vst [vmem:[%s6 + $0x12c] sm:$0xf] %v6355
    %6372 = vst [vmem:[%s6 + $0x130] sm:$0xf] %v6356
    %6373 = vst [vmem:[%s6 + $0x134] sm:$0xf] %v6357
    %6374 = vst [vmem:[%s6 + $0x138] sm:$0xf] %v6358
    %6375 = vst [vmem:[%s6 + $0x13c] sm:$0xf] %v6359
    %v6376 = vld [vmem:[#allocation2 + $0x28] sm:$0xff]
    %v6377 = vpack.c.bf16 %v6376, %v6376
    %6378 = vmatpush.bf16.msra.mxu0 %v2501
    %6379 = vmatpush.bf16.msra.mxu0 %v2485
    %6380 = vmatpush.bf16.msra.mxu0 %v2469
    %6381 = vmatpush.bf16.msra.mxu0 %v2453
    %6382 = vmatpush.bf16.msra.mxu0 %v2437
    %6383 = vmatpush.bf16.msra.mxu0 %v2421
    %6384 = vmatpush.bf16.msra.mxu0 %v2405
    %6385 = vmatpush.bf16.msra.mxu0 %v2389
    %6386 = vmatmul.bf16.gmra.mxu0 %v6377
    %v6387 = vpop.f32.mrf.mxu0
    %v6388 = vadd.f32 0.0, %v6387
    %v6389 = vpop.f32.mrf.mxu0
    %6390 = vdwg.mxu0
    %6391 = vmatpush.bf16.msra.mxu0 %v2502
    %6392 = vmatpush.bf16.msra.mxu0 %v2486
    %6393 = vmatpush.bf16.msra.mxu0 %v2470
    %6394 = vmatpush.bf16.msra.mxu0 %v2454
    %6395 = vmatpush.bf16.msra.mxu0 %v2438
    %6396 = vmatpush.bf16.msra.mxu0 %v2422
    %6397 = vmatpush.bf16.msra.mxu0 %v2406
    %6398 = vmatpush.bf16.msra.mxu0 %v2390
    %6399 = vmatmul.bf16.gmra.mxu0 %v6377
    %v6400 = vpop.f32.mrf.mxu0
    %v6401 = vadd.f32 0.0, %v6400
    %v6402 = vpop.f32.mrf.mxu0
    %6403 = vdwg.mxu0
    %6404 = vmatpush.bf16.msra.mxu0 %v2503
    %6405 = vmatpush.bf16.msra.mxu0 %v2487
    %6406 = vmatpush.bf16.msra.mxu0 %v2471
    %6407 = vmatpush.bf16.msra.mxu0 %v2455
    %6408 = vmatpush.bf16.msra.mxu0 %v2439
    %6409 = vmatpush.bf16.msra.mxu0 %v2423
    %6410 = vmatpush.bf16.msra.mxu0 %v2407
    %6411 = vmatpush.bf16.msra.mxu0 %v2391
    %6412 = vmatmul.bf16.gmra.mxu0 %v6377
    %v6413 = vpop.f32.mrf.mxu0
    %v6414 = vadd.f32 0.0, %v6413
    %v6415 = vpop.f32.mrf.mxu0
    %6416 = vdwg.mxu0
    %6417 = vmatpush.bf16.msra.mxu0 %v2504
    %6418 = vmatpush.bf16.msra.mxu0 %v2488
    %6419 = vmatpush.bf16.msra.mxu0 %v2472
    %6420 = vmatpush.bf16.msra.mxu0 %v2456
    %6421 = vmatpush.bf16.msra.mxu0 %v2440
    %6422 = vmatpush.bf16.msra.mxu0 %v2424
    %6423 = vmatpush.bf16.msra.mxu0 %v2408
    %6424 = vmatpush.bf16.msra.mxu0 %v2392
    %6425 = vmatmul.bf16.gmra.mxu0 %v6377
    %v6426 = vpop.f32.mrf.mxu0
    %v6427 = vadd.f32 0.0, %v6426
    %v6428 = vpop.f32.mrf.mxu0
    %6429 = vdwg.mxu0
    %6430 = vmatpush.bf16.msra.mxu0 %v2505
    %6431 = vmatpush.bf16.msra.mxu0 %v2489
    %6432 = vmatpush.bf16.msra.mxu0 %v2473
    %6433 = vmatpush.bf16.msra.mxu0 %v2457
    %6434 = vmatpush.bf16.msra.mxu0 %v2441
    %6435 = vmatpush.bf16.msra.mxu0 %v2425
    %6436 = vmatpush.bf16.msra.mxu0 %v2409
    %6437 = vmatpush.bf16.msra.mxu0 %v2393
    %6438 = vmatmul.bf16.gmra.mxu0 %v6377
    %v6439 = vpop.f32.mrf.mxu0
    %v6440 = vadd.f32 0.0, %v6439
    %v6441 = vpop.f32.mrf.mxu0
    %6442 = vdwg.mxu0
    %6443 = vmatpush.bf16.msra.mxu0 %v2506
    %6444 = vmatpush.bf16.msra.mxu0 %v2490
    %6445 = vmatpush.bf16.msra.mxu0 %v2474
    %6446 = vmatpush.bf16.msra.mxu0 %v2458
    %6447 = vmatpush.bf16.msra.mxu0 %v2442
    %6448 = vmatpush.bf16.msra.mxu0 %v2426
    %6449 = vmatpush.bf16.msra.mxu0 %v2410
    %6450 = vmatpush.bf16.msra.mxu0 %v2394
    %6451 = vmatmul.bf16.gmra.mxu0 %v6377
    %v6452 = vpop.f32.mrf.mxu0
    %v6453 = vadd.f32 0.0, %v6452
    %v6454 = vpop.f32.mrf.mxu0
    %6455 = vdwg.mxu0
    %6456 = vmatpush.bf16.msra.mxu0 %v2507
    %6457 = vmatpush.bf16.msra.mxu0 %v2491
    %6458 = vmatpush.bf16.msra.mxu0 %v2475
    %6459 = vmatpush.bf16.msra.mxu0 %v2459
    %6460 = vmatpush.bf16.msra.mxu0 %v2443
    %6461 = vmatpush.bf16.msra.mxu0 %v2427
    %6462 = vmatpush.bf16.msra.mxu0 %v2411
    %6463 = vmatpush.bf16.msra.mxu0 %v2395
    %6464 = vmatmul.bf16.gmra.mxu0 %v6377
    %v6465 = vpop.f32.mrf.mxu0
    %v6466 = vadd.f32 0.0, %v6465
    %v6467 = vpop.f32.mrf.mxu0
    %6468 = vdwg.mxu0
    %6469 = vmatpush.bf16.msra.mxu0 %v2508
    %6470 = vmatpush.bf16.msra.mxu0 %v2492
    %6471 = vmatpush.bf16.msra.mxu0 %v2476
    %6472 = vmatpush.bf16.msra.mxu0 %v2460
    %6473 = vmatpush.bf16.msra.mxu0 %v2444
    %6474 = vmatpush.bf16.msra.mxu0 %v2428
    %6475 = vmatpush.bf16.msra.mxu0 %v2412
    %6476 = vmatpush.bf16.msra.mxu0 %v2396
    %6477 = vmatmul.bf16.gmra.mxu0 %v6377
    %v6478 = vpop.f32.mrf.mxu0
    %v6479 = vadd.f32 0.0, %v6478
    %v6480 = vpop.f32.mrf.mxu0
    %6481 = vdwg.mxu0
    %6482 = vmatpush.bf16.msra.mxu0 %v2509
    %6483 = vmatpush.bf16.msra.mxu0 %v2493
    %6484 = vmatpush.bf16.msra.mxu0 %v2477
    %6485 = vmatpush.bf16.msra.mxu0 %v2461
    %6486 = vmatpush.bf16.msra.mxu0 %v2445
    %6487 = vmatpush.bf16.msra.mxu0 %v2429
    %6488 = vmatpush.bf16.msra.mxu0 %v2413
    %6489 = vmatpush.bf16.msra.mxu0 %v2397
    %6490 = vmatmul.bf16.gmra.mxu0 %v6377
    %v6491 = vpop.f32.mrf.mxu0
    %v6492 = vadd.f32 0.0, %v6491
    %v6493 = vpop.f32.mrf.mxu0
    %6494 = vdwg.mxu0
    %6495 = vmatpush.bf16.msra.mxu0 %v2510
    %6496 = vmatpush.bf16.msra.mxu0 %v2494
    %6497 = vmatpush.bf16.msra.mxu0 %v2478
    %6498 = vmatpush.bf16.msra.mxu0 %v2462
    %6499 = vmatpush.bf16.msra.mxu0 %v2446
    %6500 = vmatpush.bf16.msra.mxu0 %v2430
    %6501 = vmatpush.bf16.msra.mxu0 %v2414
    %6502 = vmatpush.bf16.msra.mxu0 %v2398
    %6503 = vmatmul.bf16.gmra.mxu0 %v6377
    %v6504 = vpop.f32.mrf.mxu0
    %v6505 = vadd.f32 0.0, %v6504
    %v6506 = vpop.f32.mrf.mxu0
    %6507 = vdwg.mxu0
    %6508 = vmatpush.bf16.msra.mxu0 %v2511
    %6509 = vmatpush.bf16.msra.mxu0 %v2495
    %6510 = vmatpush.bf16.msra.mxu0 %v2479
    %6511 = vmatpush.bf16.msra.mxu0 %v2463
    %6512 = vmatpush.bf16.msra.mxu0 %v2447
    %6513 = vmatpush.bf16.msra.mxu0 %v2431
    %6514 = vmatpush.bf16.msra.mxu0 %v2415
    %6515 = vmatpush.bf16.msra.mxu0 %v2399
    %6516 = vmatmul.bf16.gmra.mxu0 %v6377
    %v6517 = vpop.f32.mrf.mxu0
    %v6518 = vadd.f32 0.0, %v6517
    %v6519 = vpop.f32.mrf.mxu0
    %6520 = vdwg.mxu0
    %6521 = vmatpush.bf16.msra.mxu0 %v2512
    %6522 = vmatpush.bf16.msra.mxu0 %v2496
    %6523 = vmatpush.bf16.msra.mxu0 %v2480
    %6524 = vmatpush.bf16.msra.mxu0 %v2464
    %6525 = vmatpush.bf16.msra.mxu0 %v2448
    %6526 = vmatpush.bf16.msra.mxu0 %v2432
    %6527 = vmatpush.bf16.msra.mxu0 %v2416
    %6528 = vmatpush.bf16.msra.mxu0 %v2400
    %6529 = vmatmul.bf16.gmra.mxu0 %v6377
    %v6530 = vpop.f32.mrf.mxu0
    %v6531 = vadd.f32 0.0, %v6530
    %v6532 = vpop.f32.mrf.mxu0
    %6533 = vdwg.mxu0
    %6534 = vmatpush.bf16.msra.mxu0 %v2513
    %6535 = vmatpush.bf16.msra.mxu0 %v2497
    %6536 = vmatpush.bf16.msra.mxu0 %v2481
    %6537 = vmatpush.bf16.msra.mxu0 %v2465
    %6538 = vmatpush.bf16.msra.mxu0 %v2449
    %6539 = vmatpush.bf16.msra.mxu0 %v2433
    %6540 = vmatpush.bf16.msra.mxu0 %v2417
    %6541 = vmatpush.bf16.msra.mxu0 %v2401
    %6542 = vmatmul.bf16.gmra.mxu0 %v6377
    %v6543 = vpop.f32.mrf.mxu0
    %v6544 = vadd.f32 0.0, %v6543
    %v6545 = vpop.f32.mrf.mxu0
    %6546 = vdwg.mxu0
    %6547 = vmatpush.bf16.msra.mxu0 %v2514
    %6548 = vmatpush.bf16.msra.mxu0 %v2498
    %6549 = vmatpush.bf16.msra.mxu0 %v2482
    %6550 = vmatpush.bf16.msra.mxu0 %v2466
    %6551 = vmatpush.bf16.msra.mxu0 %v2450
    %6552 = vmatpush.bf16.msra.mxu0 %v2434
    %6553 = vmatpush.bf16.msra.mxu0 %v2418
    %6554 = vmatpush.bf16.msra.mxu0 %v2402
    %6555 = vmatmul.bf16.gmra.mxu0 %v6377
    %v6556 = vpop.f32.mrf.mxu0
    %v6557 = vadd.f32 0.0, %v6556
    %v6558 = vpop.f32.mrf.mxu0
    %6559 = vdwg.mxu0
    %6560 = vmatpush.bf16.msra.mxu0 %v2515
    %6561 = vmatpush.bf16.msra.mxu0 %v2499
    %6562 = vmatpush.bf16.msra.mxu0 %v2483
    %6563 = vmatpush.bf16.msra.mxu0 %v2467
    %6564 = vmatpush.bf16.msra.mxu0 %v2451
    %6565 = vmatpush.bf16.msra.mxu0 %v2435
    %6566 = vmatpush.bf16.msra.mxu0 %v2419
    %6567 = vmatpush.bf16.msra.mxu0 %v2403
    %6568 = vmatmul.bf16.gmra.mxu0 %v6377
    %v6569 = vpop.f32.mrf.mxu0
    %v6570 = vadd.f32 0.0, %v6569
    %v6571 = vpop.f32.mrf.mxu0
    %6572 = vdwg.mxu0
    %6573 = vmatpush.bf16.msra.mxu0 %v2516
    %6574 = vmatpush.bf16.msra.mxu0 %v2500
    %6575 = vmatpush.bf16.msra.mxu0 %v2484
    %6576 = vmatpush.bf16.msra.mxu0 %v2468
    %6577 = vmatpush.bf16.msra.mxu0 %v2452
    %6578 = vmatpush.bf16.msra.mxu0 %v2436
    %6579 = vmatpush.bf16.msra.mxu0 %v2420
    %6580 = vmatpush.bf16.msra.mxu0 %v2404
    %6581 = vmatmul.bf16.gmra.mxu0 %v6377
    %v6582 = vpop.f32.mrf.mxu0
    %v6583 = vadd.f32 0.0, %v6582
    %v6584 = vpop.f32.mrf.mxu0
    %6585 = vdwg.mxu0
    %v6586 = vmul.f32 %v6388, %v4480
    %v6587 = vadd.f32 %v6586, %v4482
    %v6588 = vmax.f32 %v6587, 0.0
    %v6589 = vmul.f32 %v6401, %v4480
    %v6590 = vadd.f32 %v6589, %v4482
    %v6591 = vmax.f32 %v6590, 0.0
    %v6592 = vmul.f32 %v6414, %v4480
    %v6593 = vadd.f32 %v6592, %v4482
    %v6594 = vmax.f32 %v6593, 0.0
    %v6595 = vmul.f32 %v6427, %v4480
    %v6596 = vadd.f32 %v6595, %v4482
    %v6597 = vmax.f32 %v6596, 0.0
    %v6598 = vmul.f32 %v6440, %v4480
    %v6599 = vadd.f32 %v6598, %v4482
    %v6600 = vmax.f32 %v6599, 0.0
    %v6601 = vmul.f32 %v6453, %v4480
    %v6602 = vadd.f32 %v6601, %v4482
    %v6603 = vmax.f32 %v6602, 0.0
    %v6604 = vmul.f32 %v6466, %v4480
    %v6605 = vadd.f32 %v6604, %v4482
    %v6606 = vmax.f32 %v6605, 0.0
    %v6607 = vmul.f32 %v6479, %v4480
    %v6608 = vadd.f32 %v6607, %v4482
    %v6609 = vmax.f32 %v6608, 0.0
    %v6610 = vmul.f32 %v6492, %v4480
    %v6611 = vadd.f32 %v6610, %v4482
    %v6612 = vmax.f32 %v6611, 0.0
    %v6613 = vmul.f32 %v6505, %v4480
    %v6614 = vadd.f32 %v6613, %v4482
    %v6615 = vmax.f32 %v6614, 0.0
    %v6616 = vmul.f32 %v6518, %v4480
    %v6617 = vadd.f32 %v6616, %v4482
    %v6618 = vmax.f32 %v6617, 0.0
    %v6619 = vmul.f32 %v6531, %v4480
    %v6620 = vadd.f32 %v6619, %v4482
    %v6621 = vmax.f32 %v6620, 0.0
    %v6622 = vmul.f32 %v6544, %v4480
    %v6623 = vadd.f32 %v6622, %v4482
    %v6624 = vmax.f32 %v6623, 0.0
    %v6625 = vmul.f32 %v6557, %v4480
    %v6626 = vadd.f32 %v6625, %v4482
    %v6627 = vmax.f32 %v6626, 0.0
    %v6628 = vmul.f32 %v6570, %v4480
    %v6629 = vadd.f32 %v6628, %v4482
    %v6630 = vmax.f32 %v6629, 0.0
    %v6631 = vmul.f32 %v6583, %v4480
    %v6632 = vadd.f32 %v6631, %v4482
    %v6633 = vmax.f32 %v6632, 0.0
    %v6634 = vpack.c.bf16 %v6591, %v6588
    %v6635 = vpack.c.bf16 %v6597, %v6594
    %v6636 = vpack.c.bf16 %v6603, %v6600
    %v6637 = vpack.c.bf16 %v6609, %v6606
    %v6638 = vpack.c.bf16 %v6615, %v6612
    %v6639 = vpack.c.bf16 %v6621, %v6618
    %v6640 = vpack.c.bf16 %v6627, %v6624
    %v6641 = vpack.c.bf16 %v6633, %v6630
    %6642 = vmatpush.bf16.msra.mxu0 %v4578
    %6643 = vmatpush.bf16.msra.mxu0 %v4577
    %6644 = vmatpush.bf16.msra.mxu0 %v4576
    %6645 = vmatpush.bf16.msra.mxu0 %v4575
    %6646 = vmatpush.bf16.msra.mxu0 %v4574
    %6647 = vmatpush.bf16.msra.mxu0 %v4573
    %6648 = vmatpush.bf16.msra.mxu0 %v4572
    %6649 = vmatpush.bf16.msra.mxu0 %v4571
    %6650 = vmatmul.bf16.gmra.mxu0 %v6634
    %v6651 = vpop.f32.mrf.mxu0
    %v6652 = vadd.f32 %v4538, %v6651
    %v6653 = vpop.f32.mrf.mxu0
    %v6654 = vadd.f32 %v4538, %v6653
    %6655 = vmatmul.bf16.gmra.mxu0 %v6635
    %v6656 = vpop.f32.mrf.mxu0
    %v6657 = vadd.f32 %v4538, %v6656
    %v6658 = vpop.f32.mrf.mxu0
    %v6659 = vadd.f32 %v4538, %v6658
    %6660 = vmatmul.bf16.gmra.mxu0 %v6636
    %v6661 = vpop.f32.mrf.mxu0
    %v6662 = vadd.f32 %v4538, %v6661
    %v6663 = vpop.f32.mrf.mxu0
    %v6664 = vadd.f32 %v4538, %v6663
    %6665 = vmatmul.bf16.gmra.mxu0 %v6637
    %v6666 = vpop.f32.mrf.mxu0
    %v6667 = vadd.f32 %v4538, %v6666
    %v6668 = vpop.f32.mrf.mxu0
    %v6669 = vadd.f32 %v4538, %v6668
    %6670 = vmatmul.bf16.gmra.mxu0 %v6638
    %v6671 = vpop.f32.mrf.mxu0
    %v6672 = vadd.f32 %v4538, %v6671
    %v6673 = vpop.f32.mrf.mxu0
    %v6674 = vadd.f32 %v4538, %v6673
    %6675 = vmatmul.bf16.gmra.mxu0 %v6639
    %v6676 = vpop.f32.mrf.mxu0
    %v6677 = vadd.f32 %v4538, %v6676
    %v6678 = vpop.f32.mrf.mxu0
    %v6679 = vadd.f32 %v4538, %v6678
    %6680 = vmatmul.bf16.gmra.mxu0 %v6640
    %v6681 = vpop.f32.mrf.mxu0
    %v6682 = vadd.f32 %v4538, %v6681
    %v6683 = vpop.f32.mrf.mxu0
    %v6684 = vadd.f32 %v4538, %v6683
    %6685 = vmatmul.bf16.gmra.mxu0 %v6641
    %v6686 = vpop.f32.mrf.mxu0
    %v6687 = vadd.f32 %v4538, %v6686
    %v6688 = vpop.f32.mrf.mxu0
    %v6689 = vadd.f32 %v4538, %v6688
    %6690 = vdwg.mxu0
    %v6691 = vmul.f32 %v6652, 0.5
    %v6692 = vmul.f32 %v6654, 0.5
    %v6693 = vmul.f32 %v6657, 0.5
    %v6694 = vmul.f32 %v6659, 0.5
    %v6695 = vmul.f32 %v6662, 0.5
    %v6696 = vmul.f32 %v6664, 0.5
    %v6697 = vmul.f32 %v6667, 0.5
    %v6698 = vmul.f32 %v6669, 0.5
    %v6699 = vmul.f32 %v6672, 0.5
    %v6700 = vmul.f32 %v6674, 0.5
    %v6701 = vmul.f32 %v6677, 0.5
    %v6702 = vmul.f32 %v6679, 0.5
    %v6703 = vmul.f32 %v6682, 0.5
    %v6704 = vmul.f32 %v6684, 0.5
    %v6705 = vmul.f32 %v6687, 0.5
    %v6706 = vmul.f32 %v6689, 0.5
    %v6707 = vtanh.pop %v6691
    %v6708 = vtanh.pop %v6692
    %v6709 = vtanh.pop %v6693
    %v6710 = vtanh.pop %v6694
    %v6711 = vtanh.pop %v6695
    %v6712 = vtanh.pop %v6696
    %v6713 = vtanh.pop %v6697
    %v6714 = vtanh.pop %v6698
    %v6715 = vtanh.pop %v6699
    %v6716 = vtanh.pop %v6700
    %v6717 = vtanh.pop %v6701
    %v6718 = vtanh.pop %v6702
    %v6719 = vtanh.pop %v6703
    %v6720 = vtanh.pop %v6704
    %v6721 = vtanh.pop %v6705
    %v6722 = vtanh.pop %v6706
    %v6723 = vmul.f32 %v6707, 0.5
    %v6724 = vmul.f32 %v6708, 0.5
    %v6725 = vmul.f32 %v6709, 0.5
    %v6726 = vmul.f32 %v6710, 0.5
    %v6727 = vmul.f32 %v6711, 0.5
    %v6728 = vmul.f32 %v6712, 0.5
    %v6729 = vmul.f32 %v6713, 0.5
    %v6730 = vmul.f32 %v6714, 0.5
    %v6731 = vmul.f32 %v6715, 0.5
    %v6732 = vmul.f32 %v6716, 0.5
    %v6733 = vmul.f32 %v6717, 0.5
    %v6734 = vmul.f32 %v6718, 0.5
    %v6735 = vmul.f32 %v6719, 0.5
    %v6736 = vmul.f32 %v6720, 0.5
    %v6737 = vmul.f32 %v6721, 0.5
    %v6738 = vmul.f32 %v6722, 0.5
    %v6739 = vadd.f32 %v6723, 0.5
    %v6740 = vadd.f32 %v6724, 0.5
    %v6741 = vadd.f32 %v6725, 0.5
    %v6742 = vadd.f32 %v6726, 0.5
    %v6743 = vadd.f32 %v6727, 0.5
    %v6744 = vadd.f32 %v6728, 0.5
    %v6745 = vadd.f32 %v6729, 0.5
    %v6746 = vadd.f32 %v6730, 0.5
    %v6747 = vadd.f32 %v6731, 0.5
    %v6748 = vadd.f32 %v6732, 0.5
    %v6749 = vadd.f32 %v6733, 0.5
    %v6750 = vadd.f32 %v6734, 0.5
    %v6751 = vadd.f32 %v6735, 0.5
    %v6752 = vadd.f32 %v6736, 0.5
    %v6753 = vadd.f32 %v6737, 0.5
    %v6754 = vadd.f32 %v6738, 0.5
    %v6755 = vpack.c.bf16 %v6739, %v6739
    %v6756 = vpack.c.bf16 %v6740, %v6740
    %v6757 = vpack.c.bf16 %v6741, %v6741
    %v6758 = vpack.c.bf16 %v6742, %v6742
    %v6759 = vpack.c.bf16 %v6743, %v6743
    %v6760 = vpack.c.bf16 %v6744, %v6744
    %v6761 = vpack.c.bf16 %v6745, %v6745
    %v6762 = vpack.c.bf16 %v6746, %v6746
    %v6763 = vpack.c.bf16 %v6747, %v6747
    %v6764 = vpack.c.bf16 %v6748, %v6748
    %v6765 = vpack.c.bf16 %v6749, %v6749
    %v6766 = vpack.c.bf16 %v6750, %v6750
    %v6767 = vpack.c.bf16 %v6751, %v6751
    %v6768 = vpack.c.bf16 %v6752, %v6752
    %v6769 = vpack.c.bf16 %v6753, %v6753
    %v6770 = vpack.c.bf16 %v6754, %v6754
    %6771 = vst [vmem:[%s6 + $0x140] sm:$0xf] %v6755
    %6772 = vst [vmem:[%s6 + $0x144] sm:$0xf] %v6756
    %6773 = vst [vmem:[%s6 + $0x148] sm:$0xf] %v6757
    %6774 = vst [vmem:[%s6 + $0x14c] sm:$0xf] %v6758
    %6775 = vst [vmem:[%s6 + $0x150] sm:$0xf] %v6759
    %6776 = vst [vmem:[%s6 + $0x154] sm:$0xf] %v6760
    %6777 = vst [vmem:[%s6 + $0x158] sm:$0xf] %v6761
    %6778 = vst [vmem:[%s6 + $0x15c] sm:$0xf] %v6762
    %6779 = vst [vmem:[%s6 + $0x160] sm:$0xf] %v6763
    %6780 = vst [vmem:[%s6 + $0x164] sm:$0xf] %v6764
    %6781 = vst [vmem:[%s6 + $0x168] sm:$0xf] %v6765
    %6782 = vst [vmem:[%s6 + $0x16c] sm:$0xf] %v6766
    %6783 = vst [vmem:[%s6 + $0x170] sm:$0xf] %v6767
    %6784 = vst [vmem:[%s6 + $0x174] sm:$0xf] %v6768
    %6785 = vst [vmem:[%s6 + $0x178] sm:$0xf] %v6769
    %6786 = vst [vmem:[%s6 + $0x17c] sm:$0xf] %v6770
    %v6787 = vld [vmem:[#allocation2 + $0x30] sm:$0xff]
    %v6788 = vpack.c.bf16 %v6787, %v6787
    %6789 = vmatpush.bf16.msra.mxu0 %v2501
    %6790 = vmatpush.bf16.msra.mxu0 %v2485
    %6791 = vmatpush.bf16.msra.mxu0 %v2469
    %6792 = vmatpush.bf16.msra.mxu0 %v2453
    %6793 = vmatpush.bf16.msra.mxu0 %v2437
    %6794 = vmatpush.bf16.msra.mxu0 %v2421
    %6795 = vmatpush.bf16.msra.mxu0 %v2405
    %6796 = vmatpush.bf16.msra.mxu0 %v2389
    %6797 = vmatmul.bf16.gmra.mxu0 %v6788
    %v6798 = vpop.f32.mrf.mxu0
    %v6799 = vadd.f32 0.0, %v6798
    %v6800 = vpop.f32.mrf.mxu0
    %6801 = vdwg.mxu0
    %6802 = vmatpush.bf16.msra.mxu0 %v2502
    %6803 = vmatpush.bf16.msra.mxu0 %v2486
    %6804 = vmatpush.bf16.msra.mxu0 %v2470
    %6805 = vmatpush.bf16.msra.mxu0 %v2454
    %6806 = vmatpush.bf16.msra.mxu0 %v2438
    %6807 = vmatpush.bf16.msra.mxu0 %v2422
    %6808 = vmatpush.bf16.msra.mxu0 %v2406
    %6809 = vmatpush.bf16.msra.mxu0 %v2390
    %6810 = vmatmul.bf16.gmra.mxu0 %v6788
    %v6811 = vpop.f32.mrf.mxu0
    %v6812 = vadd.f32 0.0, %v6811
    %v6813 = vpop.f32.mrf.mxu0
    %6814 = vdwg.mxu0
    %6815 = vmatpush.bf16.msra.mxu0 %v2503
    %6816 = vmatpush.bf16.msra.mxu0 %v2487
    %6817 = vmatpush.bf16.msra.mxu0 %v2471
    %6818 = vmatpush.bf16.msra.mxu0 %v2455
    %6819 = vmatpush.bf16.msra.mxu0 %v2439
    %6820 = vmatpush.bf16.msra.mxu0 %v2423
    %6821 = vmatpush.bf16.msra.mxu0 %v2407
    %6822 = vmatpush.bf16.msra.mxu0 %v2391
    %6823 = vmatmul.bf16.gmra.mxu0 %v6788
    %v6824 = vpop.f32.mrf.mxu0
    %v6825 = vadd.f32 0.0, %v6824
    %v6826 = vpop.f32.mrf.mxu0
    %6827 = vdwg.mxu0
    %6828 = vmatpush.bf16.msra.mxu0 %v2504
    %6829 = vmatpush.bf16.msra.mxu0 %v2488
    %6830 = vmatpush.bf16.msra.mxu0 %v2472
    %6831 = vmatpush.bf16.msra.mxu0 %v2456
    %6832 = vmatpush.bf16.msra.mxu0 %v2440
    %6833 = vmatpush.bf16.msra.mxu0 %v2424
    %6834 = vmatpush.bf16.msra.mxu0 %v2408
    %6835 = vmatpush.bf16.msra.mxu0 %v2392
    %6836 = vmatmul.bf16.gmra.mxu0 %v6788
    %v6837 = vpop.f32.mrf.mxu0
    %v6838 = vadd.f32 0.0, %v6837
    %v6839 = vpop.f32.mrf.mxu0
    %6840 = vdwg.mxu0
    %6841 = vmatpush.bf16.msra.mxu0 %v2505
    %6842 = vmatpush.bf16.msra.mxu0 %v2489
    %6843 = vmatpush.bf16.msra.mxu0 %v2473
    %6844 = vmatpush.bf16.msra.mxu0 %v2457
    %6845 = vmatpush.bf16.msra.mxu0 %v2441
    %6846 = vmatpush.bf16.msra.mxu0 %v2425
    %6847 = vmatpush.bf16.msra.mxu0 %v2409
    %6848 = vmatpush.bf16.msra.mxu0 %v2393
    %6849 = vmatmul.bf16.gmra.mxu0 %v6788
    %v6850 = vpop.f32.mrf.mxu0
    %v6851 = vadd.f32 0.0, %v6850
    %v6852 = vpop.f32.mrf.mxu0
    %6853 = vdwg.mxu0
    %6854 = vmatpush.bf16.msra.mxu0 %v2506
    %6855 = vmatpush.bf16.msra.mxu0 %v2490
    %6856 = vmatpush.bf16.msra.mxu0 %v2474
    %6857 = vmatpush.bf16.msra.mxu0 %v2458
    %6858 = vmatpush.bf16.msra.mxu0 %v2442
    %6859 = vmatpush.bf16.msra.mxu0 %v2426
    %6860 = vmatpush.bf16.msra.mxu0 %v2410
    %6861 = vmatpush.bf16.msra.mxu0 %v2394
    %6862 = vmatmul.bf16.gmra.mxu0 %v6788
    %v6863 = vpop.f32.mrf.mxu0
    %v6864 = vadd.f32 0.0, %v6863
    %v6865 = vpop.f32.mrf.mxu0
    %6866 = vdwg.mxu0
    %6867 = vmatpush.bf16.msra.mxu0 %v2507
    %6868 = vmatpush.bf16.msra.mxu0 %v2491
    %6869 = vmatpush.bf16.msra.mxu0 %v2475
    %6870 = vmatpush.bf16.msra.mxu0 %v2459
    %6871 = vmatpush.bf16.msra.mxu0 %v2443
    %6872 = vmatpush.bf16.msra.mxu0 %v2427
    %6873 = vmatpush.bf16.msra.mxu0 %v2411
    %6874 = vmatpush.bf16.msra.mxu0 %v2395
    %6875 = vmatmul.bf16.gmra.mxu0 %v6788
    %v6876 = vpop.f32.mrf.mxu0
    %v6877 = vadd.f32 0.0, %v6876
    %v6878 = vpop.f32.mrf.mxu0
    %6879 = vdwg.mxu0
    %6880 = vmatpush.bf16.msra.mxu0 %v2508
    %6881 = vmatpush.bf16.msra.mxu0 %v2492
    %6882 = vmatpush.bf16.msra.mxu0 %v2476
    %6883 = vmatpush.bf16.msra.mxu0 %v2460
    %6884 = vmatpush.bf16.msra.mxu0 %v2444
    %6885 = vmatpush.bf16.msra.mxu0 %v2428
    %6886 = vmatpush.bf16.msra.mxu0 %v2412
    %6887 = vmatpush.bf16.msra.mxu0 %v2396
    %6888 = vmatmul.bf16.gmra.mxu0 %v6788
    %v6889 = vpop.f32.mrf.mxu0
    %v6890 = vadd.f32 0.0, %v6889
    %v6891 = vpop.f32.mrf.mxu0
    %6892 = vdwg.mxu0
    %6893 = vmatpush.bf16.msra.mxu0 %v2509
    %6894 = vmatpush.bf16.msra.mxu0 %v2493
    %6895 = vmatpush.bf16.msra.mxu0 %v2477
    %6896 = vmatpush.bf16.msra.mxu0 %v2461
    %6897 = vmatpush.bf16.msra.mxu0 %v2445
    %6898 = vmatpush.bf16.msra.mxu0 %v2429
    %6899 = vmatpush.bf16.msra.mxu0 %v2413
    %6900 = vmatpush.bf16.msra.mxu0 %v2397
    %6901 = vmatmul.bf16.gmra.mxu0 %v6788
    %v6902 = vpop.f32.mrf.mxu0
    %v6903 = vadd.f32 0.0, %v6902
    %v6904 = vpop.f32.mrf.mxu0
    %6905 = vdwg.mxu0
    %6906 = vmatpush.bf16.msra.mxu0 %v2510
    %6907 = vmatpush.bf16.msra.mxu0 %v2494
    %6908 = vmatpush.bf16.msra.mxu0 %v2478
    %6909 = vmatpush.bf16.msra.mxu0 %v2462
    %6910 = vmatpush.bf16.msra.mxu0 %v2446
    %6911 = vmatpush.bf16.msra.mxu0 %v2430
    %6912 = vmatpush.bf16.msra.mxu0 %v2414
    %6913 = vmatpush.bf16.msra.mxu0 %v2398
    %6914 = vmatmul.bf16.gmra.mxu0 %v6788
    %v6915 = vpop.f32.mrf.mxu0
    %v6916 = vadd.f32 0.0, %v6915
    %v6917 = vpop.f32.mrf.mxu0
    %6918 = vdwg.mxu0
    %6919 = vmatpush.bf16.msra.mxu0 %v2511
    %6920 = vmatpush.bf16.msra.mxu0 %v2495
    %6921 = vmatpush.bf16.msra.mxu0 %v2479
    %6922 = vmatpush.bf16.msra.mxu0 %v2463
    %6923 = vmatpush.bf16.msra.mxu0 %v2447
    %6924 = vmatpush.bf16.msra.mxu0 %v2431
    %6925 = vmatpush.bf16.msra.mxu0 %v2415
    %6926 = vmatpush.bf16.msra.mxu0 %v2399
    %6927 = vmatmul.bf16.gmra.mxu0 %v6788
    %v6928 = vpop.f32.mrf.mxu0
    %v6929 = vadd.f32 0.0, %v6928
    %v6930 = vpop.f32.mrf.mxu0
    %6931 = vdwg.mxu0
    %6932 = vmatpush.bf16.msra.mxu0 %v2512
    %6933 = vmatpush.bf16.msra.mxu0 %v2496
    %6934 = vmatpush.bf16.msra.mxu0 %v2480
    %6935 = vmatpush.bf16.msra.mxu0 %v2464
    %6936 = vmatpush.bf16.msra.mxu0 %v2448
    %6937 = vmatpush.bf16.msra.mxu0 %v2432
    %6938 = vmatpush.bf16.msra.mxu0 %v2416
    %6939 = vmatpush.bf16.msra.mxu0 %v2400
    %6940 = vmatmul.bf16.gmra.mxu0 %v6788
    %v6941 = vpop.f32.mrf.mxu0
    %v6942 = vadd.f32 0.0, %v6941
    %v6943 = vpop.f32.mrf.mxu0
    %6944 = vdwg.mxu0
    %6945 = vmatpush.bf16.msra.mxu0 %v2513
    %6946 = vmatpush.bf16.msra.mxu0 %v2497
    %6947 = vmatpush.bf16.msra.mxu0 %v2481
    %6948 = vmatpush.bf16.msra.mxu0 %v2465
    %6949 = vmatpush.bf16.msra.mxu0 %v2449
    %6950 = vmatpush.bf16.msra.mxu0 %v2433
    %6951 = vmatpush.bf16.msra.mxu0 %v2417
    %6952 = vmatpush.bf16.msra.mxu0 %v2401
    %6953 = vmatmul.bf16.gmra.mxu0 %v6788
    %v6954 = vpop.f32.mrf.mxu0
    %v6955 = vadd.f32 0.0, %v6954
    %v6956 = vpop.f32.mrf.mxu0
    %6957 = vdwg.mxu0
    %6958 = vmatpush.bf16.msra.mxu0 %v2514
    %6959 = vmatpush.bf16.msra.mxu0 %v2498
    %6960 = vmatpush.bf16.msra.mxu0 %v2482
    %6961 = vmatpush.bf16.msra.mxu0 %v2466
    %6962 = vmatpush.bf16.msra.mxu0 %v2450
    %6963 = vmatpush.bf16.msra.mxu0 %v2434
    %6964 = vmatpush.bf16.msra.mxu0 %v2418
    %6965 = vmatpush.bf16.msra.mxu0 %v2402
    %6966 = vmatmul.bf16.gmra.mxu0 %v6788
    %v6967 = vpop.f32.mrf.mxu0
    %v6968 = vadd.f32 0.0, %v6967
    %v6969 = vpop.f32.mrf.mxu0
    %6970 = vdwg.mxu0
    %6971 = vmatpush.bf16.msra.mxu0 %v2515
    %6972 = vmatpush.bf16.msra.mxu0 %v2499
    %6973 = vmatpush.bf16.msra.mxu0 %v2483
    %6974 = vmatpush.bf16.msra.mxu0 %v2467
    %6975 = vmatpush.bf16.msra.mxu0 %v2451
    %6976 = vmatpush.bf16.msra.mxu0 %v2435
    %6977 = vmatpush.bf16.msra.mxu0 %v2419
    %6978 = vmatpush.bf16.msra.mxu0 %v2403
    %6979 = vmatmul.bf16.gmra.mxu0 %v6788
    %v6980 = vpop.f32.mrf.mxu0
    %v6981 = vadd.f32 0.0, %v6980
    %v6982 = vpop.f32.mrf.mxu0
    %6983 = vdwg.mxu0
    %6984 = vmatpush.bf16.msra.mxu0 %v2516
    %6985 = vmatpush.bf16.msra.mxu0 %v2500
    %6986 = vmatpush.bf16.msra.mxu0 %v2484
    %6987 = vmatpush.bf16.msra.mxu0 %v2468
    %6988 = vmatpush.bf16.msra.mxu0 %v2452
    %6989 = vmatpush.bf16.msra.mxu0 %v2436
    %6990 = vmatpush.bf16.msra.mxu0 %v2420
    %6991 = vmatpush.bf16.msra.mxu0 %v2404
    %6992 = vmatmul.bf16.gmra.mxu0 %v6788
    %v6993 = vpop.f32.mrf.mxu0
    %v6994 = vadd.f32 0.0, %v6993
    %v6995 = vpop.f32.mrf.mxu0
    %6996 = vdwg.mxu0
    %v6997 = vmul.f32 %v6799, %v4480
    %v6998 = vadd.f32 %v6997, %v4482
    %v6999 = vmax.f32 %v6998, 0.0
    %v7000 = vmul.f32 %v6812, %v4480
    %v7001 = vadd.f32 %v7000, %v4482
    %v7002 = vmax.f32 %v7001, 0.0
    %v7003 = vmul.f32 %v6825, %v4480
    %v7004 = vadd.f32 %v7003, %v4482
    %v7005 = vmax.f32 %v7004, 0.0
    %v7006 = vmul.f32 %v6838, %v4480
    %v7007 = vadd.f32 %v7006, %v4482
    %v7008 = vmax.f32 %v7007, 0.0
    %v7009 = vmul.f32 %v6851, %v4480
    %v7010 = vadd.f32 %v7009, %v4482
    %v7011 = vmax.f32 %v7010, 0.0
    %v7012 = vmul.f32 %v6864, %v4480
    %v7013 = vadd.f32 %v7012, %v4482
    %v7014 = vmax.f32 %v7013, 0.0
    %v7015 = vmul.f32 %v6877, %v4480
    %v7016 = vadd.f32 %v7015, %v4482
    %v7017 = vmax.f32 %v7016, 0.0
    %v7018 = vmul.f32 %v6890, %v4480
    %v7019 = vadd.f32 %v7018, %v4482
    %v7020 = vmax.f32 %v7019, 0.0
    %v7021 = vmul.f32 %v6903, %v4480
    %v7022 = vadd.f32 %v7021, %v4482
    %v7023 = vmax.f32 %v7022, 0.0
    %v7024 = vmul.f32 %v6916, %v4480
    %v7025 = vadd.f32 %v7024, %v4482
    %v7026 = vmax.f32 %v7025, 0.0
    %v7027 = vmul.f32 %v6929, %v4480
    %v7028 = vadd.f32 %v7027, %v4482
    %v7029 = vmax.f32 %v7028, 0.0
    %v7030 = vmul.f32 %v6942, %v4480
    %v7031 = vadd.f32 %v7030, %v4482
    %v7032 = vmax.f32 %v7031, 0.0
    %v7033 = vmul.f32 %v6955, %v4480
    %v7034 = vadd.f32 %v7033, %v4482
    %v7035 = vmax.f32 %v7034, 0.0
    %v7036 = vmul.f32 %v6968, %v4480
    %v7037 = vadd.f32 %v7036, %v4482
    %v7038 = vmax.f32 %v7037, 0.0
    %v7039 = vmul.f32 %v6981, %v4480
    %v7040 = vadd.f32 %v7039, %v4482
    %v7041 = vmax.f32 %v7040, 0.0
    %v7042 = vmul.f32 %v6994, %v4480
    %v7043 = vadd.f32 %v7042, %v4482
    %v7044 = vmax.f32 %v7043, 0.0
    %v7045 = vpack.c.bf16 %v7002, %v6999
    %v7046 = vpack.c.bf16 %v7008, %v7005
    %v7047 = vpack.c.bf16 %v7014, %v7011
    %v7048 = vpack.c.bf16 %v7020, %v7017
    %v7049 = vpack.c.bf16 %v7026, %v7023
    %v7050 = vpack.c.bf16 %v7032, %v7029
    %v7051 = vpack.c.bf16 %v7038, %v7035
    %v7052 = vpack.c.bf16 %v7044, %v7041
    %7053 = vmatpush.bf16.msra.mxu0 %v4578
    %7054 = vmatpush.bf16.msra.mxu0 %v4577
    %7055 = vmatpush.bf16.msra.mxu0 %v4576
    %7056 = vmatpush.bf16.msra.mxu0 %v4575
    %7057 = vmatpush.bf16.msra.mxu0 %v4574
    %7058 = vmatpush.bf16.msra.mxu0 %v4573
    %7059 = vmatpush.bf16.msra.mxu0 %v4572
    %7060 = vmatpush.bf16.msra.mxu0 %v4571
    %7061 = vmatmul.bf16.gmra.mxu0 %v7045
    %v7062 = vpop.f32.mrf.mxu0
    %v7063 = vadd.f32 %v4538, %v7062
    %v7064 = vpop.f32.mrf.mxu0
    %v7065 = vadd.f32 %v4538, %v7064
    %7066 = vmatmul.bf16.gmra.mxu0 %v7046
    %v7067 = vpop.f32.mrf.mxu0
    %v7068 = vadd.f32 %v4538, %v7067
    %v7069 = vpop.f32.mrf.mxu0
    %v7070 = vadd.f32 %v4538, %v7069
    %7071 = vmatmul.bf16.gmra.mxu0 %v7047
    %v7072 = vpop.f32.mrf.mxu0
    %v7073 = vadd.f32 %v4538, %v7072
    %v7074 = vpop.f32.mrf.mxu0
    %v7075 = vadd.f32 %v4538, %v7074
    %7076 = vmatmul.bf16.gmra.mxu0 %v7048
    %v7077 = vpop.f32.mrf.mxu0
    %v7078 = vadd.f32 %v4538, %v7077
    %v7079 = vpop.f32.mrf.mxu0
    %v7080 = vadd.f32 %v4538, %v7079
    %7081 = vmatmul.bf16.gmra.mxu0 %v7049
    %v7082 = vpop.f32.mrf.mxu0
    %v7083 = vadd.f32 %v4538, %v7082
    %v7084 = vpop.f32.mrf.mxu0
    %v7085 = vadd.f32 %v4538, %v7084
    %7086 = vmatmul.bf16.gmra.mxu0 %v7050
    %v7087 = vpop.f32.mrf.mxu0
    %v7088 = vadd.f32 %v4538, %v7087
    %v7089 = vpop.f32.mrf.mxu0
    %v7090 = vadd.f32 %v4538, %v7089
    %7091 = vmatmul.bf16.gmra.mxu0 %v7051
    %v7092 = vpop.f32.mrf.mxu0
    %v7093 = vadd.f32 %v4538, %v7092
    %v7094 = vpop.f32.mrf.mxu0
    %v7095 = vadd.f32 %v4538, %v7094
    %7096 = vmatmul.bf16.gmra.mxu0 %v7052
    %v7097 = vpop.f32.mrf.mxu0
    %v7098 = vadd.f32 %v4538, %v7097
    %v7099 = vpop.f32.mrf.mxu0
    %v7100 = vadd.f32 %v4538, %v7099
    %7101 = vdwg.mxu0
    %v7102 = vmul.f32 %v7063, 0.5
    %v7103 = vmul.f32 %v7065, 0.5
    %v7104 = vmul.f32 %v7068, 0.5
    %v7105 = vmul.f32 %v7070, 0.5
    %v7106 = vmul.f32 %v7073, 0.5
    %v7107 = vmul.f32 %v7075, 0.5
    %v7108 = vmul.f32 %v7078, 0.5
    %v7109 = vmul.f32 %v7080, 0.5
    %v7110 = vmul.f32 %v7083, 0.5
    %v7111 = vmul.f32 %v7085, 0.5
    %v7112 = vmul.f32 %v7088, 0.5
    %v7113 = vmul.f32 %v7090, 0.5
    %v7114 = vmul.f32 %v7093, 0.5
    %v7115 = vmul.f32 %v7095, 0.5
    %v7116 = vmul.f32 %v7098, 0.5
    %v7117 = vmul.f32 %v7100, 0.5
    %v7118 = vtanh.pop %v7102
    %v7119 = vtanh.pop %v7103
    %v7120 = vtanh.pop %v7104
    %v7121 = vtanh.pop %v7105
    %v7122 = vtanh.pop %v7106
    %v7123 = vtanh.pop %v7107
    %v7124 = vtanh.pop %v7108
    %v7125 = vtanh.pop %v7109
    %v7126 = vtanh.pop %v7110
    %v7127 = vtanh.pop %v7111
    %v7128 = vtanh.pop %v7112
    %v7129 = vtanh.pop %v7113
    %v7130 = vtanh.pop %v7114
    %v7131 = vtanh.pop %v7115
    %v7132 = vtanh.pop %v7116
    %v7133 = vtanh.pop %v7117
    %v7134 = vmul.f32 %v7118, 0.5
    %v7135 = vmul.f32 %v7119, 0.5
    %v7136 = vmul.f32 %v7120, 0.5
    %v7137 = vmul.f32 %v7121, 0.5
    %v7138 = vmul.f32 %v7122, 0.5
    %v7139 = vmul.f32 %v7123, 0.5
    %v7140 = vmul.f32 %v7124, 0.5
    %v7141 = vmul.f32 %v7125, 0.5
    %v7142 = vmul.f32 %v7126, 0.5
    %v7143 = vmul.f32 %v7127, 0.5
    %v7144 = vmul.f32 %v7128, 0.5
    %v7145 = vmul.f32 %v7129, 0.5
    %v7146 = vmul.f32 %v7130, 0.5
    %v7147 = vmul.f32 %v7131, 0.5
    %v7148 = vmul.f32 %v7132, 0.5
    %v7149 = vmul.f32 %v7133, 0.5
    %v7150 = vadd.f32 %v7134, 0.5
    %v7151 = vadd.f32 %v7135, 0.5
    %v7152 = vadd.f32 %v7136, 0.5
    %v7153 = vadd.f32 %v7137, 0.5
    %v7154 = vadd.f32 %v7138, 0.5
    %v7155 = vadd.f32 %v7139, 0.5
    %v7156 = vadd.f32 %v7140, 0.5
    %v7157 = vadd.f32 %v7141, 0.5
    %v7158 = vadd.f32 %v7142, 0.5
    %v7159 = vadd.f32 %v7143, 0.5
    %v7160 = vadd.f32 %v7144, 0.5
    %v7161 = vadd.f32 %v7145, 0.5
    %v7162 = vadd.f32 %v7146, 0.5
    %v7163 = vadd.f32 %v7147, 0.5
    %v7164 = vadd.f32 %v7148, 0.5
    %v7165 = vadd.f32 %v7149, 0.5
    %v7166 = vpack.c.bf16 %v7150, %v7150
    %v7167 = vpack.c.bf16 %v7151, %v7151
    %v7168 = vpack.c.bf16 %v7152, %v7152
    %v7169 = vpack.c.bf16 %v7153, %v7153
    %v7170 = vpack.c.bf16 %v7154, %v7154
    %v7171 = vpack.c.bf16 %v7155, %v7155
    %v7172 = vpack.c.bf16 %v7156, %v7156
    %v7173 = vpack.c.bf16 %v7157, %v7157
    %v7174 = vpack.c.bf16 %v7158, %v7158
    %v7175 = vpack.c.bf16 %v7159, %v7159
    %v7176 = vpack.c.bf16 %v7160, %v7160
    %v7177 = vpack.c.bf16 %v7161, %v7161
    %v7178 = vpack.c.bf16 %v7162, %v7162
    %v7179 = vpack.c.bf16 %v7163, %v7163
    %v7180 = vpack.c.bf16 %v7164, %v7164
    %v7181 = vpack.c.bf16 %v7165, %v7165
    %7182 = vst [vmem:[%s6 + $0x180] sm:$0xf] %v7166
    %7183 = vst [vmem:[%s6 + $0x184] sm:$0xf] %v7167
    %7184 = vst [vmem:[%s6 + $0x188] sm:$0xf] %v7168
    %7185 = vst [vmem:[%s6 + $0x18c] sm:$0xf] %v7169
    %7186 = vst [vmem:[%s6 + $0x190] sm:$0xf] %v7170
    %7187 = vst [vmem:[%s6 + $0x194] sm:$0xf] %v7171
    %7188 = vst [vmem:[%s6 + $0x198] sm:$0xf] %v7172
    %7189 = vst [vmem:[%s6 + $0x19c] sm:$0xf] %v7173
    %7190 = vst [vmem:[%s6 + $0x1a0] sm:$0xf] %v7174
    %7191 = vst [vmem:[%s6 + $0x1a4] sm:$0xf] %v7175
    %7192 = vst [vmem:[%s6 + $0x1a8] sm:$0xf] %v7176
    %7193 = vst [vmem:[%s6 + $0x1ac] sm:$0xf] %v7177
    %7194 = vst [vmem:[%s6 + $0x1b0] sm:$0xf] %v7178
    %7195 = vst [vmem:[%s6 + $0x1b4] sm:$0xf] %v7179
    %7196 = vst [vmem:[%s6 + $0x1b8] sm:$0xf] %v7180
    %7197 = vst [vmem:[%s6 + $0x1bc] sm:$0xf] %v7181
    // Predicated region
    $region46: #{conv_decoder_forward.1} parent=1 // pred_check
      _
    $region47: #{conv_decoder_forward.1} parent=1 // pred_check_branch
      %7199 = sbr.rel (0) target = $region49
    $region48: #{conv_decoder_forward.1} parent=1 // pred_region
      _
    $region49: #{conv_decoder_forward.1} parent=1 // pred_fallthru
      _
    // Predicated region
    $region50: #{conv_decoder_forward.1} parent=1 // pred_check
      _
    $region51: #{conv_decoder_forward.1} parent=1 // pred_check_branch
      %7201 = sbr.rel (0) target = $region53
    $region52: #{conv_decoder_forward.1} parent=1 // pred_region
      _
    $region53: #{conv_decoder_forward.1} parent=1 // pred_fallthru
      _
    %7202 = vsyncpa [#allocation4], 1
    %7203 = vsyncpa [#allocation6], 1
    %7204 = vsyncpa [#allocation9], 1

</llo_original>
